<compile_context>
chip_gen: v7x
topology: tpu7x:2x2x1
jax: 0.10.0
libtpu: 0.0.40
codegen_flags: <defaults>
</compile_context>

<pallas_src>
import functools
import math

import jax
import jax.numpy as jnp
from jax.experimental import pallas as pl
from jax.experimental.pallas import tpu as pltpu

BOTTLE_NECK = 300
X_DIM = 2
N_CHANNEL = 1
PAD_N = 384      # bottleneck padded to 3 * 128 lanes
OUT_PAD = 128    # final scalar output padded to one full lane tile


# ---------------------------------------------------------------------------
# Conv layer matmul kernel: out = relu(col @ w + b)
# ---------------------------------------------------------------------------
def _conv_mm_kernel(col_ref, w_ref, b_ref, o_ref, *, use_vpu: bool):
    col = col_ref[...]
    w = w_ref[...]
    if use_vpu:
        # Tiny contraction (conv1: K=9, Cout=8): 9 broadcast FMAs on the VPU
        # instead of a massively zero-padded MXU matmul.
        acc = jnp.zeros((col.shape[0], w.shape[1]), jnp.float32)
        for t in range(col.shape[1]):  # small static K, fully unrolled
            acc = acc + col[:, t:t + 1] * w[t:t + 1, :]
    else:
        acc = jnp.dot(col, w, preferred_element_type=jnp.float32)
    acc = acc + b_ref[...]
    o_ref[...] = jnp.maximum(acc, 0.0).astype(o_ref.dtype)


def _conv_matmul(col, wmat, b):
    """relu(col @ wmat + b); col:(M,K), wmat:(K,N), b:(N,) -> (M,N)."""
    M, K = col.shape
    _, N = wmat.shape
    tm = M if M <= 1024 else 1024           # big row tiles, 1-2 grid steps
    assert M % tm == 0
    kernel = functools.partial(_conv_mm_kernel, use_vpu=(K <= 16))
    return pl.pallas_call(
        kernel,
        grid=(M // tm,),
        in_specs=[
            pl.BlockSpec((tm, K), lambda i: (i, 0)),
            pl.BlockSpec((K, N), lambda i: (0, 0)),
            pl.BlockSpec((1, N), lambda i: (0, 0)),
        ],
        out_specs=pl.BlockSpec((tm, N), lambda i: (i, 0)),
        out_shape=jax.ShapeDtypeStruct((M, N), jnp.float32),
        compiler_params=pltpu.CompilerParams(
            dimension_semantics=("parallel",)),   # shards across TCs on v7x
    )(col, wmat, b.reshape(1, N))


def conv2d_s2_relu(x_nhwc, w_hwio, b):
    """Conv2d(3x3, stride 2, pad 1) + ReLU. x:(B,H,W,Cin) -> (B,H/2,W/2,Cout)."""
    B, H, W, Cin = x_nhwc.shape
    KH, KW, _, Cout = w_hwio.shape
    Hout, Wout = H // 2, W // 2
    xp = jnp.pad(x_nhwc, ((0, 0), (1, 1), (1, 1), (0, 0)))
    cols = [xp[:, kh:kh + 2 * Hout:2, kw:kw + 2 * Wout:2, :]
            for kh in range(KH) for kw in range(KW)]
    col = jnp.concatenate(cols, axis=-1).reshape(B * Hout * Wout, KH * KW * Cin)
    wmat = w_hwio.reshape(KH * KW * Cin, Cout)
    out = _conv_matmul(col, wmat, b)
    return out.reshape(B, Hout, Wout, Cout)


# ---------------------------------------------------------------------------
# Fused dense head: enc_fc + magni1 + magni2 + (concat) + fc1 + fc2 + fc3
# ---------------------------------------------------------------------------
def _fc_fused_kernel(h_ref, xs_ref,
                     w_enc_ref, b_enc_ref,
                     w_m1_ref, b_m1_ref,
                     w_m2_ref, b_m2_ref,
                     w_f1g_ref, w_f1m_ref, b_f1_ref,
                     w_f2_ref, b_f2_ref,
                     w_f3_ref, b_f3_ref,
                     o_ref):
    f32 = jnp.float32

    def dense(x, w_ref, b_ref, relu=True):
        y = jnp.dot(x, w_ref[...], preferred_element_type=f32) + b_ref[...]
        return jnp.maximum(y, 0.0) if relu else y

    # encoder head: (B, 1024) @ (1024, 384)
    g = dense(h_ref[...], w_enc_ref, b_enc_ref)

    # magni branch. First layer has K = x_dim = 2 -> two VPU broadcast FMAs
    # instead of a 2-deep MXU contraction.
    xs = xs_ref[...]
    w_m1 = w_m1_ref[...]
    m = xs[:, 0:1] * w_m1[0:1, :] + xs[:, 1:2] * w_m1[1:2, :] + b_m1_ref[...]
    m = jnp.maximum(m, 0.0)
    m = dense(m, w_m2_ref, b_m2_ref)

    # fc head: concat([g, m]) @ W_fc1 == g @ W_fc1[:300] + m @ W_fc1[300:]
    z = (jnp.dot(g, w_f1g_ref[...], preferred_element_type=f32)
         + jnp.dot(m, w_f1m_ref[...], preferred_element_type=f32)
         + b_f1_ref[...])
    z = jnp.maximum(z, 0.0)
    z = dense(z, w_f2_ref, b_f2_ref)
    y = dense(z, w_f3_ref, b_f3_ref, relu=False)
    o_ref[...] = y.astype(o_ref.dtype)


def fc_fused(h, xs, params):
    B = h.shape[0]
    args = (h, xs,
            params["enc_fc"][0], params["enc_fc"][1],
            params["magni1"][0], params["magni1"][1],
            params["magni2"][0], params["magni2"][1],
            params["fc1_g"], params["fc1_m"], params["fc1_b"],
            params["fc2"][0], params["fc2"][1],
            params["fc3"][0], params["fc3"][1])
    in_specs = [pl.BlockSpec(a.shape, lambda i: (0, 0)) for a in args]
    out = pl.pallas_call(
        _fc_fused_kernel,
        grid=(1,),
        in_specs=in_specs,
        out_specs=pl.BlockSpec((B, OUT_PAD), lambda i: (0, 0)),
        out_shape=jax.ShapeDtypeStruct((B, OUT_PAD), jnp.float32),
        compiler_params=pltpu.CompilerParams(
            dimension_semantics=("arbitrary",)),
    )(*args)
    return out[:, :1]


# ---------------------------------------------------------------------------
# Parameters (deterministic, synthetic). Dense weights are pre-padded ONCE.
# ---------------------------------------------------------------------------
def _pad_dense(w, b, kp, npad):
    wp = jnp.zeros((kp, npad), jnp.float32).at[:w.shape[0], :w.shape[1]].set(w)
    bp = jnp.zeros((1, npad), jnp.float32).at[0, :b.shape[0]].set(b)
    return wp, bp


def init_params(key):
    keys = iter(jax.random.split(key, 16))

    def conv(cin, cout):
        fan_in = 3 * 3 * cin
        w = jax.random.normal(next(keys), (3, 3, cin, cout), jnp.float32) / math.sqrt(fan_in)
        b = 0.01 * jnp.ones((cout,), jnp.float32)
        return w, b

    def dense(fin, fout):
        w = jax.random.normal(next(keys), (fin, fout), jnp.float32) / math.sqrt(fin)
        b = 0.01 * jnp.ones((fout,), jnp.float32)
        return w, b

    convs = [conv(N_CHANNEL, 8), conv(8, 16), conv(16, 32), conv(32, 64)]
    enc_w, enc_b = dense(1024, BOTTLE_NECK)
    m1_w, m1_b = dense(X_DIM, BOTTLE_NECK)
    m2_w, m2_b = dense(BOTTLE_NECK, BOTTLE_NECK)
    f1_w, f1_b = dense(2 * BOTTLE_NECK, BOTTLE_NECK)
    f2_w, f2_b = dense(BOTTLE_NECK, BOTTLE_NECK)
    f3_w, f3_b = dense(BOTTLE_NECK, 1)

    # Zero padding keeps the math exact: padded output lanes stay 0 through
    # (zero weight cols + zero bias + ReLU), and padded K rows multiply zeros.
    params = {
        "convs": convs,
        "enc_fc": _pad_dense(enc_w, enc_b, 1024, PAD_N),
        "magni1": _pad_dense(m1_w, m1_b, X_DIM, PAD_N),
        "magni2": _pad_dense(m2_w, m2_b, PAD_N, PAD_N),
        "fc2": _pad_dense(f2_w, f2_b, PAD_N, PAD_N),
        "fc3": _pad_dense(f3_w, f3_b, PAD_N, OUT_PAD),
    }
    f1g, _ = _pad_dense(f1_w[:BOTTLE_NECK], f1_b, PAD_N, PAD_N)
    f1m, f1bp = _pad_dense(f1_w[BOTTLE_NECK:], f1_b, PAD_N, PAD_N)
    params["fc1_g"], params["fc1_m"], params["fc1_b"] = f1g, f1m, f1bp
    # unpadded copies only for the pure-JAX reference check
    params["_ref"] = {
        "enc_fc": (enc_w, enc_b), "magni1": (m1_w, m1_b), "magni2": (m2_w, m2_b),
        "fc1": (f1_w, f1_b), "fc2": (f2_w, f2_b), "fc3": (f3_w, f3_b),
    }
    return params


# ---------------------------------------------------------------------------
# Forward pass (mirrors BubblyWorldNet.forward)
# ---------------------------------------------------------------------------
@jax.jit
def forward(params, gridmaps_nchw, xs):
    B = gridmaps_nchw.shape[0]
    h = jnp.transpose(gridmaps_nchw, (0, 2, 3, 1))        # NCHW -> NHWC
    for (w, b) in params["convs"]:
        h = conv2d_s2_relu(h, w, b)
    # torch Flatten operates on NCHW ordering: (B, C*H*W)
    h = jnp.transpose(h, (0, 3, 1, 2)).reshape(B, -1)      # (B, 1024)
    return fc_fused(h, xs, params)                         # (B, 1)


# Pure-JAX reference (unpadded weights) for correctness validation.
def forward_ref(params, gridmaps_nchw, xs):
    def conv_ref(x, w, b):
        B, H, W, _ = x.shape
        Hout, Wout = H // 2, W // 2
        xp = jnp.pad(x, ((0, 0), (1, 1), (1, 1), (0, 0)))
        cols = [xp[:, kh:kh + 2 * Hout:2, kw:kw + 2 * Wout:2, :]
                for kh in range(3) for kw in range(3)]
        col = jnp.concatenate(cols, axis=-1).reshape(B * Hout * Wout, -1)
        out = jnp.maximum(col @ w.reshape(-1, w.shape[-1]) + b, 0.0)
        return out.reshape(B, Hout, Wout, -1)

    B = gridmaps_nchw.shape[0]
    h = jnp.transpose(gridmaps_nchw, (0, 2, 3, 1))
    for (w, b) in params["convs"]:
        h = conv_ref(h, w, b)
    h = jnp.transpose(h, (0, 3, 1, 2)).reshape(B, -1)
    r = params["_ref"]
    relu = lambda v: jnp.maximum(v, 0.0)
    g = relu(h @ r["enc_fc"][0] + r["enc_fc"][1])
    m = relu(xs @ r["magni1"][0] + r["magni1"][1])
    m = relu(m @ r["magni2"][0] + r["magni2"][1])
    z = jnp.concatenate([g, m], axis=1)
    z = relu(z @ r["fc1"][0] + r["fc1"][1])
    z = relu(z @ r["fc2"][0] + r["fc2"][1])
    return z @ r["fc3"][0] + r["fc3"][1]


if __name__ == "__main__":
    key = jax.random.PRNGKey(0)
    kp, kg, kx = jax.random.split(key, 3)

    params = init_params(kp)
    # 64x64 spatial is required for Flatten -> Linear(1024, 300) to be valid.
    gridmaps = jax.random.normal(kg, (2, N_CHANNEL, 64, 64), jnp.float32)  # NCHW
    xs = jax.random.normal(kx, (2, X_DIM), jnp.float32)

    y = forward(params, gridmaps, xs)
    y = jax.block_until_ready(y)
    assert y.shape == (2, 1) and y.dtype == jnp.float32

    y_ref = forward_ref(params, gridmaps, xs)
    assert jnp.allclose(y, y_ref, atol=5e-2, rtol=5e-2), (y, y_ref)
    print("KERNEL_OK")
</pallas_src>

<mosaic_0001>
module attributes {stable_mosaic.version = 11 : i64} {
  func.func @_conv_mm_kernel(%arg0: i32, %arg1: memref<1024x9xf32, #tpu.memory_space<vmem>>, %arg2: memref<9x8xf32, #tpu.memory_space<vmem>>, %arg3: memref<1x8xf32, #tpu.memory_space<vmem>>, %arg4: memref<1024x8xf32, #tpu.memory_space<vmem>>) attributes {dimension_semantics = [#tpu.dimension_semantics<parallel>], iteration_bounds = array<i64: 2>, scalar_prefetch = 0 : i64, scratch_operands = 0 : i64, tpu.core_type = #tpu.core_type<tc>, window_params = [{transform_indices = @transform_0, window_bounds = array<i64: 1024, 9>}, {pipeline_mode = #tpu.pipeline_mode<synchronous>, transform_indices = @transform_1, window_bounds = array<i64: 9, 8>}, {pipeline_mode = #tpu.pipeline_mode<synchronous>, transform_indices = @transform_2, window_bounds = array<i64: 1, 8>}, {transform_indices = @transform_3, window_bounds = array<i64: 1024, 8>}]} {
    %c0 = arith.constant 0 : index
    %c0_0 = arith.constant 0 : index
    %0 = vector.load %arg1[%c0, %c0_0] : memref<1024x9xf32, #tpu.memory_space<vmem>>, vector<1024x9xf32>
    %c0_1 = arith.constant 0 : index
    %c0_2 = arith.constant 0 : index
    %1 = vector.load %arg2[%c0_1, %c0_2] : memref<9x8xf32, #tpu.memory_space<vmem>>, vector<9x8xf32>
    %cst = arith.constant 0.000000e+00 : f32
    %2 = vector.broadcast %cst : f32 to vector<1024x8xf32>
    %3 = vector.extract_strided_slice %0 {offsets = [0, 0], sizes = [1024, 1], strides = [1, 1]} : vector<1024x9xf32> to vector<1024x1xf32>
    %4 = vector.extract_strided_slice %1 {offsets = [0, 0], sizes = [1, 8], strides = [1, 1]} : vector<9x8xf32> to vector<1x8xf32>
    %5 = vector.broadcast %3 : vector<1024x1xf32> to vector<1024x8xf32>
    %6 = vector.broadcast %4 : vector<1x8xf32> to vector<1024x8xf32>
    %7 = arith.mulf %5, %6 : vector<1024x8xf32>
    %8 = arith.addf %2, %7 : vector<1024x8xf32>
    %9 = vector.extract_strided_slice %0 {offsets = [0, 1], sizes = [1024, 1], strides = [1, 1]} : vector<1024x9xf32> to vector<1024x1xf32>
    %10 = vector.extract_strided_slice %1 {offsets = [1, 0], sizes = [1, 8], strides = [1, 1]} : vector<9x8xf32> to vector<1x8xf32>
    %11 = vector.broadcast %9 : vector<1024x1xf32> to vector<1024x8xf32>
    %12 = vector.broadcast %10 : vector<1x8xf32> to vector<1024x8xf32>
    %13 = arith.mulf %11, %12 : vector<1024x8xf32>
    %14 = arith.addf %8, %13 : vector<1024x8xf32>
    %15 = vector.extract_strided_slice %0 {offsets = [0, 2], sizes = [1024, 1], strides = [1, 1]} : vector<1024x9xf32> to vector<1024x1xf32>
    %16 = vector.extract_strided_slice %1 {offsets = [2, 0], sizes = [1, 8], strides = [1, 1]} : vector<9x8xf32> to vector<1x8xf32>
    %17 = vector.broadcast %15 : vector<1024x1xf32> to vector<1024x8xf32>
    %18 = vector.broadcast %16 : vector<1x8xf32> to vector<1024x8xf32>
    %19 = arith.mulf %17, %18 : vector<1024x8xf32>
    %20 = arith.addf %14, %19 : vector<1024x8xf32>
    %21 = vector.extract_strided_slice %0 {offsets = [0, 3], sizes = [1024, 1], strides = [1, 1]} : vector<1024x9xf32> to vector<1024x1xf32>
    %22 = vector.extract_strided_slice %1 {offsets = [3, 0], sizes = [1, 8], strides = [1, 1]} : vector<9x8xf32> to vector<1x8xf32>
    %23 = vector.broadcast %21 : vector<1024x1xf32> to vector<1024x8xf32>
    %24 = vector.broadcast %22 : vector<1x8xf32> to vector<1024x8xf32>
    %25 = arith.mulf %23, %24 : vector<1024x8xf32>
    %26 = arith.addf %20, %25 : vector<1024x8xf32>
    %27 = vector.extract_strided_slice %0 {offsets = [0, 4], sizes = [1024, 1], strides = [1, 1]} : vector<1024x9xf32> to vector<1024x1xf32>
    %28 = vector.extract_strided_slice %1 {offsets = [4, 0], sizes = [1, 8], strides = [1, 1]} : vector<9x8xf32> to vector<1x8xf32>
    %29 = vector.broadcast %27 : vector<1024x1xf32> to vector<1024x8xf32>
    %30 = vector.broadcast %28 : vector<1x8xf32> to vector<1024x8xf32>
    %31 = arith.mulf %29, %30 : vector<1024x8xf32>
    %32 = arith.addf %26, %31 : vector<1024x8xf32>
    %33 = vector.extract_strided_slice %0 {offsets = [0, 5], sizes = [1024, 1], strides = [1, 1]} : vector<1024x9xf32> to vector<1024x1xf32>
    %34 = vector.extract_strided_slice %1 {offsets = [5, 0], sizes = [1, 8], strides = [1, 1]} : vector<9x8xf32> to vector<1x8xf32>
    %35 = vector.broadcast %33 : vector<1024x1xf32> to vector<1024x8xf32>
    %36 = vector.broadcast %34 : vector<1x8xf32> to vector<1024x8xf32>
    %37 = arith.mulf %35, %36 : vector<1024x8xf32>
    %38 = arith.addf %32, %37 : vector<1024x8xf32>
    %39 = vector.extract_strided_slice %0 {offsets = [0, 6], sizes = [1024, 1], strides = [1, 1]} : vector<1024x9xf32> to vector<1024x1xf32>
    %40 = vector.extract_strided_slice %1 {offsets = [6, 0], sizes = [1, 8], strides = [1, 1]} : vector<9x8xf32> to vector<1x8xf32>
    %41 = vector.broadcast %39 : vector<1024x1xf32> to vector<1024x8xf32>
    %42 = vector.broadcast %40 : vector<1x8xf32> to vector<1024x8xf32>
    %43 = arith.mulf %41, %42 : vector<1024x8xf32>
    %44 = arith.addf %38, %43 : vector<1024x8xf32>
    %45 = vector.extract_strided_slice %0 {offsets = [0, 7], sizes = [1024, 1], strides = [1, 1]} : vector<1024x9xf32> to vector<1024x1xf32>
    %46 = vector.extract_strided_slice %1 {offsets = [7, 0], sizes = [1, 8], strides = [1, 1]} : vector<9x8xf32> to vector<1x8xf32>
    %47 = vector.broadcast %45 : vector<1024x1xf32> to vector<1024x8xf32>
    %48 = vector.broadcast %46 : vector<1x8xf32> to vector<1024x8xf32>
    %49 = arith.mulf %47, %48 : vector<1024x8xf32>
    %50 = arith.addf %44, %49 : vector<1024x8xf32>
    %51 = vector.extract_strided_slice %0 {offsets = [0, 8], sizes = [1024, 1], strides = [1, 1]} : vector<1024x9xf32> to vector<1024x1xf32>
    %52 = vector.extract_strided_slice %1 {offsets = [8, 0], sizes = [1, 8], strides = [1, 1]} : vector<9x8xf32> to vector<1x8xf32>
    %53 = vector.broadcast %51 : vector<1024x1xf32> to vector<1024x8xf32>
    %54 = vector.broadcast %52 : vector<1x8xf32> to vector<1024x8xf32>
    %55 = arith.mulf %53, %54 : vector<1024x8xf32>
    %56 = arith.addf %50, %55 : vector<1024x8xf32>
    %c0_3 = arith.constant 0 : index
    %c0_4 = arith.constant 0 : index
    %57 = vector.load %arg3[%c0_3, %c0_4] : memref<1x8xf32, #tpu.memory_space<vmem>>, vector<1x8xf32>
    %58 = vector.broadcast %57 : vector<1x8xf32> to vector<1024x8xf32>
    %59 = arith.addf %56, %58 : vector<1024x8xf32>
    %cst_5 = arith.constant 0.000000e+00 : f32
    %60 = vector.broadcast %cst_5 : f32 to vector<1024x8xf32>
    %61 = arith.maximumf %59, %60 : vector<1024x8xf32>
    %c0_6 = arith.constant 0 : index
    %c0_7 = arith.constant 0 : index
    %62 = vector.load %arg4[%c0_6, %c0_7] : memref<1024x8xf32, #tpu.memory_space<vmem>>, vector<1024x8xf32>
    tpu.vector_store %arg4[%c0_6, %c0_7], %61 {strides = array<i32>} : memref<1024x8xf32, #tpu.memory_space<vmem>>, vector<1024x8xf32>,
    return
  }
  func.func @transform_0(%arg0: i32) -> (i32, i32) {
    %c0_i32 = arith.constant 0 : i32
    %c0_i32_0 = arith.constant 0 : i32
    return %arg0, %c0_i32 : i32, i32
  }
  func.func @transform_1(%arg0: i32) -> (i32, i32) {
    %c0_i32 = arith.constant 0 : i32
    %c0_i32_0 = arith.constant 0 : i32
    %c0_i32_1 = arith.constant 0 : i32
    return %c0_i32, %c0_i32_0 : i32, i32
  }
  func.func @transform_2(%arg0: i32) -> (i32, i32) {
    %c0_i32 = arith.constant 0 : i32
    %c0_i32_0 = arith.constant 0 : i32
    %c0_i32_1 = arith.constant 0 : i32
    return %c0_i32, %c0_i32_0 : i32, i32
  }
  func.func @transform_3(%arg0: i32) -> (i32, i32) {
    %c0_i32 = arith.constant 0 : i32
    %c0_i32_0 = arith.constant 0 : i32
    return %arg0, %c0_i32 : i32, i32
  }
}

module attributes {stable_mosaic.version = 11 : i64} {
  func.func @_conv_mm_kernel(%arg0: i32, %arg1: memref<512x72xf32, #tpu.memory_space<vmem>>, %arg2: memref<72x16xf32, #tpu.memory_space<vmem>>, %arg3: memref<1x16xf32, #tpu.memory_space<vmem>>, %arg4: memref<512x16xf32, #tpu.memory_space<vmem>>) attributes {dimension_semantics = [#tpu.dimension_semantics<parallel>], iteration_bounds = array<i64: 1>, scalar_prefetch = 0 : i64, scratch_operands = 0 : i64, tpu.core_type = #tpu.core_type<tc>, window_params = [{transform_indices = @transform_0, window_bounds = array<i64: 512, 72>}, {pipeline_mode = #tpu.pipeline_mode<synchronous>, transform_indices = @transform_1, window_bounds = array<i64: 72, 16>}, {pipeline_mode = #tpu.pipeline_mode<synchronous>, transform_indices = @transform_2, window_bounds = array<i64: 1, 16>}, {transform_indices = @transform_3, window_bounds = array<i64: 512, 16>}]} {
    %c0 = arith.constant 0 : index
    %c0_0 = arith.constant 0 : index
    %0 = vector.load %arg1[%c0, %c0_0] : memref<512x72xf32, #tpu.memory_space<vmem>>, vector<512x72xf32>
    %c0_1 = arith.constant 0 : index
    %c0_2 = arith.constant 0 : index
    %1 = vector.load %arg2[%c0_1, %c0_2] : memref<72x16xf32, #tpu.memory_space<vmem>>, vector<72x16xf32>
    %cst = arith.constant dense<0.000000e+00> : vector<512x16xf32>
    %2 = tpu.matmul %0, %1, %cst {dimension_numbers = #tpu.dot_dimension_numbers<[1], [0], [0], [1], [0, 0, 1, 1], [], []>} : vector<512x72xf32>, vector<72x16xf32>, vector<512x16xf32> -> vector<512x16xf32>
    %c0_3 = arith.constant 0 : index
    %c0_4 = arith.constant 0 : index
    %3 = vector.load %arg3[%c0_3, %c0_4] : memref<1x16xf32, #tpu.memory_space<vmem>>, vector<1x16xf32>
    %4 = vector.broadcast %3 : vector<1x16xf32> to vector<512x16xf32>
    %5 = arith.addf %2, %4 : vector<512x16xf32>
    %cst_5 = arith.constant 0.000000e+00 : f32
    %6 = vector.broadcast %cst_5 : f32 to vector<512x16xf32>
    %7 = arith.maximumf %5, %6 : vector<512x16xf32>
    %c0_6 = arith.constant 0 : index
    %c0_7 = arith.constant 0 : index
    %8 = vector.load %arg4[%c0_6, %c0_7] : memref<512x16xf32, #tpu.memory_space<vmem>>, vector<512x16xf32>
    tpu.vector_store %arg4[%c0_6, %c0_7], %7 {strides = array<i32>} : memref<512x16xf32, #tpu.memory_space<vmem>>, vector<512x16xf32>,
    return
  }
  func.func @transform_0(%arg0: i32) -> (i32, i32) {
    %c0_i32 = arith.constant 0 : i32
    %c0_i32_0 = arith.constant 0 : i32
    return %arg0, %c0_i32 : i32, i32
  }
  func.func @transform_1(%arg0: i32) -> (i32, i32) {
    %c0_i32 = arith.constant 0 : i32
    %c0_i32_0 = arith.constant 0 : i32
    %c0_i32_1 = arith.constant 0 : i32
    return %c0_i32, %c0_i32_0 : i32, i32
  }
  func.func @transform_2(%arg0: i32) -> (i32, i32) {
    %c0_i32 = arith.constant 0 : i32
    %c0_i32_0 = arith.constant 0 : i32
    %c0_i32_1 = arith.constant 0 : i32
    return %c0_i32, %c0_i32_0 : i32, i32
  }
  func.func @transform_3(%arg0: i32) -> (i32, i32) {
    %c0_i32 = arith.constant 0 : i32
    %c0_i32_0 = arith.constant 0 : i32
    return %arg0, %c0_i32 : i32, i32
  }
}

module attributes {stable_mosaic.version = 11 : i64} {
  func.func @_conv_mm_kernel(%arg0: i32, %arg1: memref<128x144xf32, #tpu.memory_space<vmem>>, %arg2: memref<144x32xf32, #tpu.memory_space<vmem>>, %arg3: memref<1x32xf32, #tpu.memory_space<vmem>>, %arg4: memref<128x32xf32, #tpu.memory_space<vmem>>) attributes {dimension_semantics = [#tpu.dimension_semantics<parallel>], iteration_bounds = array<i64: 1>, scalar_prefetch = 0 : i64, scratch_operands = 0 : i64, tpu.core_type = #tpu.core_type<tc>, window_params = [{transform_indices = @transform_0, window_bounds = array<i64: 128, 144>}, {pipeline_mode = #tpu.pipeline_mode<synchronous>, transform_indices = @transform_1, window_bounds = array<i64: 144, 32>}, {pipeline_mode = #tpu.pipeline_mode<synchronous>, transform_indices = @transform_2, window_bounds = array<i64: 1, 32>}, {transform_indices = @transform_3, window_bounds = array<i64: 128, 32>}]} {
    %c0 = arith.constant 0 : index
    %c0_0 = arith.constant 0 : index
    %0 = vector.load %arg1[%c0, %c0_0] : memref<128x144xf32, #tpu.memory_space<vmem>>, vector<128x144xf32>
    %c0_1 = arith.constant 0 : index
    %c0_2 = arith.constant 0 : index
    %1 = vector.load %arg2[%c0_1, %c0_2] : memref<144x32xf32, #tpu.memory_space<vmem>>, vector<144x32xf32>
    %cst = arith.constant dense<0.000000e+00> : vector<128x32xf32>
    %2 = tpu.matmul %0, %1, %cst {dimension_numbers = #tpu.dot_dimension_numbers<[1], [0], [0], [1], [0, 0, 1, 1], [], []>} : vector<128x144xf32>, vector<144x32xf32>, vector<128x32xf32> -> vector<128x32xf32>
    %c0_3 = arith.constant 0 : index
    %c0_4 = arith.constant 0 : index
    %3 = vector.load %arg3[%c0_3, %c0_4] : memref<1x32xf32, #tpu.memory_space<vmem>>, vector<1x32xf32>
    %4 = vector.broadcast %3 : vector<1x32xf32> to vector<128x32xf32>
    %5 = arith.addf %2, %4 : vector<128x32xf32>
    %cst_5 = arith.constant 0.000000e+00 : f32
    %6 = vector.broadcast %cst_5 : f32 to vector<128x32xf32>
    %7 = arith.maximumf %5, %6 : vector<128x32xf32>
    %c0_6 = arith.constant 0 : index
    %c0_7 = arith.constant 0 : index
    %8 = vector.load %arg4[%c0_6, %c0_7] : memref<128x32xf32, #tpu.memory_space<vmem>>, vector<128x32xf32>
    tpu.vector_store %arg4[%c0_6, %c0_7], %7 {strides = array<i32>} : memref<128x32xf32, #tpu.memory_space<vmem>>, vector<128x32xf32>,
    return
  }
  func.func @transform_0(%arg0: i32) -> (i32, i32) {
    %c0_i32 = arith.constant 0 : i32
    %c0_i32_0 = arith.constant 0 : i32
    return %arg0, %c0_i32 : i32, i32
  }
  func.func @transform_1(%arg0: i32) -> (i32, i32) {
    %c0_i32 = arith.constant 0 : i32
    %c0_i32_0 = arith.constant 0 : i32
    %c0_i32_1 = arith.constant 0 : i32
    return %c0_i32, %c0_i32_0 : i32, i32
  }
  func.func @transform_2(%arg0: i32) -> (i32, i32) {
    %c0_i32 = arith.constant 0 : i32
    %c0_i32_0 = arith.constant 0 : i32
    %c0_i32_1 = arith.constant 0 : i32
    return %c0_i32, %c0_i32_0 : i32, i32
  }
  func.func @transform_3(%arg0: i32) -> (i32, i32) {
    %c0_i32 = arith.constant 0 : i32
    %c0_i32_0 = arith.constant 0 : i32
    return %arg0, %c0_i32 : i32, i32
  }
}

module attributes {stable_mosaic.version = 11 : i64} {
  func.func @_conv_mm_kernel(%arg0: i32, %arg1: memref<32x288xf32, #tpu.memory_space<vmem>>, %arg2: memref<288x64xf32, #tpu.memory_space<vmem>>, %arg3: memref<1x64xf32, #tpu.memory_space<vmem>>, %arg4: memref<32x64xf32, #tpu.memory_space<vmem>>) attributes {dimension_semantics = [#tpu.dimension_semantics<parallel>], iteration_bounds = array<i64: 1>, scalar_prefetch = 0 : i64, scratch_operands = 0 : i64, tpu.core_type = #tpu.core_type<tc>, window_params = [{transform_indices = @transform_0, window_bounds = array<i64: 32, 288>}, {pipeline_mode = #tpu.pipeline_mode<synchronous>, transform_indices = @transform_1, window_bounds = array<i64: 288, 64>}, {pipeline_mode = #tpu.pipeline_mode<synchronous>, transform_indices = @transform_2, window_bounds = array<i64: 1, 64>}, {transform_indices = @transform_3, window_bounds = array<i64: 32, 64>}]} {
    %c0 = arith.constant 0 : index
    %c0_0 = arith.constant 0 : index
    %0 = vector.load %arg1[%c0, %c0_0] : memref<32x288xf32, #tpu.memory_space<vmem>>, vector<32x288xf32>
    %c0_1 = arith.constant 0 : index
    %c0_2 = arith.constant 0 : index
    %1 = vector.load %arg2[%c0_1, %c0_2] : memref<288x64xf32, #tpu.memory_space<vmem>>, vector<288x64xf32>
    %cst = arith.constant dense<0.000000e+00> : vector<32x64xf32>
    %2 = tpu.matmul %0, %1, %cst {dimension_numbers = #tpu.dot_dimension_numbers<[1], [0], [0], [1], [0, 0, 1, 1], [], []>} : vector<32x288xf32>, vector<288x64xf32>, vector<32x64xf32> -> vector<32x64xf32>
    %c0_3 = arith.constant 0 : index
    %c0_4 = arith.constant 0 : index
    %3 = vector.load %arg3[%c0_3, %c0_4] : memref<1x64xf32, #tpu.memory_space<vmem>>, vector<1x64xf32>
    %4 = vector.broadcast %3 : vector<1x64xf32> to vector<32x64xf32>
    %5 = arith.addf %2, %4 : vector<32x64xf32>
    %cst_5 = arith.constant 0.000000e+00 : f32
    %6 = vector.broadcast %cst_5 : f32 to vector<32x64xf32>
    %7 = arith.maximumf %5, %6 : vector<32x64xf32>
    %c0_6 = arith.constant 0 : index
    %c0_7 = arith.constant 0 : index
    %8 = vector.load %arg4[%c0_6, %c0_7] : memref<32x64xf32, #tpu.memory_space<vmem>>, vector<32x64xf32>
    tpu.vector_store %arg4[%c0_6, %c0_7], %7 {strides = array<i32>} : memref<32x64xf32, #tpu.memory_space<vmem>>, vector<32x64xf32>,
    return
  }
  func.func @transform_0(%arg0: i32) -> (i32, i32) {
    %c0_i32 = arith.constant 0 : i32
    %c0_i32_0 = arith.constant 0 : i32
    return %arg0, %c0_i32 : i32, i32
  }
  func.func @transform_1(%arg0: i32) -> (i32, i32) {
    %c0_i32 = arith.constant 0 : i32
    %c0_i32_0 = arith.constant 0 : i32
    %c0_i32_1 = arith.constant 0 : i32
    return %c0_i32, %c0_i32_0 : i32, i32
  }
  func.func @transform_2(%arg0: i32) -> (i32, i32) {
    %c0_i32 = arith.constant 0 : i32
    %c0_i32_0 = arith.constant 0 : i32
    %c0_i32_1 = arith.constant 0 : i32
    return %c0_i32, %c0_i32_0 : i32, i32
  }
  func.func @transform_3(%arg0: i32) -> (i32, i32) {
    %c0_i32 = arith.constant 0 : i32
    %c0_i32_0 = arith.constant 0 : i32
    return %arg0, %c0_i32 : i32, i32
  }
}

module attributes {stable_mosaic.version = 11 : i64} {
  func.func @_fc_fused_kernel(%arg0: i32, %arg1: memref<2x1024xf32, #tpu.memory_space<vmem>>, %arg2: memref<2x2xf32, #tpu.memory_space<vmem>>, %arg3: memref<1024x384xf32, #tpu.memory_space<vmem>>, %arg4: memref<1x384xf32, #tpu.memory_space<vmem>>, %arg5: memref<2x384xf32, #tpu.memory_space<vmem>>, %arg6: memref<1x384xf32, #tpu.memory_space<vmem>>, %arg7: memref<384x384xf32, #tpu.memory_space<vmem>>, %arg8: memref<1x384xf32, #tpu.memory_space<vmem>>, %arg9: memref<384x384xf32, #tpu.memory_space<vmem>>, %arg10: memref<384x384xf32, #tpu.memory_space<vmem>>, %arg11: memref<1x384xf32, #tpu.memory_space<vmem>>, %arg12: memref<384x384xf32, #tpu.memory_space<vmem>>, %arg13: memref<1x384xf32, #tpu.memory_space<vmem>>, %arg14: memref<384x128xf32, #tpu.memory_space<vmem>>, %arg15: memref<1x128xf32, #tpu.memory_space<vmem>>, %arg16: memref<2x128xf32, #tpu.memory_space<vmem>>) attributes {dimension_semantics = [#tpu.dimension_semantics<arbitrary>], iteration_bounds = array<i64: 1>, scalar_prefetch = 0 : i64, scratch_operands = 0 : i64, tpu.core_type = #tpu.core_type<tc>, window_params = [{pipeline_mode = #tpu.pipeline_mode<synchronous>, transform_indices = @transform_0, window_bounds = array<i64: 2, 1024>}, {pipeline_mode = #tpu.pipeline_mode<synchronous>, transform_indices = @transform_1, window_bounds = array<i64: 2, 2>}, {pipeline_mode = #tpu.pipeline_mode<synchronous>, transform_indices = @transform_2, window_bounds = array<i64: 1024, 384>}, {pipeline_mode = #tpu.pipeline_mode<synchronous>, transform_indices = @transform_3, window_bounds = array<i64: 1, 384>}, {pipeline_mode = #tpu.pipeline_mode<synchronous>, transform_indices = @transform_4, window_bounds = array<i64: 2, 384>}, {pipeline_mode = #tpu.pipeline_mode<synchronous>, transform_indices = @transform_5, window_bounds = array<i64: 1, 384>}, {pipeline_mode = #tpu.pipeline_mode<synchronous>, transform_indices = @transform_6, window_bounds = array<i64: 384, 384>}, {pipeline_mode = #tpu.pipeline_mode<synchronous>, transform_indices = @transform_7, window_bounds = array<i64: 1, 384>}, {pipeline_mode = #tpu.pipeline_mode<synchronous>, transform_indices = @transform_8, window_bounds = array<i64: 384, 384>}, {pipeline_mode = #tpu.pipeline_mode<synchronous>, transform_indices = @transform_9, window_bounds = array<i64: 384, 384>}, {pipeline_mode = #tpu.pipeline_mode<synchronous>, transform_indices = @transform_10, window_bounds = array<i64: 1, 384>}, {pipeline_mode = #tpu.pipeline_mode<synchronous>, transform_indices = @transform_11, window_bounds = array<i64: 384, 384>}, {pipeline_mode = #tpu.pipeline_mode<synchronous>, transform_indices = @transform_12, window_bounds = array<i64: 1, 384>}, {pipeline_mode = #tpu.pipeline_mode<synchronous>, transform_indices = @transform_13, window_bounds = array<i64: 384, 128>}, {pipeline_mode = #tpu.pipeline_mode<synchronous>, transform_indices = @transform_14, window_bounds = array<i64: 1, 128>}, {pipeline_mode = #tpu.pipeline_mode<synchronous>, transform_indices = @transform_15, window_bounds = array<i64: 2, 128>}]} {
    %c0 = arith.constant 0 : index
    %c0_0 = arith.constant 0 : index
    %0 = vector.load %arg1[%c0, %c0_0] : memref<2x1024xf32, #tpu.memory_space<vmem>>, vector<2x1024xf32>
    %c0_1 = arith.constant 0 : index
    %c0_2 = arith.constant 0 : index
    %1 = vector.load %arg3[%c0_1, %c0_2] : memref<1024x384xf32, #tpu.memory_space<vmem>>, vector<1024x384xf32>
    %cst = arith.constant dense<0.000000e+00> : vector<2x384xf32>
    %2 = tpu.matmul %0, %1, %cst {dimension_numbers = #tpu.dot_dimension_numbers<[1], [0], [0], [1], [0, 0, 1, 1], [], []>} : vector<2x1024xf32>, vector<1024x384xf32>, vector<2x384xf32> -> vector<2x384xf32>
    %c0_3 = arith.constant 0 : index
    %c0_4 = arith.constant 0 : index
    %3 = vector.load %arg4[%c0_3, %c0_4] : memref<1x384xf32, #tpu.memory_space<vmem>>, vector<1x384xf32>
    %4 = vector.broadcast %3 : vector<1x384xf32> to vector<2x384xf32>
    %5 = arith.addf %2, %4 : vector<2x384xf32>
    %cst_5 = arith.constant 0.000000e+00 : f32
    %6 = vector.broadcast %cst_5 : f32 to vector<2x384xf32>
    %7 = arith.maximumf %5, %6 : vector<2x384xf32>
    %c0_6 = arith.constant 0 : index
    %c0_7 = arith.constant 0 : index
    %8 = vector.load %arg2[%c0_6, %c0_7] : memref<2x2xf32, #tpu.memory_space<vmem>>, vector<2x2xf32>
    %c0_8 = arith.constant 0 : index
    %c0_9 = arith.constant 0 : index
    %9 = vector.load %arg5[%c0_8, %c0_9] : memref<2x384xf32, #tpu.memory_space<vmem>>, vector<2x384xf32>
    %10 = vector.extract_strided_slice %8 {offsets = [0, 0], sizes = [2, 1], strides = [1, 1]} : vector<2x2xf32> to vector<2x1xf32>
    %11 = vector.extract_strided_slice %9 {offsets = [0, 0], sizes = [1, 384], strides = [1, 1]} : vector<2x384xf32> to vector<1x384xf32>
    %12 = vector.broadcast %10 : vector<2x1xf32> to vector<2x384xf32>
    %13 = vector.broadcast %11 : vector<1x384xf32> to vector<2x384xf32>
    %14 = arith.mulf %12, %13 : vector<2x384xf32>
    %15 = vector.extract_strided_slice %8 {offsets = [0, 1], sizes = [2, 1], strides = [1, 1]} : vector<2x2xf32> to vector<2x1xf32>
    %16 = vector.extract_strided_slice %9 {offsets = [1, 0], sizes = [1, 384], strides = [1, 1]} : vector<2x384xf32> to vector<1x384xf32>
    %17 = vector.broadcast %15 : vector<2x1xf32> to vector<2x384xf32>
    %18 = vector.broadcast %16 : vector<1x384xf32> to vector<2x384xf32>
    %19 = arith.mulf %17, %18 : vector<2x384xf32>
    %20 = arith.addf %14, %19 : vector<2x384xf32>
    %c0_10 = arith.constant 0 : index
    %c0_11 = arith.constant 0 : index
    %21 = vector.load %arg6[%c0_10, %c0_11] : memref<1x384xf32, #tpu.memory_space<vmem>>, vector<1x384xf32>
    %22 = vector.broadcast %21 : vector<1x384xf32> to vector<2x384xf32>
    %23 = arith.addf %20, %22 : vector<2x384xf32>
    %cst_12 = arith.constant 0.000000e+00 : f32
    %24 = vector.broadcast %cst_12 : f32 to vector<2x384xf32>
    %25 = arith.maximumf %23, %24 : vector<2x384xf32>
    %c0_13 = arith.constant 0 : index
    %c0_14 = arith.constant 0 : index
    %26 = vector.load %arg7[%c0_13, %c0_14] : memref<384x384xf32, #tpu.memory_space<vmem>>, vector<384x384xf32>
    %cst_15 = arith.constant dense<0.000000e+00> : vector<2x384xf32>
    %27 = tpu.matmul %25, %26, %cst_15 {dimension_numbers = #tpu.dot_dimension_numbers<[1], [0], [0], [1], [0, 0, 1, 1], [], []>} : vector<2x384xf32>, vector<384x384xf32>, vector<2x384xf32> -> vector<2x384xf32>
    %c0_16 = arith.constant 0 : index
    %c0_17 = arith.constant 0 : index
    %28 = vector.load %arg8[%c0_16, %c0_17] : memref<1x384xf32, #tpu.memory_space<vmem>>, vector<1x384xf32>
    %29 = vector.broadcast %28 : vector<1x384xf32> to vector<2x384xf32>
    %30 = arith.addf %27, %29 : vector<2x384xf32>
    %cst_18 = arith.constant 0.000000e+00 : f32
    %31 = vector.broadcast %cst_18 : f32 to vector<2x384xf32>
    %32 = arith.maximumf %30, %31 : vector<2x384xf32>
    %c0_19 = arith.constant 0 : index
    %c0_20 = arith.constant 0 : index
    %33 = vector.load %arg9[%c0_19, %c0_20] : memref<384x384xf32, #tpu.memory_space<vmem>>, vector<384x384xf32>
    %cst_21 = arith.constant dense<0.000000e+00> : vector<2x384xf32>
    %34 = tpu.matmul %7, %33, %cst_21 {dimension_numbers = #tpu.dot_dimension_numbers<[1], [0], [0], [1], [0, 0, 1, 1], [], []>} : vector<2x384xf32>, vector<384x384xf32>, vector<2x384xf32> -> vector<2x384xf32>
    %c0_22 = arith.constant 0 : index
    %c0_23 = arith.constant 0 : index
    %35 = vector.load %arg10[%c0_22, %c0_23] : memref<384x384xf32, #tpu.memory_space<vmem>>, vector<384x384xf32>
    %cst_24 = arith.constant dense<0.000000e+00> : vector<2x384xf32>
    %36 = tpu.matmul %32, %35, %cst_24 {dimension_numbers = #tpu.dot_dimension_numbers<[1], [0], [0], [1], [0, 0, 1, 1], [], []>} : vector<2x384xf32>, vector<384x384xf32>, vector<2x384xf32> -> vector<2x384xf32>
    %37 = arith.addf %34, %36 : vector<2x384xf32>
    %c0_25 = arith.constant 0 : index
    %c0_26 = arith.constant 0 : index
    %38 = vector.load %arg11[%c0_25, %c0_26] : memref<1x384xf32, #tpu.memory_space<vmem>>, vector<1x384xf32>
    %39 = vector.broadcast %38 : vector<1x384xf32> to vector<2x384xf32>
    %40 = arith.addf %37, %39 : vector<2x384xf32>
    %cst_27 = arith.constant 0.000000e+00 : f32
    %41 = vector.broadcast %cst_27 : f32 to vector<2x384xf32>
    %42 = arith.maximumf %40, %41 : vector<2x384xf32>
    %c0_28 = arith.constant 0 : index
    %c0_29 = arith.constant 0 : index
    %43 = vector.load %arg12[%c0_28, %c0_29] : memref<384x384xf32, #tpu.memory_space<vmem>>, vector<384x384xf32>
    %cst_30 = arith.constant dense<0.000000e+00> : vector<2x384xf32>
    %44 = tpu.matmul %42, %43, %cst_30 {dimension_numbers = #tpu.dot_dimension_numbers<[1], [0], [0], [1], [0, 0, 1, 1], [], []>} : vector<2x384xf32>, vector<384x384xf32>, vector<2x384xf32> -> vector<2x384xf32>
    %c0_31 = arith.constant 0 : index
    %c0_32 = arith.constant 0 : index
    %45 = vector.load %arg13[%c0_31, %c0_32] : memref<1x384xf32, #tpu.memory_space<vmem>>, vector<1x384xf32>
    %46 = vector.broadcast %45 : vector<1x384xf32> to vector<2x384xf32>
    %47 = arith.addf %44, %46 : vector<2x384xf32>
    %cst_33 = arith.constant 0.000000e+00 : f32
    %48 = vector.broadcast %cst_33 : f32 to vector<2x384xf32>
    %49 = arith.maximumf %47, %48 : vector<2x384xf32>
    %c0_34 = arith.constant 0 : index
    %c0_35 = arith.constant 0 : index
    %50 = vector.load %arg14[%c0_34, %c0_35] : memref<384x128xf32, #tpu.memory_space<vmem>>, vector<384x128xf32>
    %cst_36 = arith.constant dense<0.000000e+00> : vector<2x128xf32>
    %51 = tpu.matmul %49, %50, %cst_36 {dimension_numbers = #tpu.dot_dimension_numbers<[1], [0], [0], [1], [0, 0, 1, 1], [], []>} : vector<2x384xf32>, vector<384x128xf32>, vector<2x128xf32> -> vector<2x128xf32>
    %c0_37 = arith.constant 0 : index
    %c0_38 = arith.constant 0 : index
    %52 = vector.load %arg15[%c0_37, %c0_38] : memref<1x128xf32, #tpu.memory_space<vmem>>, vector<1x128xf32>
    %53 = vector.broadcast %52 : vector<1x128xf32> to vector<2x128xf32>
    %54 = arith.addf %51, %53 : vector<2x128xf32>
    %c0_39 = arith.constant 0 : index
    %c0_40 = arith.constant 0 : index
    %55 = vector.load %arg16[%c0_39, %c0_40] : memref<2x128xf32, #tpu.memory_space<vmem>>, vector<2x128xf32>
    tpu.vector_store %arg16[%c0_39, %c0_40], %54 {strides = array<i32>} : memref<2x128xf32, #tpu.memory_space<vmem>>, vector<2x128xf32>,
    return
  }
  func.func @transform_0(%arg0: i32) -> (i32, i32) {
    %c0_i32 = arith.constant 0 : i32
    %c0_i32_0 = arith.constant 0 : i32
    %c0_i32_1 = arith.constant 0 : i32
    return %c0_i32, %c0_i32_0 : i32, i32
  }
  func.func @transform_1(%arg0: i32) -> (i32, i32) {
    %c0_i32 = arith.constant 0 : i32
    %c0_i32_0 = arith.constant 0 : i32
    %c0_i32_1 = arith.constant 0 : i32
    return %c0_i32, %c0_i32_0 : i32, i32
  }
  func.func @transform_2(%arg0: i32) -> (i32, i32) {
    %c0_i32 = arith.constant 0 : i32
    %c0_i32_0 = arith.constant 0 : i32
    %c0_i32_1 = arith.constant 0 : i32
    return %c0_i32, %c0_i32_0 : i32, i32
  }
  func.func @transform_3(%arg0: i32) -> (i32, i32) {
    %c0_i32 = arith.constant 0 : i32
    %c0_i32_0 = arith.constant 0 : i32
    %c0_i32_1 = arith.constant 0 : i32
    return %c0_i32, %c0_i32_0 : i32, i32
  }
  func.func @transform_4(%arg0: i32) -> (i32, i32) {
    %c0_i32 = arith.constant 0 : i32
    %c0_i32_0 = arith.constant 0 : i32
    %c0_i32_1 = arith.constant 0 : i32
    return %c0_i32, %c0_i32_0 : i32, i32
  }
  func.func @transform_5(%arg0: i32) -> (i32, i32) {
    %c0_i32 = arith.constant 0 : i32
    %c0_i32_0 = arith.constant 0 : i32
    %c0_i32_1 = arith.constant 0 : i32
    return %c0_i32, %c0_i32_0 : i32, i32
  }
  func.func @transform_6(%arg0: i32) -> (i32, i32) {
    %c0_i32 = arith.constant 0 : i32
    %c0_i32_0 = arith.constant 0 : i32
    %c0_i32_1 = arith.constant 0 : i32
    return %c0_i32, %c0_i32_0 : i32, i32
  }
  func.func @transform_7(%arg0: i32) -> (i32, i32) {
    %c0_i32 = arith.constant 0 : i32
    %c0_i32_0 = arith.constant 0 : i32
    %c0_i32_1 = arith.constant 0 : i32
    return %c0_i32, %c0_i32_0 : i32, i32
  }
  func.func @transform_8(%arg0: i32) -> (i32, i32) {
    %c0_i32 = arith.constant 0 : i32
    %c0_i32_0 = arith.constant 0 : i32
    %c0_i32_1 = arith.constant 0 : i32
    return %c0_i32, %c0_i32_0 : i32, i32
  }
  func.func @transform_9(%arg0: i32) -> (i32, i32) {
    %c0_i32 = arith.constant 0 : i32
    %c0_i32_0 = arith.constant 0 : i32
    %c0_i32_1 = arith.constant 0 : i32
    return %c0_i32, %c0_i32_0 : i32, i32
  }
  func.func @transform_10(%arg0: i32) -> (i32, i32) {
    %c0_i32 = arith.constant 0 : i32
    %c0_i32_0 = arith.constant 0 : i32
    %c0_i32_1 = arith.constant 0 : i32
    return %c0_i32, %c0_i32_0 : i32, i32
  }
  func.func @transform_11(%arg0: i32) -> (i32, i32) {
    %c0_i32 = arith.constant 0 : i32
    %c0_i32_0 = arith.constant 0 : i32
    %c0_i32_1 = arith.constant 0 : i32
    return %c0_i32, %c0_i32_0 : i32, i32
  }
  func.func @transform_12(%arg0: i32) -> (i32, i32) {
    %c0_i32 = arith.constant 0 : i32
    %c0_i32_0 = arith.constant 0 : i32
    %c0_i32_1 = arith.constant 0 : i32
    return %c0_i32, %c0_i32_0 : i32, i32
  }
  func.func @transform_13(%arg0: i32) -> (i32, i32) {
    %c0_i32 = arith.constant 0 : i32
    %c0_i32_0 = arith.constant 0 : i32
    %c0_i32_1 = arith.constant 0 : i32
    return %c0_i32, %c0_i32_0 : i32, i32
  }
  func.func @transform_14(%arg0: i32) -> (i32, i32) {
    %c0_i32 = arith.constant 0 : i32
    %c0_i32_0 = arith.constant 0 : i32
    %c0_i32_1 = arith.constant 0 : i32
    return %c0_i32, %c0_i32_0 : i32, i32
  }
  func.func @transform_15(%arg0: i32) -> (i32, i32) {
    %c0_i32 = arith.constant 0 : i32
    %c0_i32_0 = arith.constant 0 : i32
    %c0_i32_1 = arith.constant 0 : i32
    return %c0_i32, %c0_i32_0 : i32, i32
  }
}

</mosaic_0001>

<llo_original>
// kernel: forward.6
$region0: #{forward.6}
  #allocation0 [shape = 'u32[]', space=smem, size = 0x4, offset = 0x4, fixed_abs, tag = 'smem constant byte address 0x4 - core index']
  #allocation1 [shape = 'u32[144,128]{1,0:T(1,128)}', space=vmem, size = 0x12000, scoped, tag = 'internal scratch']
  %s0 = inlined_call_operand.vmem [shape: f32[512,72], index: 0, kind: input, shape index: {}]
  %s1 = inlined_call_operand.vmem [shape: f32[72,16], index: 1, kind: input, shape index: {}]
  %s2 = inlined_call_operand.vmem [shape: f32[1,16], index: 2, kind: input, shape index: {}]
  %s3 = inlined_call_operand.vmem [shape: f32[512,16], index: 3, kind: output, shape index: {}]
  %s4 = sld [smem:[#allocation0]]
  $region22: #{forward.6} parent=0
    _
  %s6 = ssub.s32 1, %s4
  %s7 = scalar_select 0, %s6, %s4
  // Predicated region
  $region2: #{forward.6} parent=0 // pred_check
    _
  $region3: #{forward.6} parent=0 // pred_check_branch
    %9 = sbr.rel (0) target = $region5
  $region4: #{forward.6} parent=0 // pred_region
    _
  $region5: #{forward.6} parent=0 // pred_fallthru
    _
  // Predicated region
  $region6: #{forward.6} parent=0 // pred_check
    _
  $region7: #{forward.6} parent=0 // pred_check_branch
    %11 = sbr.rel (0) target = $region9
  $region8: #{forward.6} parent=0 // pred_region
    _
  $region9: #{forward.6} parent=0 // pred_fallthru
    _
  // Predicated region
  $region10: #{forward.6} parent=0 // pred_check
    _
  $region11: #{forward.6} parent=0 // pred_check_branch
    %13 = sbr.rel (0) target = $region13
  $region12: #{forward.6} parent=0 // pred_region
    _
  $region13: #{forward.6} parent=0 // pred_fallthru
    _
  %v14 = vld [vmem:[%s0] sm:$0xff]
  %v15 = vld [vmem:[%s0 + $0x8] sm:$0xff]
  %v16 = vld [vmem:[%s0 + $0x10] sm:$0xff]
  %v17 = vld [vmem:[%s0 + $0x18] sm:$0xff]
  %v18 = vld [vmem:[%s0 + $0x20] sm:$0xff]
  %v19 = vld [vmem:[%s0 + $0x28] sm:$0xff]
  %v20 = vld [vmem:[%s0 + $0x30] sm:$0xff]
  %v21 = vld [vmem:[%s0 + $0x38] sm:$0xff]
  %v22 = vld [vmem:[%s0 + $0x40] sm:$0xff]
  %v23 = vld [vmem:[%s0 + $0x48] sm:$0xff]
  %v24 = vld [vmem:[%s0 + $0x50] sm:$0xff]
  %v25 = vld [vmem:[%s0 + $0x58] sm:$0xff]
  %v26 = vld [vmem:[%s0 + $0x60] sm:$0xff]
  %v27 = vld [vmem:[%s0 + $0x68] sm:$0xff]
  %v28 = vld [vmem:[%s0 + $0x70] sm:$0xff]
  %v29 = vld [vmem:[%s0 + $0x78] sm:$0xff]
  %v30 = vld [vmem:[%s0 + $0x80] sm:$0xff]
  %v31 = vld [vmem:[%s0 + $0x88] sm:$0xff]
  %v32 = vld [vmem:[%s0 + $0x90] sm:$0xff]
  %v33 = vld [vmem:[%s0 + $0x98] sm:$0xff]
  %v34 = vld [vmem:[%s0 + $0xa0] sm:$0xff]
  %v35 = vld [vmem:[%s0 + $0xa8] sm:$0xff]
  %v36 = vld [vmem:[%s0 + $0xb0] sm:$0xff]
  %v37 = vld [vmem:[%s0 + $0xb8] sm:$0xff]
  %v38 = vld [vmem:[%s0 + $0xc0] sm:$0xff]
  %v39 = vld [vmem:[%s0 + $0xc8] sm:$0xff]
  %v40 = vld [vmem:[%s0 + $0xd0] sm:$0xff]
  %v41 = vld [vmem:[%s0 + $0xd8] sm:$0xff]
  %v42 = vld [vmem:[%s0 + $0xe0] sm:$0xff]
  %v43 = vld [vmem:[%s0 + $0xe8] sm:$0xff]
  %v44 = vld [vmem:[%s0 + $0xf0] sm:$0xff]
  %v45 = vld [vmem:[%s0 + $0xf8] sm:$0xff]
  %v46 = vld [vmem:[%s0 + $0x100] sm:$0xff]
  %v47 = vld [vmem:[%s0 + $0x108] sm:$0xff]
  %v48 = vld [vmem:[%s0 + $0x110] sm:$0xff]
  %v49 = vld [vmem:[%s0 + $0x118] sm:$0xff]
  %v50 = vld [vmem:[%s0 + $0x120] sm:$0xff]
  %v51 = vld [vmem:[%s0 + $0x128] sm:$0xff]
  %v52 = vld [vmem:[%s0 + $0x130] sm:$0xff]
  %v53 = vld [vmem:[%s0 + $0x138] sm:$0xff]
  %v54 = vld [vmem:[%s0 + $0x140] sm:$0xff]
  %v55 = vld [vmem:[%s0 + $0x148] sm:$0xff]
  %v56 = vld [vmem:[%s0 + $0x150] sm:$0xff]
  %v57 = vld [vmem:[%s0 + $0x158] sm:$0xff]
  %v58 = vld [vmem:[%s0 + $0x160] sm:$0xff]
  %v59 = vld [vmem:[%s0 + $0x168] sm:$0xff]
  %v60 = vld [vmem:[%s0 + $0x170] sm:$0xff]
  %v61 = vld [vmem:[%s0 + $0x178] sm:$0xff]
  %v62 = vld [vmem:[%s0 + $0x180] sm:$0xff]
  %v63 = vld [vmem:[%s0 + $0x188] sm:$0xff]
  %v64 = vld [vmem:[%s0 + $0x190] sm:$0xff]
  %v65 = vld [vmem:[%s0 + $0x198] sm:$0xff]
  %v66 = vld [vmem:[%s0 + $0x1a0] sm:$0xff]
  %v67 = vld [vmem:[%s0 + $0x1a8] sm:$0xff]
  %v68 = vld [vmem:[%s0 + $0x1b0] sm:$0xff]
  %v69 = vld [vmem:[%s0 + $0x1b8] sm:$0xff]
  %v70 = vld [vmem:[%s0 + $0x1c0] sm:$0xff]
  %v71 = vld [vmem:[%s0 + $0x1c8] sm:$0xff]
  %v72 = vld [vmem:[%s0 + $0x1d0] sm:$0xff]
  %v73 = vld [vmem:[%s0 + $0x1d8] sm:$0xff]
  %v74 = vld [vmem:[%s0 + $0x1e0] sm:$0xff]
  %v75 = vld [vmem:[%s0 + $0x1e8] sm:$0xff]
  %v76 = vld [vmem:[%s0 + $0x1f0] sm:$0xff]
  %v77 = vld [vmem:[%s0 + $0x1f8] sm:$0xff]
  %v78 = vld [vmem:[%s1] sm:$0xff]
  %v79 = vld [vmem:[%s1 + $0x8] sm:$0xff]
  %v80 = vld [vmem:[%s1 + $0x10] sm:$0xff]
  %v81 = vld [vmem:[%s1 + $0x18] sm:$0xff]
  %v82 = vld [vmem:[%s1 + $0x20] sm:$0xff]
  %v83 = vld [vmem:[%s1 + $0x28] sm:$0xff]
  %v84 = vld [vmem:[%s1 + $0x30] sm:$0xff]
  %v85 = vld [vmem:[%s1 + $0x38] sm:$0xff]
  %v86 = vld [vmem:[%s1 + $0x40] sm:$0xff]
  %v87 = vld [vmem:[%s2] sm:$0x1]
  %v89 = vlaneseq
  %v90 = vshrl.u32 %v89, 7
  %v91 = vsub.s32 0, %v90
  %v92 = vrot.slane %v87, %v91
  %vm94 = vcmask 588800
  %v96 = vsel %vm94, %v14, 0
  %v99 = vsel %vm94, %v15, 0
  %v102 = vsel %vm94, %v16, 0
  %v105 = vsel %vm94, %v17, 0
  %v108 = vsel %vm94, %v18, 0
  %v111 = vsel %vm94, %v19, 0
  %v114 = vsel %vm94, %v20, 0
  %v117 = vsel %vm94, %v21, 0
  %v120 = vsel %vm94, %v22, 0
  %v123 = vsel %vm94, %v23, 0
  %v126 = vsel %vm94, %v24, 0
  %v129 = vsel %vm94, %v25, 0
  %v132 = vsel %vm94, %v26, 0
  %v135 = vsel %vm94, %v27, 0
  %v138 = vsel %vm94, %v28, 0
  %v141 = vsel %vm94, %v29, 0
  %v144 = vsel %vm94, %v30, 0
  %v147 = vsel %vm94, %v31, 0
  %v150 = vsel %vm94, %v32, 0
  %v153 = vsel %vm94, %v33, 0
  %v156 = vsel %vm94, %v34, 0
  %v159 = vsel %vm94, %v35, 0
  %v162 = vsel %vm94, %v36, 0
  %v165 = vsel %vm94, %v37, 0
  %v168 = vsel %vm94, %v38, 0
  %v171 = vsel %vm94, %v39, 0
  %v174 = vsel %vm94, %v40, 0
  %v177 = vsel %vm94, %v41, 0
  %v180 = vsel %vm94, %v42, 0
  %v183 = vsel %vm94, %v43, 0
  %v186 = vsel %vm94, %v44, 0
  %v189 = vsel %vm94, %v45, 0
  %v192 = vsel %vm94, %v46, 0
  %v195 = vsel %vm94, %v47, 0
  %v198 = vsel %vm94, %v48, 0
  %v201 = vsel %vm94, %v49, 0
  %v204 = vsel %vm94, %v50, 0
  %v207 = vsel %vm94, %v51, 0
  %v210 = vsel %vm94, %v52, 0
  %v213 = vsel %vm94, %v53, 0
  %v216 = vsel %vm94, %v54, 0
  %v219 = vsel %vm94, %v55, 0
  %v222 = vsel %vm94, %v56, 0
  %v225 = vsel %vm94, %v57, 0
  %v228 = vsel %vm94, %v58, 0
  %v231 = vsel %vm94, %v59, 0
  %v234 = vsel %vm94, %v60, 0
  %v237 = vsel %vm94, %v61, 0
  %v240 = vsel %vm94, %v62, 0
  %v243 = vsel %vm94, %v63, 0
  %v246 = vsel %vm94, %v64, 0
  %v249 = vsel %vm94, %v65, 0
  %v252 = vsel %vm94, %v66, 0
  %v255 = vsel %vm94, %v67, 0
  %v258 = vsel %vm94, %v68, 0
  %v261 = vsel %vm94, %v69, 0
  %v264 = vsel %vm94, %v70, 0
  %v267 = vsel %vm94, %v71, 0
  %v270 = vsel %vm94, %v72, 0
  %v273 = vsel %vm94, %v73, 0
  %v276 = vsel %vm94, %v74, 0
  %v279 = vsel %vm94, %v75, 0
  %v282 = vsel %vm94, %v76, 0
  %v285 = vsel %vm94, %v77, 0
  %287 = vmatprep.subr.mxu0 0.0
  %288 = vmatpush1.msra.mxu0 %v78
  %289 = vmatprep.subr.mxu0 0.0
  %290 = vmatpush1.msra.mxu0 %v79
  %291 = vmatprep.subr.mxu0 0.0
  %292 = vmatpush1.msra.mxu0 %v80
  %293 = vmatprep.subr.mxu0 0.0
  %294 = vmatpush1.msra.mxu0 %v81
  %295 = vmatprep.subr.mxu0 0.0
  %296 = vmatpush1.msra.mxu0 %v82
  %297 = vmatprep.subr.mxu0 0.0
  %298 = vmatpush1.msra.mxu0 %v83
  %299 = vmatprep.subr.mxu0 0.0
  %300 = vmatpush1.msra.mxu0 %v84
  %301 = vmatprep.subr.mxu0 0.0
  %302 = vmatpush1.msra.mxu0 %v85
  %303 = vmatprep.subr.mxu0 0.0
  %304 = vmatpush1.msra.mxu0 %v86
  %305 = vmatprep.subr.mxu0 0.0
  %306 = vmatpush1.msra.mxu0 0.0
  %307 = vmatprep.subr.mxu0 0.0
  %308 = vmatpush1.msra.mxu0 0.0
  %309 = vmatprep.subr.mxu0 0.0
  %310 = vmatpush1.msra.mxu0 0.0
  %311 = vmatprep.subr.mxu0 0.0
  %312 = vmatpush1.msra.mxu0 0.0
  %313 = vmatprep.subr.mxu0 0.0
  %314 = vmatpush1.msra.mxu0 0.0
  %315 = vmatprep.subr.mxu0 0.0
  %316 = vmatpush1.msra.mxu0 0.0
  %317 = vmatprep.subr.mxu0 0.0
  %318 = vmatpush1.msra.mxu0 0.0
  %319 = vmatprep.subr.mxu0 0.0
  %320 = vmatpush1.msra.mxu0 0.0
  %321 = vmatprep.subr.mxu0 0.0
  %322 = vmatpush1.msra.mxu0 0.0
  %323 = vmatprep.subr.mxu0 0.0
  %324 = vmatpush1.msra.mxu0 0.0
  %325 = vmatprep.subr.mxu0 0.0
  %326 = vmatpush1.msra.mxu0 0.0
  %327 = vmatprep.subr.mxu0 0.0
  %328 = vmatpush1.msra.mxu0 0.0
  %329 = vmatprep.subr.mxu0 0.0
  %330 = vmatpush1.msra.mxu0 0.0
  %331 = vmatprep.subr.mxu0 0.0
  %332 = vmatpush1.msra.mxu0 0.0
  %333 = vmatprep.subr.mxu0 0.0
  %334 = vmatpush1.msra.mxu0 0.0
  %335 = vmatprep.subr.mxu0 0.0
  %336 = vmatpush1.msra.mxu0 0.0
  %337 = vmatprep.subr.mxu0 0.0
  %338 = vmatpush1.msra.mxu0 0.0
  %339 = vmatprep.subr.mxu0 0.0
  %340 = vmatpush1.msra.mxu0 0.0
  %341 = vmatprep.subr.mxu0 0.0
  %342 = vmatpush1.msra.mxu0 0.0
  %343 = vmatprep.subr.mxu0 0.0
  %344 = vmatpush1.msra.mxu0 0.0
  %345 = vmatprep.subr.mxu0 0.0
  %346 = vmatpush1.msra.mxu0 0.0
  %347 = vmatprep.subr.mxu0 0.0
  %348 = vmatpush1.msra.mxu0 0.0
  %349 = vmatprep.subr.mxu0 0.0
  %350 = vmatpush1.msra.mxu0 0.0
  %351 = vmatprep.mubr.f32.mxu0 0.0
  %352 = vmatmul.mubr.f32.gmra.mrb[0].mxu0 %v96
  %v353 = vpop.f32.mrb[0].mxu0
  %v354 = vadd.f32 %v92, %v353
  %v355 = vpop.f32.mrb[0].mxu0
  %356 = vmatprep.mubr.f32.mxu0 0.0
  %357 = vmatmul.mubr.f32.gmra.mrb[0].mxu0 %v99
  %v358 = vpop.f32.mrb[0].mxu0
  %v359 = vadd.f32 %v92, %v358
  %v360 = vpop.f32.mrb[0].mxu0
  %361 = vmatprep.mubr.f32.mxu0 0.0
  %362 = vmatmul.mubr.f32.gmra.mrb[0].mxu0 %v102
  %v363 = vpop.f32.mrb[0].mxu0
  %v364 = vadd.f32 %v92, %v363
  %v365 = vpop.f32.mrb[0].mxu0
  %366 = vmatprep.mubr.f32.mxu0 0.0
  %367 = vmatmul.mubr.f32.gmra.mrb[0].mxu0 %v105
  %v368 = vpop.f32.mrb[0].mxu0
  %v369 = vadd.f32 %v92, %v368
  %v370 = vpop.f32.mrb[0].mxu0
  %371 = vmatprep.mubr.f32.mxu0 0.0
  %372 = vmatmul.mubr.f32.gmra.mrb[0].mxu0 %v108
  %v373 = vpop.f32.mrb[0].mxu0
  %v374 = vadd.f32 %v92, %v373
  %v375 = vpop.f32.mrb[0].mxu0
  %376 = vmatprep.mubr.f32.mxu0 0.0
  %377 = vmatmul.mubr.f32.gmra.mrb[0].mxu0 %v111
  %v378 = vpop.f32.mrb[0].mxu0
  %v379 = vadd.f32 %v92, %v378
  %v380 = vpop.f32.mrb[0].mxu0
  %381 = vmatprep.mubr.f32.mxu0 0.0
  %382 = vmatmul.mubr.f32.gmra.mrb[0].mxu0 %v114
  %v383 = vpop.f32.mrb[0].mxu0
  %v384 = vadd.f32 %v92, %v383
  %v385 = vpop.f32.mrb[0].mxu0
  %386 = vmatprep.mubr.f32.mxu0 0.0
  %387 = vmatmul.mubr.f32.gmra.mrb[0].mxu0 %v117
  %v388 = vpop.f32.mrb[0].mxu0
  %v389 = vadd.f32 %v92, %v388
  %v390 = vpop.f32.mrb[0].mxu0
  %391 = vmatprep.mubr.f32.mxu0 0.0
  %392 = vmatmul.mubr.f32.gmra.mrb[0].mxu0 %v120
  %v393 = vpop.f32.mrb[0].mxu0
  %v394 = vadd.f32 %v92, %v393
  %v395 = vpop.f32.mrb[0].mxu0
  %396 = vmatprep.mubr.f32.mxu0 0.0
  %397 = vmatmul.mubr.f32.gmra.mrb[0].mxu0 %v123
  %v398 = vpop.f32.mrb[0].mxu0
  %v399 = vadd.f32 %v92, %v398
  %v400 = vpop.f32.mrb[0].mxu0
  %401 = vmatprep.mubr.f32.mxu0 0.0
  %402 = vmatmul.mubr.f32.gmra.mrb[0].mxu0 %v126
  %v403 = vpop.f32.mrb[0].mxu0
  %v404 = vadd.f32 %v92, %v403
  %v405 = vpop.f32.mrb[0].mxu0
  %406 = vmatprep.mubr.f32.mxu0 0.0
  %407 = vmatmul.mubr.f32.gmra.mrb[0].mxu0 %v129
  %v408 = vpop.f32.mrb[0].mxu0
  %v409 = vadd.f32 %v92, %v408
  %v410 = vpop.f32.mrb[0].mxu0
  %411 = vmatprep.mubr.f32.mxu0 0.0
  %412 = vmatmul.mubr.f32.gmra.mrb[0].mxu0 %v132
  %v413 = vpop.f32.mrb[0].mxu0
  %v414 = vadd.f32 %v92, %v413
  %v415 = vpop.f32.mrb[0].mxu0
  %416 = vmatprep.mubr.f32.mxu0 0.0
  %417 = vmatmul.mubr.f32.gmra.mrb[0].mxu0 %v135
  %v418 = vpop.f32.mrb[0].mxu0
  %v419 = vadd.f32 %v92, %v418
  %v420 = vpop.f32.mrb[0].mxu0
  %421 = vmatprep.mubr.f32.mxu0 0.0
  %422 = vmatmul.mubr.f32.gmra.mrb[0].mxu0 %v138
  %v423 = vpop.f32.mrb[0].mxu0
  %v424 = vadd.f32 %v92, %v423
  %v425 = vpop.f32.mrb[0].mxu0
  %426 = vmatprep.mubr.f32.mxu0 0.0
  %427 = vmatmul.mubr.f32.gmra.mrb[0].mxu0 %v141
  %v428 = vpop.f32.mrb[0].mxu0
  %v429 = vadd.f32 %v92, %v428
  %v430 = vpop.f32.mrb[0].mxu0
  %431 = vmatprep.mubr.f32.mxu0 0.0
  %432 = vmatmul.mubr.f32.gmra.mrb[0].mxu0 %v144
  %v433 = vpop.f32.mrb[0].mxu0
  %v434 = vadd.f32 %v92, %v433
  %v435 = vpop.f32.mrb[0].mxu0
  %436 = vmatprep.mubr.f32.mxu0 0.0
  %437 = vmatmul.mubr.f32.gmra.mrb[0].mxu0 %v147
  %v438 = vpop.f32.mrb[0].mxu0
  %v439 = vadd.f32 %v92, %v438
  %v440 = vpop.f32.mrb[0].mxu0
  %441 = vmatprep.mubr.f32.mxu0 0.0
  %442 = vmatmul.mubr.f32.gmra.mrb[0].mxu0 %v150
  %v443 = vpop.f32.mrb[0].mxu0
  %v444 = vadd.f32 %v92, %v443
  %v445 = vpop.f32.mrb[0].mxu0
  %446 = vmatprep.mubr.f32.mxu0 0.0
  %447 = vmatmul.mubr.f32.gmra.mrb[0].mxu0 %v153
  %v448 = vpop.f32.mrb[0].mxu0
  %v449 = vadd.f32 %v92, %v448
  %v450 = vpop.f32.mrb[0].mxu0
  %451 = vmatprep.mubr.f32.mxu0 0.0
  %452 = vmatmul.mubr.f32.gmra.mrb[0].mxu0 %v156
  %v453 = vpop.f32.mrb[0].mxu0
  %v454 = vadd.f32 %v92, %v453
  %v455 = vpop.f32.mrb[0].mxu0
  %456 = vmatprep.mubr.f32.mxu0 0.0
  %457 = vmatmul.mubr.f32.gmra.mrb[0].mxu0 %v159
  %v458 = vpop.f32.mrb[0].mxu0
  %v459 = vadd.f32 %v92, %v458
  %v460 = vpop.f32.mrb[0].mxu0
  %461 = vmatprep.mubr.f32.mxu0 0.0
  %462 = vmatmul.mubr.f32.gmra.mrb[0].mxu0 %v162
  %v463 = vpop.f32.mrb[0].mxu0
  %v464 = vadd.f32 %v92, %v463
  %v465 = vpop.f32.mrb[0].mxu0
  %466 = vmatprep.mubr.f32.mxu0 0.0
  %467 = vmatmul.mubr.f32.gmra.mrb[0].mxu0 %v165
  %v468 = vpop.f32.mrb[0].mxu0
  %v469 = vadd.f32 %v92, %v468
  %v470 = vpop.f32.mrb[0].mxu0
  %471 = vmatprep.mubr.f32.mxu0 0.0
  %472 = vmatmul.mubr.f32.gmra.mrb[0].mxu0 %v168
  %v473 = vpop.f32.mrb[0].mxu0
  %v474 = vadd.f32 %v92, %v473
  %v475 = vpop.f32.mrb[0].mxu0
  %476 = vmatprep.mubr.f32.mxu0 0.0
  %477 = vmatmul.mubr.f32.gmra.mrb[0].mxu0 %v171
  %v478 = vpop.f32.mrb[0].mxu0
  %v479 = vadd.f32 %v92, %v478
  %v480 = vpop.f32.mrb[0].mxu0
  %481 = vmatprep.mubr.f32.mxu0 0.0
  %482 = vmatmul.mubr.f32.gmra.mrb[0].mxu0 %v174
  %v483 = vpop.f32.mrb[0].mxu0
  %v484 = vadd.f32 %v92, %v483
  %v485 = vpop.f32.mrb[0].mxu0
  %486 = vmatprep.mubr.f32.mxu0 0.0
  %487 = vmatmul.mubr.f32.gmra.mrb[0].mxu0 %v177
  %v488 = vpop.f32.mrb[0].mxu0
  %v489 = vadd.f32 %v92, %v488
  %v490 = vpop.f32.mrb[0].mxu0
  %491 = vmatprep.mubr.f32.mxu0 0.0
  %492 = vmatmul.mubr.f32.gmra.mrb[0].mxu0 %v180
  %v493 = vpop.f32.mrb[0].mxu0
  %v494 = vadd.f32 %v92, %v493
  %v495 = vpop.f32.mrb[0].mxu0
  %496 = vmatprep.mubr.f32.mxu0 0.0
  %497 = vmatmul.mubr.f32.gmra.mrb[0].mxu0 %v183
  %v498 = vpop.f32.mrb[0].mxu0
  %v499 = vadd.f32 %v92, %v498
  %v500 = vpop.f32.mrb[0].mxu0
  %501 = vmatprep.mubr.f32.mxu0 0.0
  %502 = vmatmul.mubr.f32.gmra.mrb[0].mxu0 %v186
  %v503 = vpop.f32.mrb[0].mxu0
  %v504 = vadd.f32 %v92, %v503
  %v505 = vpop.f32.mrb[0].mxu0
  %506 = vmatprep.mubr.f32.mxu0 0.0
  %507 = vmatmul.mubr.f32.gmra.mrb[0].mxu0 %v189
  %v508 = vpop.f32.mrb[0].mxu0
  %v509 = vadd.f32 %v92, %v508
  %v510 = vpop.f32.mrb[0].mxu0
  %511 = vmatprep.mubr.f32.mxu0 0.0
  %512 = vmatmul.mubr.f32.gmra.mrb[0].mxu0 %v192
  %v513 = vpop.f32.mrb[0].mxu0
  %v514 = vadd.f32 %v92, %v513
  %v515 = vpop.f32.mrb[0].mxu0
  %516 = vmatprep.mubr.f32.mxu0 0.0
  %517 = vmatmul.mubr.f32.gmra.mrb[0].mxu0 %v195
  %v518 = vpop.f32.mrb[0].mxu0
  %v519 = vadd.f32 %v92, %v518
  %v520 = vpop.f32.mrb[0].mxu0
  %521 = vmatprep.mubr.f32.mxu0 0.0
  %522 = vmatmul.mubr.f32.gmra.mrb[0].mxu0 %v198
  %v523 = vpop.f32.mrb[0].mxu0
  %v524 = vadd.f32 %v92, %v523
  %v525 = vpop.f32.mrb[0].mxu0
  %526 = vmatprep.mubr.f32.mxu0 0.0
  %527 = vmatmul.mubr.f32.gmra.mrb[0].mxu0 %v201
  %v528 = vpop.f32.mrb[0].mxu0
  %v529 = vadd.f32 %v92, %v528
  %v530 = vpop.f32.mrb[0].mxu0
  %531 = vmatprep.mubr.f32.mxu0 0.0
  %532 = vmatmul.mubr.f32.gmra.mrb[0].mxu0 %v204
  %v533 = vpop.f32.mrb[0].mxu0
  %v534 = vadd.f32 %v92, %v533
  %v535 = vpop.f32.mrb[0].mxu0
  %536 = vmatprep.mubr.f32.mxu0 0.0
  %537 = vmatmul.mubr.f32.gmra.mrb[0].mxu0 %v207
  %v538 = vpop.f32.mrb[0].mxu0
  %v539 = vadd.f32 %v92, %v538
  %v540 = vpop.f32.mrb[0].mxu0
  %541 = vmatprep.mubr.f32.mxu0 0.0
  %542 = vmatmul.mubr.f32.gmra.mrb[0].mxu0 %v210
  %v543 = vpop.f32.mrb[0].mxu0
  %v544 = vadd.f32 %v92, %v543
  %v545 = vpop.f32.mrb[0].mxu0
  %546 = vmatprep.mubr.f32.mxu0 0.0
  %547 = vmatmul.mubr.f32.gmra.mrb[0].mxu0 %v213
  %v548 = vpop.f32.mrb[0].mxu0
  %v549 = vadd.f32 %v92, %v548
  %v550 = vpop.f32.mrb[0].mxu0
  %551 = vmatprep.mubr.f32.mxu0 0.0
  %552 = vmatmul.mubr.f32.gmra.mrb[0].mxu0 %v216
  %v553 = vpop.f32.mrb[0].mxu0
  %v554 = vadd.f32 %v92, %v553
  %v555 = vpop.f32.mrb[0].mxu0
  %556 = vmatprep.mubr.f32.mxu0 0.0
  %557 = vmatmul.mubr.f32.gmra.mrb[0].mxu0 %v219
  %v558 = vpop.f32.mrb[0].mxu0
  %v559 = vadd.f32 %v92, %v558
  %v560 = vpop.f32.mrb[0].mxu0
  %561 = vmatprep.mubr.f32.mxu0 0.0
  %562 = vmatmul.mubr.f32.gmra.mrb[0].mxu0 %v222
  %v563 = vpop.f32.mrb[0].mxu0
  %v564 = vadd.f32 %v92, %v563
  %v565 = vpop.f32.mrb[0].mxu0
  %566 = vmatprep.mubr.f32.mxu0 0.0
  %567 = vmatmul.mubr.f32.gmra.mrb[0].mxu0 %v225
  %v568 = vpop.f32.mrb[0].mxu0
  %v569 = vadd.f32 %v92, %v568
  %v570 = vpop.f32.mrb[0].mxu0
  %571 = vmatprep.mubr.f32.mxu0 0.0
  %572 = vmatmul.mubr.f32.gmra.mrb[0].mxu0 %v228
  %v573 = vpop.f32.mrb[0].mxu0
  %v574 = vadd.f32 %v92, %v573
  %v575 = vpop.f32.mrb[0].mxu0
  %576 = vmatprep.mubr.f32.mxu0 0.0
  %577 = vmatmul.mubr.f32.gmra.mrb[0].mxu0 %v231
  %v578 = vpop.f32.mrb[0].mxu0
  %v579 = vadd.f32 %v92, %v578
  %v580 = vpop.f32.mrb[0].mxu0
  %581 = vmatprep.mubr.f32.mxu0 0.0
  %582 = vmatmul.mubr.f32.gmra.mrb[0].mxu0 %v234
  %v583 = vpop.f32.mrb[0].mxu0
  %v584 = vadd.f32 %v92, %v583
  %v585 = vpop.f32.mrb[0].mxu0
  %586 = vmatprep.mubr.f32.mxu0 0.0
  %587 = vmatmul.mubr.f32.gmra.mrb[0].mxu0 %v237
  %v588 = vpop.f32.mrb[0].mxu0
  %v589 = vadd.f32 %v92, %v588
  %v590 = vpop.f32.mrb[0].mxu0
  %591 = vmatprep.mubr.f32.mxu0 0.0
  %592 = vmatmul.mubr.f32.gmra.mrb[0].mxu0 %v240
  %v593 = vpop.f32.mrb[0].mxu0
  %v594 = vadd.f32 %v92, %v593
  %v595 = vpop.f32.mrb[0].mxu0
  %596 = vmatprep.mubr.f32.mxu0 0.0
  %597 = vmatmul.mubr.f32.gmra.mrb[0].mxu0 %v243
  %v598 = vpop.f32.mrb[0].mxu0
  %v599 = vadd.f32 %v92, %v598
  %v600 = vpop.f32.mrb[0].mxu0
  %601 = vmatprep.mubr.f32.mxu0 0.0
  %602 = vmatmul.mubr.f32.gmra.mrb[0].mxu0 %v246
  %v603 = vpop.f32.mrb[0].mxu0
  %v604 = vadd.f32 %v92, %v603
  %v605 = vpop.f32.mrb[0].mxu0
  %606 = vmatprep.mubr.f32.mxu0 0.0
  %607 = vmatmul.mubr.f32.gmra.mrb[0].mxu0 %v249
  %v608 = vpop.f32.mrb[0].mxu0
  %v609 = vadd.f32 %v92, %v608
  %v610 = vpop.f32.mrb[0].mxu0
  %611 = vmatprep.mubr.f32.mxu0 0.0
  %612 = vmatmul.mubr.f32.gmra.mrb[0].mxu0 %v252
  %v613 = vpop.f32.mrb[0].mxu0
  %v614 = vadd.f32 %v92, %v613
  %v615 = vpop.f32.mrb[0].mxu0
  %616 = vmatprep.mubr.f32.mxu0 0.0
  %617 = vmatmul.mubr.f32.gmra.mrb[0].mxu0 %v255
  %v618 = vpop.f32.mrb[0].mxu0
  %v619 = vadd.f32 %v92, %v618
  %v620 = vpop.f32.mrb[0].mxu0
  %621 = vmatprep.mubr.f32.mxu0 0.0
  %622 = vmatmul.mubr.f32.gmra.mrb[0].mxu0 %v258
  %v623 = vpop.f32.mrb[0].mxu0
  %v624 = vadd.f32 %v92, %v623
  %v625 = vpop.f32.mrb[0].mxu0
  %626 = vmatprep.mubr.f32.mxu0 0.0
  %627 = vmatmul.mubr.f32.gmra.mrb[0].mxu0 %v261
  %v628 = vpop.f32.mrb[0].mxu0
  %v629 = vadd.f32 %v92, %v628
  %v630 = vpop.f32.mrb[0].mxu0
  %631 = vmatprep.mubr.f32.mxu0 0.0
  %632 = vmatmul.mubr.f32.gmra.mrb[0].mxu0 %v264
  %v633 = vpop.f32.mrb[0].mxu0
  %v634 = vadd.f32 %v92, %v633
  %v635 = vpop.f32.mrb[0].mxu0
  %636 = vmatprep.mubr.f32.mxu0 0.0
  %637 = vmatmul.mubr.f32.gmra.mrb[0].mxu0 %v267
  %v638 = vpop.f32.mrb[0].mxu0
  %v639 = vadd.f32 %v92, %v638
  %v640 = vpop.f32.mrb[0].mxu0
  %641 = vmatprep.mubr.f32.mxu0 0.0
  %642 = vmatmul.mubr.f32.gmra.mrb[0].mxu0 %v270
  %v643 = vpop.f32.mrb[0].mxu0
  %v644 = vadd.f32 %v92, %v643
  %v645 = vpop.f32.mrb[0].mxu0
  %646 = vmatprep.mubr.f32.mxu0 0.0
  %647 = vmatmul.mubr.f32.gmra.mrb[0].mxu0 %v273
  %v648 = vpop.f32.mrb[0].mxu0
  %v649 = vadd.f32 %v92, %v648
  %v650 = vpop.f32.mrb[0].mxu0
  %651 = vmatprep.mubr.f32.mxu0 0.0
  %652 = vmatmul.mubr.f32.gmra.mrb[0].mxu0 %v276
  %v653 = vpop.f32.mrb[0].mxu0
  %v654 = vadd.f32 %v92, %v653
  %v655 = vpop.f32.mrb[0].mxu0
  %656 = vmatprep.mubr.f32.mxu0 0.0
  %657 = vmatmul.mubr.f32.gmra.mrb[0].mxu0 %v279
  %v658 = vpop.f32.mrb[0].mxu0
  %v659 = vadd.f32 %v92, %v658
  %v660 = vpop.f32.mrb[0].mxu0
  %661 = vmatprep.mubr.f32.mxu0 0.0
  %662 = vmatmul.mubr.f32.gmra.mrb[0].mxu0 %v282
  %v663 = vpop.f32.mrb[0].mxu0
  %v664 = vadd.f32 %v92, %v663
  %v665 = vpop.f32.mrb[0].mxu0
  %666 = vmatprep.mubr.f32.mxu0 0.0
  %667 = vmatmul.mubr.f32.gmra.mrb[0].mxu0 %v285
  %v668 = vpop.f32.mrb[0].mxu0
  %v669 = vadd.f32 %v92, %v668
  %v670 = vpop.f32.mrb[0].mxu0
  %671 = vdwg.mxu0
  %v672 = vmax.f32 %v354, 0.0
  %v673 = vmax.f32 %v359, 0.0
  %v674 = vmax.f32 %v364, 0.0
  %v675 = vmax.f32 %v369, 0.0
  %v676 = vmax.f32 %v374, 0.0
  %v677 = vmax.f32 %v379, 0.0
  %v678 = vmax.f32 %v384, 0.0
  %v679 = vmax.f32 %v389, 0.0
  %v680 = vmax.f32 %v394, 0.0
  %v681 = vmax.f32 %v399, 0.0
  %v682 = vmax.f32 %v404, 0.0
  %v683 = vmax.f32 %v409, 0.0
  %v684 = vmax.f32 %v414, 0.0
  %v685 = vmax.f32 %v419, 0.0
  %v686 = vmax.f32 %v424, 0.0
  %v687 = vmax.f32 %v429, 0.0
  %v688 = vmax.f32 %v434, 0.0
  %v689 = vmax.f32 %v439, 0.0
  %v690 = vmax.f32 %v444, 0.0
  %v691 = vmax.f32 %v449, 0.0
  %v692 = vmax.f32 %v454, 0.0
  %v693 = vmax.f32 %v459, 0.0
  %v694 = vmax.f32 %v464, 0.0
  %v695 = vmax.f32 %v469, 0.0
  %v696 = vmax.f32 %v474, 0.0
  %v697 = vmax.f32 %v479, 0.0
  %v698 = vmax.f32 %v484, 0.0
  %v699 = vmax.f32 %v489, 0.0
  %v700 = vmax.f32 %v494, 0.0
  %v701 = vmax.f32 %v499, 0.0
  %v702 = vmax.f32 %v504, 0.0
  %v703 = vmax.f32 %v509, 0.0
  %v704 = vmax.f32 %v514, 0.0
  %v705 = vmax.f32 %v519, 0.0
  %v706 = vmax.f32 %v524, 0.0
  %v707 = vmax.f32 %v529, 0.0
  %v708 = vmax.f32 %v534, 0.0
  %v709 = vmax.f32 %v539, 0.0
  %v710 = vmax.f32 %v544, 0.0
  %v711 = vmax.f32 %v549, 0.0
  %v712 = vmax.f32 %v554, 0.0
  %v713 = vmax.f32 %v559, 0.0
  %v714 = vmax.f32 %v564, 0.0
  %v715 = vmax.f32 %v569, 0.0
  %v716 = vmax.f32 %v574, 0.0
  %v717 = vmax.f32 %v579, 0.0
  %v718 = vmax.f32 %v584, 0.0
  %v719 = vmax.f32 %v589, 0.0
  %v720 = vmax.f32 %v594, 0.0
  %v721 = vmax.f32 %v599, 0.0
  %v722 = vmax.f32 %v604, 0.0
  %v723 = vmax.f32 %v609, 0.0
  %v724 = vmax.f32 %v614, 0.0
  %v725 = vmax.f32 %v619, 0.0
  %v726 = vmax.f32 %v624, 0.0
  %v727 = vmax.f32 %v629, 0.0
  %v728 = vmax.f32 %v634, 0.0
  %v729 = vmax.f32 %v639, 0.0
  %v730 = vmax.f32 %v644, 0.0
  %v731 = vmax.f32 %v649, 0.0
  %v732 = vmax.f32 %v654, 0.0
  %v733 = vmax.f32 %v659, 0.0
  %v734 = vmax.f32 %v664, 0.0
  %v735 = vmax.f32 %v669, 0.0
  %vm736 = vcmask 130048
  %737 = vst.msk [vmem:[%s3] sm:$0xff] %vm736, %v672
  %738 = vst.msk [vmem:[%s3 + $0x8] sm:$0xff] %vm736, %v673
  %739 = vst.msk [vmem:[%s3 + $0x10] sm:$0xff] %vm736, %v674
  %740 = vst.msk [vmem:[%s3 + $0x18] sm:$0xff] %vm736, %v675
  %741 = vst.msk [vmem:[%s3 + $0x20] sm:$0xff] %vm736, %v676
  %742 = vst.msk [vmem:[%s3 + $0x28] sm:$0xff] %vm736, %v677
  %743 = vst.msk [vmem:[%s3 + $0x30] sm:$0xff] %vm736, %v678
  %744 = vst.msk [vmem:[%s3 + $0x38] sm:$0xff] %vm736, %v679
  %745 = vst.msk [vmem:[%s3 + $0x40] sm:$0xff] %vm736, %v680
  %746 = vst.msk [vmem:[%s3 + $0x48] sm:$0xff] %vm736, %v681
  %747 = vst.msk [vmem:[%s3 + $0x50] sm:$0xff] %vm736, %v682
  %748 = vst.msk [vmem:[%s3 + $0x58] sm:$0xff] %vm736, %v683
  %749 = vst.msk [vmem:[%s3 + $0x60] sm:$0xff] %vm736, %v684
  %750 = vst.msk [vmem:[%s3 + $0x68] sm:$0xff] %vm736, %v685
  %751 = vst.msk [vmem:[%s3 + $0x70] sm:$0xff] %vm736, %v686
  %752 = vst.msk [vmem:[%s3 + $0x78] sm:$0xff] %vm736, %v687
  %753 = vst.msk [vmem:[%s3 + $0x80] sm:$0xff] %vm736, %v688
  %754 = vst.msk [vmem:[%s3 + $0x88] sm:$0xff] %vm736, %v689
  %755 = vst.msk [vmem:[%s3 + $0x90] sm:$0xff] %vm736, %v690
  %756 = vst.msk [vmem:[%s3 + $0x98] sm:$0xff] %vm736, %v691
  %757 = vst.msk [vmem:[%s3 + $0xa0] sm:$0xff] %vm736, %v692
  %758 = vst.msk [vmem:[%s3 + $0xa8] sm:$0xff] %vm736, %v693
  %759 = vst.msk [vmem:[%s3 + $0xb0] sm:$0xff] %vm736, %v694
  %760 = vst.msk [vmem:[%s3 + $0xb8] sm:$0xff] %vm736, %v695
  %761 = vst.msk [vmem:[%s3 + $0xc0] sm:$0xff] %vm736, %v696
  %762 = vst.msk [vmem:[%s3 + $0xc8] sm:$0xff] %vm736, %v697
  %763 = vst.msk [vmem:[%s3 + $0xd0] sm:$0xff] %vm736, %v698
  %764 = vst.msk [vmem:[%s3 + $0xd8] sm:$0xff] %vm736, %v699
  %765 = vst.msk [vmem:[%s3 + $0xe0] sm:$0xff] %vm736, %v700
  %766 = vst.msk [vmem:[%s3 + $0xe8] sm:$0xff] %vm736, %v701
  %767 = vst.msk [vmem:[%s3 + $0xf0] sm:$0xff] %vm736, %v702
  %768 = vst.msk [vmem:[%s3 + $0xf8] sm:$0xff] %vm736, %v703
  %769 = vst.msk [vmem:[%s3 + $0x100] sm:$0xff] %vm736, %v704
  %770 = vst.msk [vmem:[%s3 + $0x108] sm:$0xff] %vm736, %v705
  %771 = vst.msk [vmem:[%s3 + $0x110] sm:$0xff] %vm736, %v706
  %772 = vst.msk [vmem:[%s3 + $0x118] sm:$0xff] %vm736, %v707
  %773 = vst.msk [vmem:[%s3 + $0x120] sm:$0xff] %vm736, %v708
  %774 = vst.msk [vmem:[%s3 + $0x128] sm:$0xff] %vm736, %v709
  %775 = vst.msk [vmem:[%s3 + $0x130] sm:$0xff] %vm736, %v710
  %776 = vst.msk [vmem:[%s3 + $0x138] sm:$0xff] %vm736, %v711
  %777 = vst.msk [vmem:[%s3 + $0x140] sm:$0xff] %vm736, %v712
  %778 = vst.msk [vmem:[%s3 + $0x148] sm:$0xff] %vm736, %v713
  %779 = vst.msk [vmem:[%s3 + $0x150] sm:$0xff] %vm736, %v714
  %780 = vst.msk [vmem:[%s3 + $0x158] sm:$0xff] %vm736, %v715
  %781 = vst.msk [vmem:[%s3 + $0x160] sm:$0xff] %vm736, %v716
  %782 = vst.msk [vmem:[%s3 + $0x168] sm:$0xff] %vm736, %v717
  %783 = vst.msk [vmem:[%s3 + $0x170] sm:$0xff] %vm736, %v718
  %784 = vst.msk [vmem:[%s3 + $0x178] sm:$0xff] %vm736, %v719
  %785 = vst.msk [vmem:[%s3 + $0x180] sm:$0xff] %vm736, %v720
  %786 = vst.msk [vmem:[%s3 + $0x188] sm:$0xff] %vm736, %v721
  %787 = vst.msk [vmem:[%s3 + $0x190] sm:$0xff] %vm736, %v722
  %788 = vst.msk [vmem:[%s3 + $0x198] sm:$0xff] %vm736, %v723
  %789 = vst.msk [vmem:[%s3 + $0x1a0] sm:$0xff] %vm736, %v724
  %790 = vst.msk [vmem:[%s3 + $0x1a8] sm:$0xff] %vm736, %v725
  %791 = vst.msk [vmem:[%s3 + $0x1b0] sm:$0xff] %vm736, %v726
  %792 = vst.msk [vmem:[%s3 + $0x1b8] sm:$0xff] %vm736, %v727
  %793 = vst.msk [vmem:[%s3 + $0x1c0] sm:$0xff] %vm736, %v728
  %794 = vst.msk [vmem:[%s3 + $0x1c8] sm:$0xff] %vm736, %v729
  %795 = vst.msk [vmem:[%s3 + $0x1d0] sm:$0xff] %vm736, %v730
  %796 = vst.msk [vmem:[%s3 + $0x1d8] sm:$0xff] %vm736, %v731
  %797 = vst.msk [vmem:[%s3 + $0x1e0] sm:$0xff] %vm736, %v732
  %798 = vst.msk [vmem:[%s3 + $0x1e8] sm:$0xff] %vm736, %v733
  %799 = vst.msk [vmem:[%s3 + $0x1f0] sm:$0xff] %vm736, %v734
  %800 = vst.msk [vmem:[%s3 + $0x1f8] sm:$0xff] %vm736, %v735
  // Predicated region
  $region14: #{forward.6} parent=0 // pred_check
    _
  $region15: #{forward.6} parent=0 // pred_check_branch
    %802 = sbr.rel (0) target = $region17
  $region16: #{forward.6} parent=0 // pred_region
    _
  $region17: #{forward.6} parent=0 // pred_fallthru
    _
  // Predicated region
  $region18: #{forward.6} parent=0 // pred_check
    _
  $region19: #{forward.6} parent=0 // pred_check_branch
    %804 = sbr.rel (0) target = $region21
  $region20: #{forward.6} parent=0 // pred_region
    _
  $region21: #{forward.6} parent=0 // pred_fallthru
    _

// kernel: forward.5
$region0: #{forward.5}
  #allocation0 [shape = 'u32[]', space=smem, size = 0x4, offset = 0x4, fixed_abs, tag = 'smem constant byte address 0x4 - core index']
  #allocation1 [shape = 'u32[144,128]{1,0:T(1,128)}', space=vmem, size = 0x12000, scoped, tag = 'internal scratch']
  %s0 = inlined_call_operand.vmem [shape: f32[2048,9], index: 0, kind: input, shape index: {}]
  %s1 = inlined_call_operand.vmem [shape: f32[9,8], index: 1, kind: input, shape index: {}]
  %s2 = inlined_call_operand.vmem [shape: f32[1,8], index: 2, kind: input, shape index: {}]
  %s3 = inlined_call_operand.vmem [shape: f32[2048,8], index: 3, kind: output, shape index: {}]
  %s4 = sld [smem:[#allocation0]]
  $region45: #{forward.5} parent=0
    _
  %s6 = ssub.s32 1, %s4
  %s7 = scalar_select 0, %s6, %s4
  loop: start=0, step=1, limit=4
  $region2: #{forward.5} parent=0 // loop_pre_header
    _
  $region3: #{forward.5} parent=0 // loop_header
    %s9 = sphi 0, %s13
    %p10 = scmp.ge.s32.totalorder %s9, 4
    %s19 = sphi 0, %s21
    %s22 = sphi 0, %s19
    %s23 = sphi 0, %s22
    %s39 = sphi 0, %s23
    %s43 = sphi 0, %s43
    %s45 = sphi 0, %s43
    %s46 = sphi 0, %s45
    %s60 = sphi 0, %s46
    %s64 = sphi 0, %s64
    %s66 = sphi 0, %s64
    %s67 = sphi 0, %s66
    %s81 = sphi 0, %s67
    %s87 = sphi 0, %s89
    %s90 = sphi 0, %s87
    %s91 = sphi 0, %s90
    %s107 = sphi 0, %s91
  $region4: #{forward.5} parent=0 // loop_header_branch
    %12 = sbr.rel (%p10) target = $region8
  $region5: #{forward.5} parent=0 // loop_body
    %s14 = ssub.s32 %s9, 1
    %s15 = ssub.s32 %s9, 2
    %s16 = sadd.s32 %s9, 1
    %s17 = ssub.s32 %s9, %s16
    %p18 = scmp.eq.s32.totalorder %s17, 0
    %s20 = sadd.s32 %s19, 1
    %s21 = scalar_select %p18, %s19, %s20
    %p24 = pneg %p18
    %p25 = scmp.eq.s32.totalorder %s9, 1
    %p26 = por %p24, %p25
    %p27 = scmp.ne.s32.totalorder %s19, %s22
    %p28 = scmp.eq.s32.totalorder %s9, 0
    %p29 = por %p27, %p28
    %p30 = scmp.ne.s32.totalorder %s19, %s22
    %p31 = scmp.eq.s32.totalorder %s14, 1
    %p32 = por %p30, %p31
    %p33 = scmp.ne.s32.totalorder %s22, %s23
    %p34 = scmp.eq.s32.totalorder %s14, 0
    %p35 = por %p33, %p34
    %p36 = scmp.ne.s32.totalorder %s22, %s23
    %p37 = scmp.eq.s32.totalorder %s15, 1
    %p38 = por %p36, %p37
    %p40 = scmp.ne.s32.totalorder %s23, %s39
    %p41 = scmp.eq.s32.totalorder %s15, 0
    %p42 = por %p40, %p41
    %s44 = sadd.s32 %s43, 1
    %p47 = scmp.eq.s32.totalorder %s9, 1
    %p48 = scmp.ne.s32.totalorder %s43, %s45
    %p49 = scmp.eq.s32.totalorder %s9, 0
    %p50 = por %p48, %p49
    %p51 = scmp.ne.s32.totalorder %s43, %s45
    %p52 = scmp.eq.s32.totalorder %s14, 1
    %p53 = por %p51, %p52
    %p54 = scmp.ne.s32.totalorder %s45, %s46
    %p55 = scmp.eq.s32.totalorder %s14, 0
    %p56 = por %p54, %p55
    %p57 = scmp.ne.s32.totalorder %s45, %s46
    %p58 = scmp.eq.s32.totalorder %s15, 1
    %p59 = por %p57, %p58
    %p61 = scmp.ne.s32.totalorder %s46, %s60
    %p62 = scmp.eq.s32.totalorder %s15, 0
    %p63 = por %p61, %p62
    %s65 = sadd.s32 %s64, 1
    %p68 = scmp.eq.s32.totalorder %s9, 1
    %p69 = scmp.ne.s32.totalorder %s64, %s66
    %p70 = scmp.eq.s32.totalorder %s9, 0
    %p71 = por %p69, %p70
    %p72 = scmp.ne.s32.totalorder %s64, %s66
    %p73 = scmp.eq.s32.totalorder %s14, 1
    %p74 = por %p72, %p73
    %p75 = scmp.ne.s32.totalorder %s66, %s67
    %p76 = scmp.eq.s32.totalorder %s14, 0
    %p77 = por %p75, %p76
    %p78 = scmp.ne.s32.totalorder %s66, %s67
    %p79 = scmp.eq.s32.totalorder %s15, 1
    %p80 = por %p78, %p79
    %p82 = scmp.ne.s32.totalorder %s67, %s81
    %p83 = scmp.eq.s32.totalorder %s15, 0
    %p84 = por %p82, %p83
    %s85 = ssub.s32 %s9, %s16
    %p86 = scmp.eq.s32.totalorder %s85, 0
    %s88 = sadd.s32 %s87, 1
    %s89 = scalar_select %p86, %s87, %s88
    %p92 = pneg %p86
    %p93 = scmp.eq.s32.totalorder %s9, 1
    %p94 = por %p92, %p93
    %p95 = scmp.ne.s32.totalorder %s87, %s90
    %p96 = scmp.eq.s32.totalorder %s9, 0
    %p97 = por %p95, %p96
    %p98 = scmp.ne.s32.totalorder %s87, %s90
    %p99 = scmp.eq.s32.totalorder %s14, 1
    %p100 = por %p98, %p99
    %p101 = scmp.ne.s32.totalorder %s90, %s91
    %p102 = scmp.eq.s32.totalorder %s14, 0
    %p103 = por %p101, %p102
    %p104 = scmp.ne.s32.totalorder %s90, %s91
    %p105 = scmp.eq.s32.totalorder %s15, 1
    %p106 = por %p104, %p105
    %p108 = scmp.ne.s32.totalorder %s91, %s107
    %p109 = scmp.eq.s32.totalorder %s15, 0
    %p110 = por %p108, %p109
    %p111 = scmp.le.s32.totalorder 1, %s9
    %p112 = scmp.lt.s32.totalorder %s9, 3
    %p113 = pnand %p111, %p112
    %p114 = pneg %p113
    // Predicated region
    $region9: #{forward.5} parent=5 // pred_check
      _
    $region10: #{forward.5} parent=5 // pred_check_branch
      %116 = sbr.rel (%p113) target = $region12
    $region11: #{forward.5} parent=5 // pred_region
      %s117 = ssub.s32 %s9, 1
      // Predicated region
      $region13: #{forward.5} parent=11 // pred_check
        %p118 = pneg %p56
      $region14: #{forward.5} parent=11 // pred_check_branch
        %120 = sbr.rel (%p118) target = $region16
      $region15: #{forward.5} parent=11 // pred_region
        _
      $region16: #{forward.5} parent=11 // pred_fallthru
        _
      // Predicated region
      $region17: #{forward.5} parent=11 // pred_check
        %p121 = pneg %p77
      $region18: #{forward.5} parent=11 // pred_check_branch
        %123 = sbr.rel (%p121) target = $region20
      $region19: #{forward.5} parent=11 // pred_region
        _
      $region20: #{forward.5} parent=11 // pred_fallthru
        _
    $region12: #{forward.5} parent=5 // pred_fallthru
      _
    %p124 = scmp.lt.s32.totalorder %s9, 2
    // Predicated region
    $region21: #{forward.5} parent=5 // pred_check
      %p125 = pneg %p124
    $region22: #{forward.5} parent=5 // pred_check_branch
      %127 = sbr.rel (%p125) target = $region24
    $region23: #{forward.5} parent=5 // pred_region
      // Predicated region
      $region25: #{forward.5} parent=23 // pred_check
        %p128 = pneg %p29
      $region26: #{forward.5} parent=23 // pred_check_branch
        %130 = sbr.rel (%p128) target = $region28
      $region27: #{forward.5} parent=23 // pred_region
        %s131 = smul.u32 128, %s9
        %p132 = scmp.lt.s32.totalorder %s131, 255
        %s133 = scalar_select %p132, %s131, 255
        %s134 = smul.addr %s133, 8
        %s135 = scalar_lea.vmem %s0, %s134
        %s136 = smul.u32 128, %s9
      $region28: #{forward.5} parent=23 // pred_fallthru
        _
    $region24: #{forward.5} parent=5 // pred_fallthru
      _
    %p137 = scmp.le.s32.totalorder 1, %s9
    %p138 = scmp.lt.s32.totalorder %s9, 3
    %p139 = pnand %p137, %p138
    %p140 = pneg %p139
    // Predicated region
    $region29: #{forward.5} parent=5 // pred_check
      _
    $region30: #{forward.5} parent=5 // pred_check_branch
      %142 = sbr.rel (%p139) target = $region32
    $region31: #{forward.5} parent=5 // pred_region
      %s143 = ssub.s32 %s9, 1
      %s144 = smul.u32 128, %s14
      %p145 = scmp.lt.s32.totalorder %s144, 255
      %s146 = scalar_select %p145, %s144, 255
      %s147 = smul.addr %s146, 8
      %s148 = scalar_lea.vmem %s0, %s147
      %p149 = pneg %p35
      %p150 = pneg %p32
      %p151 = pneg %p56
      %p152 = pneg %p53
      %p153 = pneg %p77
      %p154 = pneg %p74
      %p155 = pneg %p103
      %p156 = pneg %p100
      %s157 = smul.u32 128, %s14
      %p158 = scmp.lt.s32.totalorder %s157, 255
      %s159 = scalar_select %p158, %s157, 255
      %s160 = smul.addr %s159, 8
      %s161 = scalar_lea.vmem %s3, %s160
      %s162 = smul.u32 128, %s14
      %p163 = scmp.lt.s32.totalorder %s162, 255
      %s164 = scalar_select %p163, %s162, 255
      %s165 = smul.addr %s164, 8
      %s166 = scalar_lea.vmem %s0, %s165
      %s167 = smul.u32 128, %s14
      %s168 = smul.u32 128, %s14
      %p169 = scmp.lt.s32.totalorder %s168, 255
      %s170 = scalar_select %p169, %s168, 255
      %s171 = smul.addr %s170, 8
      %s172 = scalar_lea.vmem %s3, %s171
      %s173 = smul.u32 128, %s14
      %v174 = vld [vmem:[%s166] sm:$0xff]
      %v175 = vld [vmem:[%s166 + $0x8] sm:$0xff]
      %v176 = vld [vmem:[%s166 + $0x10] sm:$0xff]
      %v177 = vld [vmem:[%s166 + $0x18] sm:$0xff]
      %v178 = vld [vmem:[%s166 + $0x20] sm:$0xff]
      %v179 = vld [vmem:[%s166 + $0x28] sm:$0xff]
      %v180 = vld [vmem:[%s166 + $0x30] sm:$0xff]
      %v181 = vld [vmem:[%s166 + $0x38] sm:$0xff]
      %v182 = vld [vmem:[%s166 + $0x40] sm:$0xff]
      %v183 = vld [vmem:[%s166 + $0x48] sm:$0xff]
      %v184 = vld [vmem:[%s166 + $0x50] sm:$0xff]
      %v185 = vld [vmem:[%s166 + $0x58] sm:$0xff]
      %v186 = vld [vmem:[%s166 + $0x60] sm:$0xff]
      %v187 = vld [vmem:[%s166 + $0x68] sm:$0xff]
      %v188 = vld [vmem:[%s166 + $0x70] sm:$0xff]
      %v189 = vld [vmem:[%s166 + $0x78] sm:$0xff]
      %v190 = vld [vmem:[%s166 + $0x80] sm:$0xff]
      %v191 = vld [vmem:[%s166 + $0x88] sm:$0xff]
      %v192 = vld [vmem:[%s166 + $0x90] sm:$0xff]
      %v193 = vld [vmem:[%s166 + $0x98] sm:$0xff]
      %v194 = vld [vmem:[%s166 + $0xa0] sm:$0xff]
      %v195 = vld [vmem:[%s166 + $0xa8] sm:$0xff]
      %v196 = vld [vmem:[%s166 + $0xb0] sm:$0xff]
      %v197 = vld [vmem:[%s166 + $0xb8] sm:$0xff]
      %v198 = vld [vmem:[%s166 + $0xc0] sm:$0xff]
      %v199 = vld [vmem:[%s166 + $0xc8] sm:$0xff]
      %v200 = vld [vmem:[%s166 + $0xd0] sm:$0xff]
      %v201 = vld [vmem:[%s166 + $0xd8] sm:$0xff]
      %v202 = vld [vmem:[%s166 + $0xe0] sm:$0xff]
      %v203 = vld [vmem:[%s166 + $0xe8] sm:$0xff]
      %v204 = vld [vmem:[%s166 + $0xf0] sm:$0xff]
      %v205 = vld [vmem:[%s166 + $0xf8] sm:$0xff]
      %v206 = vld [vmem:[%s166 + $0x100] sm:$0xff]
      %v207 = vld [vmem:[%s166 + $0x108] sm:$0xff]
      %v208 = vld [vmem:[%s166 + $0x110] sm:$0xff]
      %v209 = vld [vmem:[%s166 + $0x118] sm:$0xff]
      %v210 = vld [vmem:[%s166 + $0x120] sm:$0xff]
      %v211 = vld [vmem:[%s166 + $0x128] sm:$0xff]
      %v212 = vld [vmem:[%s166 + $0x130] sm:$0xff]
      %v213 = vld [vmem:[%s166 + $0x138] sm:$0xff]
      %v214 = vld [vmem:[%s166 + $0x140] sm:$0xff]
      %v215 = vld [vmem:[%s166 + $0x148] sm:$0xff]
      %v216 = vld [vmem:[%s166 + $0x150] sm:$0xff]
      %v217 = vld [vmem:[%s166 + $0x158] sm:$0xff]
      %v218 = vld [vmem:[%s166 + $0x160] sm:$0xff]
      %v219 = vld [vmem:[%s166 + $0x168] sm:$0xff]
      %v220 = vld [vmem:[%s166 + $0x170] sm:$0xff]
      %v221 = vld [vmem:[%s166 + $0x178] sm:$0xff]
      %v222 = vld [vmem:[%s166 + $0x180] sm:$0xff]
      %v223 = vld [vmem:[%s166 + $0x188] sm:$0xff]
      %v224 = vld [vmem:[%s166 + $0x190] sm:$0xff]
      %v225 = vld [vmem:[%s166 + $0x198] sm:$0xff]
      %v226 = vld [vmem:[%s166 + $0x1a0] sm:$0xff]
      %v227 = vld [vmem:[%s166 + $0x1a8] sm:$0xff]
      %v228 = vld [vmem:[%s166 + $0x1b0] sm:$0xff]
      %v229 = vld [vmem:[%s166 + $0x1b8] sm:$0xff]
      %v230 = vld [vmem:[%s166 + $0x1c0] sm:$0xff]
      %v231 = vld [vmem:[%s166 + $0x1c8] sm:$0xff]
      %v232 = vld [vmem:[%s166 + $0x1d0] sm:$0xff]
      %v233 = vld [vmem:[%s166 + $0x1d8] sm:$0xff]
      %v234 = vld [vmem:[%s166 + $0x1e0] sm:$0xff]
      %v235 = vld [vmem:[%s166 + $0x1e8] sm:$0xff]
      %v236 = vld [vmem:[%s166 + $0x1f0] sm:$0xff]
      %v237 = vld [vmem:[%s166 + $0x1f8] sm:$0xff]
      %v238 = vld [vmem:[%s166 + $0x200] sm:$0xff]
      %v239 = vld [vmem:[%s166 + $0x208] sm:$0xff]
      %v240 = vld [vmem:[%s166 + $0x210] sm:$0xff]
      %v241 = vld [vmem:[%s166 + $0x218] sm:$0xff]
      %v242 = vld [vmem:[%s166 + $0x220] sm:$0xff]
      %v243 = vld [vmem:[%s166 + $0x228] sm:$0xff]
      %v244 = vld [vmem:[%s166 + $0x230] sm:$0xff]
      %v245 = vld [vmem:[%s166 + $0x238] sm:$0xff]
      %v246 = vld [vmem:[%s166 + $0x240] sm:$0xff]
      %v247 = vld [vmem:[%s166 + $0x248] sm:$0xff]
      %v248 = vld [vmem:[%s166 + $0x250] sm:$0xff]
      %v249 = vld [vmem:[%s166 + $0x258] sm:$0xff]
      %v250 = vld [vmem:[%s166 + $0x260] sm:$0xff]
      %v251 = vld [vmem:[%s166 + $0x268] sm:$0xff]
      %v252 = vld [vmem:[%s166 + $0x270] sm:$0xff]
      %v253 = vld [vmem:[%s166 + $0x278] sm:$0xff]
      %v254 = vld [vmem:[%s166 + $0x280] sm:$0xff]
      %v255 = vld [vmem:[%s166 + $0x288] sm:$0xff]
      %v256 = vld [vmem:[%s166 + $0x290] sm:$0xff]
      %v257 = vld [vmem:[%s166 + $0x298] sm:$0xff]
      %v258 = vld [vmem:[%s166 + $0x2a0] sm:$0xff]
      %v259 = vld [vmem:[%s166 + $0x2a8] sm:$0xff]
      %v260 = vld [vmem:[%s166 + $0x2b0] sm:$0xff]
      %v261 = vld [vmem:[%s166 + $0x2b8] sm:$0xff]
      %v262 = vld [vmem:[%s166 + $0x2c0] sm:$0xff]
      %v263 = vld [vmem:[%s166 + $0x2c8] sm:$0xff]
      %v264 = vld [vmem:[%s166 + $0x2d0] sm:$0xff]
      %v265 = vld [vmem:[%s166 + $0x2d8] sm:$0xff]
      %v266 = vld [vmem:[%s166 + $0x2e0] sm:$0xff]
      %v267 = vld [vmem:[%s166 + $0x2e8] sm:$0xff]
      %v268 = vld [vmem:[%s166 + $0x2f0] sm:$0xff]
      %v269 = vld [vmem:[%s166 + $0x2f8] sm:$0xff]
      %v270 = vld [vmem:[%s166 + $0x300] sm:$0xff]
      %v271 = vld [vmem:[%s166 + $0x308] sm:$0xff]
      %v272 = vld [vmem:[%s166 + $0x310] sm:$0xff]
      %v273 = vld [vmem:[%s166 + $0x318] sm:$0xff]
      %v274 = vld [vmem:[%s166 + $0x320] sm:$0xff]
      %v275 = vld [vmem:[%s166 + $0x328] sm:$0xff]
      %v276 = vld [vmem:[%s166 + $0x330] sm:$0xff]
      %v277 = vld [vmem:[%s166 + $0x338] sm:$0xff]
      %v278 = vld [vmem:[%s166 + $0x340] sm:$0xff]
      %v279 = vld [vmem:[%s166 + $0x348] sm:$0xff]
      %v280 = vld [vmem:[%s166 + $0x350] sm:$0xff]
      %v281 = vld [vmem:[%s166 + $0x358] sm:$0xff]
      %v282 = vld [vmem:[%s166 + $0x360] sm:$0xff]
      %v283 = vld [vmem:[%s166 + $0x368] sm:$0xff]
      %v284 = vld [vmem:[%s166 + $0x370] sm:$0xff]
      %v285 = vld [vmem:[%s166 + $0x378] sm:$0xff]
      %v286 = vld [vmem:[%s166 + $0x380] sm:$0xff]
      %v287 = vld [vmem:[%s166 + $0x388] sm:$0xff]
      %v288 = vld [vmem:[%s166 + $0x390] sm:$0xff]
      %v289 = vld [vmem:[%s166 + $0x398] sm:$0xff]
      %v290 = vld [vmem:[%s166 + $0x3a0] sm:$0xff]
      %v291 = vld [vmem:[%s166 + $0x3a8] sm:$0xff]
      %v292 = vld [vmem:[%s166 + $0x3b0] sm:$0xff]
      %v293 = vld [vmem:[%s166 + $0x3b8] sm:$0xff]
      %v294 = vld [vmem:[%s166 + $0x3c0] sm:$0xff]
      %v295 = vld [vmem:[%s166 + $0x3c8] sm:$0xff]
      %v296 = vld [vmem:[%s166 + $0x3d0] sm:$0xff]
      %v297 = vld [vmem:[%s166 + $0x3d8] sm:$0xff]
      %v298 = vld [vmem:[%s166 + $0x3e0] sm:$0xff]
      %v299 = vld [vmem:[%s166 + $0x3e8] sm:$0xff]
      %v300 = vld [vmem:[%s166 + $0x3f0] sm:$0xff]
      %v301 = vld [vmem:[%s166 + $0x3f8] sm:$0xff]
      %v302 = vld [vmem:[%s1] sm:$0xff]
      %v303 = vld [vmem:[%s1 + $0x8] sm:$0x1]
      %305 = vset.pattern.permute.xlu0 0
      %306 = vperm.xlu0 %305, %v174
      %v307 = vpop.permute.xlu0 %306
      %310 = vset.pattern.permute.xlu0 0
      %311 = vperm.xlu0 %310, %v175
      %v312 = vpop.permute.xlu0 %311
      %315 = vset.pattern.permute.xlu0 0
      %316 = vperm.xlu0 %315, %v176
      %v317 = vpop.permute.xlu0 %316
      %320 = vset.pattern.permute.xlu0 0
      %321 = vperm.xlu0 %320, %v177
      %v322 = vpop.permute.xlu0 %321
      %325 = vset.pattern.permute.xlu0 0
      %326 = vperm.xlu0 %325, %v178
      %v327 = vpop.permute.xlu0 %326
      %330 = vset.pattern.permute.xlu0 0
      %331 = vperm.xlu0 %330, %v179
      %v332 = vpop.permute.xlu0 %331
      %335 = vset.pattern.permute.xlu0 0
      %336 = vperm.xlu0 %335, %v180
      %v337 = vpop.permute.xlu0 %336
      %340 = vset.pattern.permute.xlu0 0
      %341 = vperm.xlu0 %340, %v181
      %v342 = vpop.permute.xlu0 %341
      %345 = vset.pattern.permute.xlu0 0
      %346 = vperm.xlu0 %345, %v182
      %v347 = vpop.permute.xlu0 %346
      %350 = vset.pattern.permute.xlu0 0
      %351 = vperm.xlu0 %350, %v183
      %v352 = vpop.permute.xlu0 %351
      %355 = vset.pattern.permute.xlu0 0
      %356 = vperm.xlu0 %355, %v184
      %v357 = vpop.permute.xlu0 %356
      %360 = vset.pattern.permute.xlu0 0
      %361 = vperm.xlu0 %360, %v185
      %v362 = vpop.permute.xlu0 %361
      %365 = vset.pattern.permute.xlu0 0
      %366 = vperm.xlu0 %365, %v186
      %v367 = vpop.permute.xlu0 %366
      %370 = vset.pattern.permute.xlu0 0
      %371 = vperm.xlu0 %370, %v187
      %v372 = vpop.permute.xlu0 %371
      %375 = vset.pattern.permute.xlu0 0
      %376 = vperm.xlu0 %375, %v188
      %v377 = vpop.permute.xlu0 %376
      %380 = vset.pattern.permute.xlu0 0
      %381 = vperm.xlu0 %380, %v189
      %v382 = vpop.permute.xlu0 %381
      %385 = vset.pattern.permute.xlu0 0
      %386 = vperm.xlu0 %385, %v190
      %v387 = vpop.permute.xlu0 %386
      %390 = vset.pattern.permute.xlu0 0
      %391 = vperm.xlu0 %390, %v191
      %v392 = vpop.permute.xlu0 %391
      %395 = vset.pattern.permute.xlu0 0
      %396 = vperm.xlu0 %395, %v192
      %v397 = vpop.permute.xlu0 %396
      %400 = vset.pattern.permute.xlu0 0
      %401 = vperm.xlu0 %400, %v193
      %v402 = vpop.permute.xlu0 %401
      %405 = vset.pattern.permute.xlu0 0
      %406 = vperm.xlu0 %405, %v194
      %v407 = vpop.permute.xlu0 %406
      %410 = vset.pattern.permute.xlu0 0
      %411 = vperm.xlu0 %410, %v195
      %v412 = vpop.permute.xlu0 %411
      %415 = vset.pattern.permute.xlu0 0
      %416 = vperm.xlu0 %415, %v196
      %v417 = vpop.permute.xlu0 %416
      %420 = vset.pattern.permute.xlu0 0
      %421 = vperm.xlu0 %420, %v197
      %v422 = vpop.permute.xlu0 %421
      %425 = vset.pattern.permute.xlu0 0
      %426 = vperm.xlu0 %425, %v198
      %v427 = vpop.permute.xlu0 %426
      %430 = vset.pattern.permute.xlu0 0
      %431 = vperm.xlu0 %430, %v199
      %v432 = vpop.permute.xlu0 %431
      %435 = vset.pattern.permute.xlu0 0
      %436 = vperm.xlu0 %435, %v200
      %v437 = vpop.permute.xlu0 %436
      %440 = vset.pattern.permute.xlu0 0
      %441 = vperm.xlu0 %440, %v201
      %v442 = vpop.permute.xlu0 %441
      %445 = vset.pattern.permute.xlu0 0
      %446 = vperm.xlu0 %445, %v202
      %v447 = vpop.permute.xlu0 %446
      %450 = vset.pattern.permute.xlu0 0
      %451 = vperm.xlu0 %450, %v203
      %v452 = vpop.permute.xlu0 %451
      %455 = vset.pattern.permute.xlu0 0
      %456 = vperm.xlu0 %455, %v204
      %v457 = vpop.permute.xlu0 %456
      %460 = vset.pattern.permute.xlu0 0
      %461 = vperm.xlu0 %460, %v205
      %v462 = vpop.permute.xlu0 %461
      %465 = vset.pattern.permute.xlu0 0
      %466 = vperm.xlu0 %465, %v206
      %v467 = vpop.permute.xlu0 %466
      %470 = vset.pattern.permute.xlu0 0
      %471 = vperm.xlu0 %470, %v207
      %v472 = vpop.permute.xlu0 %471
      %475 = vset.pattern.permute.xlu0 0
      %476 = vperm.xlu0 %475, %v208
      %v477 = vpop.permute.xlu0 %476
      %480 = vset.pattern.permute.xlu0 0
      %481 = vperm.xlu0 %480, %v209
      %v482 = vpop.permute.xlu0 %481
      %485 = vset.pattern.permute.xlu0 0
      %486 = vperm.xlu0 %485, %v210
      %v487 = vpop.permute.xlu0 %486
      %490 = vset.pattern.permute.xlu0 0
      %491 = vperm.xlu0 %490, %v211
      %v492 = vpop.permute.xlu0 %491
      %495 = vset.pattern.permute.xlu0 0
      %496 = vperm.xlu0 %495, %v212
      %v497 = vpop.permute.xlu0 %496
      %500 = vset.pattern.permute.xlu0 0
      %501 = vperm.xlu0 %500, %v213
      %v502 = vpop.permute.xlu0 %501
      %505 = vset.pattern.permute.xlu0 0
      %506 = vperm.xlu0 %505, %v214
      %v507 = vpop.permute.xlu0 %506
      %510 = vset.pattern.permute.xlu0 0
      %511 = vperm.xlu0 %510, %v215
      %v512 = vpop.permute.xlu0 %511
      %515 = vset.pattern.permute.xlu0 0
      %516 = vperm.xlu0 %515, %v216
      %v517 = vpop.permute.xlu0 %516
      %520 = vset.pattern.permute.xlu0 0
      %521 = vperm.xlu0 %520, %v217
      %v522 = vpop.permute.xlu0 %521
      %525 = vset.pattern.permute.xlu0 0
      %526 = vperm.xlu0 %525, %v218
      %v527 = vpop.permute.xlu0 %526
      %530 = vset.pattern.permute.xlu0 0
      %531 = vperm.xlu0 %530, %v219
      %v532 = vpop.permute.xlu0 %531
      %535 = vset.pattern.permute.xlu0 0
      %536 = vperm.xlu0 %535, %v220
      %v537 = vpop.permute.xlu0 %536
      %540 = vset.pattern.permute.xlu0 0
      %541 = vperm.xlu0 %540, %v221
      %v542 = vpop.permute.xlu0 %541
      %545 = vset.pattern.permute.xlu0 0
      %546 = vperm.xlu0 %545, %v222
      %v547 = vpop.permute.xlu0 %546
      %550 = vset.pattern.permute.xlu0 0
      %551 = vperm.xlu0 %550, %v223
      %v552 = vpop.permute.xlu0 %551
      %555 = vset.pattern.permute.xlu0 0
      %556 = vperm.xlu0 %555, %v224
      %v557 = vpop.permute.xlu0 %556
      %560 = vset.pattern.permute.xlu0 0
      %561 = vperm.xlu0 %560, %v225
      %v562 = vpop.permute.xlu0 %561
      %565 = vset.pattern.permute.xlu0 0
      %566 = vperm.xlu0 %565, %v226
      %v567 = vpop.permute.xlu0 %566
      %570 = vset.pattern.permute.xlu0 0
      %571 = vperm.xlu0 %570, %v227
      %v572 = vpop.permute.xlu0 %571
      %575 = vset.pattern.permute.xlu0 0
      %576 = vperm.xlu0 %575, %v228
      %v577 = vpop.permute.xlu0 %576
      %580 = vset.pattern.permute.xlu0 0
      %581 = vperm.xlu0 %580, %v229
      %v582 = vpop.permute.xlu0 %581
      %585 = vset.pattern.permute.xlu0 0
      %586 = vperm.xlu0 %585, %v230
      %v587 = vpop.permute.xlu0 %586
      %590 = vset.pattern.permute.xlu0 0
      %591 = vperm.xlu0 %590, %v231
      %v592 = vpop.permute.xlu0 %591
      %595 = vset.pattern.permute.xlu0 0
      %596 = vperm.xlu0 %595, %v232
      %v597 = vpop.permute.xlu0 %596
      %600 = vset.pattern.permute.xlu0 0
      %601 = vperm.xlu0 %600, %v233
      %v602 = vpop.permute.xlu0 %601
      %605 = vset.pattern.permute.xlu0 0
      %606 = vperm.xlu0 %605, %v234
      %v607 = vpop.permute.xlu0 %606
      %610 = vset.pattern.permute.xlu0 0
      %611 = vperm.xlu0 %610, %v235
      %v612 = vpop.permute.xlu0 %611
      %615 = vset.pattern.permute.xlu0 0
      %616 = vperm.xlu0 %615, %v236
      %v617 = vpop.permute.xlu0 %616
      %620 = vset.pattern.permute.xlu0 0
      %621 = vperm.xlu0 %620, %v237
      %v622 = vpop.permute.xlu0 %621
      %625 = vset.pattern.permute.xlu0 0
      %626 = vperm.xlu0 %625, %v238
      %v627 = vpop.permute.xlu0 %626
      %630 = vset.pattern.permute.xlu0 0
      %631 = vperm.xlu0 %630, %v239
      %v632 = vpop.permute.xlu0 %631
      %635 = vset.pattern.permute.xlu0 0
      %636 = vperm.xlu0 %635, %v240
      %v637 = vpop.permute.xlu0 %636
      %640 = vset.pattern.permute.xlu0 0
      %641 = vperm.xlu0 %640, %v241
      %v642 = vpop.permute.xlu0 %641
      %645 = vset.pattern.permute.xlu0 0
      %646 = vperm.xlu0 %645, %v242
      %v647 = vpop.permute.xlu0 %646
      %650 = vset.pattern.permute.xlu0 0
      %651 = vperm.xlu0 %650, %v243
      %v652 = vpop.permute.xlu0 %651
      %655 = vset.pattern.permute.xlu0 0
      %656 = vperm.xlu0 %655, %v244
      %v657 = vpop.permute.xlu0 %656
      %660 = vset.pattern.permute.xlu0 0
      %661 = vperm.xlu0 %660, %v245
      %v662 = vpop.permute.xlu0 %661
      %665 = vset.pattern.permute.xlu0 0
      %666 = vperm.xlu0 %665, %v246
      %v667 = vpop.permute.xlu0 %666
      %670 = vset.pattern.permute.xlu0 0
      %671 = vperm.xlu0 %670, %v247
      %v672 = vpop.permute.xlu0 %671
      %675 = vset.pattern.permute.xlu0 0
      %676 = vperm.xlu0 %675, %v248
      %v677 = vpop.permute.xlu0 %676
      %680 = vset.pattern.permute.xlu0 0
      %681 = vperm.xlu0 %680, %v249
      %v682 = vpop.permute.xlu0 %681
      %685 = vset.pattern.permute.xlu0 0
      %686 = vperm.xlu0 %685, %v250
      %v687 = vpop.permute.xlu0 %686
      %690 = vset.pattern.permute.xlu0 0
      %691 = vperm.xlu0 %690, %v251
      %v692 = vpop.permute.xlu0 %691
      %695 = vset.pattern.permute.xlu0 0
      %696 = vperm.xlu0 %695, %v252
      %v697 = vpop.permute.xlu0 %696
      %700 = vset.pattern.permute.xlu0 0
      %701 = vperm.xlu0 %700, %v253
      %v702 = vpop.permute.xlu0 %701
      %705 = vset.pattern.permute.xlu0 0
      %706 = vperm.xlu0 %705, %v254
      %v707 = vpop.permute.xlu0 %706
      %710 = vset.pattern.permute.xlu0 0
      %711 = vperm.xlu0 %710, %v255
      %v712 = vpop.permute.xlu0 %711
      %715 = vset.pattern.permute.xlu0 0
      %716 = vperm.xlu0 %715, %v256
      %v717 = vpop.permute.xlu0 %716
      %720 = vset.pattern.permute.xlu0 0
      %721 = vperm.xlu0 %720, %v257
      %v722 = vpop.permute.xlu0 %721
      %725 = vset.pattern.permute.xlu0 0
      %726 = vperm.xlu0 %725, %v258
      %v727 = vpop.permute.xlu0 %726
      %730 = vset.pattern.permute.xlu0 0
      %731 = vperm.xlu0 %730, %v259
      %v732 = vpop.permute.xlu0 %731
      %735 = vset.pattern.permute.xlu0 0
      %736 = vperm.xlu0 %735, %v260
      %v737 = vpop.permute.xlu0 %736
      %740 = vset.pattern.permute.xlu0 0
      %741 = vperm.xlu0 %740, %v261
      %v742 = vpop.permute.xlu0 %741
      %745 = vset.pattern.permute.xlu0 0
      %746 = vperm.xlu0 %745, %v262
      %v747 = vpop.permute.xlu0 %746
      %750 = vset.pattern.permute.xlu0 0
      %751 = vperm.xlu0 %750, %v263
      %v752 = vpop.permute.xlu0 %751
      %755 = vset.pattern.permute.xlu0 0
      %756 = vperm.xlu0 %755, %v264
      %v757 = vpop.permute.xlu0 %756
      %760 = vset.pattern.permute.xlu0 0
      %761 = vperm.xlu0 %760, %v265
      %v762 = vpop.permute.xlu0 %761
      %765 = vset.pattern.permute.xlu0 0
      %766 = vperm.xlu0 %765, %v266
      %v767 = vpop.permute.xlu0 %766
      %770 = vset.pattern.permute.xlu0 0
      %771 = vperm.xlu0 %770, %v267
      %v772 = vpop.permute.xlu0 %771
      %775 = vset.pattern.permute.xlu0 0
      %776 = vperm.xlu0 %775, %v268
      %v777 = vpop.permute.xlu0 %776
      %780 = vset.pattern.permute.xlu0 0
      %781 = vperm.xlu0 %780, %v269
      %v782 = vpop.permute.xlu0 %781
      %785 = vset.pattern.permute.xlu0 0
      %786 = vperm.xlu0 %785, %v270
      %v787 = vpop.permute.xlu0 %786
      %790 = vset.pattern.permute.xlu0 0
      %791 = vperm.xlu0 %790, %v271
      %v792 = vpop.permute.xlu0 %791
      %795 = vset.pattern.permute.xlu0 0
      %796 = vperm.xlu0 %795, %v272
      %v797 = vpop.permute.xlu0 %796
      %800 = vset.pattern.permute.xlu0 0
      %801 = vperm.xlu0 %800, %v273
      %v802 = vpop.permute.xlu0 %801
      %805 = vset.pattern.permute.xlu0 0
      %806 = vperm.xlu0 %805, %v274
      %v807 = vpop.permute.xlu0 %806
      %810 = vset.pattern.permute.xlu0 0
      %811 = vperm.xlu0 %810, %v275
      %v812 = vpop.permute.xlu0 %811
      %815 = vset.pattern.permute.xlu0 0
      %816 = vperm.xlu0 %815, %v276
      %v817 = vpop.permute.xlu0 %816
      %820 = vset.pattern.permute.xlu0 0
      %821 = vperm.xlu0 %820, %v277
      %v822 = vpop.permute.xlu0 %821
      %825 = vset.pattern.permute.xlu0 0
      %826 = vperm.xlu0 %825, %v278
      %v827 = vpop.permute.xlu0 %826
      %830 = vset.pattern.permute.xlu0 0
      %831 = vperm.xlu0 %830, %v279
      %v832 = vpop.permute.xlu0 %831
      %835 = vset.pattern.permute.xlu0 0
      %836 = vperm.xlu0 %835, %v280
      %v837 = vpop.permute.xlu0 %836
      %840 = vset.pattern.permute.xlu0 0
      %841 = vperm.xlu0 %840, %v281
      %v842 = vpop.permute.xlu0 %841
      %845 = vset.pattern.permute.xlu0 0
      %846 = vperm.xlu0 %845, %v282
      %v847 = vpop.permute.xlu0 %846
      %850 = vset.pattern.permute.xlu0 0
      %851 = vperm.xlu0 %850, %v283
      %v852 = vpop.permute.xlu0 %851
      %855 = vset.pattern.permute.xlu0 0
      %856 = vperm.xlu0 %855, %v284
      %v857 = vpop.permute.xlu0 %856
      %860 = vset.pattern.permute.xlu0 0
      %861 = vperm.xlu0 %860, %v285
      %v862 = vpop.permute.xlu0 %861
      %865 = vset.pattern.permute.xlu0 0
      %866 = vperm.xlu0 %865, %v286
      %v867 = vpop.permute.xlu0 %866
      %870 = vset.pattern.permute.xlu0 0
      %871 = vperm.xlu0 %870, %v287
      %v872 = vpop.permute.xlu0 %871
      %875 = vset.pattern.permute.xlu0 0
      %876 = vperm.xlu0 %875, %v288
      %v877 = vpop.permute.xlu0 %876
      %880 = vset.pattern.permute.xlu0 0
      %881 = vperm.xlu0 %880, %v289
      %v882 = vpop.permute.xlu0 %881
      %885 = vset.pattern.permute.xlu0 0
      %886 = vperm.xlu0 %885, %v290
      %v887 = vpop.permute.xlu0 %886
      %890 = vset.pattern.permute.xlu0 0
      %891 = vperm.xlu0 %890, %v291
      %v892 = vpop.permute.xlu0 %891
      %895 = vset.pattern.permute.xlu0 0
      %896 = vperm.xlu0 %895, %v292
      %v897 = vpop.permute.xlu0 %896
      %900 = vset.pattern.permute.xlu0 0
      %901 = vperm.xlu0 %900, %v293
      %v902 = vpop.permute.xlu0 %901
      %905 = vset.pattern.permute.xlu0 0
      %906 = vperm.xlu0 %905, %v294
      %v907 = vpop.permute.xlu0 %906
      %910 = vset.pattern.permute.xlu0 0
      %911 = vperm.xlu0 %910, %v295
      %v912 = vpop.permute.xlu0 %911
      %915 = vset.pattern.permute.xlu0 0
      %916 = vperm.xlu0 %915, %v296
      %v917 = vpop.permute.xlu0 %916
      %920 = vset.pattern.permute.xlu0 0
      %921 = vperm.xlu0 %920, %v297
      %v922 = vpop.permute.xlu0 %921
      %925 = vset.pattern.permute.xlu0 0
      %926 = vperm.xlu0 %925, %v298
      %v927 = vpop.permute.xlu0 %926
      %930 = vset.pattern.permute.xlu0 0
      %931 = vperm.xlu0 %930, %v299
      %v932 = vpop.permute.xlu0 %931
      %935 = vset.pattern.permute.xlu0 0
      %936 = vperm.xlu0 %935, %v300
      %v937 = vpop.permute.xlu0 %936
      %940 = vset.pattern.permute.xlu0 0
      %941 = vperm.xlu0 %940, %v301
      %v942 = vpop.permute.xlu0 %941
      %v944 = vlaneseq
      %v945 = vshrl.u32 %v944, 7
      %v946 = vsub.s32 0, %v945
      %v947 = vrot.slane %v302, %v946
      %v948 = vmul.f32 %v307, %v947
      %v949 = vmul.f32 %v312, %v947
      %v950 = vmul.f32 %v317, %v947
      %v951 = vmul.f32 %v322, %v947
      %v952 = vmul.f32 %v327, %v947
      %v953 = vmul.f32 %v332, %v947
      %v954 = vmul.f32 %v337, %v947
      %v955 = vmul.f32 %v342, %v947
      %v956 = vmul.f32 %v347, %v947
      %v957 = vmul.f32 %v352, %v947
      %v958 = vmul.f32 %v357, %v947
      %v959 = vmul.f32 %v362, %v947
      %v960 = vmul.f32 %v367, %v947
      %v961 = vmul.f32 %v372, %v947
      %v962 = vmul.f32 %v377, %v947
      %v963 = vmul.f32 %v382, %v947
      %v964 = vmul.f32 %v387, %v947
      %v965 = vmul.f32 %v392, %v947
      %v966 = vmul.f32 %v397, %v947
      %v967 = vmul.f32 %v402, %v947
      %v968 = vmul.f32 %v407, %v947
      %v969 = vmul.f32 %v412, %v947
      %v970 = vmul.f32 %v417, %v947
      %v971 = vmul.f32 %v422, %v947
      %v972 = vmul.f32 %v427, %v947
      %v973 = vmul.f32 %v432, %v947
      %v974 = vmul.f32 %v437, %v947
      %v975 = vmul.f32 %v442, %v947
      %v976 = vmul.f32 %v447, %v947
      %v977 = vmul.f32 %v452, %v947
      %v978 = vmul.f32 %v457, %v947
      %v979 = vmul.f32 %v462, %v947
      %v980 = vmul.f32 %v467, %v947
      %v981 = vmul.f32 %v472, %v947
      %v982 = vmul.f32 %v477, %v947
      %v983 = vmul.f32 %v482, %v947
      %v984 = vmul.f32 %v487, %v947
      %v985 = vmul.f32 %v492, %v947
      %v986 = vmul.f32 %v497, %v947
      %v987 = vmul.f32 %v502, %v947
      %v988 = vmul.f32 %v507, %v947
      %v989 = vmul.f32 %v512, %v947
      %v990 = vmul.f32 %v517, %v947
      %v991 = vmul.f32 %v522, %v947
      %v992 = vmul.f32 %v527, %v947
      %v993 = vmul.f32 %v532, %v947
      %v994 = vmul.f32 %v537, %v947
      %v995 = vmul.f32 %v542, %v947
      %v996 = vmul.f32 %v547, %v947
      %v997 = vmul.f32 %v552, %v947
      %v998 = vmul.f32 %v557, %v947
      %v999 = vmul.f32 %v562, %v947
      %v1000 = vmul.f32 %v567, %v947
      %v1001 = vmul.f32 %v572, %v947
      %v1002 = vmul.f32 %v577, %v947
      %v1003 = vmul.f32 %v582, %v947
      %v1004 = vmul.f32 %v587, %v947
      %v1005 = vmul.f32 %v592, %v947
      %v1006 = vmul.f32 %v597, %v947
      %v1007 = vmul.f32 %v602, %v947
      %v1008 = vmul.f32 %v607, %v947
      %v1009 = vmul.f32 %v612, %v947
      %v1010 = vmul.f32 %v617, %v947
      %v1011 = vmul.f32 %v622, %v947
      %v1012 = vmul.f32 %v627, %v947
      %v1013 = vmul.f32 %v632, %v947
      %v1014 = vmul.f32 %v637, %v947
      %v1015 = vmul.f32 %v642, %v947
      %v1016 = vmul.f32 %v647, %v947
      %v1017 = vmul.f32 %v652, %v947
      %v1018 = vmul.f32 %v657, %v947
      %v1019 = vmul.f32 %v662, %v947
      %v1020 = vmul.f32 %v667, %v947
      %v1021 = vmul.f32 %v672, %v947
      %v1022 = vmul.f32 %v677, %v947
      %v1023 = vmul.f32 %v682, %v947
      %v1024 = vmul.f32 %v687, %v947
      %v1025 = vmul.f32 %v692, %v947
      %v1026 = vmul.f32 %v697, %v947
      %v1027 = vmul.f32 %v702, %v947
      %v1028 = vmul.f32 %v707, %v947
      %v1029 = vmul.f32 %v712, %v947
      %v1030 = vmul.f32 %v717, %v947
      %v1031 = vmul.f32 %v722, %v947
      %v1032 = vmul.f32 %v727, %v947
      %v1033 = vmul.f32 %v732, %v947
      %v1034 = vmul.f32 %v737, %v947
      %v1035 = vmul.f32 %v742, %v947
      %v1036 = vmul.f32 %v747, %v947
      %v1037 = vmul.f32 %v752, %v947
      %v1038 = vmul.f32 %v757, %v947
      %v1039 = vmul.f32 %v762, %v947
      %v1040 = vmul.f32 %v767, %v947
      %v1041 = vmul.f32 %v772, %v947
      %v1042 = vmul.f32 %v777, %v947
      %v1043 = vmul.f32 %v782, %v947
      %v1044 = vmul.f32 %v787, %v947
      %v1045 = vmul.f32 %v792, %v947
      %v1046 = vmul.f32 %v797, %v947
      %v1047 = vmul.f32 %v802, %v947
      %v1048 = vmul.f32 %v807, %v947
      %v1049 = vmul.f32 %v812, %v947
      %v1050 = vmul.f32 %v817, %v947
      %v1051 = vmul.f32 %v822, %v947
      %v1052 = vmul.f32 %v827, %v947
      %v1053 = vmul.f32 %v832, %v947
      %v1054 = vmul.f32 %v837, %v947
      %v1055 = vmul.f32 %v842, %v947
      %v1056 = vmul.f32 %v847, %v947
      %v1057 = vmul.f32 %v852, %v947
      %v1058 = vmul.f32 %v857, %v947
      %v1059 = vmul.f32 %v862, %v947
      %v1060 = vmul.f32 %v867, %v947
      %v1061 = vmul.f32 %v872, %v947
      %v1062 = vmul.f32 %v877, %v947
      %v1063 = vmul.f32 %v882, %v947
      %v1064 = vmul.f32 %v887, %v947
      %v1065 = vmul.f32 %v892, %v947
      %v1066 = vmul.f32 %v897, %v947
      %v1067 = vmul.f32 %v902, %v947
      %v1068 = vmul.f32 %v907, %v947
      %v1069 = vmul.f32 %v912, %v947
      %v1070 = vmul.f32 %v917, %v947
      %v1071 = vmul.f32 %v922, %v947
      %v1072 = vmul.f32 %v927, %v947
      %v1073 = vmul.f32 %v932, %v947
      %v1074 = vmul.f32 %v937, %v947
      %v1075 = vmul.f32 %v942, %v947
      %v1076 = vadd.f32 %v948, 0.0
      %v1077 = vadd.f32 %v949, 0.0
      %v1078 = vadd.f32 %v950, 0.0
      %v1079 = vadd.f32 %v951, 0.0
      %v1080 = vadd.f32 %v952, 0.0
      %v1081 = vadd.f32 %v953, 0.0
      %v1082 = vadd.f32 %v954, 0.0
      %v1083 = vadd.f32 %v955, 0.0
      %v1084 = vadd.f32 %v956, 0.0
      %v1085 = vadd.f32 %v957, 0.0
      %v1086 = vadd.f32 %v958, 0.0
      %v1087 = vadd.f32 %v959, 0.0
      %v1088 = vadd.f32 %v960, 0.0
      %v1089 = vadd.f32 %v961, 0.0
      %v1090 = vadd.f32 %v962, 0.0
      %v1091 = vadd.f32 %v963, 0.0
      %v1092 = vadd.f32 %v964, 0.0
      %v1093 = vadd.f32 %v965, 0.0
      %v1094 = vadd.f32 %v966, 0.0
      %v1095 = vadd.f32 %v967, 0.0
      %v1096 = vadd.f32 %v968, 0.0
      %v1097 = vadd.f32 %v969, 0.0
      %v1098 = vadd.f32 %v970, 0.0
      %v1099 = vadd.f32 %v971, 0.0
      %v1100 = vadd.f32 %v972, 0.0
      %v1101 = vadd.f32 %v973, 0.0
      %v1102 = vadd.f32 %v974, 0.0
      %v1103 = vadd.f32 %v975, 0.0
      %v1104 = vadd.f32 %v976, 0.0
      %v1105 = vadd.f32 %v977, 0.0
      %v1106 = vadd.f32 %v978, 0.0
      %v1107 = vadd.f32 %v979, 0.0
      %v1108 = vadd.f32 %v980, 0.0
      %v1109 = vadd.f32 %v981, 0.0
      %v1110 = vadd.f32 %v982, 0.0
      %v1111 = vadd.f32 %v983, 0.0
      %v1112 = vadd.f32 %v984, 0.0
      %v1113 = vadd.f32 %v985, 0.0
      %v1114 = vadd.f32 %v986, 0.0
      %v1115 = vadd.f32 %v987, 0.0
      %v1116 = vadd.f32 %v988, 0.0
      %v1117 = vadd.f32 %v989, 0.0
      %v1118 = vadd.f32 %v990, 0.0
      %v1119 = vadd.f32 %v991, 0.0
      %v1120 = vadd.f32 %v992, 0.0
      %v1121 = vadd.f32 %v993, 0.0
      %v1122 = vadd.f32 %v994, 0.0
      %v1123 = vadd.f32 %v995, 0.0
      %v1124 = vadd.f32 %v996, 0.0
      %v1125 = vadd.f32 %v997, 0.0
      %v1126 = vadd.f32 %v998, 0.0
      %v1127 = vadd.f32 %v999, 0.0
      %v1128 = vadd.f32 %v1000, 0.0
      %v1129 = vadd.f32 %v1001, 0.0
      %v1130 = vadd.f32 %v1002, 0.0
      %v1131 = vadd.f32 %v1003, 0.0
      %v1132 = vadd.f32 %v1004, 0.0
      %v1133 = vadd.f32 %v1005, 0.0
      %v1134 = vadd.f32 %v1006, 0.0
      %v1135 = vadd.f32 %v1007, 0.0
      %v1136 = vadd.f32 %v1008, 0.0
      %v1137 = vadd.f32 %v1009, 0.0
      %v1138 = vadd.f32 %v1010, 0.0
      %v1139 = vadd.f32 %v1011, 0.0
      %v1140 = vadd.f32 %v1012, 0.0
      %v1141 = vadd.f32 %v1013, 0.0
      %v1142 = vadd.f32 %v1014, 0.0
      %v1143 = vadd.f32 %v1015, 0.0
      %v1144 = vadd.f32 %v1016, 0.0
      %v1145 = vadd.f32 %v1017, 0.0
      %v1146 = vadd.f32 %v1018, 0.0
      %v1147 = vadd.f32 %v1019, 0.0
      %v1148 = vadd.f32 %v1020, 0.0
      %v1149 = vadd.f32 %v1021, 0.0
      %v1150 = vadd.f32 %v1022, 0.0
      %v1151 = vadd.f32 %v1023, 0.0
      %v1152 = vadd.f32 %v1024, 0.0
      %v1153 = vadd.f32 %v1025, 0.0
      %v1154 = vadd.f32 %v1026, 0.0
      %v1155 = vadd.f32 %v1027, 0.0
      %v1156 = vadd.f32 %v1028, 0.0
      %v1157 = vadd.f32 %v1029, 0.0
      %v1158 = vadd.f32 %v1030, 0.0
      %v1159 = vadd.f32 %v1031, 0.0
      %v1160 = vadd.f32 %v1032, 0.0
      %v1161 = vadd.f32 %v1033, 0.0
      %v1162 = vadd.f32 %v1034, 0.0
      %v1163 = vadd.f32 %v1035, 0.0
      %v1164 = vadd.f32 %v1036, 0.0
      %v1165 = vadd.f32 %v1037, 0.0
      %v1166 = vadd.f32 %v1038, 0.0
      %v1167 = vadd.f32 %v1039, 0.0
      %v1168 = vadd.f32 %v1040, 0.0
      %v1169 = vadd.f32 %v1041, 0.0
      %v1170 = vadd.f32 %v1042, 0.0
      %v1171 = vadd.f32 %v1043, 0.0
      %v1172 = vadd.f32 %v1044, 0.0
      %v1173 = vadd.f32 %v1045, 0.0
      %v1174 = vadd.f32 %v1046, 0.0
      %v1175 = vadd.f32 %v1047, 0.0
      %v1176 = vadd.f32 %v1048, 0.0
      %v1177 = vadd.f32 %v1049, 0.0
      %v1178 = vadd.f32 %v1050, 0.0
      %v1179 = vadd.f32 %v1051, 0.0
      %v1180 = vadd.f32 %v1052, 0.0
      %v1181 = vadd.f32 %v1053, 0.0
      %v1182 = vadd.f32 %v1054, 0.0
      %v1183 = vadd.f32 %v1055, 0.0
      %v1184 = vadd.f32 %v1056, 0.0
      %v1185 = vadd.f32 %v1057, 0.0
      %v1186 = vadd.f32 %v1058, 0.0
      %v1187 = vadd.f32 %v1059, 0.0
      %v1188 = vadd.f32 %v1060, 0.0
      %v1189 = vadd.f32 %v1061, 0.0
      %v1190 = vadd.f32 %v1062, 0.0
      %v1191 = vadd.f32 %v1063, 0.0
      %v1192 = vadd.f32 %v1064, 0.0
      %v1193 = vadd.f32 %v1065, 0.0
      %v1194 = vadd.f32 %v1066, 0.0
      %v1195 = vadd.f32 %v1067, 0.0
      %v1196 = vadd.f32 %v1068, 0.0
      %v1197 = vadd.f32 %v1069, 0.0
      %v1198 = vadd.f32 %v1070, 0.0
      %v1199 = vadd.f32 %v1071, 0.0
      %v1200 = vadd.f32 %v1072, 0.0
      %v1201 = vadd.f32 %v1073, 0.0
      %v1202 = vadd.f32 %v1074, 0.0
      %v1203 = vadd.f32 %v1075, 0.0
      %1204 = vset.pattern.permute.xlu0 1
      %1205 = vperm.xlu0 %1204, %v174
      %v1206 = vpop.permute.xlu0 %1205
      %1208 = vset.pattern.permute.xlu0 1
      %1209 = vperm.xlu0 %1208, %v175
      %v1210 = vpop.permute.xlu0 %1209
      %1212 = vset.pattern.permute.xlu0 1
      %1213 = vperm.xlu0 %1212, %v176
      %v1214 = vpop.permute.xlu0 %1213
      %1216 = vset.pattern.permute.xlu0 1
      %1217 = vperm.xlu0 %1216, %v177
      %v1218 = vpop.permute.xlu0 %1217
      %1220 = vset.pattern.permute.xlu0 1
      %1221 = vperm.xlu0 %1220, %v178
      %v1222 = vpop.permute.xlu0 %1221
      %1224 = vset.pattern.permute.xlu0 1
      %1225 = vperm.xlu0 %1224, %v179
      %v1226 = vpop.permute.xlu0 %1225
      %1228 = vset.pattern.permute.xlu0 1
      %1229 = vperm.xlu0 %1228, %v180
      %v1230 = vpop.permute.xlu0 %1229
      %1232 = vset.pattern.permute.xlu0 1
      %1233 = vperm.xlu0 %1232, %v181
      %v1234 = vpop.permute.xlu0 %1233
      %1236 = vset.pattern.permute.xlu0 1
      %1237 = vperm.xlu0 %1236, %v182
      %v1238 = vpop.permute.xlu0 %1237
      %1240 = vset.pattern.permute.xlu0 1
      %1241 = vperm.xlu0 %1240, %v183
      %v1242 = vpop.permute.xlu0 %1241
      %1244 = vset.pattern.permute.xlu0 1
      %1245 = vperm.xlu0 %1244, %v184
      %v1246 = vpop.permute.xlu0 %1245
      %1248 = vset.pattern.permute.xlu0 1
      %1249 = vperm.xlu0 %1248, %v185
      %v1250 = vpop.permute.xlu0 %1249
      %1252 = vset.pattern.permute.xlu0 1
      %1253 = vperm.xlu0 %1252, %v186
      %v1254 = vpop.permute.xlu0 %1253
      %1256 = vset.pattern.permute.xlu0 1
      %1257 = vperm.xlu0 %1256, %v187
      %v1258 = vpop.permute.xlu0 %1257
      %1260 = vset.pattern.permute.xlu0 1
      %1261 = vperm.xlu0 %1260, %v188
      %v1262 = vpop.permute.xlu0 %1261
      %1264 = vset.pattern.permute.xlu0 1
      %1265 = vperm.xlu0 %1264, %v189
      %v1266 = vpop.permute.xlu0 %1265
      %1268 = vset.pattern.permute.xlu0 1
      %1269 = vperm.xlu0 %1268, %v190
      %v1270 = vpop.permute.xlu0 %1269
      %1272 = vset.pattern.permute.xlu0 1
      %1273 = vperm.xlu0 %1272, %v191
      %v1274 = vpop.permute.xlu0 %1273
      %1276 = vset.pattern.permute.xlu0 1
      %1277 = vperm.xlu0 %1276, %v192
      %v1278 = vpop.permute.xlu0 %1277
      %1280 = vset.pattern.permute.xlu0 1
      %1281 = vperm.xlu0 %1280, %v193
      %v1282 = vpop.permute.xlu0 %1281
      %1284 = vset.pattern.permute.xlu0 1
      %1285 = vperm.xlu0 %1284, %v194
      %v1286 = vpop.permute.xlu0 %1285
      %1288 = vset.pattern.permute.xlu0 1
      %1289 = vperm.xlu0 %1288, %v195
      %v1290 = vpop.permute.xlu0 %1289
      %1292 = vset.pattern.permute.xlu0 1
      %1293 = vperm.xlu0 %1292, %v196
      %v1294 = vpop.permute.xlu0 %1293
      %1296 = vset.pattern.permute.xlu0 1
      %1297 = vperm.xlu0 %1296, %v197
      %v1298 = vpop.permute.xlu0 %1297
      %1300 = vset.pattern.permute.xlu0 1
      %1301 = vperm.xlu0 %1300, %v198
      %v1302 = vpop.permute.xlu0 %1301
      %1304 = vset.pattern.permute.xlu0 1
      %1305 = vperm.xlu0 %1304, %v199
      %v1306 = vpop.permute.xlu0 %1305
      %1308 = vset.pattern.permute.xlu0 1
      %1309 = vperm.xlu0 %1308, %v200
      %v1310 = vpop.permute.xlu0 %1309
      %1312 = vset.pattern.permute.xlu0 1
      %1313 = vperm.xlu0 %1312, %v201
      %v1314 = vpop.permute.xlu0 %1313
      %1316 = vset.pattern.permute.xlu0 1
      %1317 = vperm.xlu0 %1316, %v202
      %v1318 = vpop.permute.xlu0 %1317
      %1320 = vset.pattern.permute.xlu0 1
      %1321 = vperm.xlu0 %1320, %v203
      %v1322 = vpop.permute.xlu0 %1321
      %1324 = vset.pattern.permute.xlu0 1
      %1325 = vperm.xlu0 %1324, %v204
      %v1326 = vpop.permute.xlu0 %1325
      %1328 = vset.pattern.permute.xlu0 1
      %1329 = vperm.xlu0 %1328, %v205
      %v1330 = vpop.permute.xlu0 %1329
      %1332 = vset.pattern.permute.xlu0 1
      %1333 = vperm.xlu0 %1332, %v206
      %v1334 = vpop.permute.xlu0 %1333
      %1336 = vset.pattern.permute.xlu0 1
      %1337 = vperm.xlu0 %1336, %v207
      %v1338 = vpop.permute.xlu0 %1337
      %1340 = vset.pattern.permute.xlu0 1
      %1341 = vperm.xlu0 %1340, %v208
      %v1342 = vpop.permute.xlu0 %1341
      %1344 = vset.pattern.permute.xlu0 1
      %1345 = vperm.xlu0 %1344, %v209
      %v1346 = vpop.permute.xlu0 %1345
      %1348 = vset.pattern.permute.xlu0 1
      %1349 = vperm.xlu0 %1348, %v210
      %v1350 = vpop.permute.xlu0 %1349
      %1352 = vset.pattern.permute.xlu0 1
      %1353 = vperm.xlu0 %1352, %v211
      %v1354 = vpop.permute.xlu0 %1353
      %1356 = vset.pattern.permute.xlu0 1
      %1357 = vperm.xlu0 %1356, %v212
      %v1358 = vpop.permute.xlu0 %1357
      %1360 = vset.pattern.permute.xlu0 1
      %1361 = vperm.xlu0 %1360, %v213
      %v1362 = vpop.permute.xlu0 %1361
      %1364 = vset.pattern.permute.xlu0 1
      %1365 = vperm.xlu0 %1364, %v214
      %v1366 = vpop.permute.xlu0 %1365
      %1368 = vset.pattern.permute.xlu0 1
      %1369 = vperm.xlu0 %1368, %v215
      %v1370 = vpop.permute.xlu0 %1369
      %1372 = vset.pattern.permute.xlu0 1
      %1373 = vperm.xlu0 %1372, %v216
      %v1374 = vpop.permute.xlu0 %1373
      %1376 = vset.pattern.permute.xlu0 1
      %1377 = vperm.xlu0 %1376, %v217
      %v1378 = vpop.permute.xlu0 %1377
      %1380 = vset.pattern.permute.xlu0 1
      %1381 = vperm.xlu0 %1380, %v218
      %v1382 = vpop.permute.xlu0 %1381
      %1384 = vset.pattern.permute.xlu0 1
      %1385 = vperm.xlu0 %1384, %v219
      %v1386 = vpop.permute.xlu0 %1385
      %1388 = vset.pattern.permute.xlu0 1
      %1389 = vperm.xlu0 %1388, %v220
      %v1390 = vpop.permute.xlu0 %1389
      %1392 = vset.pattern.permute.xlu0 1
      %1393 = vperm.xlu0 %1392, %v221
      %v1394 = vpop.permute.xlu0 %1393
      %1396 = vset.pattern.permute.xlu0 1
      %1397 = vperm.xlu0 %1396, %v222
      %v1398 = vpop.permute.xlu0 %1397
      %1400 = vset.pattern.permute.xlu0 1
      %1401 = vperm.xlu0 %1400, %v223
      %v1402 = vpop.permute.xlu0 %1401
      %1404 = vset.pattern.permute.xlu0 1
      %1405 = vperm.xlu0 %1404, %v224
      %v1406 = vpop.permute.xlu0 %1405
      %1408 = vset.pattern.permute.xlu0 1
      %1409 = vperm.xlu0 %1408, %v225
      %v1410 = vpop.permute.xlu0 %1409
      %1412 = vset.pattern.permute.xlu0 1
      %1413 = vperm.xlu0 %1412, %v226
      %v1414 = vpop.permute.xlu0 %1413
      %1416 = vset.pattern.permute.xlu0 1
      %1417 = vperm.xlu0 %1416, %v227
      %v1418 = vpop.permute.xlu0 %1417
      %1420 = vset.pattern.permute.xlu0 1
      %1421 = vperm.xlu0 %1420, %v228
      %v1422 = vpop.permute.xlu0 %1421
      %1424 = vset.pattern.permute.xlu0 1
      %1425 = vperm.xlu0 %1424, %v229
      %v1426 = vpop.permute.xlu0 %1425
      %1428 = vset.pattern.permute.xlu0 1
      %1429 = vperm.xlu0 %1428, %v230
      %v1430 = vpop.permute.xlu0 %1429
      %1432 = vset.pattern.permute.xlu0 1
      %1433 = vperm.xlu0 %1432, %v231
      %v1434 = vpop.permute.xlu0 %1433
      %1436 = vset.pattern.permute.xlu0 1
      %1437 = vperm.xlu0 %1436, %v232
      %v1438 = vpop.permute.xlu0 %1437
      %1440 = vset.pattern.permute.xlu0 1
      %1441 = vperm.xlu0 %1440, %v233
      %v1442 = vpop.permute.xlu0 %1441
      %1444 = vset.pattern.permute.xlu0 1
      %1445 = vperm.xlu0 %1444, %v234
      %v1446 = vpop.permute.xlu0 %1445
      %1448 = vset.pattern.permute.xlu0 1
      %1449 = vperm.xlu0 %1448, %v235
      %v1450 = vpop.permute.xlu0 %1449
      %1452 = vset.pattern.permute.xlu0 1
      %1453 = vperm.xlu0 %1452, %v236
      %v1454 = vpop.permute.xlu0 %1453
      %1456 = vset.pattern.permute.xlu0 1
      %1457 = vperm.xlu0 %1456, %v237
      %v1458 = vpop.permute.xlu0 %1457
      %1460 = vset.pattern.permute.xlu0 1
      %1461 = vperm.xlu0 %1460, %v238
      %v1462 = vpop.permute.xlu0 %1461
      %1464 = vset.pattern.permute.xlu0 1
      %1465 = vperm.xlu0 %1464, %v239
      %v1466 = vpop.permute.xlu0 %1465
      %1468 = vset.pattern.permute.xlu0 1
      %1469 = vperm.xlu0 %1468, %v240
      %v1470 = vpop.permute.xlu0 %1469
      %1472 = vset.pattern.permute.xlu0 1
      %1473 = vperm.xlu0 %1472, %v241
      %v1474 = vpop.permute.xlu0 %1473
      %1476 = vset.pattern.permute.xlu0 1
      %1477 = vperm.xlu0 %1476, %v242
      %v1478 = vpop.permute.xlu0 %1477
      %1480 = vset.pattern.permute.xlu0 1
      %1481 = vperm.xlu0 %1480, %v243
      %v1482 = vpop.permute.xlu0 %1481
      %1484 = vset.pattern.permute.xlu0 1
      %1485 = vperm.xlu0 %1484, %v244
      %v1486 = vpop.permute.xlu0 %1485
      %1488 = vset.pattern.permute.xlu0 1
      %1489 = vperm.xlu0 %1488, %v245
      %v1490 = vpop.permute.xlu0 %1489
      %1492 = vset.pattern.permute.xlu0 1
      %1493 = vperm.xlu0 %1492, %v246
      %v1494 = vpop.permute.xlu0 %1493
      %1496 = vset.pattern.permute.xlu0 1
      %1497 = vperm.xlu0 %1496, %v247
      %v1498 = vpop.permute.xlu0 %1497
      %1500 = vset.pattern.permute.xlu0 1
      %1501 = vperm.xlu0 %1500, %v248
      %v1502 = vpop.permute.xlu0 %1501
      %1504 = vset.pattern.permute.xlu0 1
      %1505 = vperm.xlu0 %1504, %v249
      %v1506 = vpop.permute.xlu0 %1505
      %1508 = vset.pattern.permute.xlu0 1
      %1509 = vperm.xlu0 %1508, %v250
      %v1510 = vpop.permute.xlu0 %1509
      %1512 = vset.pattern.permute.xlu0 1
      %1513 = vperm.xlu0 %1512, %v251
      %v1514 = vpop.permute.xlu0 %1513
      %1516 = vset.pattern.permute.xlu0 1
      %1517 = vperm.xlu0 %1516, %v252
      %v1518 = vpop.permute.xlu0 %1517
      %1520 = vset.pattern.permute.xlu0 1
      %1521 = vperm.xlu0 %1520, %v253
      %v1522 = vpop.permute.xlu0 %1521
      %1524 = vset.pattern.permute.xlu0 1
      %1525 = vperm.xlu0 %1524, %v254
      %v1526 = vpop.permute.xlu0 %1525
      %1528 = vset.pattern.permute.xlu0 1
      %1529 = vperm.xlu0 %1528, %v255
      %v1530 = vpop.permute.xlu0 %1529
      %1532 = vset.pattern.permute.xlu0 1
      %1533 = vperm.xlu0 %1532, %v256
      %v1534 = vpop.permute.xlu0 %1533
      %1536 = vset.pattern.permute.xlu0 1
      %1537 = vperm.xlu0 %1536, %v257
      %v1538 = vpop.permute.xlu0 %1537
      %1540 = vset.pattern.permute.xlu0 1
      %1541 = vperm.xlu0 %1540, %v258
      %v1542 = vpop.permute.xlu0 %1541
      %1544 = vset.pattern.permute.xlu0 1
      %1545 = vperm.xlu0 %1544, %v259
      %v1546 = vpop.permute.xlu0 %1545
      %1548 = vset.pattern.permute.xlu0 1
      %1549 = vperm.xlu0 %1548, %v260
      %v1550 = vpop.permute.xlu0 %1549
      %1552 = vset.pattern.permute.xlu0 1
      %1553 = vperm.xlu0 %1552, %v261
      %v1554 = vpop.permute.xlu0 %1553
      %1556 = vset.pattern.permute.xlu0 1
      %1557 = vperm.xlu0 %1556, %v262
      %v1558 = vpop.permute.xlu0 %1557
      %1560 = vset.pattern.permute.xlu0 1
      %1561 = vperm.xlu0 %1560, %v263
      %v1562 = vpop.permute.xlu0 %1561
      %1564 = vset.pattern.permute.xlu0 1
      %1565 = vperm.xlu0 %1564, %v264
      %v1566 = vpop.permute.xlu0 %1565
      %1568 = vset.pattern.permute.xlu0 1
      %1569 = vperm.xlu0 %1568, %v265
      %v1570 = vpop.permute.xlu0 %1569
      %1572 = vset.pattern.permute.xlu0 1
      %1573 = vperm.xlu0 %1572, %v266
      %v1574 = vpop.permute.xlu0 %1573
      %1576 = vset.pattern.permute.xlu0 1
      %1577 = vperm.xlu0 %1576, %v267
      %v1578 = vpop.permute.xlu0 %1577
      %1580 = vset.pattern.permute.xlu0 1
      %1581 = vperm.xlu0 %1580, %v268
      %v1582 = vpop.permute.xlu0 %1581
      %1584 = vset.pattern.permute.xlu0 1
      %1585 = vperm.xlu0 %1584, %v269
      %v1586 = vpop.permute.xlu0 %1585
      %1588 = vset.pattern.permute.xlu0 1
      %1589 = vperm.xlu0 %1588, %v270
      %v1590 = vpop.permute.xlu0 %1589
      %1592 = vset.pattern.permute.xlu0 1
      %1593 = vperm.xlu0 %1592, %v271
      %v1594 = vpop.permute.xlu0 %1593
      %1596 = vset.pattern.permute.xlu0 1
      %1597 = vperm.xlu0 %1596, %v272
      %v1598 = vpop.permute.xlu0 %1597
      %1600 = vset.pattern.permute.xlu0 1
      %1601 = vperm.xlu0 %1600, %v273
      %v1602 = vpop.permute.xlu0 %1601
      %1604 = vset.pattern.permute.xlu0 1
      %1605 = vperm.xlu0 %1604, %v274
      %v1606 = vpop.permute.xlu0 %1605
      %1608 = vset.pattern.permute.xlu0 1
      %1609 = vperm.xlu0 %1608, %v275
      %v1610 = vpop.permute.xlu0 %1609
      %1612 = vset.pattern.permute.xlu0 1
      %1613 = vperm.xlu0 %1612, %v276
      %v1614 = vpop.permute.xlu0 %1613
      %1616 = vset.pattern.permute.xlu0 1
      %1617 = vperm.xlu0 %1616, %v277
      %v1618 = vpop.permute.xlu0 %1617
      %1620 = vset.pattern.permute.xlu0 1
      %1621 = vperm.xlu0 %1620, %v278
      %v1622 = vpop.permute.xlu0 %1621
      %1624 = vset.pattern.permute.xlu0 1
      %1625 = vperm.xlu0 %1624, %v279
      %v1626 = vpop.permute.xlu0 %1625
      %1628 = vset.pattern.permute.xlu0 1
      %1629 = vperm.xlu0 %1628, %v280
      %v1630 = vpop.permute.xlu0 %1629
      %1632 = vset.pattern.permute.xlu0 1
      %1633 = vperm.xlu0 %1632, %v281
      %v1634 = vpop.permute.xlu0 %1633
      %1636 = vset.pattern.permute.xlu0 1
      %1637 = vperm.xlu0 %1636, %v282
      %v1638 = vpop.permute.xlu0 %1637
      %1640 = vset.pattern.permute.xlu0 1
      %1641 = vperm.xlu0 %1640, %v283
      %v1642 = vpop.permute.xlu0 %1641
      %1644 = vset.pattern.permute.xlu0 1
      %1645 = vperm.xlu0 %1644, %v284
      %v1646 = vpop.permute.xlu0 %1645
      %1648 = vset.pattern.permute.xlu0 1
      %1649 = vperm.xlu0 %1648, %v285
      %v1650 = vpop.permute.xlu0 %1649
      %1652 = vset.pattern.permute.xlu0 1
      %1653 = vperm.xlu0 %1652, %v286
      %v1654 = vpop.permute.xlu0 %1653
      %1656 = vset.pattern.permute.xlu0 1
      %1657 = vperm.xlu0 %1656, %v287
      %v1658 = vpop.permute.xlu0 %1657
      %1660 = vset.pattern.permute.xlu0 1
      %1661 = vperm.xlu0 %1660, %v288
      %v1662 = vpop.permute.xlu0 %1661
      %1664 = vset.pattern.permute.xlu0 1
      %1665 = vperm.xlu0 %1664, %v289
      %v1666 = vpop.permute.xlu0 %1665
      %1668 = vset.pattern.permute.xlu0 1
      %1669 = vperm.xlu0 %1668, %v290
      %v1670 = vpop.permute.xlu0 %1669
      %1672 = vset.pattern.permute.xlu0 1
      %1673 = vperm.xlu0 %1672, %v291
      %v1674 = vpop.permute.xlu0 %1673
      %1676 = vset.pattern.permute.xlu0 1
      %1677 = vperm.xlu0 %1676, %v292
      %v1678 = vpop.permute.xlu0 %1677
      %1680 = vset.pattern.permute.xlu0 1
      %1681 = vperm.xlu0 %1680, %v293
      %v1682 = vpop.permute.xlu0 %1681
      %1684 = vset.pattern.permute.xlu0 1
      %1685 = vperm.xlu0 %1684, %v294
      %v1686 = vpop.permute.xlu0 %1685
      %1688 = vset.pattern.permute.xlu0 1
      %1689 = vperm.xlu0 %1688, %v295
      %v1690 = vpop.permute.xlu0 %1689
      %1692 = vset.pattern.permute.xlu0 1
      %1693 = vperm.xlu0 %1692, %v296
      %v1694 = vpop.permute.xlu0 %1693
      %1696 = vset.pattern.permute.xlu0 1
      %1697 = vperm.xlu0 %1696, %v297
      %v1698 = vpop.permute.xlu0 %1697
      %1700 = vset.pattern.permute.xlu0 1
      %1701 = vperm.xlu0 %1700, %v298
      %v1702 = vpop.permute.xlu0 %1701
      %1704 = vset.pattern.permute.xlu0 1
      %1705 = vperm.xlu0 %1704, %v299
      %v1706 = vpop.permute.xlu0 %1705
      %1708 = vset.pattern.permute.xlu0 1
      %1709 = vperm.xlu0 %1708, %v300
      %v1710 = vpop.permute.xlu0 %1709
      %1712 = vset.pattern.permute.xlu0 1
      %1713 = vperm.xlu0 %1712, %v301
      %v1714 = vpop.permute.xlu0 %1713
      %v1716 = vlaneseq
      %v1717 = vshrl.u32 %v1716, 7
      %v1718 = vsub.s32 1, %v1717
      %v1719 = vrot.slane %v302, %v1718
      %v1720 = vmul.f32 %v1206, %v1719
      %v1721 = vmul.f32 %v1210, %v1719
      %v1722 = vmul.f32 %v1214, %v1719
      %v1723 = vmul.f32 %v1218, %v1719
      %v1724 = vmul.f32 %v1222, %v1719
      %v1725 = vmul.f32 %v1226, %v1719
      %v1726 = vmul.f32 %v1230, %v1719
      %v1727 = vmul.f32 %v1234, %v1719
      %v1728 = vmul.f32 %v1238, %v1719
      %v1729 = vmul.f32 %v1242, %v1719
      %v1730 = vmul.f32 %v1246, %v1719
      %v1731 = vmul.f32 %v1250, %v1719
      %v1732 = vmul.f32 %v1254, %v1719
      %v1733 = vmul.f32 %v1258, %v1719
      %v1734 = vmul.f32 %v1262, %v1719
      %v1735 = vmul.f32 %v1266, %v1719
      %v1736 = vmul.f32 %v1270, %v1719
      %v1737 = vmul.f32 %v1274, %v1719
      %v1738 = vmul.f32 %v1278, %v1719
      %v1739 = vmul.f32 %v1282, %v1719
      %v1740 = vmul.f32 %v1286, %v1719
      %v1741 = vmul.f32 %v1290, %v1719
      %v1742 = vmul.f32 %v1294, %v1719
      %v1743 = vmul.f32 %v1298, %v1719
      %v1744 = vmul.f32 %v1302, %v1719
      %v1745 = vmul.f32 %v1306, %v1719
      %v1746 = vmul.f32 %v1310, %v1719
      %v1747 = vmul.f32 %v1314, %v1719
      %v1748 = vmul.f32 %v1318, %v1719
      %v1749 = vmul.f32 %v1322, %v1719
      %v1750 = vmul.f32 %v1326, %v1719
      %v1751 = vmul.f32 %v1330, %v1719
      %v1752 = vmul.f32 %v1334, %v1719
      %v1753 = vmul.f32 %v1338, %v1719
      %v1754 = vmul.f32 %v1342, %v1719
      %v1755 = vmul.f32 %v1346, %v1719
      %v1756 = vmul.f32 %v1350, %v1719
      %v1757 = vmul.f32 %v1354, %v1719
      %v1758 = vmul.f32 %v1358, %v1719
      %v1759 = vmul.f32 %v1362, %v1719
      %v1760 = vmul.f32 %v1366, %v1719
      %v1761 = vmul.f32 %v1370, %v1719
      %v1762 = vmul.f32 %v1374, %v1719
      %v1763 = vmul.f32 %v1378, %v1719
      %v1764 = vmul.f32 %v1382, %v1719
      %v1765 = vmul.f32 %v1386, %v1719
      %v1766 = vmul.f32 %v1390, %v1719
      %v1767 = vmul.f32 %v1394, %v1719
      %v1768 = vmul.f32 %v1398, %v1719
      %v1769 = vmul.f32 %v1402, %v1719
      %v1770 = vmul.f32 %v1406, %v1719
      %v1771 = vmul.f32 %v1410, %v1719
      %v1772 = vmul.f32 %v1414, %v1719
      %v1773 = vmul.f32 %v1418, %v1719
      %v1774 = vmul.f32 %v1422, %v1719
      %v1775 = vmul.f32 %v1426, %v1719
      %v1776 = vmul.f32 %v1430, %v1719
      %v1777 = vmul.f32 %v1434, %v1719
      %v1778 = vmul.f32 %v1438, %v1719
      %v1779 = vmul.f32 %v1442, %v1719
      %v1780 = vmul.f32 %v1446, %v1719
      %v1781 = vmul.f32 %v1450, %v1719
      %v1782 = vmul.f32 %v1454, %v1719
      %v1783 = vmul.f32 %v1458, %v1719
      %v1784 = vmul.f32 %v1462, %v1719
      %v1785 = vmul.f32 %v1466, %v1719
      %v1786 = vmul.f32 %v1470, %v1719
      %v1787 = vmul.f32 %v1474, %v1719
      %v1788 = vmul.f32 %v1478, %v1719
      %v1789 = vmul.f32 %v1482, %v1719
      %v1790 = vmul.f32 %v1486, %v1719
      %v1791 = vmul.f32 %v1490, %v1719
      %v1792 = vmul.f32 %v1494, %v1719
      %v1793 = vmul.f32 %v1498, %v1719
      %v1794 = vmul.f32 %v1502, %v1719
      %v1795 = vmul.f32 %v1506, %v1719
      %v1796 = vmul.f32 %v1510, %v1719
      %v1797 = vmul.f32 %v1514, %v1719
      %v1798 = vmul.f32 %v1518, %v1719
      %v1799 = vmul.f32 %v1522, %v1719
      %v1800 = vmul.f32 %v1526, %v1719
      %v1801 = vmul.f32 %v1530, %v1719
      %v1802 = vmul.f32 %v1534, %v1719
      %v1803 = vmul.f32 %v1538, %v1719
      %v1804 = vmul.f32 %v1542, %v1719
      %v1805 = vmul.f32 %v1546, %v1719
      %v1806 = vmul.f32 %v1550, %v1719
      %v1807 = vmul.f32 %v1554, %v1719
      %v1808 = vmul.f32 %v1558, %v1719
      %v1809 = vmul.f32 %v1562, %v1719
      %v1810 = vmul.f32 %v1566, %v1719
      %v1811 = vmul.f32 %v1570, %v1719
      %v1812 = vmul.f32 %v1574, %v1719
      %v1813 = vmul.f32 %v1578, %v1719
      %v1814 = vmul.f32 %v1582, %v1719
      %v1815 = vmul.f32 %v1586, %v1719
      %v1816 = vmul.f32 %v1590, %v1719
      %v1817 = vmul.f32 %v1594, %v1719
      %v1818 = vmul.f32 %v1598, %v1719
      %v1819 = vmul.f32 %v1602, %v1719
      %v1820 = vmul.f32 %v1606, %v1719
      %v1821 = vmul.f32 %v1610, %v1719
      %v1822 = vmul.f32 %v1614, %v1719
      %v1823 = vmul.f32 %v1618, %v1719
      %v1824 = vmul.f32 %v1622, %v1719
      %v1825 = vmul.f32 %v1626, %v1719
      %v1826 = vmul.f32 %v1630, %v1719
      %v1827 = vmul.f32 %v1634, %v1719
      %v1828 = vmul.f32 %v1638, %v1719
      %v1829 = vmul.f32 %v1642, %v1719
      %v1830 = vmul.f32 %v1646, %v1719
      %v1831 = vmul.f32 %v1650, %v1719
      %v1832 = vmul.f32 %v1654, %v1719
      %v1833 = vmul.f32 %v1658, %v1719
      %v1834 = vmul.f32 %v1662, %v1719
      %v1835 = vmul.f32 %v1666, %v1719
      %v1836 = vmul.f32 %v1670, %v1719
      %v1837 = vmul.f32 %v1674, %v1719
      %v1838 = vmul.f32 %v1678, %v1719
      %v1839 = vmul.f32 %v1682, %v1719
      %v1840 = vmul.f32 %v1686, %v1719
      %v1841 = vmul.f32 %v1690, %v1719
      %v1842 = vmul.f32 %v1694, %v1719
      %v1843 = vmul.f32 %v1698, %v1719
      %v1844 = vmul.f32 %v1702, %v1719
      %v1845 = vmul.f32 %v1706, %v1719
      %v1846 = vmul.f32 %v1710, %v1719
      %v1847 = vmul.f32 %v1714, %v1719
      %v1848 = vadd.f32 %v1076, %v1720
      %v1849 = vadd.f32 %v1077, %v1721
      %v1850 = vadd.f32 %v1078, %v1722
      %v1851 = vadd.f32 %v1079, %v1723
      %v1852 = vadd.f32 %v1080, %v1724
      %v1853 = vadd.f32 %v1081, %v1725
      %v1854 = vadd.f32 %v1082, %v1726
      %v1855 = vadd.f32 %v1083, %v1727
      %v1856 = vadd.f32 %v1084, %v1728
      %v1857 = vadd.f32 %v1085, %v1729
      %v1858 = vadd.f32 %v1086, %v1730
      %v1859 = vadd.f32 %v1087, %v1731
      %v1860 = vadd.f32 %v1088, %v1732
      %v1861 = vadd.f32 %v1089, %v1733
      %v1862 = vadd.f32 %v1090, %v1734
      %v1863 = vadd.f32 %v1091, %v1735
      %v1864 = vadd.f32 %v1092, %v1736
      %v1865 = vadd.f32 %v1093, %v1737
      %v1866 = vadd.f32 %v1094, %v1738
      %v1867 = vadd.f32 %v1095, %v1739
      %v1868 = vadd.f32 %v1096, %v1740
      %v1869 = vadd.f32 %v1097, %v1741
      %v1870 = vadd.f32 %v1098, %v1742
      %v1871 = vadd.f32 %v1099, %v1743
      %v1872 = vadd.f32 %v1100, %v1744
      %v1873 = vadd.f32 %v1101, %v1745
      %v1874 = vadd.f32 %v1102, %v1746
      %v1875 = vadd.f32 %v1103, %v1747
      %v1876 = vadd.f32 %v1104, %v1748
      %v1877 = vadd.f32 %v1105, %v1749
      %v1878 = vadd.f32 %v1106, %v1750
      %v1879 = vadd.f32 %v1107, %v1751
      %v1880 = vadd.f32 %v1108, %v1752
      %v1881 = vadd.f32 %v1109, %v1753
      %v1882 = vadd.f32 %v1110, %v1754
      %v1883 = vadd.f32 %v1111, %v1755
      %v1884 = vadd.f32 %v1112, %v1756
      %v1885 = vadd.f32 %v1113, %v1757
      %v1886 = vadd.f32 %v1114, %v1758
      %v1887 = vadd.f32 %v1115, %v1759
      %v1888 = vadd.f32 %v1116, %v1760
      %v1889 = vadd.f32 %v1117, %v1761
      %v1890 = vadd.f32 %v1118, %v1762
      %v1891 = vadd.f32 %v1119, %v1763
      %v1892 = vadd.f32 %v1120, %v1764
      %v1893 = vadd.f32 %v1121, %v1765
      %v1894 = vadd.f32 %v1122, %v1766
      %v1895 = vadd.f32 %v1123, %v1767
      %v1896 = vadd.f32 %v1124, %v1768
      %v1897 = vadd.f32 %v1125, %v1769
      %v1898 = vadd.f32 %v1126, %v1770
      %v1899 = vadd.f32 %v1127, %v1771
      %v1900 = vadd.f32 %v1128, %v1772
      %v1901 = vadd.f32 %v1129, %v1773
      %v1902 = vadd.f32 %v1130, %v1774
      %v1903 = vadd.f32 %v1131, %v1775
      %v1904 = vadd.f32 %v1132, %v1776
      %v1905 = vadd.f32 %v1133, %v1777
      %v1906 = vadd.f32 %v1134, %v1778
      %v1907 = vadd.f32 %v1135, %v1779
      %v1908 = vadd.f32 %v1136, %v1780
      %v1909 = vadd.f32 %v1137, %v1781
      %v1910 = vadd.f32 %v1138, %v1782
      %v1911 = vadd.f32 %v1139, %v1783
      %v1912 = vadd.f32 %v1140, %v1784
      %v1913 = vadd.f32 %v1141, %v1785
      %v1914 = vadd.f32 %v1142, %v1786
      %v1915 = vadd.f32 %v1143, %v1787
      %v1916 = vadd.f32 %v1144, %v1788
      %v1917 = vadd.f32 %v1145, %v1789
      %v1918 = vadd.f32 %v1146, %v1790
      %v1919 = vadd.f32 %v1147, %v1791
      %v1920 = vadd.f32 %v1148, %v1792
      %v1921 = vadd.f32 %v1149, %v1793
      %v1922 = vadd.f32 %v1150, %v1794
      %v1923 = vadd.f32 %v1151, %v1795
      %v1924 = vadd.f32 %v1152, %v1796
      %v1925 = vadd.f32 %v1153, %v1797
      %v1926 = vadd.f32 %v1154, %v1798
      %v1927 = vadd.f32 %v1155, %v1799
      %v1928 = vadd.f32 %v1156, %v1800
      %v1929 = vadd.f32 %v1157, %v1801
      %v1930 = vadd.f32 %v1158, %v1802
      %v1931 = vadd.f32 %v1159, %v1803
      %v1932 = vadd.f32 %v1160, %v1804
      %v1933 = vadd.f32 %v1161, %v1805
      %v1934 = vadd.f32 %v1162, %v1806
      %v1935 = vadd.f32 %v1163, %v1807
      %v1936 = vadd.f32 %v1164, %v1808
      %v1937 = vadd.f32 %v1165, %v1809
      %v1938 = vadd.f32 %v1166, %v1810
      %v1939 = vadd.f32 %v1167, %v1811
      %v1940 = vadd.f32 %v1168, %v1812
      %v1941 = vadd.f32 %v1169, %v1813
      %v1942 = vadd.f32 %v1170, %v1814
      %v1943 = vadd.f32 %v1171, %v1815
      %v1944 = vadd.f32 %v1172, %v1816
      %v1945 = vadd.f32 %v1173, %v1817
      %v1946 = vadd.f32 %v1174, %v1818
      %v1947 = vadd.f32 %v1175, %v1819
      %v1948 = vadd.f32 %v1176, %v1820
      %v1949 = vadd.f32 %v1177, %v1821
      %v1950 = vadd.f32 %v1178, %v1822
      %v1951 = vadd.f32 %v1179, %v1823
      %v1952 = vadd.f32 %v1180, %v1824
      %v1953 = vadd.f32 %v1181, %v1825
      %v1954 = vadd.f32 %v1182, %v1826
      %v1955 = vadd.f32 %v1183, %v1827
      %v1956 = vadd.f32 %v1184, %v1828
      %v1957 = vadd.f32 %v1185, %v1829
      %v1958 = vadd.f32 %v1186, %v1830
      %v1959 = vadd.f32 %v1187, %v1831
      %v1960 = vadd.f32 %v1188, %v1832
      %v1961 = vadd.f32 %v1189, %v1833
      %v1962 = vadd.f32 %v1190, %v1834
      %v1963 = vadd.f32 %v1191, %v1835
      %v1964 = vadd.f32 %v1192, %v1836
      %v1965 = vadd.f32 %v1193, %v1837
      %v1966 = vadd.f32 %v1194, %v1838
      %v1967 = vadd.f32 %v1195, %v1839
      %v1968 = vadd.f32 %v1196, %v1840
      %v1969 = vadd.f32 %v1197, %v1841
      %v1970 = vadd.f32 %v1198, %v1842
      %v1971 = vadd.f32 %v1199, %v1843
      %v1972 = vadd.f32 %v1200, %v1844
      %v1973 = vadd.f32 %v1201, %v1845
      %v1974 = vadd.f32 %v1202, %v1846
      %v1975 = vadd.f32 %v1203, %v1847
      %1976 = vset.pattern.permute.xlu0 2
      %1977 = vperm.xlu0 %1976, %v174
      %v1978 = vpop.permute.xlu0 %1977
      %1980 = vset.pattern.permute.xlu0 2
      %1981 = vperm.xlu0 %1980, %v175
      %v1982 = vpop.permute.xlu0 %1981
      %1984 = vset.pattern.permute.xlu0 2
      %1985 = vperm.xlu0 %1984, %v176
      %v1986 = vpop.permute.xlu0 %1985
      %1988 = vset.pattern.permute.xlu0 2
      %1989 = vperm.xlu0 %1988, %v177
      %v1990 = vpop.permute.xlu0 %1989
      %1992 = vset.pattern.permute.xlu0 2
      %1993 = vperm.xlu0 %1992, %v178
      %v1994 = vpop.permute.xlu0 %1993
      %1996 = vset.pattern.permute.xlu0 2
      %1997 = vperm.xlu0 %1996, %v179
      %v1998 = vpop.permute.xlu0 %1997
      %2000 = vset.pattern.permute.xlu0 2
      %2001 = vperm.xlu0 %2000, %v180
      %v2002 = vpop.permute.xlu0 %2001
      %2004 = vset.pattern.permute.xlu0 2
      %2005 = vperm.xlu0 %2004, %v181
      %v2006 = vpop.permute.xlu0 %2005
      %2008 = vset.pattern.permute.xlu0 2
      %2009 = vperm.xlu0 %2008, %v182
      %v2010 = vpop.permute.xlu0 %2009
      %2012 = vset.pattern.permute.xlu0 2
      %2013 = vperm.xlu0 %2012, %v183
      %v2014 = vpop.permute.xlu0 %2013
      %2016 = vset.pattern.permute.xlu0 2
      %2017 = vperm.xlu0 %2016, %v184
      %v2018 = vpop.permute.xlu0 %2017
      %2020 = vset.pattern.permute.xlu0 2
      %2021 = vperm.xlu0 %2020, %v185
      %v2022 = vpop.permute.xlu0 %2021
      %2024 = vset.pattern.permute.xlu0 2
      %2025 = vperm.xlu0 %2024, %v186
      %v2026 = vpop.permute.xlu0 %2025
      %2028 = vset.pattern.permute.xlu0 2
      %2029 = vperm.xlu0 %2028, %v187
      %v2030 = vpop.permute.xlu0 %2029
      %2032 = vset.pattern.permute.xlu0 2
      %2033 = vperm.xlu0 %2032, %v188
      %v2034 = vpop.permute.xlu0 %2033
      %2036 = vset.pattern.permute.xlu0 2
      %2037 = vperm.xlu0 %2036, %v189
      %v2038 = vpop.permute.xlu0 %2037
      %2040 = vset.pattern.permute.xlu0 2
      %2041 = vperm.xlu0 %2040, %v190
      %v2042 = vpop.permute.xlu0 %2041
      %2044 = vset.pattern.permute.xlu0 2
      %2045 = vperm.xlu0 %2044, %v191
      %v2046 = vpop.permute.xlu0 %2045
      %2048 = vset.pattern.permute.xlu0 2
      %2049 = vperm.xlu0 %2048, %v192
      %v2050 = vpop.permute.xlu0 %2049
      %2052 = vset.pattern.permute.xlu0 2
      %2053 = vperm.xlu0 %2052, %v193
      %v2054 = vpop.permute.xlu0 %2053
      %2056 = vset.pattern.permute.xlu0 2
      %2057 = vperm.xlu0 %2056, %v194
      %v2058 = vpop.permute.xlu0 %2057
      %2060 = vset.pattern.permute.xlu0 2
      %2061 = vperm.xlu0 %2060, %v195
      %v2062 = vpop.permute.xlu0 %2061
      %2064 = vset.pattern.permute.xlu0 2
      %2065 = vperm.xlu0 %2064, %v196
      %v2066 = vpop.permute.xlu0 %2065
      %2068 = vset.pattern.permute.xlu0 2
      %2069 = vperm.xlu0 %2068, %v197
      %v2070 = vpop.permute.xlu0 %2069
      %2072 = vset.pattern.permute.xlu0 2
      %2073 = vperm.xlu0 %2072, %v198
      %v2074 = vpop.permute.xlu0 %2073
      %2076 = vset.pattern.permute.xlu0 2
      %2077 = vperm.xlu0 %2076, %v199
      %v2078 = vpop.permute.xlu0 %2077
      %2080 = vset.pattern.permute.xlu0 2
      %2081 = vperm.xlu0 %2080, %v200
      %v2082 = vpop.permute.xlu0 %2081
      %2084 = vset.pattern.permute.xlu0 2
      %2085 = vperm.xlu0 %2084, %v201
      %v2086 = vpop.permute.xlu0 %2085
      %2088 = vset.pattern.permute.xlu0 2
      %2089 = vperm.xlu0 %2088, %v202
      %v2090 = vpop.permute.xlu0 %2089
      %2092 = vset.pattern.permute.xlu0 2
      %2093 = vperm.xlu0 %2092, %v203
      %v2094 = vpop.permute.xlu0 %2093
      %2096 = vset.pattern.permute.xlu0 2
      %2097 = vperm.xlu0 %2096, %v204
      %v2098 = vpop.permute.xlu0 %2097
      %2100 = vset.pattern.permute.xlu0 2
      %2101 = vperm.xlu0 %2100, %v205
      %v2102 = vpop.permute.xlu0 %2101
      %2104 = vset.pattern.permute.xlu0 2
      %2105 = vperm.xlu0 %2104, %v206
      %v2106 = vpop.permute.xlu0 %2105
      %2108 = vset.pattern.permute.xlu0 2
      %2109 = vperm.xlu0 %2108, %v207
      %v2110 = vpop.permute.xlu0 %2109
      %2112 = vset.pattern.permute.xlu0 2
      %2113 = vperm.xlu0 %2112, %v208
      %v2114 = vpop.permute.xlu0 %2113
      %2116 = vset.pattern.permute.xlu0 2
      %2117 = vperm.xlu0 %2116, %v209
      %v2118 = vpop.permute.xlu0 %2117
      %2120 = vset.pattern.permute.xlu0 2
      %2121 = vperm.xlu0 %2120, %v210
      %v2122 = vpop.permute.xlu0 %2121
      %2124 = vset.pattern.permute.xlu0 2
      %2125 = vperm.xlu0 %2124, %v211
      %v2126 = vpop.permute.xlu0 %2125
      %2128 = vset.pattern.permute.xlu0 2
      %2129 = vperm.xlu0 %2128, %v212
      %v2130 = vpop.permute.xlu0 %2129
      %2132 = vset.pattern.permute.xlu0 2
      %2133 = vperm.xlu0 %2132, %v213
      %v2134 = vpop.permute.xlu0 %2133
      %2136 = vset.pattern.permute.xlu0 2
      %2137 = vperm.xlu0 %2136, %v214
      %v2138 = vpop.permute.xlu0 %2137
      %2140 = vset.pattern.permute.xlu0 2
      %2141 = vperm.xlu0 %2140, %v215
      %v2142 = vpop.permute.xlu0 %2141
      %2144 = vset.pattern.permute.xlu0 2
      %2145 = vperm.xlu0 %2144, %v216
      %v2146 = vpop.permute.xlu0 %2145
      %2148 = vset.pattern.permute.xlu0 2
      %2149 = vperm.xlu0 %2148, %v217
      %v2150 = vpop.permute.xlu0 %2149
      %2152 = vset.pattern.permute.xlu0 2
      %2153 = vperm.xlu0 %2152, %v218
      %v2154 = vpop.permute.xlu0 %2153
      %2156 = vset.pattern.permute.xlu0 2
      %2157 = vperm.xlu0 %2156, %v219
      %v2158 = vpop.permute.xlu0 %2157
      %2160 = vset.pattern.permute.xlu0 2
      %2161 = vperm.xlu0 %2160, %v220
      %v2162 = vpop.permute.xlu0 %2161
      %2164 = vset.pattern.permute.xlu0 2
      %2165 = vperm.xlu0 %2164, %v221
      %v2166 = vpop.permute.xlu0 %2165
      %2168 = vset.pattern.permute.xlu0 2
      %2169 = vperm.xlu0 %2168, %v222
      %v2170 = vpop.permute.xlu0 %2169
      %2172 = vset.pattern.permute.xlu0 2
      %2173 = vperm.xlu0 %2172, %v223
      %v2174 = vpop.permute.xlu0 %2173
      %2176 = vset.pattern.permute.xlu0 2
      %2177 = vperm.xlu0 %2176, %v224
      %v2178 = vpop.permute.xlu0 %2177
      %2180 = vset.pattern.permute.xlu0 2
      %2181 = vperm.xlu0 %2180, %v225
      %v2182 = vpop.permute.xlu0 %2181
      %2184 = vset.pattern.permute.xlu0 2
      %2185 = vperm.xlu0 %2184, %v226
      %v2186 = vpop.permute.xlu0 %2185
      %2188 = vset.pattern.permute.xlu0 2
      %2189 = vperm.xlu0 %2188, %v227
      %v2190 = vpop.permute.xlu0 %2189
      %2192 = vset.pattern.permute.xlu0 2
      %2193 = vperm.xlu0 %2192, %v228
      %v2194 = vpop.permute.xlu0 %2193
      %2196 = vset.pattern.permute.xlu0 2
      %2197 = vperm.xlu0 %2196, %v229
      %v2198 = vpop.permute.xlu0 %2197
      %2200 = vset.pattern.permute.xlu0 2
      %2201 = vperm.xlu0 %2200, %v230
      %v2202 = vpop.permute.xlu0 %2201
      %2204 = vset.pattern.permute.xlu0 2
      %2205 = vperm.xlu0 %2204, %v231
      %v2206 = vpop.permute.xlu0 %2205
      %2208 = vset.pattern.permute.xlu0 2
      %2209 = vperm.xlu0 %2208, %v232
      %v2210 = vpop.permute.xlu0 %2209
      %2212 = vset.pattern.permute.xlu0 2
      %2213 = vperm.xlu0 %2212, %v233
      %v2214 = vpop.permute.xlu0 %2213
      %2216 = vset.pattern.permute.xlu0 2
      %2217 = vperm.xlu0 %2216, %v234
      %v2218 = vpop.permute.xlu0 %2217
      %2220 = vset.pattern.permute.xlu0 2
      %2221 = vperm.xlu0 %2220, %v235
      %v2222 = vpop.permute.xlu0 %2221
      %2224 = vset.pattern.permute.xlu0 2
      %2225 = vperm.xlu0 %2224, %v236
      %v2226 = vpop.permute.xlu0 %2225
      %2228 = vset.pattern.permute.xlu0 2
      %2229 = vperm.xlu0 %2228, %v237
      %v2230 = vpop.permute.xlu0 %2229
      %2232 = vset.pattern.permute.xlu0 2
      %2233 = vperm.xlu0 %2232, %v238
      %v2234 = vpop.permute.xlu0 %2233
      %2236 = vset.pattern.permute.xlu0 2
      %2237 = vperm.xlu0 %2236, %v239
      %v2238 = vpop.permute.xlu0 %2237
      %2240 = vset.pattern.permute.xlu0 2
      %2241 = vperm.xlu0 %2240, %v240
      %v2242 = vpop.permute.xlu0 %2241
      %2244 = vset.pattern.permute.xlu0 2
      %2245 = vperm.xlu0 %2244, %v241
      %v2246 = vpop.permute.xlu0 %2245
      %2248 = vset.pattern.permute.xlu0 2
      %2249 = vperm.xlu0 %2248, %v242
      %v2250 = vpop.permute.xlu0 %2249
      %2252 = vset.pattern.permute.xlu0 2
      %2253 = vperm.xlu0 %2252, %v243
      %v2254 = vpop.permute.xlu0 %2253
      %2256 = vset.pattern.permute.xlu0 2
      %2257 = vperm.xlu0 %2256, %v244
      %v2258 = vpop.permute.xlu0 %2257
      %2260 = vset.pattern.permute.xlu0 2
      %2261 = vperm.xlu0 %2260, %v245
      %v2262 = vpop.permute.xlu0 %2261
      %2264 = vset.pattern.permute.xlu0 2
      %2265 = vperm.xlu0 %2264, %v246
      %v2266 = vpop.permute.xlu0 %2265
      %2268 = vset.pattern.permute.xlu0 2
      %2269 = vperm.xlu0 %2268, %v247
      %v2270 = vpop.permute.xlu0 %2269
      %2272 = vset.pattern.permute.xlu0 2
      %2273 = vperm.xlu0 %2272, %v248
      %v2274 = vpop.permute.xlu0 %2273
      %2276 = vset.pattern.permute.xlu0 2
      %2277 = vperm.xlu0 %2276, %v249
      %v2278 = vpop.permute.xlu0 %2277
      %2280 = vset.pattern.permute.xlu0 2
      %2281 = vperm.xlu0 %2280, %v250
      %v2282 = vpop.permute.xlu0 %2281
      %2284 = vset.pattern.permute.xlu0 2
      %2285 = vperm.xlu0 %2284, %v251
      %v2286 = vpop.permute.xlu0 %2285
      %2288 = vset.pattern.permute.xlu0 2
      %2289 = vperm.xlu0 %2288, %v252
      %v2290 = vpop.permute.xlu0 %2289
      %2292 = vset.pattern.permute.xlu0 2
      %2293 = vperm.xlu0 %2292, %v253
      %v2294 = vpop.permute.xlu0 %2293
      %2296 = vset.pattern.permute.xlu0 2
      %2297 = vperm.xlu0 %2296, %v254
      %v2298 = vpop.permute.xlu0 %2297
      %2300 = vset.pattern.permute.xlu0 2
      %2301 = vperm.xlu0 %2300, %v255
      %v2302 = vpop.permute.xlu0 %2301
      %2304 = vset.pattern.permute.xlu0 2
      %2305 = vperm.xlu0 %2304, %v256
      %v2306 = vpop.permute.xlu0 %2305
      %2308 = vset.pattern.permute.xlu0 2
      %2309 = vperm.xlu0 %2308, %v257
      %v2310 = vpop.permute.xlu0 %2309
      %2312 = vset.pattern.permute.xlu0 2
      %2313 = vperm.xlu0 %2312, %v258
      %v2314 = vpop.permute.xlu0 %2313
      %2316 = vset.pattern.permute.xlu0 2
      %2317 = vperm.xlu0 %2316, %v259
      %v2318 = vpop.permute.xlu0 %2317
      %2320 = vset.pattern.permute.xlu0 2
      %2321 = vperm.xlu0 %2320, %v260
      %v2322 = vpop.permute.xlu0 %2321
      %2324 = vset.pattern.permute.xlu0 2
      %2325 = vperm.xlu0 %2324, %v261
      %v2326 = vpop.permute.xlu0 %2325
      %2328 = vset.pattern.permute.xlu0 2
      %2329 = vperm.xlu0 %2328, %v262
      %v2330 = vpop.permute.xlu0 %2329
      %2332 = vset.pattern.permute.xlu0 2
      %2333 = vperm.xlu0 %2332, %v263
      %v2334 = vpop.permute.xlu0 %2333
      %2336 = vset.pattern.permute.xlu0 2
      %2337 = vperm.xlu0 %2336, %v264
      %v2338 = vpop.permute.xlu0 %2337
      %2340 = vset.pattern.permute.xlu0 2
      %2341 = vperm.xlu0 %2340, %v265
      %v2342 = vpop.permute.xlu0 %2341
      %2344 = vset.pattern.permute.xlu0 2
      %2345 = vperm.xlu0 %2344, %v266
      %v2346 = vpop.permute.xlu0 %2345
      %2348 = vset.pattern.permute.xlu0 2
      %2349 = vperm.xlu0 %2348, %v267
      %v2350 = vpop.permute.xlu0 %2349
      %2352 = vset.pattern.permute.xlu0 2
      %2353 = vperm.xlu0 %2352, %v268
      %v2354 = vpop.permute.xlu0 %2353
      %2356 = vset.pattern.permute.xlu0 2
      %2357 = vperm.xlu0 %2356, %v269
      %v2358 = vpop.permute.xlu0 %2357
      %2360 = vset.pattern.permute.xlu0 2
      %2361 = vperm.xlu0 %2360, %v270
      %v2362 = vpop.permute.xlu0 %2361
      %2364 = vset.pattern.permute.xlu0 2
      %2365 = vperm.xlu0 %2364, %v271
      %v2366 = vpop.permute.xlu0 %2365
      %2368 = vset.pattern.permute.xlu0 2
      %2369 = vperm.xlu0 %2368, %v272
      %v2370 = vpop.permute.xlu0 %2369
      %2372 = vset.pattern.permute.xlu0 2
      %2373 = vperm.xlu0 %2372, %v273
      %v2374 = vpop.permute.xlu0 %2373
      %2376 = vset.pattern.permute.xlu0 2
      %2377 = vperm.xlu0 %2376, %v274
      %v2378 = vpop.permute.xlu0 %2377
      %2380 = vset.pattern.permute.xlu0 2
      %2381 = vperm.xlu0 %2380, %v275
      %v2382 = vpop.permute.xlu0 %2381
      %2384 = vset.pattern.permute.xlu0 2
      %2385 = vperm.xlu0 %2384, %v276
      %v2386 = vpop.permute.xlu0 %2385
      %2388 = vset.pattern.permute.xlu0 2
      %2389 = vperm.xlu0 %2388, %v277
      %v2390 = vpop.permute.xlu0 %2389
      %2392 = vset.pattern.permute.xlu0 2
      %2393 = vperm.xlu0 %2392, %v278
      %v2394 = vpop.permute.xlu0 %2393
      %2396 = vset.pattern.permute.xlu0 2
      %2397 = vperm.xlu0 %2396, %v279
      %v2398 = vpop.permute.xlu0 %2397
      %2400 = vset.pattern.permute.xlu0 2
      %2401 = vperm.xlu0 %2400, %v280
      %v2402 = vpop.permute.xlu0 %2401
      %2404 = vset.pattern.permute.xlu0 2
      %2405 = vperm.xlu0 %2404, %v281
      %v2406 = vpop.permute.xlu0 %2405
      %2408 = vset.pattern.permute.xlu0 2
      %2409 = vperm.xlu0 %2408, %v282
      %v2410 = vpop.permute.xlu0 %2409
      %2412 = vset.pattern.permute.xlu0 2
      %2413 = vperm.xlu0 %2412, %v283
      %v2414 = vpop.permute.xlu0 %2413
      %2416 = vset.pattern.permute.xlu0 2
      %2417 = vperm.xlu0 %2416, %v284
      %v2418 = vpop.permute.xlu0 %2417
      %2420 = vset.pattern.permute.xlu0 2
      %2421 = vperm.xlu0 %2420, %v285
      %v2422 = vpop.permute.xlu0 %2421
      %2424 = vset.pattern.permute.xlu0 2
      %2425 = vperm.xlu0 %2424, %v286
      %v2426 = vpop.permute.xlu0 %2425
      %2428 = vset.pattern.permute.xlu0 2
      %2429 = vperm.xlu0 %2428, %v287
      %v2430 = vpop.permute.xlu0 %2429
      %2432 = vset.pattern.permute.xlu0 2
      %2433 = vperm.xlu0 %2432, %v288
      %v2434 = vpop.permute.xlu0 %2433
      %2436 = vset.pattern.permute.xlu0 2
      %2437 = vperm.xlu0 %2436, %v289
      %v2438 = vpop.permute.xlu0 %2437
      %2440 = vset.pattern.permute.xlu0 2
      %2441 = vperm.xlu0 %2440, %v290
      %v2442 = vpop.permute.xlu0 %2441
      %2444 = vset.pattern.permute.xlu0 2
      %2445 = vperm.xlu0 %2444, %v291
      %v2446 = vpop.permute.xlu0 %2445
      %2448 = vset.pattern.permute.xlu0 2
      %2449 = vperm.xlu0 %2448, %v292
      %v2450 = vpop.permute.xlu0 %2449
      %2452 = vset.pattern.permute.xlu0 2
      %2453 = vperm.xlu0 %2452, %v293
      %v2454 = vpop.permute.xlu0 %2453
      %2456 = vset.pattern.permute.xlu0 2
      %2457 = vperm.xlu0 %2456, %v294
      %v2458 = vpop.permute.xlu0 %2457
      %2460 = vset.pattern.permute.xlu0 2
      %2461 = vperm.xlu0 %2460, %v295
      %v2462 = vpop.permute.xlu0 %2461
      %2464 = vset.pattern.permute.xlu0 2
      %2465 = vperm.xlu0 %2464, %v296
      %v2466 = vpop.permute.xlu0 %2465
      %2468 = vset.pattern.permute.xlu0 2
      %2469 = vperm.xlu0 %2468, %v297
      %v2470 = vpop.permute.xlu0 %2469
      %2472 = vset.pattern.permute.xlu0 2
      %2473 = vperm.xlu0 %2472, %v298
      %v2474 = vpop.permute.xlu0 %2473
      %2476 = vset.pattern.permute.xlu0 2
      %2477 = vperm.xlu0 %2476, %v299
      %v2478 = vpop.permute.xlu0 %2477
      %2480 = vset.pattern.permute.xlu0 2
      %2481 = vperm.xlu0 %2480, %v300
      %v2482 = vpop.permute.xlu0 %2481
      %2484 = vset.pattern.permute.xlu0 2
      %2485 = vperm.xlu0 %2484, %v301
      %v2486 = vpop.permute.xlu0 %2485
      %v2488 = vlaneseq
      %v2489 = vshrl.u32 %v2488, 7
      %v2490 = vsub.s32 2, %v2489
      %v2491 = vrot.slane %v302, %v2490
      %v2492 = vmul.f32 %v1978, %v2491
      %v2493 = vmul.f32 %v1982, %v2491
      %v2494 = vmul.f32 %v1986, %v2491
      %v2495 = vmul.f32 %v1990, %v2491
      %v2496 = vmul.f32 %v1994, %v2491
      %v2497 = vmul.f32 %v1998, %v2491
      %v2498 = vmul.f32 %v2002, %v2491
      %v2499 = vmul.f32 %v2006, %v2491
      %v2500 = vmul.f32 %v2010, %v2491
      %v2501 = vmul.f32 %v2014, %v2491
      %v2502 = vmul.f32 %v2018, %v2491
      %v2503 = vmul.f32 %v2022, %v2491
      %v2504 = vmul.f32 %v2026, %v2491
      %v2505 = vmul.f32 %v2030, %v2491
      %v2506 = vmul.f32 %v2034, %v2491
      %v2507 = vmul.f32 %v2038, %v2491
      %v2508 = vmul.f32 %v2042, %v2491
      %v2509 = vmul.f32 %v2046, %v2491
      %v2510 = vmul.f32 %v2050, %v2491
      %v2511 = vmul.f32 %v2054, %v2491
      %v2512 = vmul.f32 %v2058, %v2491
      %v2513 = vmul.f32 %v2062, %v2491
      %v2514 = vmul.f32 %v2066, %v2491
      %v2515 = vmul.f32 %v2070, %v2491
      %v2516 = vmul.f32 %v2074, %v2491
      %v2517 = vmul.f32 %v2078, %v2491
      %v2518 = vmul.f32 %v2082, %v2491
      %v2519 = vmul.f32 %v2086, %v2491
      %v2520 = vmul.f32 %v2090, %v2491
      %v2521 = vmul.f32 %v2094, %v2491
      %v2522 = vmul.f32 %v2098, %v2491
      %v2523 = vmul.f32 %v2102, %v2491
      %v2524 = vmul.f32 %v2106, %v2491
      %v2525 = vmul.f32 %v2110, %v2491
      %v2526 = vmul.f32 %v2114, %v2491
      %v2527 = vmul.f32 %v2118, %v2491
      %v2528 = vmul.f32 %v2122, %v2491
      %v2529 = vmul.f32 %v2126, %v2491
      %v2530 = vmul.f32 %v2130, %v2491
      %v2531 = vmul.f32 %v2134, %v2491
      %v2532 = vmul.f32 %v2138, %v2491
      %v2533 = vmul.f32 %v2142, %v2491
      %v2534 = vmul.f32 %v2146, %v2491
      %v2535 = vmul.f32 %v2150, %v2491
      %v2536 = vmul.f32 %v2154, %v2491
      %v2537 = vmul.f32 %v2158, %v2491
      %v2538 = vmul.f32 %v2162, %v2491
      %v2539 = vmul.f32 %v2166, %v2491
      %v2540 = vmul.f32 %v2170, %v2491
      %v2541 = vmul.f32 %v2174, %v2491
      %v2542 = vmul.f32 %v2178, %v2491
      %v2543 = vmul.f32 %v2182, %v2491
      %v2544 = vmul.f32 %v2186, %v2491
      %v2545 = vmul.f32 %v2190, %v2491
      %v2546 = vmul.f32 %v2194, %v2491
      %v2547 = vmul.f32 %v2198, %v2491
      %v2548 = vmul.f32 %v2202, %v2491
      %v2549 = vmul.f32 %v2206, %v2491
      %v2550 = vmul.f32 %v2210, %v2491
      %v2551 = vmul.f32 %v2214, %v2491
      %v2552 = vmul.f32 %v2218, %v2491
      %v2553 = vmul.f32 %v2222, %v2491
      %v2554 = vmul.f32 %v2226, %v2491
      %v2555 = vmul.f32 %v2230, %v2491
      %v2556 = vmul.f32 %v2234, %v2491
      %v2557 = vmul.f32 %v2238, %v2491
      %v2558 = vmul.f32 %v2242, %v2491
      %v2559 = vmul.f32 %v2246, %v2491
      %v2560 = vmul.f32 %v2250, %v2491
      %v2561 = vmul.f32 %v2254, %v2491
      %v2562 = vmul.f32 %v2258, %v2491
      %v2563 = vmul.f32 %v2262, %v2491
      %v2564 = vmul.f32 %v2266, %v2491
      %v2565 = vmul.f32 %v2270, %v2491
      %v2566 = vmul.f32 %v2274, %v2491
      %v2567 = vmul.f32 %v2278, %v2491
      %v2568 = vmul.f32 %v2282, %v2491
      %v2569 = vmul.f32 %v2286, %v2491
      %v2570 = vmul.f32 %v2290, %v2491
      %v2571 = vmul.f32 %v2294, %v2491
      %v2572 = vmul.f32 %v2298, %v2491
      %v2573 = vmul.f32 %v2302, %v2491
      %v2574 = vmul.f32 %v2306, %v2491
      %v2575 = vmul.f32 %v2310, %v2491
      %v2576 = vmul.f32 %v2314, %v2491
      %v2577 = vmul.f32 %v2318, %v2491
      %v2578 = vmul.f32 %v2322, %v2491
      %v2579 = vmul.f32 %v2326, %v2491
      %v2580 = vmul.f32 %v2330, %v2491
      %v2581 = vmul.f32 %v2334, %v2491
      %v2582 = vmul.f32 %v2338, %v2491
      %v2583 = vmul.f32 %v2342, %v2491
      %v2584 = vmul.f32 %v2346, %v2491
      %v2585 = vmul.f32 %v2350, %v2491
      %v2586 = vmul.f32 %v2354, %v2491
      %v2587 = vmul.f32 %v2358, %v2491
      %v2588 = vmul.f32 %v2362, %v2491
      %v2589 = vmul.f32 %v2366, %v2491
      %v2590 = vmul.f32 %v2370, %v2491
      %v2591 = vmul.f32 %v2374, %v2491
      %v2592 = vmul.f32 %v2378, %v2491
      %v2593 = vmul.f32 %v2382, %v2491
      %v2594 = vmul.f32 %v2386, %v2491
      %v2595 = vmul.f32 %v2390, %v2491
      %v2596 = vmul.f32 %v2394, %v2491
      %v2597 = vmul.f32 %v2398, %v2491
      %v2598 = vmul.f32 %v2402, %v2491
      %v2599 = vmul.f32 %v2406, %v2491
      %v2600 = vmul.f32 %v2410, %v2491
      %v2601 = vmul.f32 %v2414, %v2491
      %v2602 = vmul.f32 %v2418, %v2491
      %v2603 = vmul.f32 %v2422, %v2491
      %v2604 = vmul.f32 %v2426, %v2491
      %v2605 = vmul.f32 %v2430, %v2491
      %v2606 = vmul.f32 %v2434, %v2491
      %v2607 = vmul.f32 %v2438, %v2491
      %v2608 = vmul.f32 %v2442, %v2491
      %v2609 = vmul.f32 %v2446, %v2491
      %v2610 = vmul.f32 %v2450, %v2491
      %v2611 = vmul.f32 %v2454, %v2491
      %v2612 = vmul.f32 %v2458, %v2491
      %v2613 = vmul.f32 %v2462, %v2491
      %v2614 = vmul.f32 %v2466, %v2491
      %v2615 = vmul.f32 %v2470, %v2491
      %v2616 = vmul.f32 %v2474, %v2491
      %v2617 = vmul.f32 %v2478, %v2491
      %v2618 = vmul.f32 %v2482, %v2491
      %v2619 = vmul.f32 %v2486, %v2491
      %v2620 = vadd.f32 %v1848, %v2492
      %v2621 = vadd.f32 %v1849, %v2493
      %v2622 = vadd.f32 %v1850, %v2494
      %v2623 = vadd.f32 %v1851, %v2495
      %v2624 = vadd.f32 %v1852, %v2496
      %v2625 = vadd.f32 %v1853, %v2497
      %v2626 = vadd.f32 %v1854, %v2498
      %v2627 = vadd.f32 %v1855, %v2499
      %v2628 = vadd.f32 %v1856, %v2500
      %v2629 = vadd.f32 %v1857, %v2501
      %v2630 = vadd.f32 %v1858, %v2502
      %v2631 = vadd.f32 %v1859, %v2503
      %v2632 = vadd.f32 %v1860, %v2504
      %v2633 = vadd.f32 %v1861, %v2505
      %v2634 = vadd.f32 %v1862, %v2506
      %v2635 = vadd.f32 %v1863, %v2507
      %v2636 = vadd.f32 %v1864, %v2508
      %v2637 = vadd.f32 %v1865, %v2509
      %v2638 = vadd.f32 %v1866, %v2510
      %v2639 = vadd.f32 %v1867, %v2511
      %v2640 = vadd.f32 %v1868, %v2512
      %v2641 = vadd.f32 %v1869, %v2513
      %v2642 = vadd.f32 %v1870, %v2514
      %v2643 = vadd.f32 %v1871, %v2515
      %v2644 = vadd.f32 %v1872, %v2516
      %v2645 = vadd.f32 %v1873, %v2517
      %v2646 = vadd.f32 %v1874, %v2518
      %v2647 = vadd.f32 %v1875, %v2519
      %v2648 = vadd.f32 %v1876, %v2520
      %v2649 = vadd.f32 %v1877, %v2521
      %v2650 = vadd.f32 %v1878, %v2522
      %v2651 = vadd.f32 %v1879, %v2523
      %v2652 = vadd.f32 %v1880, %v2524
      %v2653 = vadd.f32 %v1881, %v2525
      %v2654 = vadd.f32 %v1882, %v2526
      %v2655 = vadd.f32 %v1883, %v2527
      %v2656 = vadd.f32 %v1884, %v2528
      %v2657 = vadd.f32 %v1885, %v2529
      %v2658 = vadd.f32 %v1886, %v2530
      %v2659 = vadd.f32 %v1887, %v2531
      %v2660 = vadd.f32 %v1888, %v2532
      %v2661 = vadd.f32 %v1889, %v2533
      %v2662 = vadd.f32 %v1890, %v2534
      %v2663 = vadd.f32 %v1891, %v2535
      %v2664 = vadd.f32 %v1892, %v2536
      %v2665 = vadd.f32 %v1893, %v2537
      %v2666 = vadd.f32 %v1894, %v2538
      %v2667 = vadd.f32 %v1895, %v2539
      %v2668 = vadd.f32 %v1896, %v2540
      %v2669 = vadd.f32 %v1897, %v2541
      %v2670 = vadd.f32 %v1898, %v2542
      %v2671 = vadd.f32 %v1899, %v2543
      %v2672 = vadd.f32 %v1900, %v2544
      %v2673 = vadd.f32 %v1901, %v2545
      %v2674 = vadd.f32 %v1902, %v2546
      %v2675 = vadd.f32 %v1903, %v2547
      %v2676 = vadd.f32 %v1904, %v2548
      %v2677 = vadd.f32 %v1905, %v2549
      %v2678 = vadd.f32 %v1906, %v2550
      %v2679 = vadd.f32 %v1907, %v2551
      %v2680 = vadd.f32 %v1908, %v2552
      %v2681 = vadd.f32 %v1909, %v2553
      %v2682 = vadd.f32 %v1910, %v2554
      %v2683 = vadd.f32 %v1911, %v2555
      %v2684 = vadd.f32 %v1912, %v2556
      %v2685 = vadd.f32 %v1913, %v2557
      %v2686 = vadd.f32 %v1914, %v2558
      %v2687 = vadd.f32 %v1915, %v2559
      %v2688 = vadd.f32 %v1916, %v2560
      %v2689 = vadd.f32 %v1917, %v2561
      %v2690 = vadd.f32 %v1918, %v2562
      %v2691 = vadd.f32 %v1919, %v2563
      %v2692 = vadd.f32 %v1920, %v2564
      %v2693 = vadd.f32 %v1921, %v2565
      %v2694 = vadd.f32 %v1922, %v2566
      %v2695 = vadd.f32 %v1923, %v2567
      %v2696 = vadd.f32 %v1924, %v2568
      %v2697 = vadd.f32 %v1925, %v2569
      %v2698 = vadd.f32 %v1926, %v2570
      %v2699 = vadd.f32 %v1927, %v2571
      %v2700 = vadd.f32 %v1928, %v2572
      %v2701 = vadd.f32 %v1929, %v2573
      %v2702 = vadd.f32 %v1930, %v2574
      %v2703 = vadd.f32 %v1931, %v2575
      %v2704 = vadd.f32 %v1932, %v2576
      %v2705 = vadd.f32 %v1933, %v2577
      %v2706 = vadd.f32 %v1934, %v2578
      %v2707 = vadd.f32 %v1935, %v2579
      %v2708 = vadd.f32 %v1936, %v2580
      %v2709 = vadd.f32 %v1937, %v2581
      %v2710 = vadd.f32 %v1938, %v2582
      %v2711 = vadd.f32 %v1939, %v2583
      %v2712 = vadd.f32 %v1940, %v2584
      %v2713 = vadd.f32 %v1941, %v2585
      %v2714 = vadd.f32 %v1942, %v2586
      %v2715 = vadd.f32 %v1943, %v2587
      %v2716 = vadd.f32 %v1944, %v2588
      %v2717 = vadd.f32 %v1945, %v2589
      %v2718 = vadd.f32 %v1946, %v2590
      %v2719 = vadd.f32 %v1947, %v2591
      %v2720 = vadd.f32 %v1948, %v2592
      %v2721 = vadd.f32 %v1949, %v2593
      %v2722 = vadd.f32 %v1950, %v2594
      %v2723 = vadd.f32 %v1951, %v2595
      %v2724 = vadd.f32 %v1952, %v2596
      %v2725 = vadd.f32 %v1953, %v2597
      %v2726 = vadd.f32 %v1954, %v2598
      %v2727 = vadd.f32 %v1955, %v2599
      %v2728 = vadd.f32 %v1956, %v2600
      %v2729 = vadd.f32 %v1957, %v2601
      %v2730 = vadd.f32 %v1958, %v2602
      %v2731 = vadd.f32 %v1959, %v2603
      %v2732 = vadd.f32 %v1960, %v2604
      %v2733 = vadd.f32 %v1961, %v2605
      %v2734 = vadd.f32 %v1962, %v2606
      %v2735 = vadd.f32 %v1963, %v2607
      %v2736 = vadd.f32 %v1964, %v2608
      %v2737 = vadd.f32 %v1965, %v2609
      %v2738 = vadd.f32 %v1966, %v2610
      %v2739 = vadd.f32 %v1967, %v2611
      %v2740 = vadd.f32 %v1968, %v2612
      %v2741 = vadd.f32 %v1969, %v2613
      %v2742 = vadd.f32 %v1970, %v2614
      %v2743 = vadd.f32 %v1971, %v2615
      %v2744 = vadd.f32 %v1972, %v2616
      %v2745 = vadd.f32 %v1973, %v2617
      %v2746 = vadd.f32 %v1974, %v2618
      %v2747 = vadd.f32 %v1975, %v2619
      %2748 = vset.pattern.permute.xlu0 3
      %2749 = vperm.xlu0 %2748, %v174
      %v2750 = vpop.permute.xlu0 %2749
      %2752 = vset.pattern.permute.xlu0 3
      %2753 = vperm.xlu0 %2752, %v175
      %v2754 = vpop.permute.xlu0 %2753
      %2756 = vset.pattern.permute.xlu0 3
      %2757 = vperm.xlu0 %2756, %v176
      %v2758 = vpop.permute.xlu0 %2757
      %2760 = vset.pattern.permute.xlu0 3
      %2761 = vperm.xlu0 %2760, %v177
      %v2762 = vpop.permute.xlu0 %2761
      %2764 = vset.pattern.permute.xlu0 3
      %2765 = vperm.xlu0 %2764, %v178
      %v2766 = vpop.permute.xlu0 %2765
      %2768 = vset.pattern.permute.xlu0 3
      %2769 = vperm.xlu0 %2768, %v179
      %v2770 = vpop.permute.xlu0 %2769
      %2772 = vset.pattern.permute.xlu0 3
      %2773 = vperm.xlu0 %2772, %v180
      %v2774 = vpop.permute.xlu0 %2773
      %2776 = vset.pattern.permute.xlu0 3
      %2777 = vperm.xlu0 %2776, %v181
      %v2778 = vpop.permute.xlu0 %2777
      %2780 = vset.pattern.permute.xlu0 3
      %2781 = vperm.xlu0 %2780, %v182
      %v2782 = vpop.permute.xlu0 %2781
      %2784 = vset.pattern.permute.xlu0 3
      %2785 = vperm.xlu0 %2784, %v183
      %v2786 = vpop.permute.xlu0 %2785
      %2788 = vset.pattern.permute.xlu0 3
      %2789 = vperm.xlu0 %2788, %v184
      %v2790 = vpop.permute.xlu0 %2789
      %2792 = vset.pattern.permute.xlu0 3
      %2793 = vperm.xlu0 %2792, %v185
      %v2794 = vpop.permute.xlu0 %2793
      %2796 = vset.pattern.permute.xlu0 3
      %2797 = vperm.xlu0 %2796, %v186
      %v2798 = vpop.permute.xlu0 %2797
      %2800 = vset.pattern.permute.xlu0 3
      %2801 = vperm.xlu0 %2800, %v187
      %v2802 = vpop.permute.xlu0 %2801
      %2804 = vset.pattern.permute.xlu0 3
      %2805 = vperm.xlu0 %2804, %v188
      %v2806 = vpop.permute.xlu0 %2805
      %2808 = vset.pattern.permute.xlu0 3
      %2809 = vperm.xlu0 %2808, %v189
      %v2810 = vpop.permute.xlu0 %2809
      %2812 = vset.pattern.permute.xlu0 3
      %2813 = vperm.xlu0 %2812, %v190
      %v2814 = vpop.permute.xlu0 %2813
      %2816 = vset.pattern.permute.xlu0 3
      %2817 = vperm.xlu0 %2816, %v191
      %v2818 = vpop.permute.xlu0 %2817
      %2820 = vset.pattern.permute.xlu0 3
      %2821 = vperm.xlu0 %2820, %v192
      %v2822 = vpop.permute.xlu0 %2821
      %2824 = vset.pattern.permute.xlu0 3
      %2825 = vperm.xlu0 %2824, %v193
      %v2826 = vpop.permute.xlu0 %2825
      %2828 = vset.pattern.permute.xlu0 3
      %2829 = vperm.xlu0 %2828, %v194
      %v2830 = vpop.permute.xlu0 %2829
      %2832 = vset.pattern.permute.xlu0 3
      %2833 = vperm.xlu0 %2832, %v195
      %v2834 = vpop.permute.xlu0 %2833
      %2836 = vset.pattern.permute.xlu0 3
      %2837 = vperm.xlu0 %2836, %v196
      %v2838 = vpop.permute.xlu0 %2837
      %2840 = vset.pattern.permute.xlu0 3
      %2841 = vperm.xlu0 %2840, %v197
      %v2842 = vpop.permute.xlu0 %2841
      %2844 = vset.pattern.permute.xlu0 3
      %2845 = vperm.xlu0 %2844, %v198
      %v2846 = vpop.permute.xlu0 %2845
      %2848 = vset.pattern.permute.xlu0 3
      %2849 = vperm.xlu0 %2848, %v199
      %v2850 = vpop.permute.xlu0 %2849
      %2852 = vset.pattern.permute.xlu0 3
      %2853 = vperm.xlu0 %2852, %v200
      %v2854 = vpop.permute.xlu0 %2853
      %2856 = vset.pattern.permute.xlu0 3
      %2857 = vperm.xlu0 %2856, %v201
      %v2858 = vpop.permute.xlu0 %2857
      %2860 = vset.pattern.permute.xlu0 3
      %2861 = vperm.xlu0 %2860, %v202
      %v2862 = vpop.permute.xlu0 %2861
      %2864 = vset.pattern.permute.xlu0 3
      %2865 = vperm.xlu0 %2864, %v203
      %v2866 = vpop.permute.xlu0 %2865
      %2868 = vset.pattern.permute.xlu0 3
      %2869 = vperm.xlu0 %2868, %v204
      %v2870 = vpop.permute.xlu0 %2869
      %2872 = vset.pattern.permute.xlu0 3
      %2873 = vperm.xlu0 %2872, %v205
      %v2874 = vpop.permute.xlu0 %2873
      %2876 = vset.pattern.permute.xlu0 3
      %2877 = vperm.xlu0 %2876, %v206
      %v2878 = vpop.permute.xlu0 %2877
      %2880 = vset.pattern.permute.xlu0 3
      %2881 = vperm.xlu0 %2880, %v207
      %v2882 = vpop.permute.xlu0 %2881
      %2884 = vset.pattern.permute.xlu0 3
      %2885 = vperm.xlu0 %2884, %v208
      %v2886 = vpop.permute.xlu0 %2885
      %2888 = vset.pattern.permute.xlu0 3
      %2889 = vperm.xlu0 %2888, %v209
      %v2890 = vpop.permute.xlu0 %2889
      %2892 = vset.pattern.permute.xlu0 3
      %2893 = vperm.xlu0 %2892, %v210
      %v2894 = vpop.permute.xlu0 %2893
      %2896 = vset.pattern.permute.xlu0 3
      %2897 = vperm.xlu0 %2896, %v211
      %v2898 = vpop.permute.xlu0 %2897
      %2900 = vset.pattern.permute.xlu0 3
      %2901 = vperm.xlu0 %2900, %v212
      %v2902 = vpop.permute.xlu0 %2901
      %2904 = vset.pattern.permute.xlu0 3
      %2905 = vperm.xlu0 %2904, %v213
      %v2906 = vpop.permute.xlu0 %2905
      %2908 = vset.pattern.permute.xlu0 3
      %2909 = vperm.xlu0 %2908, %v214
      %v2910 = vpop.permute.xlu0 %2909
      %2912 = vset.pattern.permute.xlu0 3
      %2913 = vperm.xlu0 %2912, %v215
      %v2914 = vpop.permute.xlu0 %2913
      %2916 = vset.pattern.permute.xlu0 3
      %2917 = vperm.xlu0 %2916, %v216
      %v2918 = vpop.permute.xlu0 %2917
      %2920 = vset.pattern.permute.xlu0 3
      %2921 = vperm.xlu0 %2920, %v217
      %v2922 = vpop.permute.xlu0 %2921
      %2924 = vset.pattern.permute.xlu0 3
      %2925 = vperm.xlu0 %2924, %v218
      %v2926 = vpop.permute.xlu0 %2925
      %2928 = vset.pattern.permute.xlu0 3
      %2929 = vperm.xlu0 %2928, %v219
      %v2930 = vpop.permute.xlu0 %2929
      %2932 = vset.pattern.permute.xlu0 3
      %2933 = vperm.xlu0 %2932, %v220
      %v2934 = vpop.permute.xlu0 %2933
      %2936 = vset.pattern.permute.xlu0 3
      %2937 = vperm.xlu0 %2936, %v221
      %v2938 = vpop.permute.xlu0 %2937
      %2940 = vset.pattern.permute.xlu0 3
      %2941 = vperm.xlu0 %2940, %v222
      %v2942 = vpop.permute.xlu0 %2941
      %2944 = vset.pattern.permute.xlu0 3
      %2945 = vperm.xlu0 %2944, %v223
      %v2946 = vpop.permute.xlu0 %2945
      %2948 = vset.pattern.permute.xlu0 3
      %2949 = vperm.xlu0 %2948, %v224
      %v2950 = vpop.permute.xlu0 %2949
      %2952 = vset.pattern.permute.xlu0 3
      %2953 = vperm.xlu0 %2952, %v225
      %v2954 = vpop.permute.xlu0 %2953
      %2956 = vset.pattern.permute.xlu0 3
      %2957 = vperm.xlu0 %2956, %v226
      %v2958 = vpop.permute.xlu0 %2957
      %2960 = vset.pattern.permute.xlu0 3
      %2961 = vperm.xlu0 %2960, %v227
      %v2962 = vpop.permute.xlu0 %2961
      %2964 = vset.pattern.permute.xlu0 3
      %2965 = vperm.xlu0 %2964, %v228
      %v2966 = vpop.permute.xlu0 %2965
      %2968 = vset.pattern.permute.xlu0 3
      %2969 = vperm.xlu0 %2968, %v229
      %v2970 = vpop.permute.xlu0 %2969
      %2972 = vset.pattern.permute.xlu0 3
      %2973 = vperm.xlu0 %2972, %v230
      %v2974 = vpop.permute.xlu0 %2973
      %2976 = vset.pattern.permute.xlu0 3
      %2977 = vperm.xlu0 %2976, %v231
      %v2978 = vpop.permute.xlu0 %2977
      %2980 = vset.pattern.permute.xlu0 3
      %2981 = vperm.xlu0 %2980, %v232
      %v2982 = vpop.permute.xlu0 %2981
      %2984 = vset.pattern.permute.xlu0 3
      %2985 = vperm.xlu0 %2984, %v233
      %v2986 = vpop.permute.xlu0 %2985
      %2988 = vset.pattern.permute.xlu0 3
      %2989 = vperm.xlu0 %2988, %v234
      %v2990 = vpop.permute.xlu0 %2989
      %2992 = vset.pattern.permute.xlu0 3
      %2993 = vperm.xlu0 %2992, %v235
      %v2994 = vpop.permute.xlu0 %2993
      %2996 = vset.pattern.permute.xlu0 3
      %2997 = vperm.xlu0 %2996, %v236
      %v2998 = vpop.permute.xlu0 %2997
      %3000 = vset.pattern.permute.xlu0 3
      %3001 = vperm.xlu0 %3000, %v237
      %v3002 = vpop.permute.xlu0 %3001
      %3004 = vset.pattern.permute.xlu0 3
      %3005 = vperm.xlu0 %3004, %v238
      %v3006 = vpop.permute.xlu0 %3005
      %3008 = vset.pattern.permute.xlu0 3
      %3009 = vperm.xlu0 %3008, %v239
      %v3010 = vpop.permute.xlu0 %3009
      %3012 = vset.pattern.permute.xlu0 3
      %3013 = vperm.xlu0 %3012, %v240
      %v3014 = vpop.permute.xlu0 %3013
      %3016 = vset.pattern.permute.xlu0 3
      %3017 = vperm.xlu0 %3016, %v241
      %v3018 = vpop.permute.xlu0 %3017
      %3020 = vset.pattern.permute.xlu0 3
      %3021 = vperm.xlu0 %3020, %v242
      %v3022 = vpop.permute.xlu0 %3021
      %3024 = vset.pattern.permute.xlu0 3
      %3025 = vperm.xlu0 %3024, %v243
      %v3026 = vpop.permute.xlu0 %3025
      %3028 = vset.pattern.permute.xlu0 3
      %3029 = vperm.xlu0 %3028, %v244
      %v3030 = vpop.permute.xlu0 %3029
      %3032 = vset.pattern.permute.xlu0 3
      %3033 = vperm.xlu0 %3032, %v245
      %v3034 = vpop.permute.xlu0 %3033
      %3036 = vset.pattern.permute.xlu0 3
      %3037 = vperm.xlu0 %3036, %v246
      %v3038 = vpop.permute.xlu0 %3037
      %3040 = vset.pattern.permute.xlu0 3
      %3041 = vperm.xlu0 %3040, %v247
      %v3042 = vpop.permute.xlu0 %3041
      %3044 = vset.pattern.permute.xlu0 3
      %3045 = vperm.xlu0 %3044, %v248
      %v3046 = vpop.permute.xlu0 %3045
      %3048 = vset.pattern.permute.xlu0 3
      %3049 = vperm.xlu0 %3048, %v249
      %v3050 = vpop.permute.xlu0 %3049
      %3052 = vset.pattern.permute.xlu0 3
      %3053 = vperm.xlu0 %3052, %v250
      %v3054 = vpop.permute.xlu0 %3053
      %3056 = vset.pattern.permute.xlu0 3
      %3057 = vperm.xlu0 %3056, %v251
      %v3058 = vpop.permute.xlu0 %3057
      %3060 = vset.pattern.permute.xlu0 3
      %3061 = vperm.xlu0 %3060, %v252
      %v3062 = vpop.permute.xlu0 %3061
      %3064 = vset.pattern.permute.xlu0 3
      %3065 = vperm.xlu0 %3064, %v253
      %v3066 = vpop.permute.xlu0 %3065
      %3068 = vset.pattern.permute.xlu0 3
      %3069 = vperm.xlu0 %3068, %v254
      %v3070 = vpop.permute.xlu0 %3069
      %3072 = vset.pattern.permute.xlu0 3
      %3073 = vperm.xlu0 %3072, %v255
      %v3074 = vpop.permute.xlu0 %3073
      %3076 = vset.pattern.permute.xlu0 3
      %3077 = vperm.xlu0 %3076, %v256
      %v3078 = vpop.permute.xlu0 %3077
      %3080 = vset.pattern.permute.xlu0 3
      %3081 = vperm.xlu0 %3080, %v257
      %v3082 = vpop.permute.xlu0 %3081
      %3084 = vset.pattern.permute.xlu0 3
      %3085 = vperm.xlu0 %3084, %v258
      %v3086 = vpop.permute.xlu0 %3085
      %3088 = vset.pattern.permute.xlu0 3
      %3089 = vperm.xlu0 %3088, %v259
      %v3090 = vpop.permute.xlu0 %3089
      %3092 = vset.pattern.permute.xlu0 3
      %3093 = vperm.xlu0 %3092, %v260
      %v3094 = vpop.permute.xlu0 %3093
      %3096 = vset.pattern.permute.xlu0 3
      %3097 = vperm.xlu0 %3096, %v261
      %v3098 = vpop.permute.xlu0 %3097
      %3100 = vset.pattern.permute.xlu0 3
      %3101 = vperm.xlu0 %3100, %v262
      %v3102 = vpop.permute.xlu0 %3101
      %3104 = vset.pattern.permute.xlu0 3
      %3105 = vperm.xlu0 %3104, %v263
      %v3106 = vpop.permute.xlu0 %3105
      %3108 = vset.pattern.permute.xlu0 3
      %3109 = vperm.xlu0 %3108, %v264
      %v3110 = vpop.permute.xlu0 %3109
      %3112 = vset.pattern.permute.xlu0 3
      %3113 = vperm.xlu0 %3112, %v265
      %v3114 = vpop.permute.xlu0 %3113
      %3116 = vset.pattern.permute.xlu0 3
      %3117 = vperm.xlu0 %3116, %v266
      %v3118 = vpop.permute.xlu0 %3117
      %3120 = vset.pattern.permute.xlu0 3
      %3121 = vperm.xlu0 %3120, %v267
      %v3122 = vpop.permute.xlu0 %3121
      %3124 = vset.pattern.permute.xlu0 3
      %3125 = vperm.xlu0 %3124, %v268
      %v3126 = vpop.permute.xlu0 %3125
      %3128 = vset.pattern.permute.xlu0 3
      %3129 = vperm.xlu0 %3128, %v269
      %v3130 = vpop.permute.xlu0 %3129
      %3132 = vset.pattern.permute.xlu0 3
      %3133 = vperm.xlu0 %3132, %v270
      %v3134 = vpop.permute.xlu0 %3133
      %3136 = vset.pattern.permute.xlu0 3
      %3137 = vperm.xlu0 %3136, %v271
      %v3138 = vpop.permute.xlu0 %3137
      %3140 = vset.pattern.permute.xlu0 3
      %3141 = vperm.xlu0 %3140, %v272
      %v3142 = vpop.permute.xlu0 %3141
      %3144 = vset.pattern.permute.xlu0 3
      %3145 = vperm.xlu0 %3144, %v273
      %v3146 = vpop.permute.xlu0 %3145
      %3148 = vset.pattern.permute.xlu0 3
      %3149 = vperm.xlu0 %3148, %v274
      %v3150 = vpop.permute.xlu0 %3149
      %3152 = vset.pattern.permute.xlu0 3
      %3153 = vperm.xlu0 %3152, %v275
      %v3154 = vpop.permute.xlu0 %3153
      %3156 = vset.pattern.permute.xlu0 3
      %3157 = vperm.xlu0 %3156, %v276
      %v3158 = vpop.permute.xlu0 %3157
      %3160 = vset.pattern.permute.xlu0 3
      %3161 = vperm.xlu0 %3160, %v277
      %v3162 = vpop.permute.xlu0 %3161
      %3164 = vset.pattern.permute.xlu0 3
      %3165 = vperm.xlu0 %3164, %v278
      %v3166 = vpop.permute.xlu0 %3165
      %3168 = vset.pattern.permute.xlu0 3
      %3169 = vperm.xlu0 %3168, %v279
      %v3170 = vpop.permute.xlu0 %3169
      %3172 = vset.pattern.permute.xlu0 3
      %3173 = vperm.xlu0 %3172, %v280
      %v3174 = vpop.permute.xlu0 %3173
      %3176 = vset.pattern.permute.xlu0 3
      %3177 = vperm.xlu0 %3176, %v281
      %v3178 = vpop.permute.xlu0 %3177
      %3180 = vset.pattern.permute.xlu0 3
      %3181 = vperm.xlu0 %3180, %v282
      %v3182 = vpop.permute.xlu0 %3181
      %3184 = vset.pattern.permute.xlu0 3
      %3185 = vperm.xlu0 %3184, %v283
      %v3186 = vpop.permute.xlu0 %3185
      %3188 = vset.pattern.permute.xlu0 3
      %3189 = vperm.xlu0 %3188, %v284
      %v3190 = vpop.permute.xlu0 %3189
      %3192 = vset.pattern.permute.xlu0 3
      %3193 = vperm.xlu0 %3192, %v285
      %v3194 = vpop.permute.xlu0 %3193
      %3196 = vset.pattern.permute.xlu0 3
      %3197 = vperm.xlu0 %3196, %v286
      %v3198 = vpop.permute.xlu0 %3197
      %3200 = vset.pattern.permute.xlu0 3
      %3201 = vperm.xlu0 %3200, %v287
      %v3202 = vpop.permute.xlu0 %3201
      %3204 = vset.pattern.permute.xlu0 3
      %3205 = vperm.xlu0 %3204, %v288
      %v3206 = vpop.permute.xlu0 %3205
      %3208 = vset.pattern.permute.xlu0 3
      %3209 = vperm.xlu0 %3208, %v289
      %v3210 = vpop.permute.xlu0 %3209
      %3212 = vset.pattern.permute.xlu0 3
      %3213 = vperm.xlu0 %3212, %v290
      %v3214 = vpop.permute.xlu0 %3213
      %3216 = vset.pattern.permute.xlu0 3
      %3217 = vperm.xlu0 %3216, %v291
      %v3218 = vpop.permute.xlu0 %3217
      %3220 = vset.pattern.permute.xlu0 3
      %3221 = vperm.xlu0 %3220, %v292
      %v3222 = vpop.permute.xlu0 %3221
      %3224 = vset.pattern.permute.xlu0 3
      %3225 = vperm.xlu0 %3224, %v293
      %v3226 = vpop.permute.xlu0 %3225
      %3228 = vset.pattern.permute.xlu0 3
      %3229 = vperm.xlu0 %3228, %v294
      %v3230 = vpop.permute.xlu0 %3229
      %3232 = vset.pattern.permute.xlu0 3
      %3233 = vperm.xlu0 %3232, %v295
      %v3234 = vpop.permute.xlu0 %3233
      %3236 = vset.pattern.permute.xlu0 3
      %3237 = vperm.xlu0 %3236, %v296
      %v3238 = vpop.permute.xlu0 %3237
      %3240 = vset.pattern.permute.xlu0 3
      %3241 = vperm.xlu0 %3240, %v297
      %v3242 = vpop.permute.xlu0 %3241
      %3244 = vset.pattern.permute.xlu0 3
      %3245 = vperm.xlu0 %3244, %v298
      %v3246 = vpop.permute.xlu0 %3245
      %3248 = vset.pattern.permute.xlu0 3
      %3249 = vperm.xlu0 %3248, %v299
      %v3250 = vpop.permute.xlu0 %3249
      %3252 = vset.pattern.permute.xlu0 3
      %3253 = vperm.xlu0 %3252, %v300
      %v3254 = vpop.permute.xlu0 %3253
      %3256 = vset.pattern.permute.xlu0 3
      %3257 = vperm.xlu0 %3256, %v301
      %v3258 = vpop.permute.xlu0 %3257
      %v3260 = vlaneseq
      %v3261 = vshrl.u32 %v3260, 7
      %v3262 = vsub.s32 3, %v3261
      %v3263 = vrot.slane %v302, %v3262
      %v3264 = vmul.f32 %v2750, %v3263
      %v3265 = vmul.f32 %v2754, %v3263
      %v3266 = vmul.f32 %v2758, %v3263
      %v3267 = vmul.f32 %v2762, %v3263
      %v3268 = vmul.f32 %v2766, %v3263
      %v3269 = vmul.f32 %v2770, %v3263
      %v3270 = vmul.f32 %v2774, %v3263
      %v3271 = vmul.f32 %v2778, %v3263
      %v3272 = vmul.f32 %v2782, %v3263
      %v3273 = vmul.f32 %v2786, %v3263
      %v3274 = vmul.f32 %v2790, %v3263
      %v3275 = vmul.f32 %v2794, %v3263
      %v3276 = vmul.f32 %v2798, %v3263
      %v3277 = vmul.f32 %v2802, %v3263
      %v3278 = vmul.f32 %v2806, %v3263
      %v3279 = vmul.f32 %v2810, %v3263
      %v3280 = vmul.f32 %v2814, %v3263
      %v3281 = vmul.f32 %v2818, %v3263
      %v3282 = vmul.f32 %v2822, %v3263
      %v3283 = vmul.f32 %v2826, %v3263
      %v3284 = vmul.f32 %v2830, %v3263
      %v3285 = vmul.f32 %v2834, %v3263
      %v3286 = vmul.f32 %v2838, %v3263
      %v3287 = vmul.f32 %v2842, %v3263
      %v3288 = vmul.f32 %v2846, %v3263
      %v3289 = vmul.f32 %v2850, %v3263
      %v3290 = vmul.f32 %v2854, %v3263
      %v3291 = vmul.f32 %v2858, %v3263
      %v3292 = vmul.f32 %v2862, %v3263
      %v3293 = vmul.f32 %v2866, %v3263
      %v3294 = vmul.f32 %v2870, %v3263
      %v3295 = vmul.f32 %v2874, %v3263
      %v3296 = vmul.f32 %v2878, %v3263
      %v3297 = vmul.f32 %v2882, %v3263
      %v3298 = vmul.f32 %v2886, %v3263
      %v3299 = vmul.f32 %v2890, %v3263
      %v3300 = vmul.f32 %v2894, %v3263
      %v3301 = vmul.f32 %v2898, %v3263
      %v3302 = vmul.f32 %v2902, %v3263
      %v3303 = vmul.f32 %v2906, %v3263
      %v3304 = vmul.f32 %v2910, %v3263
      %v3305 = vmul.f32 %v2914, %v3263
      %v3306 = vmul.f32 %v2918, %v3263
      %v3307 = vmul.f32 %v2922, %v3263
      %v3308 = vmul.f32 %v2926, %v3263
      %v3309 = vmul.f32 %v2930, %v3263
      %v3310 = vmul.f32 %v2934, %v3263
      %v3311 = vmul.f32 %v2938, %v3263
      %v3312 = vmul.f32 %v2942, %v3263
      %v3313 = vmul.f32 %v2946, %v3263
      %v3314 = vmul.f32 %v2950, %v3263
      %v3315 = vmul.f32 %v2954, %v3263
      %v3316 = vmul.f32 %v2958, %v3263
      %v3317 = vmul.f32 %v2962, %v3263
      %v3318 = vmul.f32 %v2966, %v3263
      %v3319 = vmul.f32 %v2970, %v3263
      %v3320 = vmul.f32 %v2974, %v3263
      %v3321 = vmul.f32 %v2978, %v3263
      %v3322 = vmul.f32 %v2982, %v3263
      %v3323 = vmul.f32 %v2986, %v3263
      %v3324 = vmul.f32 %v2990, %v3263
      %v3325 = vmul.f32 %v2994, %v3263
      %v3326 = vmul.f32 %v2998, %v3263
      %v3327 = vmul.f32 %v3002, %v3263
      %v3328 = vmul.f32 %v3006, %v3263
      %v3329 = vmul.f32 %v3010, %v3263
      %v3330 = vmul.f32 %v3014, %v3263
      %v3331 = vmul.f32 %v3018, %v3263
      %v3332 = vmul.f32 %v3022, %v3263
      %v3333 = vmul.f32 %v3026, %v3263
      %v3334 = vmul.f32 %v3030, %v3263
      %v3335 = vmul.f32 %v3034, %v3263
      %v3336 = vmul.f32 %v3038, %v3263
      %v3337 = vmul.f32 %v3042, %v3263
      %v3338 = vmul.f32 %v3046, %v3263
      %v3339 = vmul.f32 %v3050, %v3263
      %v3340 = vmul.f32 %v3054, %v3263
      %v3341 = vmul.f32 %v3058, %v3263
      %v3342 = vmul.f32 %v3062, %v3263
      %v3343 = vmul.f32 %v3066, %v3263
      %v3344 = vmul.f32 %v3070, %v3263
      %v3345 = vmul.f32 %v3074, %v3263
      %v3346 = vmul.f32 %v3078, %v3263
      %v3347 = vmul.f32 %v3082, %v3263
      %v3348 = vmul.f32 %v3086, %v3263
      %v3349 = vmul.f32 %v3090, %v3263
      %v3350 = vmul.f32 %v3094, %v3263
      %v3351 = vmul.f32 %v3098, %v3263
      %v3352 = vmul.f32 %v3102, %v3263
      %v3353 = vmul.f32 %v3106, %v3263
      %v3354 = vmul.f32 %v3110, %v3263
      %v3355 = vmul.f32 %v3114, %v3263
      %v3356 = vmul.f32 %v3118, %v3263
      %v3357 = vmul.f32 %v3122, %v3263
      %v3358 = vmul.f32 %v3126, %v3263
      %v3359 = vmul.f32 %v3130, %v3263
      %v3360 = vmul.f32 %v3134, %v3263
      %v3361 = vmul.f32 %v3138, %v3263
      %v3362 = vmul.f32 %v3142, %v3263
      %v3363 = vmul.f32 %v3146, %v3263
      %v3364 = vmul.f32 %v3150, %v3263
      %v3365 = vmul.f32 %v3154, %v3263
      %v3366 = vmul.f32 %v3158, %v3263
      %v3367 = vmul.f32 %v3162, %v3263
      %v3368 = vmul.f32 %v3166, %v3263
      %v3369 = vmul.f32 %v3170, %v3263
      %v3370 = vmul.f32 %v3174, %v3263
      %v3371 = vmul.f32 %v3178, %v3263
      %v3372 = vmul.f32 %v3182, %v3263
      %v3373 = vmul.f32 %v3186, %v3263
      %v3374 = vmul.f32 %v3190, %v3263
      %v3375 = vmul.f32 %v3194, %v3263
      %v3376 = vmul.f32 %v3198, %v3263
      %v3377 = vmul.f32 %v3202, %v3263
      %v3378 = vmul.f32 %v3206, %v3263
      %v3379 = vmul.f32 %v3210, %v3263
      %v3380 = vmul.f32 %v3214, %v3263
      %v3381 = vmul.f32 %v3218, %v3263
      %v3382 = vmul.f32 %v3222, %v3263
      %v3383 = vmul.f32 %v3226, %v3263
      %v3384 = vmul.f32 %v3230, %v3263
      %v3385 = vmul.f32 %v3234, %v3263
      %v3386 = vmul.f32 %v3238, %v3263
      %v3387 = vmul.f32 %v3242, %v3263
      %v3388 = vmul.f32 %v3246, %v3263
      %v3389 = vmul.f32 %v3250, %v3263
      %v3390 = vmul.f32 %v3254, %v3263
      %v3391 = vmul.f32 %v3258, %v3263
      %v3392 = vadd.f32 %v2620, %v3264
      %v3393 = vadd.f32 %v2621, %v3265
      %v3394 = vadd.f32 %v2622, %v3266
      %v3395 = vadd.f32 %v2623, %v3267
      %v3396 = vadd.f32 %v2624, %v3268
      %v3397 = vadd.f32 %v2625, %v3269
      %v3398 = vadd.f32 %v2626, %v3270
      %v3399 = vadd.f32 %v2627, %v3271
      %v3400 = vadd.f32 %v2628, %v3272
      %v3401 = vadd.f32 %v2629, %v3273
      %v3402 = vadd.f32 %v2630, %v3274
      %v3403 = vadd.f32 %v2631, %v3275
      %v3404 = vadd.f32 %v2632, %v3276
      %v3405 = vadd.f32 %v2633, %v3277
      %v3406 = vadd.f32 %v2634, %v3278
      %v3407 = vadd.f32 %v2635, %v3279
      %v3408 = vadd.f32 %v2636, %v3280
      %v3409 = vadd.f32 %v2637, %v3281
      %v3410 = vadd.f32 %v2638, %v3282
      %v3411 = vadd.f32 %v2639, %v3283
      %v3412 = vadd.f32 %v2640, %v3284
      %v3413 = vadd.f32 %v2641, %v3285
      %v3414 = vadd.f32 %v2642, %v3286
      %v3415 = vadd.f32 %v2643, %v3287
      %v3416 = vadd.f32 %v2644, %v3288
      %v3417 = vadd.f32 %v2645, %v3289
      %v3418 = vadd.f32 %v2646, %v3290
      %v3419 = vadd.f32 %v2647, %v3291
      %v3420 = vadd.f32 %v2648, %v3292
      %v3421 = vadd.f32 %v2649, %v3293
      %v3422 = vadd.f32 %v2650, %v3294
      %v3423 = vadd.f32 %v2651, %v3295
      %v3424 = vadd.f32 %v2652, %v3296
      %v3425 = vadd.f32 %v2653, %v3297
      %v3426 = vadd.f32 %v2654, %v3298
      %v3427 = vadd.f32 %v2655, %v3299
      %v3428 = vadd.f32 %v2656, %v3300
      %v3429 = vadd.f32 %v2657, %v3301
      %v3430 = vadd.f32 %v2658, %v3302
      %v3431 = vadd.f32 %v2659, %v3303
      %v3432 = vadd.f32 %v2660, %v3304
      %v3433 = vadd.f32 %v2661, %v3305
      %v3434 = vadd.f32 %v2662, %v3306
      %v3435 = vadd.f32 %v2663, %v3307
      %v3436 = vadd.f32 %v2664, %v3308
      %v3437 = vadd.f32 %v2665, %v3309
      %v3438 = vadd.f32 %v2666, %v3310
      %v3439 = vadd.f32 %v2667, %v3311
      %v3440 = vadd.f32 %v2668, %v3312
      %v3441 = vadd.f32 %v2669, %v3313
      %v3442 = vadd.f32 %v2670, %v3314
      %v3443 = vadd.f32 %v2671, %v3315
      %v3444 = vadd.f32 %v2672, %v3316
      %v3445 = vadd.f32 %v2673, %v3317
      %v3446 = vadd.f32 %v2674, %v3318
      %v3447 = vadd.f32 %v2675, %v3319
      %v3448 = vadd.f32 %v2676, %v3320
      %v3449 = vadd.f32 %v2677, %v3321
      %v3450 = vadd.f32 %v2678, %v3322
      %v3451 = vadd.f32 %v2679, %v3323
      %v3452 = vadd.f32 %v2680, %v3324
      %v3453 = vadd.f32 %v2681, %v3325
      %v3454 = vadd.f32 %v2682, %v3326
      %v3455 = vadd.f32 %v2683, %v3327
      %v3456 = vadd.f32 %v2684, %v3328
      %v3457 = vadd.f32 %v2685, %v3329
      %v3458 = vadd.f32 %v2686, %v3330
      %v3459 = vadd.f32 %v2687, %v3331
      %v3460 = vadd.f32 %v2688, %v3332
      %v3461 = vadd.f32 %v2689, %v3333
      %v3462 = vadd.f32 %v2690, %v3334
      %v3463 = vadd.f32 %v2691, %v3335
      %v3464 = vadd.f32 %v2692, %v3336
      %v3465 = vadd.f32 %v2693, %v3337
      %v3466 = vadd.f32 %v2694, %v3338
      %v3467 = vadd.f32 %v2695, %v3339
      %v3468 = vadd.f32 %v2696, %v3340
      %v3469 = vadd.f32 %v2697, %v3341
      %v3470 = vadd.f32 %v2698, %v3342
      %v3471 = vadd.f32 %v2699, %v3343
      %v3472 = vadd.f32 %v2700, %v3344
      %v3473 = vadd.f32 %v2701, %v3345
      %v3474 = vadd.f32 %v2702, %v3346
      %v3475 = vadd.f32 %v2703, %v3347
      %v3476 = vadd.f32 %v2704, %v3348
      %v3477 = vadd.f32 %v2705, %v3349
      %v3478 = vadd.f32 %v2706, %v3350
      %v3479 = vadd.f32 %v2707, %v3351
      %v3480 = vadd.f32 %v2708, %v3352
      %v3481 = vadd.f32 %v2709, %v3353
      %v3482 = vadd.f32 %v2710, %v3354
      %v3483 = vadd.f32 %v2711, %v3355
      %v3484 = vadd.f32 %v2712, %v3356
      %v3485 = vadd.f32 %v2713, %v3357
      %v3486 = vadd.f32 %v2714, %v3358
      %v3487 = vadd.f32 %v2715, %v3359
      %v3488 = vadd.f32 %v2716, %v3360
      %v3489 = vadd.f32 %v2717, %v3361
      %v3490 = vadd.f32 %v2718, %v3362
      %v3491 = vadd.f32 %v2719, %v3363
      %v3492 = vadd.f32 %v2720, %v3364
      %v3493 = vadd.f32 %v2721, %v3365
      %v3494 = vadd.f32 %v2722, %v3366
      %v3495 = vadd.f32 %v2723, %v3367
      %v3496 = vadd.f32 %v2724, %v3368
      %v3497 = vadd.f32 %v2725, %v3369
      %v3498 = vadd.f32 %v2726, %v3370
      %v3499 = vadd.f32 %v2727, %v3371
      %v3500 = vadd.f32 %v2728, %v3372
      %v3501 = vadd.f32 %v2729, %v3373
      %v3502 = vadd.f32 %v2730, %v3374
      %v3503 = vadd.f32 %v2731, %v3375
      %v3504 = vadd.f32 %v2732, %v3376
      %v3505 = vadd.f32 %v2733, %v3377
      %v3506 = vadd.f32 %v2734, %v3378
      %v3507 = vadd.f32 %v2735, %v3379
      %v3508 = vadd.f32 %v2736, %v3380
      %v3509 = vadd.f32 %v2737, %v3381
      %v3510 = vadd.f32 %v2738, %v3382
      %v3511 = vadd.f32 %v2739, %v3383
      %v3512 = vadd.f32 %v2740, %v3384
      %v3513 = vadd.f32 %v2741, %v3385
      %v3514 = vadd.f32 %v2742, %v3386
      %v3515 = vadd.f32 %v2743, %v3387
      %v3516 = vadd.f32 %v2744, %v3388
      %v3517 = vadd.f32 %v2745, %v3389
      %v3518 = vadd.f32 %v2746, %v3390
      %v3519 = vadd.f32 %v2747, %v3391
      %3520 = vset.pattern.permute.xlu0 4
      %3521 = vperm.xlu0 %3520, %v174
      %v3522 = vpop.permute.xlu0 %3521
      %3524 = vset.pattern.permute.xlu0 4
      %3525 = vperm.xlu0 %3524, %v175
      %v3526 = vpop.permute.xlu0 %3525
      %3528 = vset.pattern.permute.xlu0 4
      %3529 = vperm.xlu0 %3528, %v176
      %v3530 = vpop.permute.xlu0 %3529
      %3532 = vset.pattern.permute.xlu0 4
      %3533 = vperm.xlu0 %3532, %v177
      %v3534 = vpop.permute.xlu0 %3533
      %3536 = vset.pattern.permute.xlu0 4
      %3537 = vperm.xlu0 %3536, %v178
      %v3538 = vpop.permute.xlu0 %3537
      %3540 = vset.pattern.permute.xlu0 4
      %3541 = vperm.xlu0 %3540, %v179
      %v3542 = vpop.permute.xlu0 %3541
      %3544 = vset.pattern.permute.xlu0 4
      %3545 = vperm.xlu0 %3544, %v180
      %v3546 = vpop.permute.xlu0 %3545
      %3548 = vset.pattern.permute.xlu0 4
      %3549 = vperm.xlu0 %3548, %v181
      %v3550 = vpop.permute.xlu0 %3549
      %3552 = vset.pattern.permute.xlu0 4
      %3553 = vperm.xlu0 %3552, %v182
      %v3554 = vpop.permute.xlu0 %3553
      %3556 = vset.pattern.permute.xlu0 4
      %3557 = vperm.xlu0 %3556, %v183
      %v3558 = vpop.permute.xlu0 %3557
      %3560 = vset.pattern.permute.xlu0 4
      %3561 = vperm.xlu0 %3560, %v184
      %v3562 = vpop.permute.xlu0 %3561
      %3564 = vset.pattern.permute.xlu0 4
      %3565 = vperm.xlu0 %3564, %v185
      %v3566 = vpop.permute.xlu0 %3565
      %3568 = vset.pattern.permute.xlu0 4
      %3569 = vperm.xlu0 %3568, %v186
      %v3570 = vpop.permute.xlu0 %3569
      %3572 = vset.pattern.permute.xlu0 4
      %3573 = vperm.xlu0 %3572, %v187
      %v3574 = vpop.permute.xlu0 %3573
      %3576 = vset.pattern.permute.xlu0 4
      %3577 = vperm.xlu0 %3576, %v188
      %v3578 = vpop.permute.xlu0 %3577
      %3580 = vset.pattern.permute.xlu0 4
      %3581 = vperm.xlu0 %3580, %v189
      %v3582 = vpop.permute.xlu0 %3581
      %3584 = vset.pattern.permute.xlu0 4
      %3585 = vperm.xlu0 %3584, %v190
      %v3586 = vpop.permute.xlu0 %3585
      %3588 = vset.pattern.permute.xlu0 4
      %3589 = vperm.xlu0 %3588, %v191
      %v3590 = vpop.permute.xlu0 %3589
      %3592 = vset.pattern.permute.xlu0 4
      %3593 = vperm.xlu0 %3592, %v192
      %v3594 = vpop.permute.xlu0 %3593
      %3596 = vset.pattern.permute.xlu0 4
      %3597 = vperm.xlu0 %3596, %v193
      %v3598 = vpop.permute.xlu0 %3597
      %3600 = vset.pattern.permute.xlu0 4
      %3601 = vperm.xlu0 %3600, %v194
      %v3602 = vpop.permute.xlu0 %3601
      %3604 = vset.pattern.permute.xlu0 4
      %3605 = vperm.xlu0 %3604, %v195
      %v3606 = vpop.permute.xlu0 %3605
      %3608 = vset.pattern.permute.xlu0 4
      %3609 = vperm.xlu0 %3608, %v196
      %v3610 = vpop.permute.xlu0 %3609
      %3612 = vset.pattern.permute.xlu0 4
      %3613 = vperm.xlu0 %3612, %v197
      %v3614 = vpop.permute.xlu0 %3613
      %3616 = vset.pattern.permute.xlu0 4
      %3617 = vperm.xlu0 %3616, %v198
      %v3618 = vpop.permute.xlu0 %3617
      %3620 = vset.pattern.permute.xlu0 4
      %3621 = vperm.xlu0 %3620, %v199
      %v3622 = vpop.permute.xlu0 %3621
      %3624 = vset.pattern.permute.xlu0 4
      %3625 = vperm.xlu0 %3624, %v200
      %v3626 = vpop.permute.xlu0 %3625
      %3628 = vset.pattern.permute.xlu0 4
      %3629 = vperm.xlu0 %3628, %v201
      %v3630 = vpop.permute.xlu0 %3629
      %3632 = vset.pattern.permute.xlu0 4
      %3633 = vperm.xlu0 %3632, %v202
      %v3634 = vpop.permute.xlu0 %3633
      %3636 = vset.pattern.permute.xlu0 4
      %3637 = vperm.xlu0 %3636, %v203
      %v3638 = vpop.permute.xlu0 %3637
      %3640 = vset.pattern.permute.xlu0 4
      %3641 = vperm.xlu0 %3640, %v204
      %v3642 = vpop.permute.xlu0 %3641
      %3644 = vset.pattern.permute.xlu0 4
      %3645 = vperm.xlu0 %3644, %v205
      %v3646 = vpop.permute.xlu0 %3645
      %3648 = vset.pattern.permute.xlu0 4
      %3649 = vperm.xlu0 %3648, %v206
      %v3650 = vpop.permute.xlu0 %3649
      %3652 = vset.pattern.permute.xlu0 4
      %3653 = vperm.xlu0 %3652, %v207
      %v3654 = vpop.permute.xlu0 %3653
      %3656 = vset.pattern.permute.xlu0 4
      %3657 = vperm.xlu0 %3656, %v208
      %v3658 = vpop.permute.xlu0 %3657
      %3660 = vset.pattern.permute.xlu0 4
      %3661 = vperm.xlu0 %3660, %v209
      %v3662 = vpop.permute.xlu0 %3661
      %3664 = vset.pattern.permute.xlu0 4
      %3665 = vperm.xlu0 %3664, %v210
      %v3666 = vpop.permute.xlu0 %3665
      %3668 = vset.pattern.permute.xlu0 4
      %3669 = vperm.xlu0 %3668, %v211
      %v3670 = vpop.permute.xlu0 %3669
      %3672 = vset.pattern.permute.xlu0 4
      %3673 = vperm.xlu0 %3672, %v212
      %v3674 = vpop.permute.xlu0 %3673
      %3676 = vset.pattern.permute.xlu0 4
      %3677 = vperm.xlu0 %3676, %v213
      %v3678 = vpop.permute.xlu0 %3677
      %3680 = vset.pattern.permute.xlu0 4
      %3681 = vperm.xlu0 %3680, %v214
      %v3682 = vpop.permute.xlu0 %3681
      %3684 = vset.pattern.permute.xlu0 4
      %3685 = vperm.xlu0 %3684, %v215
      %v3686 = vpop.permute.xlu0 %3685
      %3688 = vset.pattern.permute.xlu0 4
      %3689 = vperm.xlu0 %3688, %v216
      %v3690 = vpop.permute.xlu0 %3689
      %3692 = vset.pattern.permute.xlu0 4
      %3693 = vperm.xlu0 %3692, %v217
      %v3694 = vpop.permute.xlu0 %3693
      %3696 = vset.pattern.permute.xlu0 4
      %3697 = vperm.xlu0 %3696, %v218
      %v3698 = vpop.permute.xlu0 %3697
      %3700 = vset.pattern.permute.xlu0 4
      %3701 = vperm.xlu0 %3700, %v219
      %v3702 = vpop.permute.xlu0 %3701
      %3704 = vset.pattern.permute.xlu0 4
      %3705 = vperm.xlu0 %3704, %v220
      %v3706 = vpop.permute.xlu0 %3705
      %3708 = vset.pattern.permute.xlu0 4
      %3709 = vperm.xlu0 %3708, %v221
      %v3710 = vpop.permute.xlu0 %3709
      %3712 = vset.pattern.permute.xlu0 4
      %3713 = vperm.xlu0 %3712, %v222
      %v3714 = vpop.permute.xlu0 %3713
      %3716 = vset.pattern.permute.xlu0 4
      %3717 = vperm.xlu0 %3716, %v223
      %v3718 = vpop.permute.xlu0 %3717
      %3720 = vset.pattern.permute.xlu0 4
      %3721 = vperm.xlu0 %3720, %v224
      %v3722 = vpop.permute.xlu0 %3721
      %3724 = vset.pattern.permute.xlu0 4
      %3725 = vperm.xlu0 %3724, %v225
      %v3726 = vpop.permute.xlu0 %3725
      %3728 = vset.pattern.permute.xlu0 4
      %3729 = vperm.xlu0 %3728, %v226
      %v3730 = vpop.permute.xlu0 %3729
      %3732 = vset.pattern.permute.xlu0 4
      %3733 = vperm.xlu0 %3732, %v227
      %v3734 = vpop.permute.xlu0 %3733
      %3736 = vset.pattern.permute.xlu0 4
      %3737 = vperm.xlu0 %3736, %v228
      %v3738 = vpop.permute.xlu0 %3737
      %3740 = vset.pattern.permute.xlu0 4
      %3741 = vperm.xlu0 %3740, %v229
      %v3742 = vpop.permute.xlu0 %3741
      %3744 = vset.pattern.permute.xlu0 4
      %3745 = vperm.xlu0 %3744, %v230
      %v3746 = vpop.permute.xlu0 %3745
      %3748 = vset.pattern.permute.xlu0 4
      %3749 = vperm.xlu0 %3748, %v231
      %v3750 = vpop.permute.xlu0 %3749
      %3752 = vset.pattern.permute.xlu0 4
      %3753 = vperm.xlu0 %3752, %v232
      %v3754 = vpop.permute.xlu0 %3753
      %3756 = vset.pattern.permute.xlu0 4
      %3757 = vperm.xlu0 %3756, %v233
      %v3758 = vpop.permute.xlu0 %3757
      %3760 = vset.pattern.permute.xlu0 4
      %3761 = vperm.xlu0 %3760, %v234
      %v3762 = vpop.permute.xlu0 %3761
      %3764 = vset.pattern.permute.xlu0 4
      %3765 = vperm.xlu0 %3764, %v235
      %v3766 = vpop.permute.xlu0 %3765
      %3768 = vset.pattern.permute.xlu0 4
      %3769 = vperm.xlu0 %3768, %v236
      %v3770 = vpop.permute.xlu0 %3769
      %3772 = vset.pattern.permute.xlu0 4
      %3773 = vperm.xlu0 %3772, %v237
      %v3774 = vpop.permute.xlu0 %3773
      %3776 = vset.pattern.permute.xlu0 4
      %3777 = vperm.xlu0 %3776, %v238
      %v3778 = vpop.permute.xlu0 %3777
      %3780 = vset.pattern.permute.xlu0 4
      %3781 = vperm.xlu0 %3780, %v239
      %v3782 = vpop.permute.xlu0 %3781
      %3784 = vset.pattern.permute.xlu0 4
      %3785 = vperm.xlu0 %3784, %v240
      %v3786 = vpop.permute.xlu0 %3785
      %3788 = vset.pattern.permute.xlu0 4
      %3789 = vperm.xlu0 %3788, %v241
      %v3790 = vpop.permute.xlu0 %3789
      %3792 = vset.pattern.permute.xlu0 4
      %3793 = vperm.xlu0 %3792, %v242
      %v3794 = vpop.permute.xlu0 %3793
      %3796 = vset.pattern.permute.xlu0 4
      %3797 = vperm.xlu0 %3796, %v243
      %v3798 = vpop.permute.xlu0 %3797
      %3800 = vset.pattern.permute.xlu0 4
      %3801 = vperm.xlu0 %3800, %v244
      %v3802 = vpop.permute.xlu0 %3801
      %3804 = vset.pattern.permute.xlu0 4
      %3805 = vperm.xlu0 %3804, %v245
      %v3806 = vpop.permute.xlu0 %3805
      %3808 = vset.pattern.permute.xlu0 4
      %3809 = vperm.xlu0 %3808, %v246
      %v3810 = vpop.permute.xlu0 %3809
      %3812 = vset.pattern.permute.xlu0 4
      %3813 = vperm.xlu0 %3812, %v247
      %v3814 = vpop.permute.xlu0 %3813
      %3816 = vset.pattern.permute.xlu0 4
      %3817 = vperm.xlu0 %3816, %v248
      %v3818 = vpop.permute.xlu0 %3817
      %3820 = vset.pattern.permute.xlu0 4
      %3821 = vperm.xlu0 %3820, %v249
      %v3822 = vpop.permute.xlu0 %3821
      %3824 = vset.pattern.permute.xlu0 4
      %3825 = vperm.xlu0 %3824, %v250
      %v3826 = vpop.permute.xlu0 %3825
      %3828 = vset.pattern.permute.xlu0 4
      %3829 = vperm.xlu0 %3828, %v251
      %v3830 = vpop.permute.xlu0 %3829
      %3832 = vset.pattern.permute.xlu0 4
      %3833 = vperm.xlu0 %3832, %v252
      %v3834 = vpop.permute.xlu0 %3833
      %3836 = vset.pattern.permute.xlu0 4
      %3837 = vperm.xlu0 %3836, %v253
      %v3838 = vpop.permute.xlu0 %3837
      %3840 = vset.pattern.permute.xlu0 4
      %3841 = vperm.xlu0 %3840, %v254
      %v3842 = vpop.permute.xlu0 %3841
      %3844 = vset.pattern.permute.xlu0 4
      %3845 = vperm.xlu0 %3844, %v255
      %v3846 = vpop.permute.xlu0 %3845
      %3848 = vset.pattern.permute.xlu0 4
      %3849 = vperm.xlu0 %3848, %v256
      %v3850 = vpop.permute.xlu0 %3849
      %3852 = vset.pattern.permute.xlu0 4
      %3853 = vperm.xlu0 %3852, %v257
      %v3854 = vpop.permute.xlu0 %3853
      %3856 = vset.pattern.permute.xlu0 4
      %3857 = vperm.xlu0 %3856, %v258
      %v3858 = vpop.permute.xlu0 %3857
      %3860 = vset.pattern.permute.xlu0 4
      %3861 = vperm.xlu0 %3860, %v259
      %v3862 = vpop.permute.xlu0 %3861
      %3864 = vset.pattern.permute.xlu0 4
      %3865 = vperm.xlu0 %3864, %v260
      %v3866 = vpop.permute.xlu0 %3865
      %3868 = vset.pattern.permute.xlu0 4
      %3869 = vperm.xlu0 %3868, %v261
      %v3870 = vpop.permute.xlu0 %3869
      %3872 = vset.pattern.permute.xlu0 4
      %3873 = vperm.xlu0 %3872, %v262
      %v3874 = vpop.permute.xlu0 %3873
      %3876 = vset.pattern.permute.xlu0 4
      %3877 = vperm.xlu0 %3876, %v263
      %v3878 = vpop.permute.xlu0 %3877
      %3880 = vset.pattern.permute.xlu0 4
      %3881 = vperm.xlu0 %3880, %v264
      %v3882 = vpop.permute.xlu0 %3881
      %3884 = vset.pattern.permute.xlu0 4
      %3885 = vperm.xlu0 %3884, %v265
      %v3886 = vpop.permute.xlu0 %3885
      %3888 = vset.pattern.permute.xlu0 4
      %3889 = vperm.xlu0 %3888, %v266
      %v3890 = vpop.permute.xlu0 %3889
      %3892 = vset.pattern.permute.xlu0 4
      %3893 = vperm.xlu0 %3892, %v267
      %v3894 = vpop.permute.xlu0 %3893
      %3896 = vset.pattern.permute.xlu0 4
      %3897 = vperm.xlu0 %3896, %v268
      %v3898 = vpop.permute.xlu0 %3897
      %3900 = vset.pattern.permute.xlu0 4
      %3901 = vperm.xlu0 %3900, %v269
      %v3902 = vpop.permute.xlu0 %3901
      %3904 = vset.pattern.permute.xlu0 4
      %3905 = vperm.xlu0 %3904, %v270
      %v3906 = vpop.permute.xlu0 %3905
      %3908 = vset.pattern.permute.xlu0 4
      %3909 = vperm.xlu0 %3908, %v271
      %v3910 = vpop.permute.xlu0 %3909
      %3912 = vset.pattern.permute.xlu0 4
      %3913 = vperm.xlu0 %3912, %v272
      %v3914 = vpop.permute.xlu0 %3913
      %3916 = vset.pattern.permute.xlu0 4
      %3917 = vperm.xlu0 %3916, %v273
      %v3918 = vpop.permute.xlu0 %3917
      %3920 = vset.pattern.permute.xlu0 4
      %3921 = vperm.xlu0 %3920, %v274
      %v3922 = vpop.permute.xlu0 %3921
      %3924 = vset.pattern.permute.xlu0 4
      %3925 = vperm.xlu0 %3924, %v275
      %v3926 = vpop.permute.xlu0 %3925
      %3928 = vset.pattern.permute.xlu0 4
      %3929 = vperm.xlu0 %3928, %v276
      %v3930 = vpop.permute.xlu0 %3929
      %3932 = vset.pattern.permute.xlu0 4
      %3933 = vperm.xlu0 %3932, %v277
      %v3934 = vpop.permute.xlu0 %3933
      %3936 = vset.pattern.permute.xlu0 4
      %3937 = vperm.xlu0 %3936, %v278
      %v3938 = vpop.permute.xlu0 %3937
      %3940 = vset.pattern.permute.xlu0 4
      %3941 = vperm.xlu0 %3940, %v279
      %v3942 = vpop.permute.xlu0 %3941
      %3944 = vset.pattern.permute.xlu0 4
      %3945 = vperm.xlu0 %3944, %v280
      %v3946 = vpop.permute.xlu0 %3945
      %3948 = vset.pattern.permute.xlu0 4
      %3949 = vperm.xlu0 %3948, %v281
      %v3950 = vpop.permute.xlu0 %3949
      %3952 = vset.pattern.permute.xlu0 4
      %3953 = vperm.xlu0 %3952, %v282
      %v3954 = vpop.permute.xlu0 %3953
      %3956 = vset.pattern.permute.xlu0 4
      %3957 = vperm.xlu0 %3956, %v283
      %v3958 = vpop.permute.xlu0 %3957
      %3960 = vset.pattern.permute.xlu0 4
      %3961 = vperm.xlu0 %3960, %v284
      %v3962 = vpop.permute.xlu0 %3961
      %3964 = vset.pattern.permute.xlu0 4
      %3965 = vperm.xlu0 %3964, %v285
      %v3966 = vpop.permute.xlu0 %3965
      %3968 = vset.pattern.permute.xlu0 4
      %3969 = vperm.xlu0 %3968, %v286
      %v3970 = vpop.permute.xlu0 %3969
      %3972 = vset.pattern.permute.xlu0 4
      %3973 = vperm.xlu0 %3972, %v287
      %v3974 = vpop.permute.xlu0 %3973
      %3976 = vset.pattern.permute.xlu0 4
      %3977 = vperm.xlu0 %3976, %v288
      %v3978 = vpop.permute.xlu0 %3977
      %3980 = vset.pattern.permute.xlu0 4
      %3981 = vperm.xlu0 %3980, %v289
      %v3982 = vpop.permute.xlu0 %3981
      %3984 = vset.pattern.permute.xlu0 4
      %3985 = vperm.xlu0 %3984, %v290
      %v3986 = vpop.permute.xlu0 %3985
      %3988 = vset.pattern.permute.xlu0 4
      %3989 = vperm.xlu0 %3988, %v291
      %v3990 = vpop.permute.xlu0 %3989
      %3992 = vset.pattern.permute.xlu0 4
      %3993 = vperm.xlu0 %3992, %v292
      %v3994 = vpop.permute.xlu0 %3993
      %3996 = vset.pattern.permute.xlu0 4
      %3997 = vperm.xlu0 %3996, %v293
      %v3998 = vpop.permute.xlu0 %3997
      %4000 = vset.pattern.permute.xlu0 4
      %4001 = vperm.xlu0 %4000, %v294
      %v4002 = vpop.permute.xlu0 %4001
      %4004 = vset.pattern.permute.xlu0 4
      %4005 = vperm.xlu0 %4004, %v295
      %v4006 = vpop.permute.xlu0 %4005
      %4008 = vset.pattern.permute.xlu0 4
      %4009 = vperm.xlu0 %4008, %v296
      %v4010 = vpop.permute.xlu0 %4009
      %4012 = vset.pattern.permute.xlu0 4
      %4013 = vperm.xlu0 %4012, %v297
      %v4014 = vpop.permute.xlu0 %4013
      %4016 = vset.pattern.permute.xlu0 4
      %4017 = vperm.xlu0 %4016, %v298
      %v4018 = vpop.permute.xlu0 %4017
      %4020 = vset.pattern.permute.xlu0 4
      %4021 = vperm.xlu0 %4020, %v299
      %v4022 = vpop.permute.xlu0 %4021
      %4024 = vset.pattern.permute.xlu0 4
      %4025 = vperm.xlu0 %4024, %v300
      %v4026 = vpop.permute.xlu0 %4025
      %4028 = vset.pattern.permute.xlu0 4
      %4029 = vperm.xlu0 %4028, %v301
      %v4030 = vpop.permute.xlu0 %4029
      %v4032 = vlaneseq
      %v4033 = vshrl.u32 %v4032, 7
      %v4034 = vsub.s32 4, %v4033
      %v4035 = vrot.slane %v302, %v4034
      %v4036 = vmul.f32 %v3522, %v4035
      %v4037 = vmul.f32 %v3526, %v4035
      %v4038 = vmul.f32 %v3530, %v4035
      %v4039 = vmul.f32 %v3534, %v4035
      %v4040 = vmul.f32 %v3538, %v4035
      %v4041 = vmul.f32 %v3542, %v4035
      %v4042 = vmul.f32 %v3546, %v4035
      %v4043 = vmul.f32 %v3550, %v4035
      %v4044 = vmul.f32 %v3554, %v4035
      %v4045 = vmul.f32 %v3558, %v4035
      %v4046 = vmul.f32 %v3562, %v4035
      %v4047 = vmul.f32 %v3566, %v4035
      %v4048 = vmul.f32 %v3570, %v4035
      %v4049 = vmul.f32 %v3574, %v4035
      %v4050 = vmul.f32 %v3578, %v4035
      %v4051 = vmul.f32 %v3582, %v4035
      %v4052 = vmul.f32 %v3586, %v4035
      %v4053 = vmul.f32 %v3590, %v4035
      %v4054 = vmul.f32 %v3594, %v4035
      %v4055 = vmul.f32 %v3598, %v4035
      %v4056 = vmul.f32 %v3602, %v4035
      %v4057 = vmul.f32 %v3606, %v4035
      %v4058 = vmul.f32 %v3610, %v4035
      %v4059 = vmul.f32 %v3614, %v4035
      %v4060 = vmul.f32 %v3618, %v4035
      %v4061 = vmul.f32 %v3622, %v4035
      %v4062 = vmul.f32 %v3626, %v4035
      %v4063 = vmul.f32 %v3630, %v4035
      %v4064 = vmul.f32 %v3634, %v4035
      %v4065 = vmul.f32 %v3638, %v4035
      %v4066 = vmul.f32 %v3642, %v4035
      %v4067 = vmul.f32 %v3646, %v4035
      %v4068 = vmul.f32 %v3650, %v4035
      %v4069 = vmul.f32 %v3654, %v4035
      %v4070 = vmul.f32 %v3658, %v4035
      %v4071 = vmul.f32 %v3662, %v4035
      %v4072 = vmul.f32 %v3666, %v4035
      %v4073 = vmul.f32 %v3670, %v4035
      %v4074 = vmul.f32 %v3674, %v4035
      %v4075 = vmul.f32 %v3678, %v4035
      %v4076 = vmul.f32 %v3682, %v4035
      %v4077 = vmul.f32 %v3686, %v4035
      %v4078 = vmul.f32 %v3690, %v4035
      %v4079 = vmul.f32 %v3694, %v4035
      %v4080 = vmul.f32 %v3698, %v4035
      %v4081 = vmul.f32 %v3702, %v4035
      %v4082 = vmul.f32 %v3706, %v4035
      %v4083 = vmul.f32 %v3710, %v4035
      %v4084 = vmul.f32 %v3714, %v4035
      %v4085 = vmul.f32 %v3718, %v4035
      %v4086 = vmul.f32 %v3722, %v4035
      %v4087 = vmul.f32 %v3726, %v4035
      %v4088 = vmul.f32 %v3730, %v4035
      %v4089 = vmul.f32 %v3734, %v4035
      %v4090 = vmul.f32 %v3738, %v4035
      %v4091 = vmul.f32 %v3742, %v4035
      %v4092 = vmul.f32 %v3746, %v4035
      %v4093 = vmul.f32 %v3750, %v4035
      %v4094 = vmul.f32 %v3754, %v4035
      %v4095 = vmul.f32 %v3758, %v4035
      %v4096 = vmul.f32 %v3762, %v4035
      %v4097 = vmul.f32 %v3766, %v4035
      %v4098 = vmul.f32 %v3770, %v4035
      %v4099 = vmul.f32 %v3774, %v4035
      %v4100 = vmul.f32 %v3778, %v4035
      %v4101 = vmul.f32 %v3782, %v4035
      %v4102 = vmul.f32 %v3786, %v4035
      %v4103 = vmul.f32 %v3790, %v4035
      %v4104 = vmul.f32 %v3794, %v4035
      %v4105 = vmul.f32 %v3798, %v4035
      %v4106 = vmul.f32 %v3802, %v4035
      %v4107 = vmul.f32 %v3806, %v4035
      %v4108 = vmul.f32 %v3810, %v4035
      %v4109 = vmul.f32 %v3814, %v4035
      %v4110 = vmul.f32 %v3818, %v4035
      %v4111 = vmul.f32 %v3822, %v4035
      %v4112 = vmul.f32 %v3826, %v4035
      %v4113 = vmul.f32 %v3830, %v4035
      %v4114 = vmul.f32 %v3834, %v4035
      %v4115 = vmul.f32 %v3838, %v4035
      %v4116 = vmul.f32 %v3842, %v4035
      %v4117 = vmul.f32 %v3846, %v4035
      %v4118 = vmul.f32 %v3850, %v4035
      %v4119 = vmul.f32 %v3854, %v4035
      %v4120 = vmul.f32 %v3858, %v4035
      %v4121 = vmul.f32 %v3862, %v4035
      %v4122 = vmul.f32 %v3866, %v4035
      %v4123 = vmul.f32 %v3870, %v4035
      %v4124 = vmul.f32 %v3874, %v4035
      %v4125 = vmul.f32 %v3878, %v4035
      %v4126 = vmul.f32 %v3882, %v4035
      %v4127 = vmul.f32 %v3886, %v4035
      %v4128 = vmul.f32 %v3890, %v4035
      %v4129 = vmul.f32 %v3894, %v4035
      %v4130 = vmul.f32 %v3898, %v4035
      %v4131 = vmul.f32 %v3902, %v4035
      %v4132 = vmul.f32 %v3906, %v4035
      %v4133 = vmul.f32 %v3910, %v4035
      %v4134 = vmul.f32 %v3914, %v4035
      %v4135 = vmul.f32 %v3918, %v4035
      %v4136 = vmul.f32 %v3922, %v4035
      %v4137 = vmul.f32 %v3926, %v4035
      %v4138 = vmul.f32 %v3930, %v4035
      %v4139 = vmul.f32 %v3934, %v4035
      %v4140 = vmul.f32 %v3938, %v4035
      %v4141 = vmul.f32 %v3942, %v4035
      %v4142 = vmul.f32 %v3946, %v4035
      %v4143 = vmul.f32 %v3950, %v4035
      %v4144 = vmul.f32 %v3954, %v4035
      %v4145 = vmul.f32 %v3958, %v4035
      %v4146 = vmul.f32 %v3962, %v4035
      %v4147 = vmul.f32 %v3966, %v4035
      %v4148 = vmul.f32 %v3970, %v4035
      %v4149 = vmul.f32 %v3974, %v4035
      %v4150 = vmul.f32 %v3978, %v4035
      %v4151 = vmul.f32 %v3982, %v4035
      %v4152 = vmul.f32 %v3986, %v4035
      %v4153 = vmul.f32 %v3990, %v4035
      %v4154 = vmul.f32 %v3994, %v4035
      %v4155 = vmul.f32 %v3998, %v4035
      %v4156 = vmul.f32 %v4002, %v4035
      %v4157 = vmul.f32 %v4006, %v4035
      %v4158 = vmul.f32 %v4010, %v4035
      %v4159 = vmul.f32 %v4014, %v4035
      %v4160 = vmul.f32 %v4018, %v4035
      %v4161 = vmul.f32 %v4022, %v4035
      %v4162 = vmul.f32 %v4026, %v4035
      %v4163 = vmul.f32 %v4030, %v4035
      %v4164 = vadd.f32 %v3392, %v4036
      %v4165 = vadd.f32 %v3393, %v4037
      %v4166 = vadd.f32 %v3394, %v4038
      %v4167 = vadd.f32 %v3395, %v4039
      %v4168 = vadd.f32 %v3396, %v4040
      %v4169 = vadd.f32 %v3397, %v4041
      %v4170 = vadd.f32 %v3398, %v4042
      %v4171 = vadd.f32 %v3399, %v4043
      %v4172 = vadd.f32 %v3400, %v4044
      %v4173 = vadd.f32 %v3401, %v4045
      %v4174 = vadd.f32 %v3402, %v4046
      %v4175 = vadd.f32 %v3403, %v4047
      %v4176 = vadd.f32 %v3404, %v4048
      %v4177 = vadd.f32 %v3405, %v4049
      %v4178 = vadd.f32 %v3406, %v4050
      %v4179 = vadd.f32 %v3407, %v4051
      %v4180 = vadd.f32 %v3408, %v4052
      %v4181 = vadd.f32 %v3409, %v4053
      %v4182 = vadd.f32 %v3410, %v4054
      %v4183 = vadd.f32 %v3411, %v4055
      %v4184 = vadd.f32 %v3412, %v4056
      %v4185 = vadd.f32 %v3413, %v4057
      %v4186 = vadd.f32 %v3414, %v4058
      %v4187 = vadd.f32 %v3415, %v4059
      %v4188 = vadd.f32 %v3416, %v4060
      %v4189 = vadd.f32 %v3417, %v4061
      %v4190 = vadd.f32 %v3418, %v4062
      %v4191 = vadd.f32 %v3419, %v4063
      %v4192 = vadd.f32 %v3420, %v4064
      %v4193 = vadd.f32 %v3421, %v4065
      %v4194 = vadd.f32 %v3422, %v4066
      %v4195 = vadd.f32 %v3423, %v4067
      %v4196 = vadd.f32 %v3424, %v4068
      %v4197 = vadd.f32 %v3425, %v4069
      %v4198 = vadd.f32 %v3426, %v4070
      %v4199 = vadd.f32 %v3427, %v4071
      %v4200 = vadd.f32 %v3428, %v4072
      %v4201 = vadd.f32 %v3429, %v4073
      %v4202 = vadd.f32 %v3430, %v4074
      %v4203 = vadd.f32 %v3431, %v4075
      %v4204 = vadd.f32 %v3432, %v4076
      %v4205 = vadd.f32 %v3433, %v4077
      %v4206 = vadd.f32 %v3434, %v4078
      %v4207 = vadd.f32 %v3435, %v4079
      %v4208 = vadd.f32 %v3436, %v4080
      %v4209 = vadd.f32 %v3437, %v4081
      %v4210 = vadd.f32 %v3438, %v4082
      %v4211 = vadd.f32 %v3439, %v4083
      %v4212 = vadd.f32 %v3440, %v4084
      %v4213 = vadd.f32 %v3441, %v4085
      %v4214 = vadd.f32 %v3442, %v4086
      %v4215 = vadd.f32 %v3443, %v4087
      %v4216 = vadd.f32 %v3444, %v4088
      %v4217 = vadd.f32 %v3445, %v4089
      %v4218 = vadd.f32 %v3446, %v4090
      %v4219 = vadd.f32 %v3447, %v4091
      %v4220 = vadd.f32 %v3448, %v4092
      %v4221 = vadd.f32 %v3449, %v4093
      %v4222 = vadd.f32 %v3450, %v4094
      %v4223 = vadd.f32 %v3451, %v4095
      %v4224 = vadd.f32 %v3452, %v4096
      %v4225 = vadd.f32 %v3453, %v4097
      %v4226 = vadd.f32 %v3454, %v4098
      %v4227 = vadd.f32 %v3455, %v4099
      %v4228 = vadd.f32 %v3456, %v4100
      %v4229 = vadd.f32 %v3457, %v4101
      %v4230 = vadd.f32 %v3458, %v4102
      %v4231 = vadd.f32 %v3459, %v4103
      %v4232 = vadd.f32 %v3460, %v4104
      %v4233 = vadd.f32 %v3461, %v4105
      %v4234 = vadd.f32 %v3462, %v4106
      %v4235 = vadd.f32 %v3463, %v4107
      %v4236 = vadd.f32 %v3464, %v4108
      %v4237 = vadd.f32 %v3465, %v4109
      %v4238 = vadd.f32 %v3466, %v4110
      %v4239 = vadd.f32 %v3467, %v4111
      %v4240 = vadd.f32 %v3468, %v4112
      %v4241 = vadd.f32 %v3469, %v4113
      %v4242 = vadd.f32 %v3470, %v4114
      %v4243 = vadd.f32 %v3471, %v4115
      %v4244 = vadd.f32 %v3472, %v4116
      %v4245 = vadd.f32 %v3473, %v4117
      %v4246 = vadd.f32 %v3474, %v4118
      %v4247 = vadd.f32 %v3475, %v4119
      %v4248 = vadd.f32 %v3476, %v4120
      %v4249 = vadd.f32 %v3477, %v4121
      %v4250 = vadd.f32 %v3478, %v4122
      %v4251 = vadd.f32 %v3479, %v4123
      %v4252 = vadd.f32 %v3480, %v4124
      %v4253 = vadd.f32 %v3481, %v4125
      %v4254 = vadd.f32 %v3482, %v4126
      %v4255 = vadd.f32 %v3483, %v4127
      %v4256 = vadd.f32 %v3484, %v4128
      %v4257 = vadd.f32 %v3485, %v4129
      %v4258 = vadd.f32 %v3486, %v4130
      %v4259 = vadd.f32 %v3487, %v4131
      %v4260 = vadd.f32 %v3488, %v4132
      %v4261 = vadd.f32 %v3489, %v4133
      %v4262 = vadd.f32 %v3490, %v4134
      %v4263 = vadd.f32 %v3491, %v4135
      %v4264 = vadd.f32 %v3492, %v4136
      %v4265 = vadd.f32 %v3493, %v4137
      %v4266 = vadd.f32 %v3494, %v4138
      %v4267 = vadd.f32 %v3495, %v4139
      %v4268 = vadd.f32 %v3496, %v4140
      %v4269 = vadd.f32 %v3497, %v4141
      %v4270 = vadd.f32 %v3498, %v4142
      %v4271 = vadd.f32 %v3499, %v4143
      %v4272 = vadd.f32 %v3500, %v4144
      %v4273 = vadd.f32 %v3501, %v4145
      %v4274 = vadd.f32 %v3502, %v4146
      %v4275 = vadd.f32 %v3503, %v4147
      %v4276 = vadd.f32 %v3504, %v4148
      %v4277 = vadd.f32 %v3505, %v4149
      %v4278 = vadd.f32 %v3506, %v4150
      %v4279 = vadd.f32 %v3507, %v4151
      %v4280 = vadd.f32 %v3508, %v4152
      %v4281 = vadd.f32 %v3509, %v4153
      %v4282 = vadd.f32 %v3510, %v4154
      %v4283 = vadd.f32 %v3511, %v4155
      %v4284 = vadd.f32 %v3512, %v4156
      %v4285 = vadd.f32 %v3513, %v4157
      %v4286 = vadd.f32 %v3514, %v4158
      %v4287 = vadd.f32 %v3515, %v4159
      %v4288 = vadd.f32 %v3516, %v4160
      %v4289 = vadd.f32 %v3517, %v4161
      %v4290 = vadd.f32 %v3518, %v4162
      %v4291 = vadd.f32 %v3519, %v4163
      %4292 = vset.pattern.permute.xlu0 5
      %4293 = vperm.xlu0 %4292, %v174
      %v4294 = vpop.permute.xlu0 %4293
      %4296 = vset.pattern.permute.xlu0 5
      %4297 = vperm.xlu0 %4296, %v175
      %v4298 = vpop.permute.xlu0 %4297
      %4300 = vset.pattern.permute.xlu0 5
      %4301 = vperm.xlu0 %4300, %v176
      %v4302 = vpop.permute.xlu0 %4301
      %4304 = vset.pattern.permute.xlu0 5
      %4305 = vperm.xlu0 %4304, %v177
      %v4306 = vpop.permute.xlu0 %4305
      %4308 = vset.pattern.permute.xlu0 5
      %4309 = vperm.xlu0 %4308, %v178
      %v4310 = vpop.permute.xlu0 %4309
      %4312 = vset.pattern.permute.xlu0 5
      %4313 = vperm.xlu0 %4312, %v179
      %v4314 = vpop.permute.xlu0 %4313
      %4316 = vset.pattern.permute.xlu0 5
      %4317 = vperm.xlu0 %4316, %v180
      %v4318 = vpop.permute.xlu0 %4317
      %4320 = vset.pattern.permute.xlu0 5
      %4321 = vperm.xlu0 %4320, %v181
      %v4322 = vpop.permute.xlu0 %4321
      %4324 = vset.pattern.permute.xlu0 5
      %4325 = vperm.xlu0 %4324, %v182
      %v4326 = vpop.permute.xlu0 %4325
      %4328 = vset.pattern.permute.xlu0 5
      %4329 = vperm.xlu0 %4328, %v183
      %v4330 = vpop.permute.xlu0 %4329
      %4332 = vset.pattern.permute.xlu0 5
      %4333 = vperm.xlu0 %4332, %v184
      %v4334 = vpop.permute.xlu0 %4333
      %4336 = vset.pattern.permute.xlu0 5
      %4337 = vperm.xlu0 %4336, %v185
      %v4338 = vpop.permute.xlu0 %4337
      %4340 = vset.pattern.permute.xlu0 5
      %4341 = vperm.xlu0 %4340, %v186
      %v4342 = vpop.permute.xlu0 %4341
      %4344 = vset.pattern.permute.xlu0 5
      %4345 = vperm.xlu0 %4344, %v187
      %v4346 = vpop.permute.xlu0 %4345
      %4348 = vset.pattern.permute.xlu0 5
      %4349 = vperm.xlu0 %4348, %v188
      %v4350 = vpop.permute.xlu0 %4349
      %4352 = vset.pattern.permute.xlu0 5
      %4353 = vperm.xlu0 %4352, %v189
      %v4354 = vpop.permute.xlu0 %4353
      %4356 = vset.pattern.permute.xlu0 5
      %4357 = vperm.xlu0 %4356, %v190
      %v4358 = vpop.permute.xlu0 %4357
      %4360 = vset.pattern.permute.xlu0 5
      %4361 = vperm.xlu0 %4360, %v191
      %v4362 = vpop.permute.xlu0 %4361
      %4364 = vset.pattern.permute.xlu0 5
      %4365 = vperm.xlu0 %4364, %v192
      %v4366 = vpop.permute.xlu0 %4365
      %4368 = vset.pattern.permute.xlu0 5
      %4369 = vperm.xlu0 %4368, %v193
      %v4370 = vpop.permute.xlu0 %4369
      %4372 = vset.pattern.permute.xlu0 5
      %4373 = vperm.xlu0 %4372, %v194
      %v4374 = vpop.permute.xlu0 %4373
      %4376 = vset.pattern.permute.xlu0 5
      %4377 = vperm.xlu0 %4376, %v195
      %v4378 = vpop.permute.xlu0 %4377
      %4380 = vset.pattern.permute.xlu0 5
      %4381 = vperm.xlu0 %4380, %v196
      %v4382 = vpop.permute.xlu0 %4381
      %4384 = vset.pattern.permute.xlu0 5
      %4385 = vperm.xlu0 %4384, %v197
      %v4386 = vpop.permute.xlu0 %4385
      %4388 = vset.pattern.permute.xlu0 5
      %4389 = vperm.xlu0 %4388, %v198
      %v4390 = vpop.permute.xlu0 %4389
      %4392 = vset.pattern.permute.xlu0 5
      %4393 = vperm.xlu0 %4392, %v199
      %v4394 = vpop.permute.xlu0 %4393
      %4396 = vset.pattern.permute.xlu0 5
      %4397 = vperm.xlu0 %4396, %v200
      %v4398 = vpop.permute.xlu0 %4397
      %4400 = vset.pattern.permute.xlu0 5
      %4401 = vperm.xlu0 %4400, %v201
      %v4402 = vpop.permute.xlu0 %4401
      %4404 = vset.pattern.permute.xlu0 5
      %4405 = vperm.xlu0 %4404, %v202
      %v4406 = vpop.permute.xlu0 %4405
      %4408 = vset.pattern.permute.xlu0 5
      %4409 = vperm.xlu0 %4408, %v203
      %v4410 = vpop.permute.xlu0 %4409
      %4412 = vset.pattern.permute.xlu0 5
      %4413 = vperm.xlu0 %4412, %v204
      %v4414 = vpop.permute.xlu0 %4413
      %4416 = vset.pattern.permute.xlu0 5
      %4417 = vperm.xlu0 %4416, %v205
      %v4418 = vpop.permute.xlu0 %4417
      %4420 = vset.pattern.permute.xlu0 5
      %4421 = vperm.xlu0 %4420, %v206
      %v4422 = vpop.permute.xlu0 %4421
      %4424 = vset.pattern.permute.xlu0 5
      %4425 = vperm.xlu0 %4424, %v207
      %v4426 = vpop.permute.xlu0 %4425
      %4428 = vset.pattern.permute.xlu0 5
      %4429 = vperm.xlu0 %4428, %v208
      %v4430 = vpop.permute.xlu0 %4429
      %4432 = vset.pattern.permute.xlu0 5
      %4433 = vperm.xlu0 %4432, %v209
      %v4434 = vpop.permute.xlu0 %4433
      %4436 = vset.pattern.permute.xlu0 5
      %4437 = vperm.xlu0 %4436, %v210
      %v4438 = vpop.permute.xlu0 %4437
      %4440 = vset.pattern.permute.xlu0 5
      %4441 = vperm.xlu0 %4440, %v211
      %v4442 = vpop.permute.xlu0 %4441
      %4444 = vset.pattern.permute.xlu0 5
      %4445 = vperm.xlu0 %4444, %v212
      %v4446 = vpop.permute.xlu0 %4445
      %4448 = vset.pattern.permute.xlu0 5
      %4449 = vperm.xlu0 %4448, %v213
      %v4450 = vpop.permute.xlu0 %4449
      %4452 = vset.pattern.permute.xlu0 5
      %4453 = vperm.xlu0 %4452, %v214
      %v4454 = vpop.permute.xlu0 %4453
      %4456 = vset.pattern.permute.xlu0 5
      %4457 = vperm.xlu0 %4456, %v215
      %v4458 = vpop.permute.xlu0 %4457
      %4460 = vset.pattern.permute.xlu0 5
      %4461 = vperm.xlu0 %4460, %v216
      %v4462 = vpop.permute.xlu0 %4461
      %4464 = vset.pattern.permute.xlu0 5
      %4465 = vperm.xlu0 %4464, %v217
      %v4466 = vpop.permute.xlu0 %4465
      %4468 = vset.pattern.permute.xlu0 5
      %4469 = vperm.xlu0 %4468, %v218
      %v4470 = vpop.permute.xlu0 %4469
      %4472 = vset.pattern.permute.xlu0 5
      %4473 = vperm.xlu0 %4472, %v219
      %v4474 = vpop.permute.xlu0 %4473
      %4476 = vset.pattern.permute.xlu0 5
      %4477 = vperm.xlu0 %4476, %v220
      %v4478 = vpop.permute.xlu0 %4477
      %4480 = vset.pattern.permute.xlu0 5
      %4481 = vperm.xlu0 %4480, %v221
      %v4482 = vpop.permute.xlu0 %4481
      %4484 = vset.pattern.permute.xlu0 5
      %4485 = vperm.xlu0 %4484, %v222
      %v4486 = vpop.permute.xlu0 %4485
      %4488 = vset.pattern.permute.xlu0 5
      %4489 = vperm.xlu0 %4488, %v223
      %v4490 = vpop.permute.xlu0 %4489
      %4492 = vset.pattern.permute.xlu0 5
      %4493 = vperm.xlu0 %4492, %v224
      %v4494 = vpop.permute.xlu0 %4493
      %4496 = vset.pattern.permute.xlu0 5
      %4497 = vperm.xlu0 %4496, %v225
      %v4498 = vpop.permute.xlu0 %4497
      %4500 = vset.pattern.permute.xlu0 5
      %4501 = vperm.xlu0 %4500, %v226
      %v4502 = vpop.permute.xlu0 %4501
      %4504 = vset.pattern.permute.xlu0 5
      %4505 = vperm.xlu0 %4504, %v227
      %v4506 = vpop.permute.xlu0 %4505
      %4508 = vset.pattern.permute.xlu0 5
      %4509 = vperm.xlu0 %4508, %v228
      %v4510 = vpop.permute.xlu0 %4509
      %4512 = vset.pattern.permute.xlu0 5
      %4513 = vperm.xlu0 %4512, %v229
      %v4514 = vpop.permute.xlu0 %4513
      %4516 = vset.pattern.permute.xlu0 5
      %4517 = vperm.xlu0 %4516, %v230
      %v4518 = vpop.permute.xlu0 %4517
      %4520 = vset.pattern.permute.xlu0 5
      %4521 = vperm.xlu0 %4520, %v231
      %v4522 = vpop.permute.xlu0 %4521
      %4524 = vset.pattern.permute.xlu0 5
      %4525 = vperm.xlu0 %4524, %v232
      %v4526 = vpop.permute.xlu0 %4525
      %4528 = vset.pattern.permute.xlu0 5
      %4529 = vperm.xlu0 %4528, %v233
      %v4530 = vpop.permute.xlu0 %4529
      %4532 = vset.pattern.permute.xlu0 5
      %4533 = vperm.xlu0 %4532, %v234
      %v4534 = vpop.permute.xlu0 %4533
      %4536 = vset.pattern.permute.xlu0 5
      %4537 = vperm.xlu0 %4536, %v235
      %v4538 = vpop.permute.xlu0 %4537
      %4540 = vset.pattern.permute.xlu0 5
      %4541 = vperm.xlu0 %4540, %v236
      %v4542 = vpop.permute.xlu0 %4541
      %4544 = vset.pattern.permute.xlu0 5
      %4545 = vperm.xlu0 %4544, %v237
      %v4546 = vpop.permute.xlu0 %4545
      %4548 = vset.pattern.permute.xlu0 5
      %4549 = vperm.xlu0 %4548, %v238
      %v4550 = vpop.permute.xlu0 %4549
      %4552 = vset.pattern.permute.xlu0 5
      %4553 = vperm.xlu0 %4552, %v239
      %v4554 = vpop.permute.xlu0 %4553
      %4556 = vset.pattern.permute.xlu0 5
      %4557 = vperm.xlu0 %4556, %v240
      %v4558 = vpop.permute.xlu0 %4557
      %4560 = vset.pattern.permute.xlu0 5
      %4561 = vperm.xlu0 %4560, %v241
      %v4562 = vpop.permute.xlu0 %4561
      %4564 = vset.pattern.permute.xlu0 5
      %4565 = vperm.xlu0 %4564, %v242
      %v4566 = vpop.permute.xlu0 %4565
      %4568 = vset.pattern.permute.xlu0 5
      %4569 = vperm.xlu0 %4568, %v243
      %v4570 = vpop.permute.xlu0 %4569
      %4572 = vset.pattern.permute.xlu0 5
      %4573 = vperm.xlu0 %4572, %v244
      %v4574 = vpop.permute.xlu0 %4573
      %4576 = vset.pattern.permute.xlu0 5
      %4577 = vperm.xlu0 %4576, %v245
      %v4578 = vpop.permute.xlu0 %4577
      %4580 = vset.pattern.permute.xlu0 5
      %4581 = vperm.xlu0 %4580, %v246
      %v4582 = vpop.permute.xlu0 %4581
      %4584 = vset.pattern.permute.xlu0 5
      %4585 = vperm.xlu0 %4584, %v247
      %v4586 = vpop.permute.xlu0 %4585
      %4588 = vset.pattern.permute.xlu0 5
      %4589 = vperm.xlu0 %4588, %v248
      %v4590 = vpop.permute.xlu0 %4589
      %4592 = vset.pattern.permute.xlu0 5
      %4593 = vperm.xlu0 %4592, %v249
      %v4594 = vpop.permute.xlu0 %4593
      %4596 = vset.pattern.permute.xlu0 5
      %4597 = vperm.xlu0 %4596, %v250
      %v4598 = vpop.permute.xlu0 %4597
      %4600 = vset.pattern.permute.xlu0 5
      %4601 = vperm.xlu0 %4600, %v251
      %v4602 = vpop.permute.xlu0 %4601
      %4604 = vset.pattern.permute.xlu0 5
      %4605 = vperm.xlu0 %4604, %v252
      %v4606 = vpop.permute.xlu0 %4605
      %4608 = vset.pattern.permute.xlu0 5
      %4609 = vperm.xlu0 %4608, %v253
      %v4610 = vpop.permute.xlu0 %4609
      %4612 = vset.pattern.permute.xlu0 5
      %4613 = vperm.xlu0 %4612, %v254
      %v4614 = vpop.permute.xlu0 %4613
      %4616 = vset.pattern.permute.xlu0 5
      %4617 = vperm.xlu0 %4616, %v255
      %v4618 = vpop.permute.xlu0 %4617
      %4620 = vset.pattern.permute.xlu0 5
      %4621 = vperm.xlu0 %4620, %v256
      %v4622 = vpop.permute.xlu0 %4621
      %4624 = vset.pattern.permute.xlu0 5
      %4625 = vperm.xlu0 %4624, %v257
      %v4626 = vpop.permute.xlu0 %4625
      %4628 = vset.pattern.permute.xlu0 5
      %4629 = vperm.xlu0 %4628, %v258
      %v4630 = vpop.permute.xlu0 %4629
      %4632 = vset.pattern.permute.xlu0 5
      %4633 = vperm.xlu0 %4632, %v259
      %v4634 = vpop.permute.xlu0 %4633
      %4636 = vset.pattern.permute.xlu0 5
      %4637 = vperm.xlu0 %4636, %v260
      %v4638 = vpop.permute.xlu0 %4637
      %4640 = vset.pattern.permute.xlu0 5
      %4641 = vperm.xlu0 %4640, %v261
      %v4642 = vpop.permute.xlu0 %4641
      %4644 = vset.pattern.permute.xlu0 5
      %4645 = vperm.xlu0 %4644, %v262
      %v4646 = vpop.permute.xlu0 %4645
      %4648 = vset.pattern.permute.xlu0 5
      %4649 = vperm.xlu0 %4648, %v263
      %v4650 = vpop.permute.xlu0 %4649
      %4652 = vset.pattern.permute.xlu0 5
      %4653 = vperm.xlu0 %4652, %v264
      %v4654 = vpop.permute.xlu0 %4653
      %4656 = vset.pattern.permute.xlu0 5
      %4657 = vperm.xlu0 %4656, %v265
      %v4658 = vpop.permute.xlu0 %4657
      %4660 = vset.pattern.permute.xlu0 5
      %4661 = vperm.xlu0 %4660, %v266
      %v4662 = vpop.permute.xlu0 %4661
      %4664 = vset.pattern.permute.xlu0 5
      %4665 = vperm.xlu0 %4664, %v267
      %v4666 = vpop.permute.xlu0 %4665
      %4668 = vset.pattern.permute.xlu0 5
      %4669 = vperm.xlu0 %4668, %v268
      %v4670 = vpop.permute.xlu0 %4669
      %4672 = vset.pattern.permute.xlu0 5
      %4673 = vperm.xlu0 %4672, %v269
      %v4674 = vpop.permute.xlu0 %4673
      %4676 = vset.pattern.permute.xlu0 5
      %4677 = vperm.xlu0 %4676, %v270
      %v4678 = vpop.permute.xlu0 %4677
      %4680 = vset.pattern.permute.xlu0 5
      %4681 = vperm.xlu0 %4680, %v271
      %v4682 = vpop.permute.xlu0 %4681
      %4684 = vset.pattern.permute.xlu0 5
      %4685 = vperm.xlu0 %4684, %v272
      %v4686 = vpop.permute.xlu0 %4685
      %4688 = vset.pattern.permute.xlu0 5
      %4689 = vperm.xlu0 %4688, %v273
      %v4690 = vpop.permute.xlu0 %4689
      %4692 = vset.pattern.permute.xlu0 5
      %4693 = vperm.xlu0 %4692, %v274
      %v4694 = vpop.permute.xlu0 %4693
      %4696 = vset.pattern.permute.xlu0 5
      %4697 = vperm.xlu0 %4696, %v275
      %v4698 = vpop.permute.xlu0 %4697
      %4700 = vset.pattern.permute.xlu0 5
      %4701 = vperm.xlu0 %4700, %v276
      %v4702 = vpop.permute.xlu0 %4701
      %4704 = vset.pattern.permute.xlu0 5
      %4705 = vperm.xlu0 %4704, %v277
      %v4706 = vpop.permute.xlu0 %4705
      %4708 = vset.pattern.permute.xlu0 5
      %4709 = vperm.xlu0 %4708, %v278
      %v4710 = vpop.permute.xlu0 %4709
      %4712 = vset.pattern.permute.xlu0 5
      %4713 = vperm.xlu0 %4712, %v279
      %v4714 = vpop.permute.xlu0 %4713
      %4716 = vset.pattern.permute.xlu0 5
      %4717 = vperm.xlu0 %4716, %v280
      %v4718 = vpop.permute.xlu0 %4717
      %4720 = vset.pattern.permute.xlu0 5
      %4721 = vperm.xlu0 %4720, %v281
      %v4722 = vpop.permute.xlu0 %4721
      %4724 = vset.pattern.permute.xlu0 5
      %4725 = vperm.xlu0 %4724, %v282
      %v4726 = vpop.permute.xlu0 %4725
      %4728 = vset.pattern.permute.xlu0 5
      %4729 = vperm.xlu0 %4728, %v283
      %v4730 = vpop.permute.xlu0 %4729
      %4732 = vset.pattern.permute.xlu0 5
      %4733 = vperm.xlu0 %4732, %v284
      %v4734 = vpop.permute.xlu0 %4733
      %4736 = vset.pattern.permute.xlu0 5
      %4737 = vperm.xlu0 %4736, %v285
      %v4738 = vpop.permute.xlu0 %4737
      %4740 = vset.pattern.permute.xlu0 5
      %4741 = vperm.xlu0 %4740, %v286
      %v4742 = vpop.permute.xlu0 %4741
      %4744 = vset.pattern.permute.xlu0 5
      %4745 = vperm.xlu0 %4744, %v287
      %v4746 = vpop.permute.xlu0 %4745
      %4748 = vset.pattern.permute.xlu0 5
      %4749 = vperm.xlu0 %4748, %v288
      %v4750 = vpop.permute.xlu0 %4749
      %4752 = vset.pattern.permute.xlu0 5
      %4753 = vperm.xlu0 %4752, %v289
      %v4754 = vpop.permute.xlu0 %4753
      %4756 = vset.pattern.permute.xlu0 5
      %4757 = vperm.xlu0 %4756, %v290
      %v4758 = vpop.permute.xlu0 %4757
      %4760 = vset.pattern.permute.xlu0 5
      %4761 = vperm.xlu0 %4760, %v291
      %v4762 = vpop.permute.xlu0 %4761
      %4764 = vset.pattern.permute.xlu0 5
      %4765 = vperm.xlu0 %4764, %v292
      %v4766 = vpop.permute.xlu0 %4765
      %4768 = vset.pattern.permute.xlu0 5
      %4769 = vperm.xlu0 %4768, %v293
      %v4770 = vpop.permute.xlu0 %4769
      %4772 = vset.pattern.permute.xlu0 5
      %4773 = vperm.xlu0 %4772, %v294
      %v4774 = vpop.permute.xlu0 %4773
      %4776 = vset.pattern.permute.xlu0 5
      %4777 = vperm.xlu0 %4776, %v295
      %v4778 = vpop.permute.xlu0 %4777
      %4780 = vset.pattern.permute.xlu0 5
      %4781 = vperm.xlu0 %4780, %v296
      %v4782 = vpop.permute.xlu0 %4781
      %4784 = vset.pattern.permute.xlu0 5
      %4785 = vperm.xlu0 %4784, %v297
      %v4786 = vpop.permute.xlu0 %4785
      %4788 = vset.pattern.permute.xlu0 5
      %4789 = vperm.xlu0 %4788, %v298
      %v4790 = vpop.permute.xlu0 %4789
      %4792 = vset.pattern.permute.xlu0 5
      %4793 = vperm.xlu0 %4792, %v299
      %v4794 = vpop.permute.xlu0 %4793
      %4796 = vset.pattern.permute.xlu0 5
      %4797 = vperm.xlu0 %4796, %v300
      %v4798 = vpop.permute.xlu0 %4797
      %4800 = vset.pattern.permute.xlu0 5
      %4801 = vperm.xlu0 %4800, %v301
      %v4802 = vpop.permute.xlu0 %4801
      %v4804 = vlaneseq
      %v4805 = vshrl.u32 %v4804, 7
      %v4806 = vsub.s32 5, %v4805
      %v4807 = vrot.slane %v302, %v4806
      %v4808 = vmul.f32 %v4294, %v4807
      %v4809 = vmul.f32 %v4298, %v4807
      %v4810 = vmul.f32 %v4302, %v4807
      %v4811 = vmul.f32 %v4306, %v4807
      %v4812 = vmul.f32 %v4310, %v4807
      %v4813 = vmul.f32 %v4314, %v4807
      %v4814 = vmul.f32 %v4318, %v4807
      %v4815 = vmul.f32 %v4322, %v4807
      %v4816 = vmul.f32 %v4326, %v4807
      %v4817 = vmul.f32 %v4330, %v4807
      %v4818 = vmul.f32 %v4334, %v4807
      %v4819 = vmul.f32 %v4338, %v4807
      %v4820 = vmul.f32 %v4342, %v4807
      %v4821 = vmul.f32 %v4346, %v4807
      %v4822 = vmul.f32 %v4350, %v4807
      %v4823 = vmul.f32 %v4354, %v4807
      %v4824 = vmul.f32 %v4358, %v4807
      %v4825 = vmul.f32 %v4362, %v4807
      %v4826 = vmul.f32 %v4366, %v4807
      %v4827 = vmul.f32 %v4370, %v4807
      %v4828 = vmul.f32 %v4374, %v4807
      %v4829 = vmul.f32 %v4378, %v4807
      %v4830 = vmul.f32 %v4382, %v4807
      %v4831 = vmul.f32 %v4386, %v4807
      %v4832 = vmul.f32 %v4390, %v4807
      %v4833 = vmul.f32 %v4394, %v4807
      %v4834 = vmul.f32 %v4398, %v4807
      %v4835 = vmul.f32 %v4402, %v4807
      %v4836 = vmul.f32 %v4406, %v4807
      %v4837 = vmul.f32 %v4410, %v4807
      %v4838 = vmul.f32 %v4414, %v4807
      %v4839 = vmul.f32 %v4418, %v4807
      %v4840 = vmul.f32 %v4422, %v4807
      %v4841 = vmul.f32 %v4426, %v4807
      %v4842 = vmul.f32 %v4430, %v4807
      %v4843 = vmul.f32 %v4434, %v4807
      %v4844 = vmul.f32 %v4438, %v4807
      %v4845 = vmul.f32 %v4442, %v4807
      %v4846 = vmul.f32 %v4446, %v4807
      %v4847 = vmul.f32 %v4450, %v4807
      %v4848 = vmul.f32 %v4454, %v4807
      %v4849 = vmul.f32 %v4458, %v4807
      %v4850 = vmul.f32 %v4462, %v4807
      %v4851 = vmul.f32 %v4466, %v4807
      %v4852 = vmul.f32 %v4470, %v4807
      %v4853 = vmul.f32 %v4474, %v4807
      %v4854 = vmul.f32 %v4478, %v4807
      %v4855 = vmul.f32 %v4482, %v4807
      %v4856 = vmul.f32 %v4486, %v4807
      %v4857 = vmul.f32 %v4490, %v4807
      %v4858 = vmul.f32 %v4494, %v4807
      %v4859 = vmul.f32 %v4498, %v4807
      %v4860 = vmul.f32 %v4502, %v4807
      %v4861 = vmul.f32 %v4506, %v4807
      %v4862 = vmul.f32 %v4510, %v4807
      %v4863 = vmul.f32 %v4514, %v4807
      %v4864 = vmul.f32 %v4518, %v4807
      %v4865 = vmul.f32 %v4522, %v4807
      %v4866 = vmul.f32 %v4526, %v4807
      %v4867 = vmul.f32 %v4530, %v4807
      %v4868 = vmul.f32 %v4534, %v4807
      %v4869 = vmul.f32 %v4538, %v4807
      %v4870 = vmul.f32 %v4542, %v4807
      %v4871 = vmul.f32 %v4546, %v4807
      %v4872 = vmul.f32 %v4550, %v4807
      %v4873 = vmul.f32 %v4554, %v4807
      %v4874 = vmul.f32 %v4558, %v4807
      %v4875 = vmul.f32 %v4562, %v4807
      %v4876 = vmul.f32 %v4566, %v4807
      %v4877 = vmul.f32 %v4570, %v4807
      %v4878 = vmul.f32 %v4574, %v4807
      %v4879 = vmul.f32 %v4578, %v4807
      %v4880 = vmul.f32 %v4582, %v4807
      %v4881 = vmul.f32 %v4586, %v4807
      %v4882 = vmul.f32 %v4590, %v4807
      %v4883 = vmul.f32 %v4594, %v4807
      %v4884 = vmul.f32 %v4598, %v4807
      %v4885 = vmul.f32 %v4602, %v4807
      %v4886 = vmul.f32 %v4606, %v4807
      %v4887 = vmul.f32 %v4610, %v4807
      %v4888 = vmul.f32 %v4614, %v4807
      %v4889 = vmul.f32 %v4618, %v4807
      %v4890 = vmul.f32 %v4622, %v4807
      %v4891 = vmul.f32 %v4626, %v4807
      %v4892 = vmul.f32 %v4630, %v4807
      %v4893 = vmul.f32 %v4634, %v4807
      %v4894 = vmul.f32 %v4638, %v4807
      %v4895 = vmul.f32 %v4642, %v4807
      %v4896 = vmul.f32 %v4646, %v4807
      %v4897 = vmul.f32 %v4650, %v4807
      %v4898 = vmul.f32 %v4654, %v4807
      %v4899 = vmul.f32 %v4658, %v4807
      %v4900 = vmul.f32 %v4662, %v4807
      %v4901 = vmul.f32 %v4666, %v4807
      %v4902 = vmul.f32 %v4670, %v4807
      %v4903 = vmul.f32 %v4674, %v4807
      %v4904 = vmul.f32 %v4678, %v4807
      %v4905 = vmul.f32 %v4682, %v4807
      %v4906 = vmul.f32 %v4686, %v4807
      %v4907 = vmul.f32 %v4690, %v4807
      %v4908 = vmul.f32 %v4694, %v4807
      %v4909 = vmul.f32 %v4698, %v4807
      %v4910 = vmul.f32 %v4702, %v4807
      %v4911 = vmul.f32 %v4706, %v4807
      %v4912 = vmul.f32 %v4710, %v4807
      %v4913 = vmul.f32 %v4714, %v4807
      %v4914 = vmul.f32 %v4718, %v4807
      %v4915 = vmul.f32 %v4722, %v4807
      %v4916 = vmul.f32 %v4726, %v4807
      %v4917 = vmul.f32 %v4730, %v4807
      %v4918 = vmul.f32 %v4734, %v4807
      %v4919 = vmul.f32 %v4738, %v4807
      %v4920 = vmul.f32 %v4742, %v4807
      %v4921 = vmul.f32 %v4746, %v4807
      %v4922 = vmul.f32 %v4750, %v4807
      %v4923 = vmul.f32 %v4754, %v4807
      %v4924 = vmul.f32 %v4758, %v4807
      %v4925 = vmul.f32 %v4762, %v4807
      %v4926 = vmul.f32 %v4766, %v4807
      %v4927 = vmul.f32 %v4770, %v4807
      %v4928 = vmul.f32 %v4774, %v4807
      %v4929 = vmul.f32 %v4778, %v4807
      %v4930 = vmul.f32 %v4782, %v4807
      %v4931 = vmul.f32 %v4786, %v4807
      %v4932 = vmul.f32 %v4790, %v4807
      %v4933 = vmul.f32 %v4794, %v4807
      %v4934 = vmul.f32 %v4798, %v4807
      %v4935 = vmul.f32 %v4802, %v4807
      %v4936 = vadd.f32 %v4164, %v4808
      %v4937 = vadd.f32 %v4165, %v4809
      %v4938 = vadd.f32 %v4166, %v4810
      %v4939 = vadd.f32 %v4167, %v4811
      %v4940 = vadd.f32 %v4168, %v4812
      %v4941 = vadd.f32 %v4169, %v4813
      %v4942 = vadd.f32 %v4170, %v4814
      %v4943 = vadd.f32 %v4171, %v4815
      %v4944 = vadd.f32 %v4172, %v4816
      %v4945 = vadd.f32 %v4173, %v4817
      %v4946 = vadd.f32 %v4174, %v4818
      %v4947 = vadd.f32 %v4175, %v4819
      %v4948 = vadd.f32 %v4176, %v4820
      %v4949 = vadd.f32 %v4177, %v4821
      %v4950 = vadd.f32 %v4178, %v4822
      %v4951 = vadd.f32 %v4179, %v4823
      %v4952 = vadd.f32 %v4180, %v4824
      %v4953 = vadd.f32 %v4181, %v4825
      %v4954 = vadd.f32 %v4182, %v4826
      %v4955 = vadd.f32 %v4183, %v4827
      %v4956 = vadd.f32 %v4184, %v4828
      %v4957 = vadd.f32 %v4185, %v4829
      %v4958 = vadd.f32 %v4186, %v4830
      %v4959 = vadd.f32 %v4187, %v4831
      %v4960 = vadd.f32 %v4188, %v4832
      %v4961 = vadd.f32 %v4189, %v4833
      %v4962 = vadd.f32 %v4190, %v4834
      %v4963 = vadd.f32 %v4191, %v4835
      %v4964 = vadd.f32 %v4192, %v4836
      %v4965 = vadd.f32 %v4193, %v4837
      %v4966 = vadd.f32 %v4194, %v4838
      %v4967 = vadd.f32 %v4195, %v4839
      %v4968 = vadd.f32 %v4196, %v4840
      %v4969 = vadd.f32 %v4197, %v4841
      %v4970 = vadd.f32 %v4198, %v4842
      %v4971 = vadd.f32 %v4199, %v4843
      %v4972 = vadd.f32 %v4200, %v4844
      %v4973 = vadd.f32 %v4201, %v4845
      %v4974 = vadd.f32 %v4202, %v4846
      %v4975 = vadd.f32 %v4203, %v4847
      %v4976 = vadd.f32 %v4204, %v4848
      %v4977 = vadd.f32 %v4205, %v4849
      %v4978 = vadd.f32 %v4206, %v4850
      %v4979 = vadd.f32 %v4207, %v4851
      %v4980 = vadd.f32 %v4208, %v4852
      %v4981 = vadd.f32 %v4209, %v4853
      %v4982 = vadd.f32 %v4210, %v4854
      %v4983 = vadd.f32 %v4211, %v4855
      %v4984 = vadd.f32 %v4212, %v4856
      %v4985 = vadd.f32 %v4213, %v4857
      %v4986 = vadd.f32 %v4214, %v4858
      %v4987 = vadd.f32 %v4215, %v4859
      %v4988 = vadd.f32 %v4216, %v4860
      %v4989 = vadd.f32 %v4217, %v4861
      %v4990 = vadd.f32 %v4218, %v4862
      %v4991 = vadd.f32 %v4219, %v4863
      %v4992 = vadd.f32 %v4220, %v4864
      %v4993 = vadd.f32 %v4221, %v4865
      %v4994 = vadd.f32 %v4222, %v4866
      %v4995 = vadd.f32 %v4223, %v4867
      %v4996 = vadd.f32 %v4224, %v4868
      %v4997 = vadd.f32 %v4225, %v4869
      %v4998 = vadd.f32 %v4226, %v4870
      %v4999 = vadd.f32 %v4227, %v4871
      %v5000 = vadd.f32 %v4228, %v4872
      %v5001 = vadd.f32 %v4229, %v4873
      %v5002 = vadd.f32 %v4230, %v4874
      %v5003 = vadd.f32 %v4231, %v4875
      %v5004 = vadd.f32 %v4232, %v4876
      %v5005 = vadd.f32 %v4233, %v4877
      %v5006 = vadd.f32 %v4234, %v4878
      %v5007 = vadd.f32 %v4235, %v4879
      %v5008 = vadd.f32 %v4236, %v4880
      %v5009 = vadd.f32 %v4237, %v4881
      %v5010 = vadd.f32 %v4238, %v4882
      %v5011 = vadd.f32 %v4239, %v4883
      %v5012 = vadd.f32 %v4240, %v4884
      %v5013 = vadd.f32 %v4241, %v4885
      %v5014 = vadd.f32 %v4242, %v4886
      %v5015 = vadd.f32 %v4243, %v4887
      %v5016 = vadd.f32 %v4244, %v4888
      %v5017 = vadd.f32 %v4245, %v4889
      %v5018 = vadd.f32 %v4246, %v4890
      %v5019 = vadd.f32 %v4247, %v4891
      %v5020 = vadd.f32 %v4248, %v4892
      %v5021 = vadd.f32 %v4249, %v4893
      %v5022 = vadd.f32 %v4250, %v4894
      %v5023 = vadd.f32 %v4251, %v4895
      %v5024 = vadd.f32 %v4252, %v4896
      %v5025 = vadd.f32 %v4253, %v4897
      %v5026 = vadd.f32 %v4254, %v4898
      %v5027 = vadd.f32 %v4255, %v4899
      %v5028 = vadd.f32 %v4256, %v4900
      %v5029 = vadd.f32 %v4257, %v4901
      %v5030 = vadd.f32 %v4258, %v4902
      %v5031 = vadd.f32 %v4259, %v4903
      %v5032 = vadd.f32 %v4260, %v4904
      %v5033 = vadd.f32 %v4261, %v4905
      %v5034 = vadd.f32 %v4262, %v4906
      %v5035 = vadd.f32 %v4263, %v4907
      %v5036 = vadd.f32 %v4264, %v4908
      %v5037 = vadd.f32 %v4265, %v4909
      %v5038 = vadd.f32 %v4266, %v4910
      %v5039 = vadd.f32 %v4267, %v4911
      %v5040 = vadd.f32 %v4268, %v4912
      %v5041 = vadd.f32 %v4269, %v4913
      %v5042 = vadd.f32 %v4270, %v4914
      %v5043 = vadd.f32 %v4271, %v4915
      %v5044 = vadd.f32 %v4272, %v4916
      %v5045 = vadd.f32 %v4273, %v4917
      %v5046 = vadd.f32 %v4274, %v4918
      %v5047 = vadd.f32 %v4275, %v4919
      %v5048 = vadd.f32 %v4276, %v4920
      %v5049 = vadd.f32 %v4277, %v4921
      %v5050 = vadd.f32 %v4278, %v4922
      %v5051 = vadd.f32 %v4279, %v4923
      %v5052 = vadd.f32 %v4280, %v4924
      %v5053 = vadd.f32 %v4281, %v4925
      %v5054 = vadd.f32 %v4282, %v4926
      %v5055 = vadd.f32 %v4283, %v4927
      %v5056 = vadd.f32 %v4284, %v4928
      %v5057 = vadd.f32 %v4285, %v4929
      %v5058 = vadd.f32 %v4286, %v4930
      %v5059 = vadd.f32 %v4287, %v4931
      %v5060 = vadd.f32 %v4288, %v4932
      %v5061 = vadd.f32 %v4289, %v4933
      %v5062 = vadd.f32 %v4290, %v4934
      %v5063 = vadd.f32 %v4291, %v4935
      %5064 = vset.pattern.permute.xlu0 6
      %5065 = vperm.xlu0 %5064, %v174
      %v5066 = vpop.permute.xlu0 %5065
      %5068 = vset.pattern.permute.xlu0 6
      %5069 = vperm.xlu0 %5068, %v175
      %v5070 = vpop.permute.xlu0 %5069
      %5072 = vset.pattern.permute.xlu0 6
      %5073 = vperm.xlu0 %5072, %v176
      %v5074 = vpop.permute.xlu0 %5073
      %5076 = vset.pattern.permute.xlu0 6
      %5077 = vperm.xlu0 %5076, %v177
      %v5078 = vpop.permute.xlu0 %5077
      %5080 = vset.pattern.permute.xlu0 6
      %5081 = vperm.xlu0 %5080, %v178
      %v5082 = vpop.permute.xlu0 %5081
      %5084 = vset.pattern.permute.xlu0 6
      %5085 = vperm.xlu0 %5084, %v179
      %v5086 = vpop.permute.xlu0 %5085
      %5088 = vset.pattern.permute.xlu0 6
      %5089 = vperm.xlu0 %5088, %v180
      %v5090 = vpop.permute.xlu0 %5089
      %5092 = vset.pattern.permute.xlu0 6
      %5093 = vperm.xlu0 %5092, %v181
      %v5094 = vpop.permute.xlu0 %5093
      %5096 = vset.pattern.permute.xlu0 6
      %5097 = vperm.xlu0 %5096, %v182
      %v5098 = vpop.permute.xlu0 %5097
      %5100 = vset.pattern.permute.xlu0 6
      %5101 = vperm.xlu0 %5100, %v183
      %v5102 = vpop.permute.xlu0 %5101
      %5104 = vset.pattern.permute.xlu0 6
      %5105 = vperm.xlu0 %5104, %v184
      %v5106 = vpop.permute.xlu0 %5105
      %5108 = vset.pattern.permute.xlu0 6
      %5109 = vperm.xlu0 %5108, %v185
      %v5110 = vpop.permute.xlu0 %5109
      %5112 = vset.pattern.permute.xlu0 6
      %5113 = vperm.xlu0 %5112, %v186
      %v5114 = vpop.permute.xlu0 %5113
      %5116 = vset.pattern.permute.xlu0 6
      %5117 = vperm.xlu0 %5116, %v187
      %v5118 = vpop.permute.xlu0 %5117
      %5120 = vset.pattern.permute.xlu0 6
      %5121 = vperm.xlu0 %5120, %v188
      %v5122 = vpop.permute.xlu0 %5121
      %5124 = vset.pattern.permute.xlu0 6
      %5125 = vperm.xlu0 %5124, %v189
      %v5126 = vpop.permute.xlu0 %5125
      %5128 = vset.pattern.permute.xlu0 6
      %5129 = vperm.xlu0 %5128, %v190
      %v5130 = vpop.permute.xlu0 %5129
      %5132 = vset.pattern.permute.xlu0 6
      %5133 = vperm.xlu0 %5132, %v191
      %v5134 = vpop.permute.xlu0 %5133
      %5136 = vset.pattern.permute.xlu0 6
      %5137 = vperm.xlu0 %5136, %v192
      %v5138 = vpop.permute.xlu0 %5137
      %5140 = vset.pattern.permute.xlu0 6
      %5141 = vperm.xlu0 %5140, %v193
      %v5142 = vpop.permute.xlu0 %5141
      %5144 = vset.pattern.permute.xlu0 6
      %5145 = vperm.xlu0 %5144, %v194
      %v5146 = vpop.permute.xlu0 %5145
      %5148 = vset.pattern.permute.xlu0 6
      %5149 = vperm.xlu0 %5148, %v195
      %v5150 = vpop.permute.xlu0 %5149
      %5152 = vset.pattern.permute.xlu0 6
      %5153 = vperm.xlu0 %5152, %v196
      %v5154 = vpop.permute.xlu0 %5153
      %5156 = vset.pattern.permute.xlu0 6
      %5157 = vperm.xlu0 %5156, %v197
      %v5158 = vpop.permute.xlu0 %5157
      %5160 = vset.pattern.permute.xlu0 6
      %5161 = vperm.xlu0 %5160, %v198
      %v5162 = vpop.permute.xlu0 %5161
      %5164 = vset.pattern.permute.xlu0 6
      %5165 = vperm.xlu0 %5164, %v199
      %v5166 = vpop.permute.xlu0 %5165
      %5168 = vset.pattern.permute.xlu0 6
      %5169 = vperm.xlu0 %5168, %v200
      %v5170 = vpop.permute.xlu0 %5169
      %5172 = vset.pattern.permute.xlu0 6
      %5173 = vperm.xlu0 %5172, %v201
      %v5174 = vpop.permute.xlu0 %5173
      %5176 = vset.pattern.permute.xlu0 6
      %5177 = vperm.xlu0 %5176, %v202
      %v5178 = vpop.permute.xlu0 %5177
      %5180 = vset.pattern.permute.xlu0 6
      %5181 = vperm.xlu0 %5180, %v203
      %v5182 = vpop.permute.xlu0 %5181
      %5184 = vset.pattern.permute.xlu0 6
      %5185 = vperm.xlu0 %5184, %v204
      %v5186 = vpop.permute.xlu0 %5185
      %5188 = vset.pattern.permute.xlu0 6
      %5189 = vperm.xlu0 %5188, %v205
      %v5190 = vpop.permute.xlu0 %5189
      %5192 = vset.pattern.permute.xlu0 6
      %5193 = vperm.xlu0 %5192, %v206
      %v5194 = vpop.permute.xlu0 %5193
      %5196 = vset.pattern.permute.xlu0 6
      %5197 = vperm.xlu0 %5196, %v207
      %v5198 = vpop.permute.xlu0 %5197
      %5200 = vset.pattern.permute.xlu0 6
      %5201 = vperm.xlu0 %5200, %v208
      %v5202 = vpop.permute.xlu0 %5201
      %5204 = vset.pattern.permute.xlu0 6
      %5205 = vperm.xlu0 %5204, %v209
      %v5206 = vpop.permute.xlu0 %5205
      %5208 = vset.pattern.permute.xlu0 6
      %5209 = vperm.xlu0 %5208, %v210
      %v5210 = vpop.permute.xlu0 %5209
      %5212 = vset.pattern.permute.xlu0 6
      %5213 = vperm.xlu0 %5212, %v211
      %v5214 = vpop.permute.xlu0 %5213
      %5216 = vset.pattern.permute.xlu0 6
      %5217 = vperm.xlu0 %5216, %v212
      %v5218 = vpop.permute.xlu0 %5217
      %5220 = vset.pattern.permute.xlu0 6
      %5221 = vperm.xlu0 %5220, %v213
      %v5222 = vpop.permute.xlu0 %5221
      %5224 = vset.pattern.permute.xlu0 6
      %5225 = vperm.xlu0 %5224, %v214
      %v5226 = vpop.permute.xlu0 %5225
      %5228 = vset.pattern.permute.xlu0 6
      %5229 = vperm.xlu0 %5228, %v215
      %v5230 = vpop.permute.xlu0 %5229
      %5232 = vset.pattern.permute.xlu0 6
      %5233 = vperm.xlu0 %5232, %v216
      %v5234 = vpop.permute.xlu0 %5233
      %5236 = vset.pattern.permute.xlu0 6
      %5237 = vperm.xlu0 %5236, %v217
      %v5238 = vpop.permute.xlu0 %5237
      %5240 = vset.pattern.permute.xlu0 6
      %5241 = vperm.xlu0 %5240, %v218
      %v5242 = vpop.permute.xlu0 %5241
      %5244 = vset.pattern.permute.xlu0 6
      %5245 = vperm.xlu0 %5244, %v219
      %v5246 = vpop.permute.xlu0 %5245
      %5248 = vset.pattern.permute.xlu0 6
      %5249 = vperm.xlu0 %5248, %v220
      %v5250 = vpop.permute.xlu0 %5249
      %5252 = vset.pattern.permute.xlu0 6
      %5253 = vperm.xlu0 %5252, %v221
      %v5254 = vpop.permute.xlu0 %5253
      %5256 = vset.pattern.permute.xlu0 6
      %5257 = vperm.xlu0 %5256, %v222
      %v5258 = vpop.permute.xlu0 %5257
      %5260 = vset.pattern.permute.xlu0 6
      %5261 = vperm.xlu0 %5260, %v223
      %v5262 = vpop.permute.xlu0 %5261
      %5264 = vset.pattern.permute.xlu0 6
      %5265 = vperm.xlu0 %5264, %v224
      %v5266 = vpop.permute.xlu0 %5265
      %5268 = vset.pattern.permute.xlu0 6
      %5269 = vperm.xlu0 %5268, %v225
      %v5270 = vpop.permute.xlu0 %5269
      %5272 = vset.pattern.permute.xlu0 6
      %5273 = vperm.xlu0 %5272, %v226
      %v5274 = vpop.permute.xlu0 %5273
      %5276 = vset.pattern.permute.xlu0 6
      %5277 = vperm.xlu0 %5276, %v227
      %v5278 = vpop.permute.xlu0 %5277
      %5280 = vset.pattern.permute.xlu0 6
      %5281 = vperm.xlu0 %5280, %v228
      %v5282 = vpop.permute.xlu0 %5281
      %5284 = vset.pattern.permute.xlu0 6
      %5285 = vperm.xlu0 %5284, %v229
      %v5286 = vpop.permute.xlu0 %5285
      %5288 = vset.pattern.permute.xlu0 6
      %5289 = vperm.xlu0 %5288, %v230
      %v5290 = vpop.permute.xlu0 %5289
      %5292 = vset.pattern.permute.xlu0 6
      %5293 = vperm.xlu0 %5292, %v231
      %v5294 = vpop.permute.xlu0 %5293
      %5296 = vset.pattern.permute.xlu0 6
      %5297 = vperm.xlu0 %5296, %v232
      %v5298 = vpop.permute.xlu0 %5297
      %5300 = vset.pattern.permute.xlu0 6
      %5301 = vperm.xlu0 %5300, %v233
      %v5302 = vpop.permute.xlu0 %5301
      %5304 = vset.pattern.permute.xlu0 6
      %5305 = vperm.xlu0 %5304, %v234
      %v5306 = vpop.permute.xlu0 %5305
      %5308 = vset.pattern.permute.xlu0 6
      %5309 = vperm.xlu0 %5308, %v235
      %v5310 = vpop.permute.xlu0 %5309
      %5312 = vset.pattern.permute.xlu0 6
      %5313 = vperm.xlu0 %5312, %v236
      %v5314 = vpop.permute.xlu0 %5313
      %5316 = vset.pattern.permute.xlu0 6
      %5317 = vperm.xlu0 %5316, %v237
      %v5318 = vpop.permute.xlu0 %5317
      %5320 = vset.pattern.permute.xlu0 6
      %5321 = vperm.xlu0 %5320, %v238
      %v5322 = vpop.permute.xlu0 %5321
      %5324 = vset.pattern.permute.xlu0 6
      %5325 = vperm.xlu0 %5324, %v239
      %v5326 = vpop.permute.xlu0 %5325
      %5328 = vset.pattern.permute.xlu0 6
      %5329 = vperm.xlu0 %5328, %v240
      %v5330 = vpop.permute.xlu0 %5329
      %5332 = vset.pattern.permute.xlu0 6
      %5333 = vperm.xlu0 %5332, %v241
      %v5334 = vpop.permute.xlu0 %5333
      %5336 = vset.pattern.permute.xlu0 6
      %5337 = vperm.xlu0 %5336, %v242
      %v5338 = vpop.permute.xlu0 %5337
      %5340 = vset.pattern.permute.xlu0 6
      %5341 = vperm.xlu0 %5340, %v243
      %v5342 = vpop.permute.xlu0 %5341
      %5344 = vset.pattern.permute.xlu0 6
      %5345 = vperm.xlu0 %5344, %v244
      %v5346 = vpop.permute.xlu0 %5345
      %5348 = vset.pattern.permute.xlu0 6
      %5349 = vperm.xlu0 %5348, %v245
      %v5350 = vpop.permute.xlu0 %5349
      %5352 = vset.pattern.permute.xlu0 6
      %5353 = vperm.xlu0 %5352, %v246
      %v5354 = vpop.permute.xlu0 %5353
      %5356 = vset.pattern.permute.xlu0 6
      %5357 = vperm.xlu0 %5356, %v247
      %v5358 = vpop.permute.xlu0 %5357
      %5360 = vset.pattern.permute.xlu0 6
      %5361 = vperm.xlu0 %5360, %v248
      %v5362 = vpop.permute.xlu0 %5361
      %5364 = vset.pattern.permute.xlu0 6
      %5365 = vperm.xlu0 %5364, %v249
      %v5366 = vpop.permute.xlu0 %5365
      %5368 = vset.pattern.permute.xlu0 6
      %5369 = vperm.xlu0 %5368, %v250
      %v5370 = vpop.permute.xlu0 %5369
      %5372 = vset.pattern.permute.xlu0 6
      %5373 = vperm.xlu0 %5372, %v251
      %v5374 = vpop.permute.xlu0 %5373
      %5376 = vset.pattern.permute.xlu0 6
      %5377 = vperm.xlu0 %5376, %v252
      %v5378 = vpop.permute.xlu0 %5377
      %5380 = vset.pattern.permute.xlu0 6
      %5381 = vperm.xlu0 %5380, %v253
      %v5382 = vpop.permute.xlu0 %5381
      %5384 = vset.pattern.permute.xlu0 6
      %5385 = vperm.xlu0 %5384, %v254
      %v5386 = vpop.permute.xlu0 %5385
      %5388 = vset.pattern.permute.xlu0 6
      %5389 = vperm.xlu0 %5388, %v255
      %v5390 = vpop.permute.xlu0 %5389
      %5392 = vset.pattern.permute.xlu0 6
      %5393 = vperm.xlu0 %5392, %v256
      %v5394 = vpop.permute.xlu0 %5393
      %5396 = vset.pattern.permute.xlu0 6
      %5397 = vperm.xlu0 %5396, %v257
      %v5398 = vpop.permute.xlu0 %5397
      %5400 = vset.pattern.permute.xlu0 6
      %5401 = vperm.xlu0 %5400, %v258
      %v5402 = vpop.permute.xlu0 %5401
      %5404 = vset.pattern.permute.xlu0 6
      %5405 = vperm.xlu0 %5404, %v259
      %v5406 = vpop.permute.xlu0 %5405
      %5408 = vset.pattern.permute.xlu0 6
      %5409 = vperm.xlu0 %5408, %v260
      %v5410 = vpop.permute.xlu0 %5409
      %5412 = vset.pattern.permute.xlu0 6
      %5413 = vperm.xlu0 %5412, %v261
      %v5414 = vpop.permute.xlu0 %5413
      %5416 = vset.pattern.permute.xlu0 6
      %5417 = vperm.xlu0 %5416, %v262
      %v5418 = vpop.permute.xlu0 %5417
      %5420 = vset.pattern.permute.xlu0 6
      %5421 = vperm.xlu0 %5420, %v263
      %v5422 = vpop.permute.xlu0 %5421
      %5424 = vset.pattern.permute.xlu0 6
      %5425 = vperm.xlu0 %5424, %v264
      %v5426 = vpop.permute.xlu0 %5425
      %5428 = vset.pattern.permute.xlu0 6
      %5429 = vperm.xlu0 %5428, %v265
      %v5430 = vpop.permute.xlu0 %5429
      %5432 = vset.pattern.permute.xlu0 6
      %5433 = vperm.xlu0 %5432, %v266
      %v5434 = vpop.permute.xlu0 %5433
      %5436 = vset.pattern.permute.xlu0 6
      %5437 = vperm.xlu0 %5436, %v267
      %v5438 = vpop.permute.xlu0 %5437
      %5440 = vset.pattern.permute.xlu0 6
      %5441 = vperm.xlu0 %5440, %v268
      %v5442 = vpop.permute.xlu0 %5441
      %5444 = vset.pattern.permute.xlu0 6
      %5445 = vperm.xlu0 %5444, %v269
      %v5446 = vpop.permute.xlu0 %5445
      %5448 = vset.pattern.permute.xlu0 6
      %5449 = vperm.xlu0 %5448, %v270
      %v5450 = vpop.permute.xlu0 %5449
      %5452 = vset.pattern.permute.xlu0 6
      %5453 = vperm.xlu0 %5452, %v271
      %v5454 = vpop.permute.xlu0 %5453
      %5456 = vset.pattern.permute.xlu0 6
      %5457 = vperm.xlu0 %5456, %v272
      %v5458 = vpop.permute.xlu0 %5457
      %5460 = vset.pattern.permute.xlu0 6
      %5461 = vperm.xlu0 %5460, %v273
      %v5462 = vpop.permute.xlu0 %5461
      %5464 = vset.pattern.permute.xlu0 6
      %5465 = vperm.xlu0 %5464, %v274
      %v5466 = vpop.permute.xlu0 %5465
      %5468 = vset.pattern.permute.xlu0 6
      %5469 = vperm.xlu0 %5468, %v275
      %v5470 = vpop.permute.xlu0 %5469
      %5472 = vset.pattern.permute.xlu0 6
      %5473 = vperm.xlu0 %5472, %v276
      %v5474 = vpop.permute.xlu0 %5473
      %5476 = vset.pattern.permute.xlu0 6
      %5477 = vperm.xlu0 %5476, %v277
      %v5478 = vpop.permute.xlu0 %5477
      %5480 = vset.pattern.permute.xlu0 6
      %5481 = vperm.xlu0 %5480, %v278
      %v5482 = vpop.permute.xlu0 %5481
      %5484 = vset.pattern.permute.xlu0 6
      %5485 = vperm.xlu0 %5484, %v279
      %v5486 = vpop.permute.xlu0 %5485
      %5488 = vset.pattern.permute.xlu0 6
      %5489 = vperm.xlu0 %5488, %v280
      %v5490 = vpop.permute.xlu0 %5489
      %5492 = vset.pattern.permute.xlu0 6
      %5493 = vperm.xlu0 %5492, %v281
      %v5494 = vpop.permute.xlu0 %5493
      %5496 = vset.pattern.permute.xlu0 6
      %5497 = vperm.xlu0 %5496, %v282
      %v5498 = vpop.permute.xlu0 %5497
      %5500 = vset.pattern.permute.xlu0 6
      %5501 = vperm.xlu0 %5500, %v283
      %v5502 = vpop.permute.xlu0 %5501
      %5504 = vset.pattern.permute.xlu0 6
      %5505 = vperm.xlu0 %5504, %v284
      %v5506 = vpop.permute.xlu0 %5505
      %5508 = vset.pattern.permute.xlu0 6
      %5509 = vperm.xlu0 %5508, %v285
      %v5510 = vpop.permute.xlu0 %5509
      %5512 = vset.pattern.permute.xlu0 6
      %5513 = vperm.xlu0 %5512, %v286
      %v5514 = vpop.permute.xlu0 %5513
      %5516 = vset.pattern.permute.xlu0 6
      %5517 = vperm.xlu0 %5516, %v287
      %v5518 = vpop.permute.xlu0 %5517
      %5520 = vset.pattern.permute.xlu0 6
      %5521 = vperm.xlu0 %5520, %v288
      %v5522 = vpop.permute.xlu0 %5521
      %5524 = vset.pattern.permute.xlu0 6
      %5525 = vperm.xlu0 %5524, %v289
      %v5526 = vpop.permute.xlu0 %5525
      %5528 = vset.pattern.permute.xlu0 6
      %5529 = vperm.xlu0 %5528, %v290
      %v5530 = vpop.permute.xlu0 %5529
      %5532 = vset.pattern.permute.xlu0 6
      %5533 = vperm.xlu0 %5532, %v291
      %v5534 = vpop.permute.xlu0 %5533
      %5536 = vset.pattern.permute.xlu0 6
      %5537 = vperm.xlu0 %5536, %v292
      %v5538 = vpop.permute.xlu0 %5537
      %5540 = vset.pattern.permute.xlu0 6
      %5541 = vperm.xlu0 %5540, %v293
      %v5542 = vpop.permute.xlu0 %5541
      %5544 = vset.pattern.permute.xlu0 6
      %5545 = vperm.xlu0 %5544, %v294
      %v5546 = vpop.permute.xlu0 %5545
      %5548 = vset.pattern.permute.xlu0 6
      %5549 = vperm.xlu0 %5548, %v295
      %v5550 = vpop.permute.xlu0 %5549
      %5552 = vset.pattern.permute.xlu0 6
      %5553 = vperm.xlu0 %5552, %v296
      %v5554 = vpop.permute.xlu0 %5553
      %5556 = vset.pattern.permute.xlu0 6
      %5557 = vperm.xlu0 %5556, %v297
      %v5558 = vpop.permute.xlu0 %5557
      %5560 = vset.pattern.permute.xlu0 6
      %5561 = vperm.xlu0 %5560, %v298
      %v5562 = vpop.permute.xlu0 %5561
      %5564 = vset.pattern.permute.xlu0 6
      %5565 = vperm.xlu0 %5564, %v299
      %v5566 = vpop.permute.xlu0 %5565
      %5568 = vset.pattern.permute.xlu0 6
      %5569 = vperm.xlu0 %5568, %v300
      %v5570 = vpop.permute.xlu0 %5569
      %5572 = vset.pattern.permute.xlu0 6
      %5573 = vperm.xlu0 %5572, %v301
      %v5574 = vpop.permute.xlu0 %5573
      %v5576 = vlaneseq
      %v5577 = vshrl.u32 %v5576, 7
      %v5578 = vsub.s32 6, %v5577
      %v5579 = vrot.slane %v302, %v5578
      %v5580 = vmul.f32 %v5066, %v5579
      %v5581 = vmul.f32 %v5070, %v5579
      %v5582 = vmul.f32 %v5074, %v5579
      %v5583 = vmul.f32 %v5078, %v5579
      %v5584 = vmul.f32 %v5082, %v5579
      %v5585 = vmul.f32 %v5086, %v5579
      %v5586 = vmul.f32 %v5090, %v5579
      %v5587 = vmul.f32 %v5094, %v5579
      %v5588 = vmul.f32 %v5098, %v5579
      %v5589 = vmul.f32 %v5102, %v5579
      %v5590 = vmul.f32 %v5106, %v5579
      %v5591 = vmul.f32 %v5110, %v5579
      %v5592 = vmul.f32 %v5114, %v5579
      %v5593 = vmul.f32 %v5118, %v5579
      %v5594 = vmul.f32 %v5122, %v5579
      %v5595 = vmul.f32 %v5126, %v5579
      %v5596 = vmul.f32 %v5130, %v5579
      %v5597 = vmul.f32 %v5134, %v5579
      %v5598 = vmul.f32 %v5138, %v5579
      %v5599 = vmul.f32 %v5142, %v5579
      %v5600 = vmul.f32 %v5146, %v5579
      %v5601 = vmul.f32 %v5150, %v5579
      %v5602 = vmul.f32 %v5154, %v5579
      %v5603 = vmul.f32 %v5158, %v5579
      %v5604 = vmul.f32 %v5162, %v5579
      %v5605 = vmul.f32 %v5166, %v5579
      %v5606 = vmul.f32 %v5170, %v5579
      %v5607 = vmul.f32 %v5174, %v5579
      %v5608 = vmul.f32 %v5178, %v5579
      %v5609 = vmul.f32 %v5182, %v5579
      %v5610 = vmul.f32 %v5186, %v5579
      %v5611 = vmul.f32 %v5190, %v5579
      %v5612 = vmul.f32 %v5194, %v5579
      %v5613 = vmul.f32 %v5198, %v5579
      %v5614 = vmul.f32 %v5202, %v5579
      %v5615 = vmul.f32 %v5206, %v5579
      %v5616 = vmul.f32 %v5210, %v5579
      %v5617 = vmul.f32 %v5214, %v5579
      %v5618 = vmul.f32 %v5218, %v5579
      %v5619 = vmul.f32 %v5222, %v5579
      %v5620 = vmul.f32 %v5226, %v5579
      %v5621 = vmul.f32 %v5230, %v5579
      %v5622 = vmul.f32 %v5234, %v5579
      %v5623 = vmul.f32 %v5238, %v5579
      %v5624 = vmul.f32 %v5242, %v5579
      %v5625 = vmul.f32 %v5246, %v5579
      %v5626 = vmul.f32 %v5250, %v5579
      %v5627 = vmul.f32 %v5254, %v5579
      %v5628 = vmul.f32 %v5258, %v5579
      %v5629 = vmul.f32 %v5262, %v5579
      %v5630 = vmul.f32 %v5266, %v5579
      %v5631 = vmul.f32 %v5270, %v5579
      %v5632 = vmul.f32 %v5274, %v5579
      %v5633 = vmul.f32 %v5278, %v5579
      %v5634 = vmul.f32 %v5282, %v5579
      %v5635 = vmul.f32 %v5286, %v5579
      %v5636 = vmul.f32 %v5290, %v5579
      %v5637 = vmul.f32 %v5294, %v5579
      %v5638 = vmul.f32 %v5298, %v5579
      %v5639 = vmul.f32 %v5302, %v5579
      %v5640 = vmul.f32 %v5306, %v5579
      %v5641 = vmul.f32 %v5310, %v5579
      %v5642 = vmul.f32 %v5314, %v5579
      %v5643 = vmul.f32 %v5318, %v5579
      %v5644 = vmul.f32 %v5322, %v5579
      %v5645 = vmul.f32 %v5326, %v5579
      %v5646 = vmul.f32 %v5330, %v5579
      %v5647 = vmul.f32 %v5334, %v5579
      %v5648 = vmul.f32 %v5338, %v5579
      %v5649 = vmul.f32 %v5342, %v5579
      %v5650 = vmul.f32 %v5346, %v5579
      %v5651 = vmul.f32 %v5350, %v5579
      %v5652 = vmul.f32 %v5354, %v5579
      %v5653 = vmul.f32 %v5358, %v5579
      %v5654 = vmul.f32 %v5362, %v5579
      %v5655 = vmul.f32 %v5366, %v5579
      %v5656 = vmul.f32 %v5370, %v5579
      %v5657 = vmul.f32 %v5374, %v5579
      %v5658 = vmul.f32 %v5378, %v5579
      %v5659 = vmul.f32 %v5382, %v5579
      %v5660 = vmul.f32 %v5386, %v5579
      %v5661 = vmul.f32 %v5390, %v5579
      %v5662 = vmul.f32 %v5394, %v5579
      %v5663 = vmul.f32 %v5398, %v5579
      %v5664 = vmul.f32 %v5402, %v5579
      %v5665 = vmul.f32 %v5406, %v5579
      %v5666 = vmul.f32 %v5410, %v5579
      %v5667 = vmul.f32 %v5414, %v5579
      %v5668 = vmul.f32 %v5418, %v5579
      %v5669 = vmul.f32 %v5422, %v5579
      %v5670 = vmul.f32 %v5426, %v5579
      %v5671 = vmul.f32 %v5430, %v5579
      %v5672 = vmul.f32 %v5434, %v5579
      %v5673 = vmul.f32 %v5438, %v5579
      %v5674 = vmul.f32 %v5442, %v5579
      %v5675 = vmul.f32 %v5446, %v5579
      %v5676 = vmul.f32 %v5450, %v5579
      %v5677 = vmul.f32 %v5454, %v5579
      %v5678 = vmul.f32 %v5458, %v5579
      %v5679 = vmul.f32 %v5462, %v5579
      %v5680 = vmul.f32 %v5466, %v5579
      %v5681 = vmul.f32 %v5470, %v5579
      %v5682 = vmul.f32 %v5474, %v5579
      %v5683 = vmul.f32 %v5478, %v5579
      %v5684 = vmul.f32 %v5482, %v5579
      %v5685 = vmul.f32 %v5486, %v5579
      %v5686 = vmul.f32 %v5490, %v5579
      %v5687 = vmul.f32 %v5494, %v5579
      %v5688 = vmul.f32 %v5498, %v5579
      %v5689 = vmul.f32 %v5502, %v5579
      %v5690 = vmul.f32 %v5506, %v5579
      %v5691 = vmul.f32 %v5510, %v5579
      %v5692 = vmul.f32 %v5514, %v5579
      %v5693 = vmul.f32 %v5518, %v5579
      %v5694 = vmul.f32 %v5522, %v5579
      %v5695 = vmul.f32 %v5526, %v5579
      %v5696 = vmul.f32 %v5530, %v5579
      %v5697 = vmul.f32 %v5534, %v5579
      %v5698 = vmul.f32 %v5538, %v5579
      %v5699 = vmul.f32 %v5542, %v5579
      %v5700 = vmul.f32 %v5546, %v5579
      %v5701 = vmul.f32 %v5550, %v5579
      %v5702 = vmul.f32 %v5554, %v5579
      %v5703 = vmul.f32 %v5558, %v5579
      %v5704 = vmul.f32 %v5562, %v5579
      %v5705 = vmul.f32 %v5566, %v5579
      %v5706 = vmul.f32 %v5570, %v5579
      %v5707 = vmul.f32 %v5574, %v5579
      %v5708 = vadd.f32 %v4936, %v5580
      %v5709 = vadd.f32 %v4937, %v5581
      %v5710 = vadd.f32 %v4938, %v5582
      %v5711 = vadd.f32 %v4939, %v5583
      %v5712 = vadd.f32 %v4940, %v5584
      %v5713 = vadd.f32 %v4941, %v5585
      %v5714 = vadd.f32 %v4942, %v5586
      %v5715 = vadd.f32 %v4943, %v5587
      %v5716 = vadd.f32 %v4944, %v5588
      %v5717 = vadd.f32 %v4945, %v5589
      %v5718 = vadd.f32 %v4946, %v5590
      %v5719 = vadd.f32 %v4947, %v5591
      %v5720 = vadd.f32 %v4948, %v5592
      %v5721 = vadd.f32 %v4949, %v5593
      %v5722 = vadd.f32 %v4950, %v5594
      %v5723 = vadd.f32 %v4951, %v5595
      %v5724 = vadd.f32 %v4952, %v5596
      %v5725 = vadd.f32 %v4953, %v5597
      %v5726 = vadd.f32 %v4954, %v5598
      %v5727 = vadd.f32 %v4955, %v5599
      %v5728 = vadd.f32 %v4956, %v5600
      %v5729 = vadd.f32 %v4957, %v5601
      %v5730 = vadd.f32 %v4958, %v5602
      %v5731 = vadd.f32 %v4959, %v5603
      %v5732 = vadd.f32 %v4960, %v5604
      %v5733 = vadd.f32 %v4961, %v5605
      %v5734 = vadd.f32 %v4962, %v5606
      %v5735 = vadd.f32 %v4963, %v5607
      %v5736 = vadd.f32 %v4964, %v5608
      %v5737 = vadd.f32 %v4965, %v5609
      %v5738 = vadd.f32 %v4966, %v5610
      %v5739 = vadd.f32 %v4967, %v5611
      %v5740 = vadd.f32 %v4968, %v5612
      %v5741 = vadd.f32 %v4969, %v5613
      %v5742 = vadd.f32 %v4970, %v5614
      %v5743 = vadd.f32 %v4971, %v5615
      %v5744 = vadd.f32 %v4972, %v5616
      %v5745 = vadd.f32 %v4973, %v5617
      %v5746 = vadd.f32 %v4974, %v5618
      %v5747 = vadd.f32 %v4975, %v5619
      %v5748 = vadd.f32 %v4976, %v5620
      %v5749 = vadd.f32 %v4977, %v5621
      %v5750 = vadd.f32 %v4978, %v5622
      %v5751 = vadd.f32 %v4979, %v5623
      %v5752 = vadd.f32 %v4980, %v5624
      %v5753 = vadd.f32 %v4981, %v5625
      %v5754 = vadd.f32 %v4982, %v5626
      %v5755 = vadd.f32 %v4983, %v5627
      %v5756 = vadd.f32 %v4984, %v5628
      %v5757 = vadd.f32 %v4985, %v5629
      %v5758 = vadd.f32 %v4986, %v5630
      %v5759 = vadd.f32 %v4987, %v5631
      %v5760 = vadd.f32 %v4988, %v5632
      %v5761 = vadd.f32 %v4989, %v5633
      %v5762 = vadd.f32 %v4990, %v5634
      %v5763 = vadd.f32 %v4991, %v5635
      %v5764 = vadd.f32 %v4992, %v5636
      %v5765 = vadd.f32 %v4993, %v5637
      %v5766 = vadd.f32 %v4994, %v5638
      %v5767 = vadd.f32 %v4995, %v5639
      %v5768 = vadd.f32 %v4996, %v5640
      %v5769 = vadd.f32 %v4997, %v5641
      %v5770 = vadd.f32 %v4998, %v5642
      %v5771 = vadd.f32 %v4999, %v5643
      %v5772 = vadd.f32 %v5000, %v5644
      %v5773 = vadd.f32 %v5001, %v5645
      %v5774 = vadd.f32 %v5002, %v5646
      %v5775 = vadd.f32 %v5003, %v5647
      %v5776 = vadd.f32 %v5004, %v5648
      %v5777 = vadd.f32 %v5005, %v5649
      %v5778 = vadd.f32 %v5006, %v5650
      %v5779 = vadd.f32 %v5007, %v5651
      %v5780 = vadd.f32 %v5008, %v5652
      %v5781 = vadd.f32 %v5009, %v5653
      %v5782 = vadd.f32 %v5010, %v5654
      %v5783 = vadd.f32 %v5011, %v5655
      %v5784 = vadd.f32 %v5012, %v5656
      %v5785 = vadd.f32 %v5013, %v5657
      %v5786 = vadd.f32 %v5014, %v5658
      %v5787 = vadd.f32 %v5015, %v5659
      %v5788 = vadd.f32 %v5016, %v5660
      %v5789 = vadd.f32 %v5017, %v5661
      %v5790 = vadd.f32 %v5018, %v5662
      %v5791 = vadd.f32 %v5019, %v5663
      %v5792 = vadd.f32 %v5020, %v5664
      %v5793 = vadd.f32 %v5021, %v5665
      %v5794 = vadd.f32 %v5022, %v5666
      %v5795 = vadd.f32 %v5023, %v5667
      %v5796 = vadd.f32 %v5024, %v5668
      %v5797 = vadd.f32 %v5025, %v5669
      %v5798 = vadd.f32 %v5026, %v5670
      %v5799 = vadd.f32 %v5027, %v5671
      %v5800 = vadd.f32 %v5028, %v5672
      %v5801 = vadd.f32 %v5029, %v5673
      %v5802 = vadd.f32 %v5030, %v5674
      %v5803 = vadd.f32 %v5031, %v5675
      %v5804 = vadd.f32 %v5032, %v5676
      %v5805 = vadd.f32 %v5033, %v5677
      %v5806 = vadd.f32 %v5034, %v5678
      %v5807 = vadd.f32 %v5035, %v5679
      %v5808 = vadd.f32 %v5036, %v5680
      %v5809 = vadd.f32 %v5037, %v5681
      %v5810 = vadd.f32 %v5038, %v5682
      %v5811 = vadd.f32 %v5039, %v5683
      %v5812 = vadd.f32 %v5040, %v5684
      %v5813 = vadd.f32 %v5041, %v5685
      %v5814 = vadd.f32 %v5042, %v5686
      %v5815 = vadd.f32 %v5043, %v5687
      %v5816 = vadd.f32 %v5044, %v5688
      %v5817 = vadd.f32 %v5045, %v5689
      %v5818 = vadd.f32 %v5046, %v5690
      %v5819 = vadd.f32 %v5047, %v5691
      %v5820 = vadd.f32 %v5048, %v5692
      %v5821 = vadd.f32 %v5049, %v5693
      %v5822 = vadd.f32 %v5050, %v5694
      %v5823 = vadd.f32 %v5051, %v5695
      %v5824 = vadd.f32 %v5052, %v5696
      %v5825 = vadd.f32 %v5053, %v5697
      %v5826 = vadd.f32 %v5054, %v5698
      %v5827 = vadd.f32 %v5055, %v5699
      %v5828 = vadd.f32 %v5056, %v5700
      %v5829 = vadd.f32 %v5057, %v5701
      %v5830 = vadd.f32 %v5058, %v5702
      %v5831 = vadd.f32 %v5059, %v5703
      %v5832 = vadd.f32 %v5060, %v5704
      %v5833 = vadd.f32 %v5061, %v5705
      %v5834 = vadd.f32 %v5062, %v5706
      %v5835 = vadd.f32 %v5063, %v5707
      %5836 = vset.pattern.permute.xlu0 7
      %5837 = vperm.xlu0 %5836, %v174
      %v5838 = vpop.permute.xlu0 %5837
      %5840 = vset.pattern.permute.xlu0 7
      %5841 = vperm.xlu0 %5840, %v175
      %v5842 = vpop.permute.xlu0 %5841
      %5844 = vset.pattern.permute.xlu0 7
      %5845 = vperm.xlu0 %5844, %v176
      %v5846 = vpop.permute.xlu0 %5845
      %5848 = vset.pattern.permute.xlu0 7
      %5849 = vperm.xlu0 %5848, %v177
      %v5850 = vpop.permute.xlu0 %5849
      %5852 = vset.pattern.permute.xlu0 7
      %5853 = vperm.xlu0 %5852, %v178
      %v5854 = vpop.permute.xlu0 %5853
      %5856 = vset.pattern.permute.xlu0 7
      %5857 = vperm.xlu0 %5856, %v179
      %v5858 = vpop.permute.xlu0 %5857
      %5860 = vset.pattern.permute.xlu0 7
      %5861 = vperm.xlu0 %5860, %v180
      %v5862 = vpop.permute.xlu0 %5861
      %5864 = vset.pattern.permute.xlu0 7
      %5865 = vperm.xlu0 %5864, %v181
      %v5866 = vpop.permute.xlu0 %5865
      %5868 = vset.pattern.permute.xlu0 7
      %5869 = vperm.xlu0 %5868, %v182
      %v5870 = vpop.permute.xlu0 %5869
      %5872 = vset.pattern.permute.xlu0 7
      %5873 = vperm.xlu0 %5872, %v183
      %v5874 = vpop.permute.xlu0 %5873
      %5876 = vset.pattern.permute.xlu0 7
      %5877 = vperm.xlu0 %5876, %v184
      %v5878 = vpop.permute.xlu0 %5877
      %5880 = vset.pattern.permute.xlu0 7
      %5881 = vperm.xlu0 %5880, %v185
      %v5882 = vpop.permute.xlu0 %5881
      %5884 = vset.pattern.permute.xlu0 7
      %5885 = vperm.xlu0 %5884, %v186
      %v5886 = vpop.permute.xlu0 %5885
      %5888 = vset.pattern.permute.xlu0 7
      %5889 = vperm.xlu0 %5888, %v187
      %v5890 = vpop.permute.xlu0 %5889
      %5892 = vset.pattern.permute.xlu0 7
      %5893 = vperm.xlu0 %5892, %v188
      %v5894 = vpop.permute.xlu0 %5893
      %5896 = vset.pattern.permute.xlu0 7
      %5897 = vperm.xlu0 %5896, %v189
      %v5898 = vpop.permute.xlu0 %5897
      %5900 = vset.pattern.permute.xlu0 7
      %5901 = vperm.xlu0 %5900, %v190
      %v5902 = vpop.permute.xlu0 %5901
      %5904 = vset.pattern.permute.xlu0 7
      %5905 = vperm.xlu0 %5904, %v191
      %v5906 = vpop.permute.xlu0 %5905
      %5908 = vset.pattern.permute.xlu0 7
      %5909 = vperm.xlu0 %5908, %v192
      %v5910 = vpop.permute.xlu0 %5909
      %5912 = vset.pattern.permute.xlu0 7
      %5913 = vperm.xlu0 %5912, %v193
      %v5914 = vpop.permute.xlu0 %5913
      %5916 = vset.pattern.permute.xlu0 7
      %5917 = vperm.xlu0 %5916, %v194
      %v5918 = vpop.permute.xlu0 %5917
      %5920 = vset.pattern.permute.xlu0 7
      %5921 = vperm.xlu0 %5920, %v195
      %v5922 = vpop.permute.xlu0 %5921
      %5924 = vset.pattern.permute.xlu0 7
      %5925 = vperm.xlu0 %5924, %v196
      %v5926 = vpop.permute.xlu0 %5925
      %5928 = vset.pattern.permute.xlu0 7
      %5929 = vperm.xlu0 %5928, %v197
      %v5930 = vpop.permute.xlu0 %5929
      %5932 = vset.pattern.permute.xlu0 7
      %5933 = vperm.xlu0 %5932, %v198
      %v5934 = vpop.permute.xlu0 %5933
      %5936 = vset.pattern.permute.xlu0 7
      %5937 = vperm.xlu0 %5936, %v199
      %v5938 = vpop.permute.xlu0 %5937
      %5940 = vset.pattern.permute.xlu0 7
      %5941 = vperm.xlu0 %5940, %v200
      %v5942 = vpop.permute.xlu0 %5941
      %5944 = vset.pattern.permute.xlu0 7
      %5945 = vperm.xlu0 %5944, %v201
      %v5946 = vpop.permute.xlu0 %5945
      %5948 = vset.pattern.permute.xlu0 7
      %5949 = vperm.xlu0 %5948, %v202
      %v5950 = vpop.permute.xlu0 %5949
      %5952 = vset.pattern.permute.xlu0 7
      %5953 = vperm.xlu0 %5952, %v203
      %v5954 = vpop.permute.xlu0 %5953
      %5956 = vset.pattern.permute.xlu0 7
      %5957 = vperm.xlu0 %5956, %v204
      %v5958 = vpop.permute.xlu0 %5957
      %5960 = vset.pattern.permute.xlu0 7
      %5961 = vperm.xlu0 %5960, %v205
      %v5962 = vpop.permute.xlu0 %5961
      %5964 = vset.pattern.permute.xlu0 7
      %5965 = vperm.xlu0 %5964, %v206
      %v5966 = vpop.permute.xlu0 %5965
      %5968 = vset.pattern.permute.xlu0 7
      %5969 = vperm.xlu0 %5968, %v207
      %v5970 = vpop.permute.xlu0 %5969
      %5972 = vset.pattern.permute.xlu0 7
      %5973 = vperm.xlu0 %5972, %v208
      %v5974 = vpop.permute.xlu0 %5973
      %5976 = vset.pattern.permute.xlu0 7
      %5977 = vperm.xlu0 %5976, %v209
      %v5978 = vpop.permute.xlu0 %5977
      %5980 = vset.pattern.permute.xlu0 7
      %5981 = vperm.xlu0 %5980, %v210
      %v5982 = vpop.permute.xlu0 %5981
      %5984 = vset.pattern.permute.xlu0 7
      %5985 = vperm.xlu0 %5984, %v211
      %v5986 = vpop.permute.xlu0 %5985
      %5988 = vset.pattern.permute.xlu0 7
      %5989 = vperm.xlu0 %5988, %v212
      %v5990 = vpop.permute.xlu0 %5989
      %5992 = vset.pattern.permute.xlu0 7
      %5993 = vperm.xlu0 %5992, %v213
      %v5994 = vpop.permute.xlu0 %5993
      %5996 = vset.pattern.permute.xlu0 7
      %5997 = vperm.xlu0 %5996, %v214
      %v5998 = vpop.permute.xlu0 %5997
      %6000 = vset.pattern.permute.xlu0 7
      %6001 = vperm.xlu0 %6000, %v215
      %v6002 = vpop.permute.xlu0 %6001
      %6004 = vset.pattern.permute.xlu0 7
      %6005 = vperm.xlu0 %6004, %v216
      %v6006 = vpop.permute.xlu0 %6005
      %6008 = vset.pattern.permute.xlu0 7
      %6009 = vperm.xlu0 %6008, %v217
      %v6010 = vpop.permute.xlu0 %6009
      %6012 = vset.pattern.permute.xlu0 7
      %6013 = vperm.xlu0 %6012, %v218
      %v6014 = vpop.permute.xlu0 %6013
      %6016 = vset.pattern.permute.xlu0 7
      %6017 = vperm.xlu0 %6016, %v219
      %v6018 = vpop.permute.xlu0 %6017
      %6020 = vset.pattern.permute.xlu0 7
      %6021 = vperm.xlu0 %6020, %v220
      %v6022 = vpop.permute.xlu0 %6021
      %6024 = vset.pattern.permute.xlu0 7
      %6025 = vperm.xlu0 %6024, %v221
      %v6026 = vpop.permute.xlu0 %6025
      %6028 = vset.pattern.permute.xlu0 7
      %6029 = vperm.xlu0 %6028, %v222
      %v6030 = vpop.permute.xlu0 %6029
      %6032 = vset.pattern.permute.xlu0 7
      %6033 = vperm.xlu0 %6032, %v223
      %v6034 = vpop.permute.xlu0 %6033
      %6036 = vset.pattern.permute.xlu0 7
      %6037 = vperm.xlu0 %6036, %v224
      %v6038 = vpop.permute.xlu0 %6037
      %6040 = vset.pattern.permute.xlu0 7
      %6041 = vperm.xlu0 %6040, %v225
      %v6042 = vpop.permute.xlu0 %6041
      %6044 = vset.pattern.permute.xlu0 7
      %6045 = vperm.xlu0 %6044, %v226
      %v6046 = vpop.permute.xlu0 %6045
      %6048 = vset.pattern.permute.xlu0 7
      %6049 = vperm.xlu0 %6048, %v227
      %v6050 = vpop.permute.xlu0 %6049
      %6052 = vset.pattern.permute.xlu0 7
      %6053 = vperm.xlu0 %6052, %v228
      %v6054 = vpop.permute.xlu0 %6053
      %6056 = vset.pattern.permute.xlu0 7
      %6057 = vperm.xlu0 %6056, %v229
      %v6058 = vpop.permute.xlu0 %6057
      %6060 = vset.pattern.permute.xlu0 7
      %6061 = vperm.xlu0 %6060, %v230
      %v6062 = vpop.permute.xlu0 %6061
      %6064 = vset.pattern.permute.xlu0 7
      %6065 = vperm.xlu0 %6064, %v231
      %v6066 = vpop.permute.xlu0 %6065
      %6068 = vset.pattern.permute.xlu0 7
      %6069 = vperm.xlu0 %6068, %v232
      %v6070 = vpop.permute.xlu0 %6069
      %6072 = vset.pattern.permute.xlu0 7
      %6073 = vperm.xlu0 %6072, %v233
      %v6074 = vpop.permute.xlu0 %6073
      %6076 = vset.pattern.permute.xlu0 7
      %6077 = vperm.xlu0 %6076, %v234
      %v6078 = vpop.permute.xlu0 %6077
      %6080 = vset.pattern.permute.xlu0 7
      %6081 = vperm.xlu0 %6080, %v235
      %v6082 = vpop.permute.xlu0 %6081
      %6084 = vset.pattern.permute.xlu0 7
      %6085 = vperm.xlu0 %6084, %v236
      %v6086 = vpop.permute.xlu0 %6085
      %6088 = vset.pattern.permute.xlu0 7
      %6089 = vperm.xlu0 %6088, %v237
      %v6090 = vpop.permute.xlu0 %6089
      %6092 = vset.pattern.permute.xlu0 7
      %6093 = vperm.xlu0 %6092, %v238
      %v6094 = vpop.permute.xlu0 %6093
      %6096 = vset.pattern.permute.xlu0 7
      %6097 = vperm.xlu0 %6096, %v239
      %v6098 = vpop.permute.xlu0 %6097
      %6100 = vset.pattern.permute.xlu0 7
      %6101 = vperm.xlu0 %6100, %v240
      %v6102 = vpop.permute.xlu0 %6101
      %6104 = vset.pattern.permute.xlu0 7
      %6105 = vperm.xlu0 %6104, %v241
      %v6106 = vpop.permute.xlu0 %6105
      %6108 = vset.pattern.permute.xlu0 7
      %6109 = vperm.xlu0 %6108, %v242
      %v6110 = vpop.permute.xlu0 %6109
      %6112 = vset.pattern.permute.xlu0 7
      %6113 = vperm.xlu0 %6112, %v243
      %v6114 = vpop.permute.xlu0 %6113
      %6116 = vset.pattern.permute.xlu0 7
      %6117 = vperm.xlu0 %6116, %v244
      %v6118 = vpop.permute.xlu0 %6117
      %6120 = vset.pattern.permute.xlu0 7
      %6121 = vperm.xlu0 %6120, %v245
      %v6122 = vpop.permute.xlu0 %6121
      %6124 = vset.pattern.permute.xlu0 7
      %6125 = vperm.xlu0 %6124, %v246
      %v6126 = vpop.permute.xlu0 %6125
      %6128 = vset.pattern.permute.xlu0 7
      %6129 = vperm.xlu0 %6128, %v247
      %v6130 = vpop.permute.xlu0 %6129
      %6132 = vset.pattern.permute.xlu0 7
      %6133 = vperm.xlu0 %6132, %v248
      %v6134 = vpop.permute.xlu0 %6133
      %6136 = vset.pattern.permute.xlu0 7
      %6137 = vperm.xlu0 %6136, %v249
      %v6138 = vpop.permute.xlu0 %6137
      %6140 = vset.pattern.permute.xlu0 7
      %6141 = vperm.xlu0 %6140, %v250
      %v6142 = vpop.permute.xlu0 %6141
      %6144 = vset.pattern.permute.xlu0 7
      %6145 = vperm.xlu0 %6144, %v251
      %v6146 = vpop.permute.xlu0 %6145
      %6148 = vset.pattern.permute.xlu0 7
      %6149 = vperm.xlu0 %6148, %v252
      %v6150 = vpop.permute.xlu0 %6149
      %6152 = vset.pattern.permute.xlu0 7
      %6153 = vperm.xlu0 %6152, %v253
      %v6154 = vpop.permute.xlu0 %6153
      %6156 = vset.pattern.permute.xlu0 7
      %6157 = vperm.xlu0 %6156, %v254
      %v6158 = vpop.permute.xlu0 %6157
      %6160 = vset.pattern.permute.xlu0 7
      %6161 = vperm.xlu0 %6160, %v255
      %v6162 = vpop.permute.xlu0 %6161
      %6164 = vset.pattern.permute.xlu0 7
      %6165 = vperm.xlu0 %6164, %v256
      %v6166 = vpop.permute.xlu0 %6165
      %6168 = vset.pattern.permute.xlu0 7
      %6169 = vperm.xlu0 %6168, %v257
      %v6170 = vpop.permute.xlu0 %6169
      %6172 = vset.pattern.permute.xlu0 7
      %6173 = vperm.xlu0 %6172, %v258
      %v6174 = vpop.permute.xlu0 %6173
      %6176 = vset.pattern.permute.xlu0 7
      %6177 = vperm.xlu0 %6176, %v259
      %v6178 = vpop.permute.xlu0 %6177
      %6180 = vset.pattern.permute.xlu0 7
      %6181 = vperm.xlu0 %6180, %v260
      %v6182 = vpop.permute.xlu0 %6181
      %6184 = vset.pattern.permute.xlu0 7
      %6185 = vperm.xlu0 %6184, %v261
      %v6186 = vpop.permute.xlu0 %6185
      %6188 = vset.pattern.permute.xlu0 7
      %6189 = vperm.xlu0 %6188, %v262
      %v6190 = vpop.permute.xlu0 %6189
      %6192 = vset.pattern.permute.xlu0 7
      %6193 = vperm.xlu0 %6192, %v263
      %v6194 = vpop.permute.xlu0 %6193
      %6196 = vset.pattern.permute.xlu0 7
      %6197 = vperm.xlu0 %6196, %v264
      %v6198 = vpop.permute.xlu0 %6197
      %6200 = vset.pattern.permute.xlu0 7
      %6201 = vperm.xlu0 %6200, %v265
      %v6202 = vpop.permute.xlu0 %6201
      %6204 = vset.pattern.permute.xlu0 7
      %6205 = vperm.xlu0 %6204, %v266
      %v6206 = vpop.permute.xlu0 %6205
      %6208 = vset.pattern.permute.xlu0 7
      %6209 = vperm.xlu0 %6208, %v267
      %v6210 = vpop.permute.xlu0 %6209
      %6212 = vset.pattern.permute.xlu0 7
      %6213 = vperm.xlu0 %6212, %v268
      %v6214 = vpop.permute.xlu0 %6213
      %6216 = vset.pattern.permute.xlu0 7
      %6217 = vperm.xlu0 %6216, %v269
      %v6218 = vpop.permute.xlu0 %6217
      %6220 = vset.pattern.permute.xlu0 7
      %6221 = vperm.xlu0 %6220, %v270
      %v6222 = vpop.permute.xlu0 %6221
      %6224 = vset.pattern.permute.xlu0 7
      %6225 = vperm.xlu0 %6224, %v271
      %v6226 = vpop.permute.xlu0 %6225
      %6228 = vset.pattern.permute.xlu0 7
      %6229 = vperm.xlu0 %6228, %v272
      %v6230 = vpop.permute.xlu0 %6229
      %6232 = vset.pattern.permute.xlu0 7
      %6233 = vperm.xlu0 %6232, %v273
      %v6234 = vpop.permute.xlu0 %6233
      %6236 = vset.pattern.permute.xlu0 7
      %6237 = vperm.xlu0 %6236, %v274
      %v6238 = vpop.permute.xlu0 %6237
      %6240 = vset.pattern.permute.xlu0 7
      %6241 = vperm.xlu0 %6240, %v275
      %v6242 = vpop.permute.xlu0 %6241
      %6244 = vset.pattern.permute.xlu0 7
      %6245 = vperm.xlu0 %6244, %v276
      %v6246 = vpop.permute.xlu0 %6245
      %6248 = vset.pattern.permute.xlu0 7
      %6249 = vperm.xlu0 %6248, %v277
      %v6250 = vpop.permute.xlu0 %6249
      %6252 = vset.pattern.permute.xlu0 7
      %6253 = vperm.xlu0 %6252, %v278
      %v6254 = vpop.permute.xlu0 %6253
      %6256 = vset.pattern.permute.xlu0 7
      %6257 = vperm.xlu0 %6256, %v279
      %v6258 = vpop.permute.xlu0 %6257
      %6260 = vset.pattern.permute.xlu0 7
      %6261 = vperm.xlu0 %6260, %v280
      %v6262 = vpop.permute.xlu0 %6261
      %6264 = vset.pattern.permute.xlu0 7
      %6265 = vperm.xlu0 %6264, %v281
      %v6266 = vpop.permute.xlu0 %6265
      %6268 = vset.pattern.permute.xlu0 7
      %6269 = vperm.xlu0 %6268, %v282
      %v6270 = vpop.permute.xlu0 %6269
      %6272 = vset.pattern.permute.xlu0 7
      %6273 = vperm.xlu0 %6272, %v283
      %v6274 = vpop.permute.xlu0 %6273
      %6276 = vset.pattern.permute.xlu0 7
      %6277 = vperm.xlu0 %6276, %v284
      %v6278 = vpop.permute.xlu0 %6277
      %6280 = vset.pattern.permute.xlu0 7
      %6281 = vperm.xlu0 %6280, %v285
      %v6282 = vpop.permute.xlu0 %6281
      %6284 = vset.pattern.permute.xlu0 7
      %6285 = vperm.xlu0 %6284, %v286
      %v6286 = vpop.permute.xlu0 %6285
      %6288 = vset.pattern.permute.xlu0 7
      %6289 = vperm.xlu0 %6288, %v287
      %v6290 = vpop.permute.xlu0 %6289
      %6292 = vset.pattern.permute.xlu0 7
      %6293 = vperm.xlu0 %6292, %v288
      %v6294 = vpop.permute.xlu0 %6293
      %6296 = vset.pattern.permute.xlu0 7
      %6297 = vperm.xlu0 %6296, %v289
      %v6298 = vpop.permute.xlu0 %6297
      %6300 = vset.pattern.permute.xlu0 7
      %6301 = vperm.xlu0 %6300, %v290
      %v6302 = vpop.permute.xlu0 %6301
      %6304 = vset.pattern.permute.xlu0 7
      %6305 = vperm.xlu0 %6304, %v291
      %v6306 = vpop.permute.xlu0 %6305
      %6308 = vset.pattern.permute.xlu0 7
      %6309 = vperm.xlu0 %6308, %v292
      %v6310 = vpop.permute.xlu0 %6309
      %6312 = vset.pattern.permute.xlu0 7
      %6313 = vperm.xlu0 %6312, %v293
      %v6314 = vpop.permute.xlu0 %6313
      %6316 = vset.pattern.permute.xlu0 7
      %6317 = vperm.xlu0 %6316, %v294
      %v6318 = vpop.permute.xlu0 %6317
      %6320 = vset.pattern.permute.xlu0 7
      %6321 = vperm.xlu0 %6320, %v295
      %v6322 = vpop.permute.xlu0 %6321
      %6324 = vset.pattern.permute.xlu0 7
      %6325 = vperm.xlu0 %6324, %v296
      %v6326 = vpop.permute.xlu0 %6325
      %6328 = vset.pattern.permute.xlu0 7
      %6329 = vperm.xlu0 %6328, %v297
      %v6330 = vpop.permute.xlu0 %6329
      %6332 = vset.pattern.permute.xlu0 7
      %6333 = vperm.xlu0 %6332, %v298
      %v6334 = vpop.permute.xlu0 %6333
      %6336 = vset.pattern.permute.xlu0 7
      %6337 = vperm.xlu0 %6336, %v299
      %v6338 = vpop.permute.xlu0 %6337
      %6340 = vset.pattern.permute.xlu0 7
      %6341 = vperm.xlu0 %6340, %v300
      %v6342 = vpop.permute.xlu0 %6341
      %6344 = vset.pattern.permute.xlu0 7
      %6345 = vperm.xlu0 %6344, %v301
      %v6346 = vpop.permute.xlu0 %6345
      %v6348 = vlaneseq
      %v6349 = vshrl.u32 %v6348, 7
      %v6350 = vsub.s32 7, %v6349
      %v6351 = vrot.slane %v302, %v6350
      %v6352 = vmul.f32 %v5838, %v6351
      %v6353 = vmul.f32 %v5842, %v6351
      %v6354 = vmul.f32 %v5846, %v6351
      %v6355 = vmul.f32 %v5850, %v6351
      %v6356 = vmul.f32 %v5854, %v6351
      %v6357 = vmul.f32 %v5858, %v6351
      %v6358 = vmul.f32 %v5862, %v6351
      %v6359 = vmul.f32 %v5866, %v6351
      %v6360 = vmul.f32 %v5870, %v6351
      %v6361 = vmul.f32 %v5874, %v6351
      %v6362 = vmul.f32 %v5878, %v6351
      %v6363 = vmul.f32 %v5882, %v6351
      %v6364 = vmul.f32 %v5886, %v6351
      %v6365 = vmul.f32 %v5890, %v6351
      %v6366 = vmul.f32 %v5894, %v6351
      %v6367 = vmul.f32 %v5898, %v6351
      %v6368 = vmul.f32 %v5902, %v6351
      %v6369 = vmul.f32 %v5906, %v6351
      %v6370 = vmul.f32 %v5910, %v6351
      %v6371 = vmul.f32 %v5914, %v6351
      %v6372 = vmul.f32 %v5918, %v6351
      %v6373 = vmul.f32 %v5922, %v6351
      %v6374 = vmul.f32 %v5926, %v6351
      %v6375 = vmul.f32 %v5930, %v6351
      %v6376 = vmul.f32 %v5934, %v6351
      %v6377 = vmul.f32 %v5938, %v6351
      %v6378 = vmul.f32 %v5942, %v6351
      %v6379 = vmul.f32 %v5946, %v6351
      %v6380 = vmul.f32 %v5950, %v6351
      %v6381 = vmul.f32 %v5954, %v6351
      %v6382 = vmul.f32 %v5958, %v6351
      %v6383 = vmul.f32 %v5962, %v6351
      %v6384 = vmul.f32 %v5966, %v6351
      %v6385 = vmul.f32 %v5970, %v6351
      %v6386 = vmul.f32 %v5974, %v6351
      %v6387 = vmul.f32 %v5978, %v6351
      %v6388 = vmul.f32 %v5982, %v6351
      %v6389 = vmul.f32 %v5986, %v6351
      %v6390 = vmul.f32 %v5990, %v6351
      %v6391 = vmul.f32 %v5994, %v6351
      %v6392 = vmul.f32 %v5998, %v6351
      %v6393 = vmul.f32 %v6002, %v6351
      %v6394 = vmul.f32 %v6006, %v6351
      %v6395 = vmul.f32 %v6010, %v6351
      %v6396 = vmul.f32 %v6014, %v6351
      %v6397 = vmul.f32 %v6018, %v6351
      %v6398 = vmul.f32 %v6022, %v6351
      %v6399 = vmul.f32 %v6026, %v6351
      %v6400 = vmul.f32 %v6030, %v6351
      %v6401 = vmul.f32 %v6034, %v6351
      %v6402 = vmul.f32 %v6038, %v6351
      %v6403 = vmul.f32 %v6042, %v6351
      %v6404 = vmul.f32 %v6046, %v6351
      %v6405 = vmul.f32 %v6050, %v6351
      %v6406 = vmul.f32 %v6054, %v6351
      %v6407 = vmul.f32 %v6058, %v6351
      %v6408 = vmul.f32 %v6062, %v6351
      %v6409 = vmul.f32 %v6066, %v6351
      %v6410 = vmul.f32 %v6070, %v6351
      %v6411 = vmul.f32 %v6074, %v6351
      %v6412 = vmul.f32 %v6078, %v6351
      %v6413 = vmul.f32 %v6082, %v6351
      %v6414 = vmul.f32 %v6086, %v6351
      %v6415 = vmul.f32 %v6090, %v6351
      %v6416 = vmul.f32 %v6094, %v6351
      %v6417 = vmul.f32 %v6098, %v6351
      %v6418 = vmul.f32 %v6102, %v6351
      %v6419 = vmul.f32 %v6106, %v6351
      %v6420 = vmul.f32 %v6110, %v6351
      %v6421 = vmul.f32 %v6114, %v6351
      %v6422 = vmul.f32 %v6118, %v6351
      %v6423 = vmul.f32 %v6122, %v6351
      %v6424 = vmul.f32 %v6126, %v6351
      %v6425 = vmul.f32 %v6130, %v6351
      %v6426 = vmul.f32 %v6134, %v6351
      %v6427 = vmul.f32 %v6138, %v6351
      %v6428 = vmul.f32 %v6142, %v6351
      %v6429 = vmul.f32 %v6146, %v6351
      %v6430 = vmul.f32 %v6150, %v6351
      %v6431 = vmul.f32 %v6154, %v6351
      %v6432 = vmul.f32 %v6158, %v6351
      %v6433 = vmul.f32 %v6162, %v6351
      %v6434 = vmul.f32 %v6166, %v6351
      %v6435 = vmul.f32 %v6170, %v6351
      %v6436 = vmul.f32 %v6174, %v6351
      %v6437 = vmul.f32 %v6178, %v6351
      %v6438 = vmul.f32 %v6182, %v6351
      %v6439 = vmul.f32 %v6186, %v6351
      %v6440 = vmul.f32 %v6190, %v6351
      %v6441 = vmul.f32 %v6194, %v6351
      %v6442 = vmul.f32 %v6198, %v6351
      %v6443 = vmul.f32 %v6202, %v6351
      %v6444 = vmul.f32 %v6206, %v6351
      %v6445 = vmul.f32 %v6210, %v6351
      %v6446 = vmul.f32 %v6214, %v6351
      %v6447 = vmul.f32 %v6218, %v6351
      %v6448 = vmul.f32 %v6222, %v6351
      %v6449 = vmul.f32 %v6226, %v6351
      %v6450 = vmul.f32 %v6230, %v6351
      %v6451 = vmul.f32 %v6234, %v6351
      %v6452 = vmul.f32 %v6238, %v6351
      %v6453 = vmul.f32 %v6242, %v6351
      %v6454 = vmul.f32 %v6246, %v6351
      %v6455 = vmul.f32 %v6250, %v6351
      %v6456 = vmul.f32 %v6254, %v6351
      %v6457 = vmul.f32 %v6258, %v6351
      %v6458 = vmul.f32 %v6262, %v6351
      %v6459 = vmul.f32 %v6266, %v6351
      %v6460 = vmul.f32 %v6270, %v6351
      %v6461 = vmul.f32 %v6274, %v6351
      %v6462 = vmul.f32 %v6278, %v6351
      %v6463 = vmul.f32 %v6282, %v6351
      %v6464 = vmul.f32 %v6286, %v6351
      %v6465 = vmul.f32 %v6290, %v6351
      %v6466 = vmul.f32 %v6294, %v6351
      %v6467 = vmul.f32 %v6298, %v6351
      %v6468 = vmul.f32 %v6302, %v6351
      %v6469 = vmul.f32 %v6306, %v6351
      %v6470 = vmul.f32 %v6310, %v6351
      %v6471 = vmul.f32 %v6314, %v6351
      %v6472 = vmul.f32 %v6318, %v6351
      %v6473 = vmul.f32 %v6322, %v6351
      %v6474 = vmul.f32 %v6326, %v6351
      %v6475 = vmul.f32 %v6330, %v6351
      %v6476 = vmul.f32 %v6334, %v6351
      %v6477 = vmul.f32 %v6338, %v6351
      %v6478 = vmul.f32 %v6342, %v6351
      %v6479 = vmul.f32 %v6346, %v6351
      %v6480 = vadd.f32 %v5708, %v6352
      %v6481 = vadd.f32 %v5709, %v6353
      %v6482 = vadd.f32 %v5710, %v6354
      %v6483 = vadd.f32 %v5711, %v6355
      %v6484 = vadd.f32 %v5712, %v6356
      %v6485 = vadd.f32 %v5713, %v6357
      %v6486 = vadd.f32 %v5714, %v6358
      %v6487 = vadd.f32 %v5715, %v6359
      %v6488 = vadd.f32 %v5716, %v6360
      %v6489 = vadd.f32 %v5717, %v6361
      %v6490 = vadd.f32 %v5718, %v6362
      %v6491 = vadd.f32 %v5719, %v6363
      %v6492 = vadd.f32 %v5720, %v6364
      %v6493 = vadd.f32 %v5721, %v6365
      %v6494 = vadd.f32 %v5722, %v6366
      %v6495 = vadd.f32 %v5723, %v6367
      %v6496 = vadd.f32 %v5724, %v6368
      %v6497 = vadd.f32 %v5725, %v6369
      %v6498 = vadd.f32 %v5726, %v6370
      %v6499 = vadd.f32 %v5727, %v6371
      %v6500 = vadd.f32 %v5728, %v6372
      %v6501 = vadd.f32 %v5729, %v6373
      %v6502 = vadd.f32 %v5730, %v6374
      %v6503 = vadd.f32 %v5731, %v6375
      %v6504 = vadd.f32 %v5732, %v6376
      %v6505 = vadd.f32 %v5733, %v6377
      %v6506 = vadd.f32 %v5734, %v6378
      %v6507 = vadd.f32 %v5735, %v6379
      %v6508 = vadd.f32 %v5736, %v6380
      %v6509 = vadd.f32 %v5737, %v6381
      %v6510 = vadd.f32 %v5738, %v6382
      %v6511 = vadd.f32 %v5739, %v6383
      %v6512 = vadd.f32 %v5740, %v6384
      %v6513 = vadd.f32 %v5741, %v6385
      %v6514 = vadd.f32 %v5742, %v6386
      %v6515 = vadd.f32 %v5743, %v6387
      %v6516 = vadd.f32 %v5744, %v6388
      %v6517 = vadd.f32 %v5745, %v6389
      %v6518 = vadd.f32 %v5746, %v6390
      %v6519 = vadd.f32 %v5747, %v6391
      %v6520 = vadd.f32 %v5748, %v6392
      %v6521 = vadd.f32 %v5749, %v6393
      %v6522 = vadd.f32 %v5750, %v6394
      %v6523 = vadd.f32 %v5751, %v6395
      %v6524 = vadd.f32 %v5752, %v6396
      %v6525 = vadd.f32 %v5753, %v6397
      %v6526 = vadd.f32 %v5754, %v6398
      %v6527 = vadd.f32 %v5755, %v6399
      %v6528 = vadd.f32 %v5756, %v6400
      %v6529 = vadd.f32 %v5757, %v6401
      %v6530 = vadd.f32 %v5758, %v6402
      %v6531 = vadd.f32 %v5759, %v6403
      %v6532 = vadd.f32 %v5760, %v6404
      %v6533 = vadd.f32 %v5761, %v6405
      %v6534 = vadd.f32 %v5762, %v6406
      %v6535 = vadd.f32 %v5763, %v6407
      %v6536 = vadd.f32 %v5764, %v6408
      %v6537 = vadd.f32 %v5765, %v6409
      %v6538 = vadd.f32 %v5766, %v6410
      %v6539 = vadd.f32 %v5767, %v6411
      %v6540 = vadd.f32 %v5768, %v6412
      %v6541 = vadd.f32 %v5769, %v6413
      %v6542 = vadd.f32 %v5770, %v6414
      %v6543 = vadd.f32 %v5771, %v6415
      %v6544 = vadd.f32 %v5772, %v6416
      %v6545 = vadd.f32 %v5773, %v6417
      %v6546 = vadd.f32 %v5774, %v6418
      %v6547 = vadd.f32 %v5775, %v6419
      %v6548 = vadd.f32 %v5776, %v6420
      %v6549 = vadd.f32 %v5777, %v6421
      %v6550 = vadd.f32 %v5778, %v6422
      %v6551 = vadd.f32 %v5779, %v6423
      %v6552 = vadd.f32 %v5780, %v6424
      %v6553 = vadd.f32 %v5781, %v6425
      %v6554 = vadd.f32 %v5782, %v6426
      %v6555 = vadd.f32 %v5783, %v6427
      %v6556 = vadd.f32 %v5784, %v6428
      %v6557 = vadd.f32 %v5785, %v6429
      %v6558 = vadd.f32 %v5786, %v6430
      %v6559 = vadd.f32 %v5787, %v6431
      %v6560 = vadd.f32 %v5788, %v6432
      %v6561 = vadd.f32 %v5789, %v6433
      %v6562 = vadd.f32 %v5790, %v6434
      %v6563 = vadd.f32 %v5791, %v6435
      %v6564 = vadd.f32 %v5792, %v6436
      %v6565 = vadd.f32 %v5793, %v6437
      %v6566 = vadd.f32 %v5794, %v6438
      %v6567 = vadd.f32 %v5795, %v6439
      %v6568 = vadd.f32 %v5796, %v6440
      %v6569 = vadd.f32 %v5797, %v6441
      %v6570 = vadd.f32 %v5798, %v6442
      %v6571 = vadd.f32 %v5799, %v6443
      %v6572 = vadd.f32 %v5800, %v6444
      %v6573 = vadd.f32 %v5801, %v6445
      %v6574 = vadd.f32 %v5802, %v6446
      %v6575 = vadd.f32 %v5803, %v6447
      %v6576 = vadd.f32 %v5804, %v6448
      %v6577 = vadd.f32 %v5805, %v6449
      %v6578 = vadd.f32 %v5806, %v6450
      %v6579 = vadd.f32 %v5807, %v6451
      %v6580 = vadd.f32 %v5808, %v6452
      %v6581 = vadd.f32 %v5809, %v6453
      %v6582 = vadd.f32 %v5810, %v6454
      %v6583 = vadd.f32 %v5811, %v6455
      %v6584 = vadd.f32 %v5812, %v6456
      %v6585 = vadd.f32 %v5813, %v6457
      %v6586 = vadd.f32 %v5814, %v6458
      %v6587 = vadd.f32 %v5815, %v6459
      %v6588 = vadd.f32 %v5816, %v6460
      %v6589 = vadd.f32 %v5817, %v6461
      %v6590 = vadd.f32 %v5818, %v6462
      %v6591 = vadd.f32 %v5819, %v6463
      %v6592 = vadd.f32 %v5820, %v6464
      %v6593 = vadd.f32 %v5821, %v6465
      %v6594 = vadd.f32 %v5822, %v6466
      %v6595 = vadd.f32 %v5823, %v6467
      %v6596 = vadd.f32 %v5824, %v6468
      %v6597 = vadd.f32 %v5825, %v6469
      %v6598 = vadd.f32 %v5826, %v6470
      %v6599 = vadd.f32 %v5827, %v6471
      %v6600 = vadd.f32 %v5828, %v6472
      %v6601 = vadd.f32 %v5829, %v6473
      %v6602 = vadd.f32 %v5830, %v6474
      %v6603 = vadd.f32 %v5831, %v6475
      %v6604 = vadd.f32 %v5832, %v6476
      %v6605 = vadd.f32 %v5833, %v6477
      %v6606 = vadd.f32 %v5834, %v6478
      %v6607 = vadd.f32 %v5835, %v6479
      %6608 = vset.pattern.permute.xlu0 8
      %6609 = vperm.xlu0 %6608, %v174
      %v6610 = vpop.permute.xlu0 %6609
      %6612 = vset.pattern.permute.xlu0 8
      %6613 = vperm.xlu0 %6612, %v175
      %v6614 = vpop.permute.xlu0 %6613
      %6616 = vset.pattern.permute.xlu0 8
      %6617 = vperm.xlu0 %6616, %v176
      %v6618 = vpop.permute.xlu0 %6617
      %6620 = vset.pattern.permute.xlu0 8
      %6621 = vperm.xlu0 %6620, %v177
      %v6622 = vpop.permute.xlu0 %6621
      %6624 = vset.pattern.permute.xlu0 8
      %6625 = vperm.xlu0 %6624, %v178
      %v6626 = vpop.permute.xlu0 %6625
      %6628 = vset.pattern.permute.xlu0 8
      %6629 = vperm.xlu0 %6628, %v179
      %v6630 = vpop.permute.xlu0 %6629
      %6632 = vset.pattern.permute.xlu0 8
      %6633 = vperm.xlu0 %6632, %v180
      %v6634 = vpop.permute.xlu0 %6633
      %6636 = vset.pattern.permute.xlu0 8
      %6637 = vperm.xlu0 %6636, %v181
      %v6638 = vpop.permute.xlu0 %6637
      %6640 = vset.pattern.permute.xlu0 8
      %6641 = vperm.xlu0 %6640, %v182
      %v6642 = vpop.permute.xlu0 %6641
      %6644 = vset.pattern.permute.xlu0 8
      %6645 = vperm.xlu0 %6644, %v183
      %v6646 = vpop.permute.xlu0 %6645
      %6648 = vset.pattern.permute.xlu0 8
      %6649 = vperm.xlu0 %6648, %v184
      %v6650 = vpop.permute.xlu0 %6649
      %6652 = vset.pattern.permute.xlu0 8
      %6653 = vperm.xlu0 %6652, %v185
      %v6654 = vpop.permute.xlu0 %6653
      %6656 = vset.pattern.permute.xlu0 8
      %6657 = vperm.xlu0 %6656, %v186
      %v6658 = vpop.permute.xlu0 %6657
      %6660 = vset.pattern.permute.xlu0 8
      %6661 = vperm.xlu0 %6660, %v187
      %v6662 = vpop.permute.xlu0 %6661
      %6664 = vset.pattern.permute.xlu0 8
      %6665 = vperm.xlu0 %6664, %v188
      %v6666 = vpop.permute.xlu0 %6665
      %6668 = vset.pattern.permute.xlu0 8
      %6669 = vperm.xlu0 %6668, %v189
      %v6670 = vpop.permute.xlu0 %6669
      %6672 = vset.pattern.permute.xlu0 8
      %6673 = vperm.xlu0 %6672, %v190
      %v6674 = vpop.permute.xlu0 %6673
      %6676 = vset.pattern.permute.xlu0 8
      %6677 = vperm.xlu0 %6676, %v191
      %v6678 = vpop.permute.xlu0 %6677
      %6680 = vset.pattern.permute.xlu0 8
      %6681 = vperm.xlu0 %6680, %v192
      %v6682 = vpop.permute.xlu0 %6681
      %6684 = vset.pattern.permute.xlu0 8
      %6685 = vperm.xlu0 %6684, %v193
      %v6686 = vpop.permute.xlu0 %6685
      %6688 = vset.pattern.permute.xlu0 8
      %6689 = vperm.xlu0 %6688, %v194
      %v6690 = vpop.permute.xlu0 %6689
      %6692 = vset.pattern.permute.xlu0 8
      %6693 = vperm.xlu0 %6692, %v195
      %v6694 = vpop.permute.xlu0 %6693
      %6696 = vset.pattern.permute.xlu0 8
      %6697 = vperm.xlu0 %6696, %v196
      %v6698 = vpop.permute.xlu0 %6697
      %6700 = vset.pattern.permute.xlu0 8
      %6701 = vperm.xlu0 %6700, %v197
      %v6702 = vpop.permute.xlu0 %6701
      %6704 = vset.pattern.permute.xlu0 8
      %6705 = vperm.xlu0 %6704, %v198
      %v6706 = vpop.permute.xlu0 %6705
      %6708 = vset.pattern.permute.xlu0 8
      %6709 = vperm.xlu0 %6708, %v199
      %v6710 = vpop.permute.xlu0 %6709
      %6712 = vset.pattern.permute.xlu0 8
      %6713 = vperm.xlu0 %6712, %v200
      %v6714 = vpop.permute.xlu0 %6713
      %6716 = vset.pattern.permute.xlu0 8
      %6717 = vperm.xlu0 %6716, %v201
      %v6718 = vpop.permute.xlu0 %6717
      %6720 = vset.pattern.permute.xlu0 8
      %6721 = vperm.xlu0 %6720, %v202
      %v6722 = vpop.permute.xlu0 %6721
      %6724 = vset.pattern.permute.xlu0 8
      %6725 = vperm.xlu0 %6724, %v203
      %v6726 = vpop.permute.xlu0 %6725
      %6728 = vset.pattern.permute.xlu0 8
      %6729 = vperm.xlu0 %6728, %v204
      %v6730 = vpop.permute.xlu0 %6729
      %6732 = vset.pattern.permute.xlu0 8
      %6733 = vperm.xlu0 %6732, %v205
      %v6734 = vpop.permute.xlu0 %6733
      %6736 = vset.pattern.permute.xlu0 8
      %6737 = vperm.xlu0 %6736, %v206
      %v6738 = vpop.permute.xlu0 %6737
      %6740 = vset.pattern.permute.xlu0 8
      %6741 = vperm.xlu0 %6740, %v207
      %v6742 = vpop.permute.xlu0 %6741
      %6744 = vset.pattern.permute.xlu0 8
      %6745 = vperm.xlu0 %6744, %v208
      %v6746 = vpop.permute.xlu0 %6745
      %6748 = vset.pattern.permute.xlu0 8
      %6749 = vperm.xlu0 %6748, %v209
      %v6750 = vpop.permute.xlu0 %6749
      %6752 = vset.pattern.permute.xlu0 8
      %6753 = vperm.xlu0 %6752, %v210
      %v6754 = vpop.permute.xlu0 %6753
      %6756 = vset.pattern.permute.xlu0 8
      %6757 = vperm.xlu0 %6756, %v211
      %v6758 = vpop.permute.xlu0 %6757
      %6760 = vset.pattern.permute.xlu0 8
      %6761 = vperm.xlu0 %6760, %v212
      %v6762 = vpop.permute.xlu0 %6761
      %6764 = vset.pattern.permute.xlu0 8
      %6765 = vperm.xlu0 %6764, %v213
      %v6766 = vpop.permute.xlu0 %6765
      %6768 = vset.pattern.permute.xlu0 8
      %6769 = vperm.xlu0 %6768, %v214
      %v6770 = vpop.permute.xlu0 %6769
      %6772 = vset.pattern.permute.xlu0 8
      %6773 = vperm.xlu0 %6772, %v215
      %v6774 = vpop.permute.xlu0 %6773
      %6776 = vset.pattern.permute.xlu0 8
      %6777 = vperm.xlu0 %6776, %v216
      %v6778 = vpop.permute.xlu0 %6777
      %6780 = vset.pattern.permute.xlu0 8
      %6781 = vperm.xlu0 %6780, %v217
      %v6782 = vpop.permute.xlu0 %6781
      %6784 = vset.pattern.permute.xlu0 8
      %6785 = vperm.xlu0 %6784, %v218
      %v6786 = vpop.permute.xlu0 %6785
      %6788 = vset.pattern.permute.xlu0 8
      %6789 = vperm.xlu0 %6788, %v219
      %v6790 = vpop.permute.xlu0 %6789
      %6792 = vset.pattern.permute.xlu0 8
      %6793 = vperm.xlu0 %6792, %v220
      %v6794 = vpop.permute.xlu0 %6793
      %6796 = vset.pattern.permute.xlu0 8
      %6797 = vperm.xlu0 %6796, %v221
      %v6798 = vpop.permute.xlu0 %6797
      %6800 = vset.pattern.permute.xlu0 8
      %6801 = vperm.xlu0 %6800, %v222
      %v6802 = vpop.permute.xlu0 %6801
      %6804 = vset.pattern.permute.xlu0 8
      %6805 = vperm.xlu0 %6804, %v223
      %v6806 = vpop.permute.xlu0 %6805
      %6808 = vset.pattern.permute.xlu0 8
      %6809 = vperm.xlu0 %6808, %v224
      %v6810 = vpop.permute.xlu0 %6809
      %6812 = vset.pattern.permute.xlu0 8
      %6813 = vperm.xlu0 %6812, %v225
      %v6814 = vpop.permute.xlu0 %6813
      %6816 = vset.pattern.permute.xlu0 8
      %6817 = vperm.xlu0 %6816, %v226
      %v6818 = vpop.permute.xlu0 %6817
      %6820 = vset.pattern.permute.xlu0 8
      %6821 = vperm.xlu0 %6820, %v227
      %v6822 = vpop.permute.xlu0 %6821
      %6824 = vset.pattern.permute.xlu0 8
      %6825 = vperm.xlu0 %6824, %v228
      %v6826 = vpop.permute.xlu0 %6825
      %6828 = vset.pattern.permute.xlu0 8
      %6829 = vperm.xlu0 %6828, %v229
      %v6830 = vpop.permute.xlu0 %6829
      %6832 = vset.pattern.permute.xlu0 8
      %6833 = vperm.xlu0 %6832, %v230
      %v6834 = vpop.permute.xlu0 %6833
      %6836 = vset.pattern.permute.xlu0 8
      %6837 = vperm.xlu0 %6836, %v231
      %v6838 = vpop.permute.xlu0 %6837
      %6840 = vset.pattern.permute.xlu0 8
      %6841 = vperm.xlu0 %6840, %v232
      %v6842 = vpop.permute.xlu0 %6841
      %6844 = vset.pattern.permute.xlu0 8
      %6845 = vperm.xlu0 %6844, %v233
      %v6846 = vpop.permute.xlu0 %6845
      %6848 = vset.pattern.permute.xlu0 8
      %6849 = vperm.xlu0 %6848, %v234
      %v6850 = vpop.permute.xlu0 %6849
      %6852 = vset.pattern.permute.xlu0 8
      %6853 = vperm.xlu0 %6852, %v235
      %v6854 = vpop.permute.xlu0 %6853
      %6856 = vset.pattern.permute.xlu0 8
      %6857 = vperm.xlu0 %6856, %v236
      %v6858 = vpop.permute.xlu0 %6857
      %6860 = vset.pattern.permute.xlu0 8
      %6861 = vperm.xlu0 %6860, %v237
      %v6862 = vpop.permute.xlu0 %6861
      %6864 = vset.pattern.permute.xlu0 8
      %6865 = vperm.xlu0 %6864, %v238
      %v6866 = vpop.permute.xlu0 %6865
      %6868 = vset.pattern.permute.xlu0 8
      %6869 = vperm.xlu0 %6868, %v239
      %v6870 = vpop.permute.xlu0 %6869
      %6872 = vset.pattern.permute.xlu0 8
      %6873 = vperm.xlu0 %6872, %v240
      %v6874 = vpop.permute.xlu0 %6873
      %6876 = vset.pattern.permute.xlu0 8
      %6877 = vperm.xlu0 %6876, %v241
      %v6878 = vpop.permute.xlu0 %6877
      %6880 = vset.pattern.permute.xlu0 8
      %6881 = vperm.xlu0 %6880, %v242
      %v6882 = vpop.permute.xlu0 %6881
      %6884 = vset.pattern.permute.xlu0 8
      %6885 = vperm.xlu0 %6884, %v243
      %v6886 = vpop.permute.xlu0 %6885
      %6888 = vset.pattern.permute.xlu0 8
      %6889 = vperm.xlu0 %6888, %v244
      %v6890 = vpop.permute.xlu0 %6889
      %6892 = vset.pattern.permute.xlu0 8
      %6893 = vperm.xlu0 %6892, %v245
      %v6894 = vpop.permute.xlu0 %6893
      %6896 = vset.pattern.permute.xlu0 8
      %6897 = vperm.xlu0 %6896, %v246
      %v6898 = vpop.permute.xlu0 %6897
      %6900 = vset.pattern.permute.xlu0 8
      %6901 = vperm.xlu0 %6900, %v247
      %v6902 = vpop.permute.xlu0 %6901
      %6904 = vset.pattern.permute.xlu0 8
      %6905 = vperm.xlu0 %6904, %v248
      %v6906 = vpop.permute.xlu0 %6905
      %6908 = vset.pattern.permute.xlu0 8
      %6909 = vperm.xlu0 %6908, %v249
      %v6910 = vpop.permute.xlu0 %6909
      %6912 = vset.pattern.permute.xlu0 8
      %6913 = vperm.xlu0 %6912, %v250
      %v6914 = vpop.permute.xlu0 %6913
      %6916 = vset.pattern.permute.xlu0 8
      %6917 = vperm.xlu0 %6916, %v251
      %v6918 = vpop.permute.xlu0 %6917
      %6920 = vset.pattern.permute.xlu0 8
      %6921 = vperm.xlu0 %6920, %v252
      %v6922 = vpop.permute.xlu0 %6921
      %6924 = vset.pattern.permute.xlu0 8
      %6925 = vperm.xlu0 %6924, %v253
      %v6926 = vpop.permute.xlu0 %6925
      %6928 = vset.pattern.permute.xlu0 8
      %6929 = vperm.xlu0 %6928, %v254
      %v6930 = vpop.permute.xlu0 %6929
      %6932 = vset.pattern.permute.xlu0 8
      %6933 = vperm.xlu0 %6932, %v255
      %v6934 = vpop.permute.xlu0 %6933
      %6936 = vset.pattern.permute.xlu0 8
      %6937 = vperm.xlu0 %6936, %v256
      %v6938 = vpop.permute.xlu0 %6937
      %6940 = vset.pattern.permute.xlu0 8
      %6941 = vperm.xlu0 %6940, %v257
      %v6942 = vpop.permute.xlu0 %6941
      %6944 = vset.pattern.permute.xlu0 8
      %6945 = vperm.xlu0 %6944, %v258
      %v6946 = vpop.permute.xlu0 %6945
      %6948 = vset.pattern.permute.xlu0 8
      %6949 = vperm.xlu0 %6948, %v259
      %v6950 = vpop.permute.xlu0 %6949
      %6952 = vset.pattern.permute.xlu0 8
      %6953 = vperm.xlu0 %6952, %v260
      %v6954 = vpop.permute.xlu0 %6953
      %6956 = vset.pattern.permute.xlu0 8
      %6957 = vperm.xlu0 %6956, %v261
      %v6958 = vpop.permute.xlu0 %6957
      %6960 = vset.pattern.permute.xlu0 8
      %6961 = vperm.xlu0 %6960, %v262
      %v6962 = vpop.permute.xlu0 %6961
      %6964 = vset.pattern.permute.xlu0 8
      %6965 = vperm.xlu0 %6964, %v263
      %v6966 = vpop.permute.xlu0 %6965
      %6968 = vset.pattern.permute.xlu0 8
      %6969 = vperm.xlu0 %6968, %v264
      %v6970 = vpop.permute.xlu0 %6969
      %6972 = vset.pattern.permute.xlu0 8
      %6973 = vperm.xlu0 %6972, %v265
      %v6974 = vpop.permute.xlu0 %6973
      %6976 = vset.pattern.permute.xlu0 8
      %6977 = vperm.xlu0 %6976, %v266
      %v6978 = vpop.permute.xlu0 %6977
      %6980 = vset.pattern.permute.xlu0 8
      %6981 = vperm.xlu0 %6980, %v267
      %v6982 = vpop.permute.xlu0 %6981
      %6984 = vset.pattern.permute.xlu0 8
      %6985 = vperm.xlu0 %6984, %v268
      %v6986 = vpop.permute.xlu0 %6985
      %6988 = vset.pattern.permute.xlu0 8
      %6989 = vperm.xlu0 %6988, %v269
      %v6990 = vpop.permute.xlu0 %6989
      %6992 = vset.pattern.permute.xlu0 8
      %6993 = vperm.xlu0 %6992, %v270
      %v6994 = vpop.permute.xlu0 %6993
      %6996 = vset.pattern.permute.xlu0 8
      %6997 = vperm.xlu0 %6996, %v271
      %v6998 = vpop.permute.xlu0 %6997
      %7000 = vset.pattern.permute.xlu0 8
      %7001 = vperm.xlu0 %7000, %v272
      %v7002 = vpop.permute.xlu0 %7001
      %7004 = vset.pattern.permute.xlu0 8
      %7005 = vperm.xlu0 %7004, %v273
      %v7006 = vpop.permute.xlu0 %7005
      %7008 = vset.pattern.permute.xlu0 8
      %7009 = vperm.xlu0 %7008, %v274
      %v7010 = vpop.permute.xlu0 %7009
      %7012 = vset.pattern.permute.xlu0 8
      %7013 = vperm.xlu0 %7012, %v275
      %v7014 = vpop.permute.xlu0 %7013
      %7016 = vset.pattern.permute.xlu0 8
      %7017 = vperm.xlu0 %7016, %v276
      %v7018 = vpop.permute.xlu0 %7017
      %7020 = vset.pattern.permute.xlu0 8
      %7021 = vperm.xlu0 %7020, %v277
      %v7022 = vpop.permute.xlu0 %7021
      %7024 = vset.pattern.permute.xlu0 8
      %7025 = vperm.xlu0 %7024, %v278
      %v7026 = vpop.permute.xlu0 %7025
      %7028 = vset.pattern.permute.xlu0 8
      %7029 = vperm.xlu0 %7028, %v279
      %v7030 = vpop.permute.xlu0 %7029
      %7032 = vset.pattern.permute.xlu0 8
      %7033 = vperm.xlu0 %7032, %v280
      %v7034 = vpop.permute.xlu0 %7033
      %7036 = vset.pattern.permute.xlu0 8
      %7037 = vperm.xlu0 %7036, %v281
      %v7038 = vpop.permute.xlu0 %7037
      %7040 = vset.pattern.permute.xlu0 8
      %7041 = vperm.xlu0 %7040, %v282
      %v7042 = vpop.permute.xlu0 %7041
      %7044 = vset.pattern.permute.xlu0 8
      %7045 = vperm.xlu0 %7044, %v283
      %v7046 = vpop.permute.xlu0 %7045
      %7048 = vset.pattern.permute.xlu0 8
      %7049 = vperm.xlu0 %7048, %v284
      %v7050 = vpop.permute.xlu0 %7049
      %7052 = vset.pattern.permute.xlu0 8
      %7053 = vperm.xlu0 %7052, %v285
      %v7054 = vpop.permute.xlu0 %7053
      %7056 = vset.pattern.permute.xlu0 8
      %7057 = vperm.xlu0 %7056, %v286
      %v7058 = vpop.permute.xlu0 %7057
      %7060 = vset.pattern.permute.xlu0 8
      %7061 = vperm.xlu0 %7060, %v287
      %v7062 = vpop.permute.xlu0 %7061
      %7064 = vset.pattern.permute.xlu0 8
      %7065 = vperm.xlu0 %7064, %v288
      %v7066 = vpop.permute.xlu0 %7065
      %7068 = vset.pattern.permute.xlu0 8
      %7069 = vperm.xlu0 %7068, %v289
      %v7070 = vpop.permute.xlu0 %7069
      %7072 = vset.pattern.permute.xlu0 8
      %7073 = vperm.xlu0 %7072, %v290
      %v7074 = vpop.permute.xlu0 %7073
      %7076 = vset.pattern.permute.xlu0 8
      %7077 = vperm.xlu0 %7076, %v291
      %v7078 = vpop.permute.xlu0 %7077
      %7080 = vset.pattern.permute.xlu0 8
      %7081 = vperm.xlu0 %7080, %v292
      %v7082 = vpop.permute.xlu0 %7081
      %7084 = vset.pattern.permute.xlu0 8
      %7085 = vperm.xlu0 %7084, %v293
      %v7086 = vpop.permute.xlu0 %7085
      %7088 = vset.pattern.permute.xlu0 8
      %7089 = vperm.xlu0 %7088, %v294
      %v7090 = vpop.permute.xlu0 %7089
      %7092 = vset.pattern.permute.xlu0 8
      %7093 = vperm.xlu0 %7092, %v295
      %v7094 = vpop.permute.xlu0 %7093
      %7096 = vset.pattern.permute.xlu0 8
      %7097 = vperm.xlu0 %7096, %v296
      %v7098 = vpop.permute.xlu0 %7097
      %7100 = vset.pattern.permute.xlu0 8
      %7101 = vperm.xlu0 %7100, %v297
      %v7102 = vpop.permute.xlu0 %7101
      %7104 = vset.pattern.permute.xlu0 8
      %7105 = vperm.xlu0 %7104, %v298
      %v7106 = vpop.permute.xlu0 %7105
      %7108 = vset.pattern.permute.xlu0 8
      %7109 = vperm.xlu0 %7108, %v299
      %v7110 = vpop.permute.xlu0 %7109
      %7112 = vset.pattern.permute.xlu0 8
      %7113 = vperm.xlu0 %7112, %v300
      %v7114 = vpop.permute.xlu0 %7113
      %7116 = vset.pattern.permute.xlu0 8
      %7117 = vperm.xlu0 %7116, %v301
      %v7118 = vpop.permute.xlu0 %7117
      %v7120 = vlaneseq
      %v7121 = vshrl.u32 %v7120, 7
      %v7122 = vsub.s32 0, %v7121
      %v7123 = vrot.slane %v303, %v7122
      %v7124 = vmul.f32 %v6610, %v7123
      %v7125 = vmul.f32 %v6614, %v7123
      %v7126 = vmul.f32 %v6618, %v7123
      %v7127 = vmul.f32 %v6622, %v7123
      %v7128 = vmul.f32 %v6626, %v7123
      %v7129 = vmul.f32 %v6630, %v7123
      %v7130 = vmul.f32 %v6634, %v7123
      %v7131 = vmul.f32 %v6638, %v7123
      %v7132 = vmul.f32 %v6642, %v7123
      %v7133 = vmul.f32 %v6646, %v7123
      %v7134 = vmul.f32 %v6650, %v7123
      %v7135 = vmul.f32 %v6654, %v7123
      %v7136 = vmul.f32 %v6658, %v7123
      %v7137 = vmul.f32 %v6662, %v7123
      %v7138 = vmul.f32 %v6666, %v7123
      %v7139 = vmul.f32 %v6670, %v7123
      %v7140 = vmul.f32 %v6674, %v7123
      %v7141 = vmul.f32 %v6678, %v7123
      %v7142 = vmul.f32 %v6682, %v7123
      %v7143 = vmul.f32 %v6686, %v7123
      %v7144 = vmul.f32 %v6690, %v7123
      %v7145 = vmul.f32 %v6694, %v7123
      %v7146 = vmul.f32 %v6698, %v7123
      %v7147 = vmul.f32 %v6702, %v7123
      %v7148 = vmul.f32 %v6706, %v7123
      %v7149 = vmul.f32 %v6710, %v7123
      %v7150 = vmul.f32 %v6714, %v7123
      %v7151 = vmul.f32 %v6718, %v7123
      %v7152 = vmul.f32 %v6722, %v7123
      %v7153 = vmul.f32 %v6726, %v7123
      %v7154 = vmul.f32 %v6730, %v7123
      %v7155 = vmul.f32 %v6734, %v7123
      %v7156 = vmul.f32 %v6738, %v7123
      %v7157 = vmul.f32 %v6742, %v7123
      %v7158 = vmul.f32 %v6746, %v7123
      %v7159 = vmul.f32 %v6750, %v7123
      %v7160 = vmul.f32 %v6754, %v7123
      %v7161 = vmul.f32 %v6758, %v7123
      %v7162 = vmul.f32 %v6762, %v7123
      %v7163 = vmul.f32 %v6766, %v7123
      %v7164 = vmul.f32 %v6770, %v7123
      %v7165 = vmul.f32 %v6774, %v7123
      %v7166 = vmul.f32 %v6778, %v7123
      %v7167 = vmul.f32 %v6782, %v7123
      %v7168 = vmul.f32 %v6786, %v7123
      %v7169 = vmul.f32 %v6790, %v7123
      %v7170 = vmul.f32 %v6794, %v7123
      %v7171 = vmul.f32 %v6798, %v7123
      %v7172 = vmul.f32 %v6802, %v7123
      %v7173 = vmul.f32 %v6806, %v7123
      %v7174 = vmul.f32 %v6810, %v7123
      %v7175 = vmul.f32 %v6814, %v7123
      %v7176 = vmul.f32 %v6818, %v7123
      %v7177 = vmul.f32 %v6822, %v7123
      %v7178 = vmul.f32 %v6826, %v7123
      %v7179 = vmul.f32 %v6830, %v7123
      %v7180 = vmul.f32 %v6834, %v7123
      %v7181 = vmul.f32 %v6838, %v7123
      %v7182 = vmul.f32 %v6842, %v7123
      %v7183 = vmul.f32 %v6846, %v7123
      %v7184 = vmul.f32 %v6850, %v7123
      %v7185 = vmul.f32 %v6854, %v7123
      %v7186 = vmul.f32 %v6858, %v7123
      %v7187 = vmul.f32 %v6862, %v7123
      %v7188 = vmul.f32 %v6866, %v7123
      %v7189 = vmul.f32 %v6870, %v7123
      %v7190 = vmul.f32 %v6874, %v7123
      %v7191 = vmul.f32 %v6878, %v7123
      %v7192 = vmul.f32 %v6882, %v7123
      %v7193 = vmul.f32 %v6886, %v7123
      %v7194 = vmul.f32 %v6890, %v7123
      %v7195 = vmul.f32 %v6894, %v7123
      %v7196 = vmul.f32 %v6898, %v7123
      %v7197 = vmul.f32 %v6902, %v7123
      %v7198 = vmul.f32 %v6906, %v7123
      %v7199 = vmul.f32 %v6910, %v7123
      %v7200 = vmul.f32 %v6914, %v7123
      %v7201 = vmul.f32 %v6918, %v7123
      %v7202 = vmul.f32 %v6922, %v7123
      %v7203 = vmul.f32 %v6926, %v7123
      %v7204 = vmul.f32 %v6930, %v7123
      %v7205 = vmul.f32 %v6934, %v7123
      %v7206 = vmul.f32 %v6938, %v7123
      %v7207 = vmul.f32 %v6942, %v7123
      %v7208 = vmul.f32 %v6946, %v7123
      %v7209 = vmul.f32 %v6950, %v7123
      %v7210 = vmul.f32 %v6954, %v7123
      %v7211 = vmul.f32 %v6958, %v7123
      %v7212 = vmul.f32 %v6962, %v7123
      %v7213 = vmul.f32 %v6966, %v7123
      %v7214 = vmul.f32 %v6970, %v7123
      %v7215 = vmul.f32 %v6974, %v7123
      %v7216 = vmul.f32 %v6978, %v7123
      %v7217 = vmul.f32 %v6982, %v7123
      %v7218 = vmul.f32 %v6986, %v7123
      %v7219 = vmul.f32 %v6990, %v7123
      %v7220 = vmul.f32 %v6994, %v7123
      %v7221 = vmul.f32 %v6998, %v7123
      %v7222 = vmul.f32 %v7002, %v7123
      %v7223 = vmul.f32 %v7006, %v7123
      %v7224 = vmul.f32 %v7010, %v7123
      %v7225 = vmul.f32 %v7014, %v7123
      %v7226 = vmul.f32 %v7018, %v7123
      %v7227 = vmul.f32 %v7022, %v7123
      %v7228 = vmul.f32 %v7026, %v7123
      %v7229 = vmul.f32 %v7030, %v7123
      %v7230 = vmul.f32 %v7034, %v7123
      %v7231 = vmul.f32 %v7038, %v7123
      %v7232 = vmul.f32 %v7042, %v7123
      %v7233 = vmul.f32 %v7046, %v7123
      %v7234 = vmul.f32 %v7050, %v7123
      %v7235 = vmul.f32 %v7054, %v7123
      %v7236 = vmul.f32 %v7058, %v7123
      %v7237 = vmul.f32 %v7062, %v7123
      %v7238 = vmul.f32 %v7066, %v7123
      %v7239 = vmul.f32 %v7070, %v7123
      %v7240 = vmul.f32 %v7074, %v7123
      %v7241 = vmul.f32 %v7078, %v7123
      %v7242 = vmul.f32 %v7082, %v7123
      %v7243 = vmul.f32 %v7086, %v7123
      %v7244 = vmul.f32 %v7090, %v7123
      %v7245 = vmul.f32 %v7094, %v7123
      %v7246 = vmul.f32 %v7098, %v7123
      %v7247 = vmul.f32 %v7102, %v7123
      %v7248 = vmul.f32 %v7106, %v7123
      %v7249 = vmul.f32 %v7110, %v7123
      %v7250 = vmul.f32 %v7114, %v7123
      %v7251 = vmul.f32 %v7118, %v7123
      %v7252 = vadd.f32 %v6480, %v7124
      %v7253 = vadd.f32 %v6481, %v7125
      %v7254 = vadd.f32 %v6482, %v7126
      %v7255 = vadd.f32 %v6483, %v7127
      %v7256 = vadd.f32 %v6484, %v7128
      %v7257 = vadd.f32 %v6485, %v7129
      %v7258 = vadd.f32 %v6486, %v7130
      %v7259 = vadd.f32 %v6487, %v7131
      %v7260 = vadd.f32 %v6488, %v7132
      %v7261 = vadd.f32 %v6489, %v7133
      %v7262 = vadd.f32 %v6490, %v7134
      %v7263 = vadd.f32 %v6491, %v7135
      %v7264 = vadd.f32 %v6492, %v7136
      %v7265 = vadd.f32 %v6493, %v7137
      %v7266 = vadd.f32 %v6494, %v7138
      %v7267 = vadd.f32 %v6495, %v7139
      %v7268 = vadd.f32 %v6496, %v7140
      %v7269 = vadd.f32 %v6497, %v7141
      %v7270 = vadd.f32 %v6498, %v7142
      %v7271 = vadd.f32 %v6499, %v7143
      %v7272 = vadd.f32 %v6500, %v7144
      %v7273 = vadd.f32 %v6501, %v7145
      %v7274 = vadd.f32 %v6502, %v7146
      %v7275 = vadd.f32 %v6503, %v7147
      %v7276 = vadd.f32 %v6504, %v7148
      %v7277 = vadd.f32 %v6505, %v7149
      %v7278 = vadd.f32 %v6506, %v7150
      %v7279 = vadd.f32 %v6507, %v7151
      %v7280 = vadd.f32 %v6508, %v7152
      %v7281 = vadd.f32 %v6509, %v7153
      %v7282 = vadd.f32 %v6510, %v7154
      %v7283 = vadd.f32 %v6511, %v7155
      %v7284 = vadd.f32 %v6512, %v7156
      %v7285 = vadd.f32 %v6513, %v7157
      %v7286 = vadd.f32 %v6514, %v7158
      %v7287 = vadd.f32 %v6515, %v7159
      %v7288 = vadd.f32 %v6516, %v7160
      %v7289 = vadd.f32 %v6517, %v7161
      %v7290 = vadd.f32 %v6518, %v7162
      %v7291 = vadd.f32 %v6519, %v7163
      %v7292 = vadd.f32 %v6520, %v7164
      %v7293 = vadd.f32 %v6521, %v7165
      %v7294 = vadd.f32 %v6522, %v7166
      %v7295 = vadd.f32 %v6523, %v7167
      %v7296 = vadd.f32 %v6524, %v7168
      %v7297 = vadd.f32 %v6525, %v7169
      %v7298 = vadd.f32 %v6526, %v7170
      %v7299 = vadd.f32 %v6527, %v7171
      %v7300 = vadd.f32 %v6528, %v7172
      %v7301 = vadd.f32 %v6529, %v7173
      %v7302 = vadd.f32 %v6530, %v7174
      %v7303 = vadd.f32 %v6531, %v7175
      %v7304 = vadd.f32 %v6532, %v7176
      %v7305 = vadd.f32 %v6533, %v7177
      %v7306 = vadd.f32 %v6534, %v7178
      %v7307 = vadd.f32 %v6535, %v7179
      %v7308 = vadd.f32 %v6536, %v7180
      %v7309 = vadd.f32 %v6537, %v7181
      %v7310 = vadd.f32 %v6538, %v7182
      %v7311 = vadd.f32 %v6539, %v7183
      %v7312 = vadd.f32 %v6540, %v7184
      %v7313 = vadd.f32 %v6541, %v7185
      %v7314 = vadd.f32 %v6542, %v7186
      %v7315 = vadd.f32 %v6543, %v7187
      %v7316 = vadd.f32 %v6544, %v7188
      %v7317 = vadd.f32 %v6545, %v7189
      %v7318 = vadd.f32 %v6546, %v7190
      %v7319 = vadd.f32 %v6547, %v7191
      %v7320 = vadd.f32 %v6548, %v7192
      %v7321 = vadd.f32 %v6549, %v7193
      %v7322 = vadd.f32 %v6550, %v7194
      %v7323 = vadd.f32 %v6551, %v7195
      %v7324 = vadd.f32 %v6552, %v7196
      %v7325 = vadd.f32 %v6553, %v7197
      %v7326 = vadd.f32 %v6554, %v7198
      %v7327 = vadd.f32 %v6555, %v7199
      %v7328 = vadd.f32 %v6556, %v7200
      %v7329 = vadd.f32 %v6557, %v7201
      %v7330 = vadd.f32 %v6558, %v7202
      %v7331 = vadd.f32 %v6559, %v7203
      %v7332 = vadd.f32 %v6560, %v7204
      %v7333 = vadd.f32 %v6561, %v7205
      %v7334 = vadd.f32 %v6562, %v7206
      %v7335 = vadd.f32 %v6563, %v7207
      %v7336 = vadd.f32 %v6564, %v7208
      %v7337 = vadd.f32 %v6565, %v7209
      %v7338 = vadd.f32 %v6566, %v7210
      %v7339 = vadd.f32 %v6567, %v7211
      %v7340 = vadd.f32 %v6568, %v7212
      %v7341 = vadd.f32 %v6569, %v7213
      %v7342 = vadd.f32 %v6570, %v7214
      %v7343 = vadd.f32 %v6571, %v7215
      %v7344 = vadd.f32 %v6572, %v7216
      %v7345 = vadd.f32 %v6573, %v7217
      %v7346 = vadd.f32 %v6574, %v7218
      %v7347 = vadd.f32 %v6575, %v7219
      %v7348 = vadd.f32 %v6576, %v7220
      %v7349 = vadd.f32 %v6577, %v7221
      %v7350 = vadd.f32 %v6578, %v7222
      %v7351 = vadd.f32 %v6579, %v7223
      %v7352 = vadd.f32 %v6580, %v7224
      %v7353 = vadd.f32 %v6581, %v7225
      %v7354 = vadd.f32 %v6582, %v7226
      %v7355 = vadd.f32 %v6583, %v7227
      %v7356 = vadd.f32 %v6584, %v7228
      %v7357 = vadd.f32 %v6585, %v7229
      %v7358 = vadd.f32 %v6586, %v7230
      %v7359 = vadd.f32 %v6587, %v7231
      %v7360 = vadd.f32 %v6588, %v7232
      %v7361 = vadd.f32 %v6589, %v7233
      %v7362 = vadd.f32 %v6590, %v7234
      %v7363 = vadd.f32 %v6591, %v7235
      %v7364 = vadd.f32 %v6592, %v7236
      %v7365 = vadd.f32 %v6593, %v7237
      %v7366 = vadd.f32 %v6594, %v7238
      %v7367 = vadd.f32 %v6595, %v7239
      %v7368 = vadd.f32 %v6596, %v7240
      %v7369 = vadd.f32 %v6597, %v7241
      %v7370 = vadd.f32 %v6598, %v7242
      %v7371 = vadd.f32 %v6599, %v7243
      %v7372 = vadd.f32 %v6600, %v7244
      %v7373 = vadd.f32 %v6601, %v7245
      %v7374 = vadd.f32 %v6602, %v7246
      %v7375 = vadd.f32 %v6603, %v7247
      %v7376 = vadd.f32 %v6604, %v7248
      %v7377 = vadd.f32 %v6605, %v7249
      %v7378 = vadd.f32 %v6606, %v7250
      %v7379 = vadd.f32 %v6607, %v7251
      %v7380 = vld [vmem:[%s2] sm:$0x1]
      %v7382 = vlaneseq
      %v7383 = vshrl.u32 %v7382, 7
      %v7384 = vsub.s32 0, %v7383
      %v7385 = vrot.slane %v7380, %v7384
      %v7387 = vadd.f32 %v7252, %v7385
      %v7388 = vadd.f32 %v7253, %v7385
      %v7389 = vadd.f32 %v7254, %v7385
      %v7390 = vadd.f32 %v7255, %v7385
      %v7391 = vadd.f32 %v7256, %v7385
      %v7392 = vadd.f32 %v7257, %v7385
      %v7393 = vadd.f32 %v7258, %v7385
      %v7394 = vadd.f32 %v7259, %v7385
      %v7395 = vadd.f32 %v7260, %v7385
      %v7396 = vadd.f32 %v7261, %v7385
      %v7397 = vadd.f32 %v7262, %v7385
      %v7398 = vadd.f32 %v7263, %v7385
      %v7399 = vadd.f32 %v7264, %v7385
      %v7400 = vadd.f32 %v7265, %v7385
      %v7401 = vadd.f32 %v7266, %v7385
      %v7402 = vadd.f32 %v7267, %v7385
      %v7403 = vadd.f32 %v7268, %v7385
      %v7404 = vadd.f32 %v7269, %v7385
      %v7405 = vadd.f32 %v7270, %v7385
      %v7406 = vadd.f32 %v7271, %v7385
      %v7407 = vadd.f32 %v7272, %v7385
      %v7408 = vadd.f32 %v7273, %v7385
      %v7409 = vadd.f32 %v7274, %v7385
      %v7410 = vadd.f32 %v7275, %v7385
      %v7411 = vadd.f32 %v7276, %v7385
      %v7412 = vadd.f32 %v7277, %v7385
      %v7413 = vadd.f32 %v7278, %v7385
      %v7414 = vadd.f32 %v7279, %v7385
      %v7415 = vadd.f32 %v7280, %v7385
      %v7416 = vadd.f32 %v7281, %v7385
      %v7417 = vadd.f32 %v7282, %v7385
      %v7418 = vadd.f32 %v7283, %v7385
      %v7419 = vadd.f32 %v7284, %v7385
      %v7420 = vadd.f32 %v7285, %v7385
      %v7421 = vadd.f32 %v7286, %v7385
      %v7422 = vadd.f32 %v7287, %v7385
      %v7423 = vadd.f32 %v7288, %v7385
      %v7424 = vadd.f32 %v7289, %v7385
      %v7425 = vadd.f32 %v7290, %v7385
      %v7426 = vadd.f32 %v7291, %v7385
      %v7427 = vadd.f32 %v7292, %v7385
      %v7428 = vadd.f32 %v7293, %v7385
      %v7429 = vadd.f32 %v7294, %v7385
      %v7430 = vadd.f32 %v7295, %v7385
      %v7431 = vadd.f32 %v7296, %v7385
      %v7432 = vadd.f32 %v7297, %v7385
      %v7433 = vadd.f32 %v7298, %v7385
      %v7434 = vadd.f32 %v7299, %v7385
      %v7435 = vadd.f32 %v7300, %v7385
      %v7436 = vadd.f32 %v7301, %v7385
      %v7437 = vadd.f32 %v7302, %v7385
      %v7438 = vadd.f32 %v7303, %v7385
      %v7439 = vadd.f32 %v7304, %v7385
      %v7440 = vadd.f32 %v7305, %v7385
      %v7441 = vadd.f32 %v7306, %v7385
      %v7442 = vadd.f32 %v7307, %v7385
      %v7443 = vadd.f32 %v7308, %v7385
      %v7444 = vadd.f32 %v7309, %v7385
      %v7445 = vadd.f32 %v7310, %v7385
      %v7446 = vadd.f32 %v7311, %v7385
      %v7447 = vadd.f32 %v7312, %v7385
      %v7448 = vadd.f32 %v7313, %v7385
      %v7449 = vadd.f32 %v7314, %v7385
      %v7450 = vadd.f32 %v7315, %v7385
      %v7451 = vadd.f32 %v7316, %v7385
      %v7452 = vadd.f32 %v7317, %v7385
      %v7453 = vadd.f32 %v7318, %v7385
      %v7454 = vadd.f32 %v7319, %v7385
      %v7455 = vadd.f32 %v7320, %v7385
      %v7456 = vadd.f32 %v7321, %v7385
      %v7457 = vadd.f32 %v7322, %v7385
      %v7458 = vadd.f32 %v7323, %v7385
      %v7459 = vadd.f32 %v7324, %v7385
      %v7460 = vadd.f32 %v7325, %v7385
      %v7461 = vadd.f32 %v7326, %v7385
      %v7462 = vadd.f32 %v7327, %v7385
      %v7463 = vadd.f32 %v7328, %v7385
      %v7464 = vadd.f32 %v7329, %v7385
      %v7465 = vadd.f32 %v7330, %v7385
      %v7466 = vadd.f32 %v7331, %v7385
      %v7467 = vadd.f32 %v7332, %v7385
      %v7468 = vadd.f32 %v7333, %v7385
      %v7469 = vadd.f32 %v7334, %v7385
      %v7470 = vadd.f32 %v7335, %v7385
      %v7471 = vadd.f32 %v7336, %v7385
      %v7472 = vadd.f32 %v7337, %v7385
      %v7473 = vadd.f32 %v7338, %v7385
      %v7474 = vadd.f32 %v7339, %v7385
      %v7475 = vadd.f32 %v7340, %v7385
      %v7476 = vadd.f32 %v7341, %v7385
      %v7477 = vadd.f32 %v7342, %v7385
      %v7478 = vadd.f32 %v7343, %v7385
      %v7479 = vadd.f32 %v7344, %v7385
      %v7480 = vadd.f32 %v7345, %v7385
      %v7481 = vadd.f32 %v7346, %v7385
      %v7482 = vadd.f32 %v7347, %v7385
      %v7483 = vadd.f32 %v7348, %v7385
      %v7484 = vadd.f32 %v7349, %v7385
      %v7485 = vadd.f32 %v7350, %v7385
      %v7486 = vadd.f32 %v7351, %v7385
      %v7487 = vadd.f32 %v7352, %v7385
      %v7488 = vadd.f32 %v7353, %v7385
      %v7489 = vadd.f32 %v7354, %v7385
      %v7490 = vadd.f32 %v7355, %v7385
      %v7491 = vadd.f32 %v7356, %v7385
      %v7492 = vadd.f32 %v7357, %v7385
      %v7493 = vadd.f32 %v7358, %v7385
      %v7494 = vadd.f32 %v7359, %v7385
      %v7495 = vadd.f32 %v7360, %v7385
      %v7496 = vadd.f32 %v7361, %v7385
      %v7497 = vadd.f32 %v7362, %v7385
      %v7498 = vadd.f32 %v7363, %v7385
      %v7499 = vadd.f32 %v7364, %v7385
      %v7500 = vadd.f32 %v7365, %v7385
      %v7501 = vadd.f32 %v7366, %v7385
      %v7502 = vadd.f32 %v7367, %v7385
      %v7503 = vadd.f32 %v7368, %v7385
      %v7504 = vadd.f32 %v7369, %v7385
      %v7505 = vadd.f32 %v7370, %v7385
      %v7506 = vadd.f32 %v7371, %v7385
      %v7507 = vadd.f32 %v7372, %v7385
      %v7508 = vadd.f32 %v7373, %v7385
      %v7509 = vadd.f32 %v7374, %v7385
      %v7510 = vadd.f32 %v7375, %v7385
      %v7511 = vadd.f32 %v7376, %v7385
      %v7512 = vadd.f32 %v7377, %v7385
      %v7513 = vadd.f32 %v7378, %v7385
      %v7514 = vadd.f32 %v7379, %v7385
      %v7515 = vmax.f32 %v7387, 0.0
      %v7516 = vmax.f32 %v7388, 0.0
      %v7517 = vmax.f32 %v7389, 0.0
      %v7518 = vmax.f32 %v7390, 0.0
      %v7519 = vmax.f32 %v7391, 0.0
      %v7520 = vmax.f32 %v7392, 0.0
      %v7521 = vmax.f32 %v7393, 0.0
      %v7522 = vmax.f32 %v7394, 0.0
      %v7523 = vmax.f32 %v7395, 0.0
      %v7524 = vmax.f32 %v7396, 0.0
      %v7525 = vmax.f32 %v7397, 0.0
      %v7526 = vmax.f32 %v7398, 0.0
      %v7527 = vmax.f32 %v7399, 0.0
      %v7528 = vmax.f32 %v7400, 0.0
      %v7529 = vmax.f32 %v7401, 0.0
      %v7530 = vmax.f32 %v7402, 0.0
      %v7531 = vmax.f32 %v7403, 0.0
      %v7532 = vmax.f32 %v7404, 0.0
      %v7533 = vmax.f32 %v7405, 0.0
      %v7534 = vmax.f32 %v7406, 0.0
      %v7535 = vmax.f32 %v7407, 0.0
      %v7536 = vmax.f32 %v7408, 0.0
      %v7537 = vmax.f32 %v7409, 0.0
      %v7538 = vmax.f32 %v7410, 0.0
      %v7539 = vmax.f32 %v7411, 0.0
      %v7540 = vmax.f32 %v7412, 0.0
      %v7541 = vmax.f32 %v7413, 0.0
      %v7542 = vmax.f32 %v7414, 0.0
      %v7543 = vmax.f32 %v7415, 0.0
      %v7544 = vmax.f32 %v7416, 0.0
      %v7545 = vmax.f32 %v7417, 0.0
      %v7546 = vmax.f32 %v7418, 0.0
      %v7547 = vmax.f32 %v7419, 0.0
      %v7548 = vmax.f32 %v7420, 0.0
      %v7549 = vmax.f32 %v7421, 0.0
      %v7550 = vmax.f32 %v7422, 0.0
      %v7551 = vmax.f32 %v7423, 0.0
      %v7552 = vmax.f32 %v7424, 0.0
      %v7553 = vmax.f32 %v7425, 0.0
      %v7554 = vmax.f32 %v7426, 0.0
      %v7555 = vmax.f32 %v7427, 0.0
      %v7556 = vmax.f32 %v7428, 0.0
      %v7557 = vmax.f32 %v7429, 0.0
      %v7558 = vmax.f32 %v7430, 0.0
      %v7559 = vmax.f32 %v7431, 0.0
      %v7560 = vmax.f32 %v7432, 0.0
      %v7561 = vmax.f32 %v7433, 0.0
      %v7562 = vmax.f32 %v7434, 0.0
      %v7563 = vmax.f32 %v7435, 0.0
      %v7564 = vmax.f32 %v7436, 0.0
      %v7565 = vmax.f32 %v7437, 0.0
      %v7566 = vmax.f32 %v7438, 0.0
      %v7567 = vmax.f32 %v7439, 0.0
      %v7568 = vmax.f32 %v7440, 0.0
      %v7569 = vmax.f32 %v7441, 0.0
      %v7570 = vmax.f32 %v7442, 0.0
      %v7571 = vmax.f32 %v7443, 0.0
      %v7572 = vmax.f32 %v7444, 0.0
      %v7573 = vmax.f32 %v7445, 0.0
      %v7574 = vmax.f32 %v7446, 0.0
      %v7575 = vmax.f32 %v7447, 0.0
      %v7576 = vmax.f32 %v7448, 0.0
      %v7577 = vmax.f32 %v7449, 0.0
      %v7578 = vmax.f32 %v7450, 0.0
      %v7579 = vmax.f32 %v7451, 0.0
      %v7580 = vmax.f32 %v7452, 0.0
      %v7581 = vmax.f32 %v7453, 0.0
      %v7582 = vmax.f32 %v7454, 0.0
      %v7583 = vmax.f32 %v7455, 0.0
      %v7584 = vmax.f32 %v7456, 0.0
      %v7585 = vmax.f32 %v7457, 0.0
      %v7586 = vmax.f32 %v7458, 0.0
      %v7587 = vmax.f32 %v7459, 0.0
      %v7588 = vmax.f32 %v7460, 0.0
      %v7589 = vmax.f32 %v7461, 0.0
      %v7590 = vmax.f32 %v7462, 0.0
      %v7591 = vmax.f32 %v7463, 0.0
      %v7592 = vmax.f32 %v7464, 0.0
      %v7593 = vmax.f32 %v7465, 0.0
      %v7594 = vmax.f32 %v7466, 0.0
      %v7595 = vmax.f32 %v7467, 0.0
      %v7596 = vmax.f32 %v7468, 0.0
      %v7597 = vmax.f32 %v7469, 0.0
      %v7598 = vmax.f32 %v7470, 0.0
      %v7599 = vmax.f32 %v7471, 0.0
      %v7600 = vmax.f32 %v7472, 0.0
      %v7601 = vmax.f32 %v7473, 0.0
      %v7602 = vmax.f32 %v7474, 0.0
      %v7603 = vmax.f32 %v7475, 0.0
      %v7604 = vmax.f32 %v7476, 0.0
      %v7605 = vmax.f32 %v7477, 0.0
      %v7606 = vmax.f32 %v7478, 0.0
      %v7607 = vmax.f32 %v7479, 0.0
      %v7608 = vmax.f32 %v7480, 0.0
      %v7609 = vmax.f32 %v7481, 0.0
      %v7610 = vmax.f32 %v7482, 0.0
      %v7611 = vmax.f32 %v7483, 0.0
      %v7612 = vmax.f32 %v7484, 0.0
      %v7613 = vmax.f32 %v7485, 0.0
      %v7614 = vmax.f32 %v7486, 0.0
      %v7615 = vmax.f32 %v7487, 0.0
      %v7616 = vmax.f32 %v7488, 0.0
      %v7617 = vmax.f32 %v7489, 0.0
      %v7618 = vmax.f32 %v7490, 0.0
      %v7619 = vmax.f32 %v7491, 0.0
      %v7620 = vmax.f32 %v7492, 0.0
      %v7621 = vmax.f32 %v7493, 0.0
      %v7622 = vmax.f32 %v7494, 0.0
      %v7623 = vmax.f32 %v7495, 0.0
      %v7624 = vmax.f32 %v7496, 0.0
      %v7625 = vmax.f32 %v7497, 0.0
      %v7626 = vmax.f32 %v7498, 0.0
      %v7627 = vmax.f32 %v7499, 0.0
      %v7628 = vmax.f32 %v7500, 0.0
      %v7629 = vmax.f32 %v7501, 0.0
      %v7630 = vmax.f32 %v7502, 0.0
      %v7631 = vmax.f32 %v7503, 0.0
      %v7632 = vmax.f32 %v7504, 0.0
      %v7633 = vmax.f32 %v7505, 0.0
      %v7634 = vmax.f32 %v7506, 0.0
      %v7635 = vmax.f32 %v7507, 0.0
      %v7636 = vmax.f32 %v7508, 0.0
      %v7637 = vmax.f32 %v7509, 0.0
      %v7638 = vmax.f32 %v7510, 0.0
      %v7639 = vmax.f32 %v7511, 0.0
      %v7640 = vmax.f32 %v7512, 0.0
      %v7641 = vmax.f32 %v7513, 0.0
      %v7642 = vmax.f32 %v7514, 0.0
      %vm7643 = vcmask 64512
      %7644 = vst.msk [vmem:[%s172] sm:$0xff] %vm7643, %v7515
      %7645 = vst.msk [vmem:[%s172 + $0x8] sm:$0xff] %vm7643, %v7516
      %7646 = vst.msk [vmem:[%s172 + $0x10] sm:$0xff] %vm7643, %v7517
      %7647 = vst.msk [vmem:[%s172 + $0x18] sm:$0xff] %vm7643, %v7518
      %7648 = vst.msk [vmem:[%s172 + $0x20] sm:$0xff] %vm7643, %v7519
      %7649 = vst.msk [vmem:[%s172 + $0x28] sm:$0xff] %vm7643, %v7520
      %7650 = vst.msk [vmem:[%s172 + $0x30] sm:$0xff] %vm7643, %v7521
      %7651 = vst.msk [vmem:[%s172 + $0x38] sm:$0xff] %vm7643, %v7522
      %7652 = vst.msk [vmem:[%s172 + $0x40] sm:$0xff] %vm7643, %v7523
      %7653 = vst.msk [vmem:[%s172 + $0x48] sm:$0xff] %vm7643, %v7524
      %7654 = vst.msk [vmem:[%s172 + $0x50] sm:$0xff] %vm7643, %v7525
      %7655 = vst.msk [vmem:[%s172 + $0x58] sm:$0xff] %vm7643, %v7526
      %7656 = vst.msk [vmem:[%s172 + $0x60] sm:$0xff] %vm7643, %v7527
      %7657 = vst.msk [vmem:[%s172 + $0x68] sm:$0xff] %vm7643, %v7528
      %7658 = vst.msk [vmem:[%s172 + $0x70] sm:$0xff] %vm7643, %v7529
      %7659 = vst.msk [vmem:[%s172 + $0x78] sm:$0xff] %vm7643, %v7530
      %7660 = vst.msk [vmem:[%s172 + $0x80] sm:$0xff] %vm7643, %v7531
      %7661 = vst.msk [vmem:[%s172 + $0x88] sm:$0xff] %vm7643, %v7532
      %7662 = vst.msk [vmem:[%s172 + $0x90] sm:$0xff] %vm7643, %v7533
      %7663 = vst.msk [vmem:[%s172 + $0x98] sm:$0xff] %vm7643, %v7534
      %7664 = vst.msk [vmem:[%s172 + $0xa0] sm:$0xff] %vm7643, %v7535
      %7665 = vst.msk [vmem:[%s172 + $0xa8] sm:$0xff] %vm7643, %v7536
      %7666 = vst.msk [vmem:[%s172 + $0xb0] sm:$0xff] %vm7643, %v7537
      %7667 = vst.msk [vmem:[%s172 + $0xb8] sm:$0xff] %vm7643, %v7538
      %7668 = vst.msk [vmem:[%s172 + $0xc0] sm:$0xff] %vm7643, %v7539
      %7669 = vst.msk [vmem:[%s172 + $0xc8] sm:$0xff] %vm7643, %v7540
      %7670 = vst.msk [vmem:[%s172 + $0xd0] sm:$0xff] %vm7643, %v7541
      %7671 = vst.msk [vmem:[%s172 + $0xd8] sm:$0xff] %vm7643, %v7542
      %7672 = vst.msk [vmem:[%s172 + $0xe0] sm:$0xff] %vm7643, %v7543
      %7673 = vst.msk [vmem:[%s172 + $0xe8] sm:$0xff] %vm7643, %v7544
      %7674 = vst.msk [vmem:[%s172 + $0xf0] sm:$0xff] %vm7643, %v7545
      %7675 = vst.msk [vmem:[%s172 + $0xf8] sm:$0xff] %vm7643, %v7546
      %7676 = vst.msk [vmem:[%s172 + $0x100] sm:$0xff] %vm7643, %v7547
      %7677 = vst.msk [vmem:[%s172 + $0x108] sm:$0xff] %vm7643, %v7548
      %7678 = vst.msk [vmem:[%s172 + $0x110] sm:$0xff] %vm7643, %v7549
      %7679 = vst.msk [vmem:[%s172 + $0x118] sm:$0xff] %vm7643, %v7550
      %7680 = vst.msk [vmem:[%s172 + $0x120] sm:$0xff] %vm7643, %v7551
      %7681 = vst.msk [vmem:[%s172 + $0x128] sm:$0xff] %vm7643, %v7552
      %7682 = vst.msk [vmem:[%s172 + $0x130] sm:$0xff] %vm7643, %v7553
      %7683 = vst.msk [vmem:[%s172 + $0x138] sm:$0xff] %vm7643, %v7554
      %7684 = vst.msk [vmem:[%s172 + $0x140] sm:$0xff] %vm7643, %v7555
      %7685 = vst.msk [vmem:[%s172 + $0x148] sm:$0xff] %vm7643, %v7556
      %7686 = vst.msk [vmem:[%s172 + $0x150] sm:$0xff] %vm7643, %v7557
      %7687 = vst.msk [vmem:[%s172 + $0x158] sm:$0xff] %vm7643, %v7558
      %7688 = vst.msk [vmem:[%s172 + $0x160] sm:$0xff] %vm7643, %v7559
      %7689 = vst.msk [vmem:[%s172 + $0x168] sm:$0xff] %vm7643, %v7560
      %7690 = vst.msk [vmem:[%s172 + $0x170] sm:$0xff] %vm7643, %v7561
      %7691 = vst.msk [vmem:[%s172 + $0x178] sm:$0xff] %vm7643, %v7562
      %7692 = vst.msk [vmem:[%s172 + $0x180] sm:$0xff] %vm7643, %v7563
      %7693 = vst.msk [vmem:[%s172 + $0x188] sm:$0xff] %vm7643, %v7564
      %7694 = vst.msk [vmem:[%s172 + $0x190] sm:$0xff] %vm7643, %v7565
      %7695 = vst.msk [vmem:[%s172 + $0x198] sm:$0xff] %vm7643, %v7566
      %7696 = vst.msk [vmem:[%s172 + $0x1a0] sm:$0xff] %vm7643, %v7567
      %7697 = vst.msk [vmem:[%s172 + $0x1a8] sm:$0xff] %vm7643, %v7568
      %7698 = vst.msk [vmem:[%s172 + $0x1b0] sm:$0xff] %vm7643, %v7569
      %7699 = vst.msk [vmem:[%s172 + $0x1b8] sm:$0xff] %vm7643, %v7570
      %7700 = vst.msk [vmem:[%s172 + $0x1c0] sm:$0xff] %vm7643, %v7571
      %7701 = vst.msk [vmem:[%s172 + $0x1c8] sm:$0xff] %vm7643, %v7572
      %7702 = vst.msk [vmem:[%s172 + $0x1d0] sm:$0xff] %vm7643, %v7573
      %7703 = vst.msk [vmem:[%s172 + $0x1d8] sm:$0xff] %vm7643, %v7574
      %7704 = vst.msk [vmem:[%s172 + $0x1e0] sm:$0xff] %vm7643, %v7575
      %7705 = vst.msk [vmem:[%s172 + $0x1e8] sm:$0xff] %vm7643, %v7576
      %7706 = vst.msk [vmem:[%s172 + $0x1f0] sm:$0xff] %vm7643, %v7577
      %7707 = vst.msk [vmem:[%s172 + $0x1f8] sm:$0xff] %vm7643, %v7578
      %7708 = vst.msk [vmem:[%s172 + $0x200] sm:$0xff] %vm7643, %v7579
      %7709 = vst.msk [vmem:[%s172 + $0x208] sm:$0xff] %vm7643, %v7580
      %7710 = vst.msk [vmem:[%s172 + $0x210] sm:$0xff] %vm7643, %v7581
      %7711 = vst.msk [vmem:[%s172 + $0x218] sm:$0xff] %vm7643, %v7582
      %7712 = vst.msk [vmem:[%s172 + $0x220] sm:$0xff] %vm7643, %v7583
      %7713 = vst.msk [vmem:[%s172 + $0x228] sm:$0xff] %vm7643, %v7584
      %7714 = vst.msk [vmem:[%s172 + $0x230] sm:$0xff] %vm7643, %v7585
      %7715 = vst.msk [vmem:[%s172 + $0x238] sm:$0xff] %vm7643, %v7586
      %7716 = vst.msk [vmem:[%s172 + $0x240] sm:$0xff] %vm7643, %v7587
      %7717 = vst.msk [vmem:[%s172 + $0x248] sm:$0xff] %vm7643, %v7588
      %7718 = vst.msk [vmem:[%s172 + $0x250] sm:$0xff] %vm7643, %v7589
      %7719 = vst.msk [vmem:[%s172 + $0x258] sm:$0xff] %vm7643, %v7590
      %7720 = vst.msk [vmem:[%s172 + $0x260] sm:$0xff] %vm7643, %v7591
      %7721 = vst.msk [vmem:[%s172 + $0x268] sm:$0xff] %vm7643, %v7592
      %7722 = vst.msk [vmem:[%s172 + $0x270] sm:$0xff] %vm7643, %v7593
      %7723 = vst.msk [vmem:[%s172 + $0x278] sm:$0xff] %vm7643, %v7594
      %7724 = vst.msk [vmem:[%s172 + $0x280] sm:$0xff] %vm7643, %v7595
      %7725 = vst.msk [vmem:[%s172 + $0x288] sm:$0xff] %vm7643, %v7596
      %7726 = vst.msk [vmem:[%s172 + $0x290] sm:$0xff] %vm7643, %v7597
      %7727 = vst.msk [vmem:[%s172 + $0x298] sm:$0xff] %vm7643, %v7598
      %7728 = vst.msk [vmem:[%s172 + $0x2a0] sm:$0xff] %vm7643, %v7599
      %7729 = vst.msk [vmem:[%s172 + $0x2a8] sm:$0xff] %vm7643, %v7600
      %7730 = vst.msk [vmem:[%s172 + $0x2b0] sm:$0xff] %vm7643, %v7601
      %7731 = vst.msk [vmem:[%s172 + $0x2b8] sm:$0xff] %vm7643, %v7602
      %7732 = vst.msk [vmem:[%s172 + $0x2c0] sm:$0xff] %vm7643, %v7603
      %7733 = vst.msk [vmem:[%s172 + $0x2c8] sm:$0xff] %vm7643, %v7604
      %7734 = vst.msk [vmem:[%s172 + $0x2d0] sm:$0xff] %vm7643, %v7605
      %7735 = vst.msk [vmem:[%s172 + $0x2d8] sm:$0xff] %vm7643, %v7606
      %7736 = vst.msk [vmem:[%s172 + $0x2e0] sm:$0xff] %vm7643, %v7607
      %7737 = vst.msk [vmem:[%s172 + $0x2e8] sm:$0xff] %vm7643, %v7608
      %7738 = vst.msk [vmem:[%s172 + $0x2f0] sm:$0xff] %vm7643, %v7609
      %7739 = vst.msk [vmem:[%s172 + $0x2f8] sm:$0xff] %vm7643, %v7610
      %7740 = vst.msk [vmem:[%s172 + $0x300] sm:$0xff] %vm7643, %v7611
      %7741 = vst.msk [vmem:[%s172 + $0x308] sm:$0xff] %vm7643, %v7612
      %7742 = vst.msk [vmem:[%s172 + $0x310] sm:$0xff] %vm7643, %v7613
      %7743 = vst.msk [vmem:[%s172 + $0x318] sm:$0xff] %vm7643, %v7614
      %7744 = vst.msk [vmem:[%s172 + $0x320] sm:$0xff] %vm7643, %v7615
      %7745 = vst.msk [vmem:[%s172 + $0x328] sm:$0xff] %vm7643, %v7616
      %7746 = vst.msk [vmem:[%s172 + $0x330] sm:$0xff] %vm7643, %v7617
      %7747 = vst.msk [vmem:[%s172 + $0x338] sm:$0xff] %vm7643, %v7618
      %7748 = vst.msk [vmem:[%s172 + $0x340] sm:$0xff] %vm7643, %v7619
      %7749 = vst.msk [vmem:[%s172 + $0x348] sm:$0xff] %vm7643, %v7620
      %7750 = vst.msk [vmem:[%s172 + $0x350] sm:$0xff] %vm7643, %v7621
      %7751 = vst.msk [vmem:[%s172 + $0x358] sm:$0xff] %vm7643, %v7622
      %7752 = vst.msk [vmem:[%s172 + $0x360] sm:$0xff] %vm7643, %v7623
      %7753 = vst.msk [vmem:[%s172 + $0x368] sm:$0xff] %vm7643, %v7624
      %7754 = vst.msk [vmem:[%s172 + $0x370] sm:$0xff] %vm7643, %v7625
      %7755 = vst.msk [vmem:[%s172 + $0x378] sm:$0xff] %vm7643, %v7626
      %7756 = vst.msk [vmem:[%s172 + $0x380] sm:$0xff] %vm7643, %v7627
      %7757 = vst.msk [vmem:[%s172 + $0x388] sm:$0xff] %vm7643, %v7628
      %7758 = vst.msk [vmem:[%s172 + $0x390] sm:$0xff] %vm7643, %v7629
      %7759 = vst.msk [vmem:[%s172 + $0x398] sm:$0xff] %vm7643, %v7630
      %7760 = vst.msk [vmem:[%s172 + $0x3a0] sm:$0xff] %vm7643, %v7631
      %7761 = vst.msk [vmem:[%s172 + $0x3a8] sm:$0xff] %vm7643, %v7632
      %7762 = vst.msk [vmem:[%s172 + $0x3b0] sm:$0xff] %vm7643, %v7633
      %7763 = vst.msk [vmem:[%s172 + $0x3b8] sm:$0xff] %vm7643, %v7634
      %7764 = vst.msk [vmem:[%s172 + $0x3c0] sm:$0xff] %vm7643, %v7635
      %7765 = vst.msk [vmem:[%s172 + $0x3c8] sm:$0xff] %vm7643, %v7636
      %7766 = vst.msk [vmem:[%s172 + $0x3d0] sm:$0xff] %vm7643, %v7637
      %7767 = vst.msk [vmem:[%s172 + $0x3d8] sm:$0xff] %vm7643, %v7638
      %7768 = vst.msk [vmem:[%s172 + $0x3e0] sm:$0xff] %vm7643, %v7639
      %7769 = vst.msk [vmem:[%s172 + $0x3e8] sm:$0xff] %vm7643, %v7640
      %7770 = vst.msk [vmem:[%s172 + $0x3f0] sm:$0xff] %vm7643, %v7641
      %7771 = vst.msk [vmem:[%s172 + $0x3f8] sm:$0xff] %vm7643, %v7642
      %s7772 = smul.u32 128, %s14
      %p7773 = scmp.lt.s32.totalorder %s7772, 255
      %s7774 = scalar_select %p7773, %s7772, 255
      %s7775 = smul.addr %s7774, 8
      %s7776 = scalar_lea.vmem %s3, %s7775
      // Predicated region
      $region33: #{forward.5} parent=31 // pred_check
        %p7777 = pneg %p100
      $region34: #{forward.5} parent=31 // pred_check_branch
        %7779 = sbr.rel (%p7777) target = $region36
      $region35: #{forward.5} parent=31 // pred_region
        %s7780 = smul.u32 128, %s14
      $region36: #{forward.5} parent=31 // pred_fallthru
        _
    $region32: #{forward.5} parent=5 // pred_fallthru
      _
    %p7781 = scmp.le.s32.totalorder 2, %s9
    // Predicated region
    $region37: #{forward.5} parent=5 // pred_check
      %p7782 = pneg %p7781
    $region38: #{forward.5} parent=5 // pred_check_branch
      %7784 = sbr.rel (%p7782) target = $region40
    $region39: #{forward.5} parent=5 // pred_region
      %s7785 = ssub.s32 %s9, 2
      // Predicated region
      $region41: #{forward.5} parent=39 // pred_check
        %p7786 = pneg %p106
      $region42: #{forward.5} parent=39 // pred_check_branch
        %7788 = sbr.rel (%p7786) target = $region44
      $region43: #{forward.5} parent=39 // pred_region
        %s7789 = smul.u32 128, %s15
        %p7790 = scmp.lt.s32.totalorder %s7789, 255
        %s7791 = scalar_select %p7790, %s7789, 255
        %s7792 = smul.addr %s7791, 8
        %s7793 = scalar_lea.vmem %s3, %s7792
      $region44: #{forward.5} parent=39 // pred_fallthru
        _
    $region40: #{forward.5} parent=5 // pred_fallthru
      _
  $region6: #{forward.5} parent=0 // loop_footer
    %s13 = sadd.s32 1, %s9
  $region7: #{forward.5} parent=0 // loop_footer_branch
    %8 = sbr.rel target = $region3
  $region8: #{forward.5} parent=0 // loop_exit
    _

// kernel: forward.7
$region0: #{forward.7}
  #allocation0 [shape = 'u32[]', space=smem, size = 0x4, offset = 0x4, fixed_abs, tag = 'smem constant byte address 0x4 - core index']
  #allocation1 [shape = 'u32[144,128]{1,0:T(1,128)}', space=vmem, size = 0x12000, scoped, tag = 'internal scratch']
  %s0 = inlined_call_operand.vmem [shape: f32[128,144], index: 0, kind: input, shape index: {}]
  %s1 = inlined_call_operand.vmem [shape: f32[144,32], index: 1, kind: input, shape index: {}]
  %s2 = inlined_call_operand.vmem [shape: f32[1,32], index: 2, kind: input, shape index: {}]
  %s3 = inlined_call_operand.vmem [shape: f32[128,32], index: 3, kind: output, shape index: {}]
  %s4 = sld [smem:[#allocation0]]
  $region22: #{forward.7} parent=0
    _
  %s6 = ssub.s32 1, %s4
  %s7 = scalar_select 0, %s6, %s4
  // Predicated region
  $region2: #{forward.7} parent=0 // pred_check
    _
  $region3: #{forward.7} parent=0 // pred_check_branch
    %9 = sbr.rel (0) target = $region5
  $region4: #{forward.7} parent=0 // pred_region
    _
  $region5: #{forward.7} parent=0 // pred_fallthru
    _
  // Predicated region
  $region6: #{forward.7} parent=0 // pred_check
    _
  $region7: #{forward.7} parent=0 // pred_check_branch
    %11 = sbr.rel (0) target = $region9
  $region8: #{forward.7} parent=0 // pred_region
    _
  $region9: #{forward.7} parent=0 // pred_fallthru
    _
  // Predicated region
  $region10: #{forward.7} parent=0 // pred_check
    _
  $region11: #{forward.7} parent=0 // pred_check_branch
    %13 = sbr.rel (0) target = $region13
  $region12: #{forward.7} parent=0 // pred_region
    _
  $region13: #{forward.7} parent=0 // pred_fallthru
    _
  %v14 = vld [vmem:[%s0] sm:$0xff]
  %v15 = vld [vmem:[%s0 + $0x8] sm:$0xff]
  %v16 = vld [vmem:[%s0 + $0x10] sm:$0xff]
  %v17 = vld [vmem:[%s0 + $0x18] sm:$0xff]
  %v18 = vld [vmem:[%s0 + $0x20] sm:$0xff]
  %v19 = vld [vmem:[%s0 + $0x28] sm:$0xff]
  %v20 = vld [vmem:[%s0 + $0x30] sm:$0xff]
  %v21 = vld [vmem:[%s0 + $0x38] sm:$0xff]
  %v22 = vld [vmem:[%s0 + $0x40] sm:$0xff]
  %v23 = vld [vmem:[%s0 + $0x48] sm:$0xff]
  %v24 = vld [vmem:[%s0 + $0x50] sm:$0xff]
  %v25 = vld [vmem:[%s0 + $0x58] sm:$0xff]
  %v26 = vld [vmem:[%s0 + $0x60] sm:$0xff]
  %v27 = vld [vmem:[%s0 + $0x68] sm:$0xff]
  %v28 = vld [vmem:[%s0 + $0x70] sm:$0xff]
  %v29 = vld [vmem:[%s0 + $0x78] sm:$0xff]
  %v30 = vld [vmem:[%s0 + $0x80] sm:$0xff]
  %v31 = vld [vmem:[%s0 + $0x88] sm:$0xff]
  %v32 = vld [vmem:[%s0 + $0x90] sm:$0xff]
  %v33 = vld [vmem:[%s0 + $0x98] sm:$0xff]
  %v34 = vld [vmem:[%s0 + $0xa0] sm:$0xff]
  %v35 = vld [vmem:[%s0 + $0xa8] sm:$0xff]
  %v36 = vld [vmem:[%s0 + $0xb0] sm:$0xff]
  %v37 = vld [vmem:[%s0 + $0xb8] sm:$0xff]
  %v38 = vld [vmem:[%s0 + $0xc0] sm:$0xff]
  %v39 = vld [vmem:[%s0 + $0xc8] sm:$0xff]
  %v40 = vld [vmem:[%s0 + $0xd0] sm:$0xff]
  %v41 = vld [vmem:[%s0 + $0xd8] sm:$0xff]
  %v42 = vld [vmem:[%s0 + $0xe0] sm:$0xff]
  %v43 = vld [vmem:[%s0 + $0xe8] sm:$0xff]
  %v44 = vld [vmem:[%s0 + $0xf0] sm:$0xff]
  %v45 = vld [vmem:[%s0 + $0xf8] sm:$0xff]
  %v46 = vld [vmem:[%s1] sm:$0xff]
  %v47 = vld [vmem:[%s1 + $0x8] sm:$0xff]
  %v48 = vld [vmem:[%s1 + $0x10] sm:$0xff]
  %v49 = vld [vmem:[%s1 + $0x18] sm:$0xff]
  %v50 = vld [vmem:[%s1 + $0x20] sm:$0xff]
  %v51 = vld [vmem:[%s1 + $0x28] sm:$0xff]
  %v52 = vld [vmem:[%s1 + $0x30] sm:$0xff]
  %v53 = vld [vmem:[%s1 + $0x38] sm:$0xff]
  %v54 = vld [vmem:[%s1 + $0x40] sm:$0xff]
  %v55 = vld [vmem:[%s1 + $0x48] sm:$0xff]
  %v56 = vld [vmem:[%s1 + $0x50] sm:$0xff]
  %v57 = vld [vmem:[%s1 + $0x58] sm:$0xff]
  %v58 = vld [vmem:[%s1 + $0x60] sm:$0xff]
  %v59 = vld [vmem:[%s1 + $0x68] sm:$0xff]
  %v60 = vld [vmem:[%s1 + $0x70] sm:$0xff]
  %v61 = vld [vmem:[%s1 + $0x78] sm:$0xff]
  %v62 = vld [vmem:[%s1 + $0x80] sm:$0xff]
  %v63 = vld [vmem:[%s1 + $0x88] sm:$0xff]
  %v64 = vld [vmem:[%s2] sm:$0x1]
  %v66 = vlaneseq
  %v67 = vshrl.u32 %v66, 7
  %v68 = vsub.s32 0, %v67
  %v69 = vrot.slane %v64, %v68
  %vm71 = vcmask 130048
  %v73 = vsel %vm71, %v15, 0
  %v76 = vsel %vm71, %v17, 0
  %v79 = vsel %vm71, %v19, 0
  %v82 = vsel %vm71, %v21, 0
  %v85 = vsel %vm71, %v23, 0
  %v88 = vsel %vm71, %v25, 0
  %v91 = vsel %vm71, %v27, 0
  %v94 = vsel %vm71, %v29, 0
  %v97 = vsel %vm71, %v31, 0
  %v100 = vsel %vm71, %v33, 0
  %v103 = vsel %vm71, %v35, 0
  %v106 = vsel %vm71, %v37, 0
  %v109 = vsel %vm71, %v39, 0
  %v112 = vsel %vm71, %v41, 0
  %v115 = vsel %vm71, %v43, 0
  %v118 = vsel %vm71, %v45, 0
  %120 = vmatprep.subr.mxu0 0.0
  %121 = vmatpush1.msra.mxu0 %v46
  %122 = vmatprep.subr.mxu0 0.0
  %123 = vmatpush1.msra.mxu0 %v47
  %124 = vmatprep.subr.mxu0 0.0
  %125 = vmatpush1.msra.mxu0 %v48
  %126 = vmatprep.subr.mxu0 0.0
  %127 = vmatpush1.msra.mxu0 %v49
  %128 = vmatprep.subr.mxu0 0.0
  %129 = vmatpush1.msra.mxu0 %v50
  %130 = vmatprep.subr.mxu0 0.0
  %131 = vmatpush1.msra.mxu0 %v51
  %132 = vmatprep.subr.mxu0 0.0
  %133 = vmatpush1.msra.mxu0 %v52
  %134 = vmatprep.subr.mxu0 0.0
  %135 = vmatpush1.msra.mxu0 %v53
  %136 = vmatprep.subr.mxu0 0.0
  %137 = vmatpush1.msra.mxu0 %v54
  %138 = vmatprep.subr.mxu0 0.0
  %139 = vmatpush1.msra.mxu0 %v55
  %140 = vmatprep.subr.mxu0 0.0
  %141 = vmatpush1.msra.mxu0 %v56
  %142 = vmatprep.subr.mxu0 0.0
  %143 = vmatpush1.msra.mxu0 %v57
  %144 = vmatprep.subr.mxu0 0.0
  %145 = vmatpush1.msra.mxu0 %v58
  %146 = vmatprep.subr.mxu0 0.0
  %147 = vmatpush1.msra.mxu0 %v59
  %148 = vmatprep.subr.mxu0 0.0
  %149 = vmatpush1.msra.mxu0 %v60
  %150 = vmatprep.subr.mxu0 0.0
  %151 = vmatpush1.msra.mxu0 %v61
  %152 = vmatprep.subr.mxu0 0.0
  %153 = vmatpush1.msra.mxu0 %v62
  %154 = vmatprep.subr.mxu0 0.0
  %155 = vmatpush1.msra.mxu0 %v63
  %156 = vmatprep.subr.mxu0 0.0
  %157 = vmatpush1.msra.mxu0 0.0
  %158 = vmatprep.subr.mxu0 0.0
  %159 = vmatpush1.msra.mxu0 0.0
  %160 = vmatprep.subr.mxu0 0.0
  %161 = vmatpush1.msra.mxu0 0.0
  %162 = vmatprep.subr.mxu0 0.0
  %163 = vmatpush1.msra.mxu0 0.0
  %164 = vmatprep.subr.mxu0 0.0
  %165 = vmatpush1.msra.mxu0 0.0
  %166 = vmatprep.subr.mxu0 0.0
  %167 = vmatpush1.msra.mxu0 0.0
  %168 = vmatprep.subr.mxu0 0.0
  %169 = vmatpush1.msra.mxu0 0.0
  %170 = vmatprep.subr.mxu0 0.0
  %171 = vmatpush1.msra.mxu0 0.0
  %172 = vmatprep.subr.mxu0 0.0
  %173 = vmatpush1.msra.mxu0 0.0
  %174 = vmatprep.subr.mxu0 0.0
  %175 = vmatpush1.msra.mxu0 0.0
  %176 = vmatprep.subr.mxu0 0.0
  %177 = vmatpush1.msra.mxu0 0.0
  %178 = vmatprep.subr.mxu0 0.0
  %179 = vmatpush1.msra.mxu0 0.0
  %180 = vmatprep.subr.mxu0 0.0
  %181 = vmatpush1.msra.mxu0 0.0
  %182 = vmatprep.subr.mxu0 0.0
  %183 = vmatpush1.msra.mxu0 0.0
  %184 = vmatprep.mubr.f32.mxu0 %v73
  %185 = vmatmul.mubr.f32.gmra.mrb[0].mxu0 %v14
  %v186 = vpop.f32.mrb[0].mxu0
  %v187 = vadd.f32 %v69, %v186
  %v188 = vpop.f32.mrb[0].mxu0
  %189 = vmatprep.mubr.f32.mxu0 %v76
  %190 = vmatmul.mubr.f32.gmra.mrb[0].mxu0 %v16
  %v191 = vpop.f32.mrb[0].mxu0
  %v192 = vadd.f32 %v69, %v191
  %v193 = vpop.f32.mrb[0].mxu0
  %194 = vmatprep.mubr.f32.mxu0 %v79
  %195 = vmatmul.mubr.f32.gmra.mrb[0].mxu0 %v18
  %v196 = vpop.f32.mrb[0].mxu0
  %v197 = vadd.f32 %v69, %v196
  %v198 = vpop.f32.mrb[0].mxu0
  %199 = vmatprep.mubr.f32.mxu0 %v82
  %200 = vmatmul.mubr.f32.gmra.mrb[0].mxu0 %v20
  %v201 = vpop.f32.mrb[0].mxu0
  %v202 = vadd.f32 %v69, %v201
  %v203 = vpop.f32.mrb[0].mxu0
  %204 = vmatprep.mubr.f32.mxu0 %v85
  %205 = vmatmul.mubr.f32.gmra.mrb[0].mxu0 %v22
  %v206 = vpop.f32.mrb[0].mxu0
  %v207 = vadd.f32 %v69, %v206
  %v208 = vpop.f32.mrb[0].mxu0
  %209 = vmatprep.mubr.f32.mxu0 %v88
  %210 = vmatmul.mubr.f32.gmra.mrb[0].mxu0 %v24
  %v211 = vpop.f32.mrb[0].mxu0
  %v212 = vadd.f32 %v69, %v211
  %v213 = vpop.f32.mrb[0].mxu0
  %214 = vmatprep.mubr.f32.mxu0 %v91
  %215 = vmatmul.mubr.f32.gmra.mrb[0].mxu0 %v26
  %v216 = vpop.f32.mrb[0].mxu0
  %v217 = vadd.f32 %v69, %v216
  %v218 = vpop.f32.mrb[0].mxu0
  %219 = vmatprep.mubr.f32.mxu0 %v94
  %220 = vmatmul.mubr.f32.gmra.mrb[0].mxu0 %v28
  %v221 = vpop.f32.mrb[0].mxu0
  %v222 = vadd.f32 %v69, %v221
  %v223 = vpop.f32.mrb[0].mxu0
  %224 = vmatprep.mubr.f32.mxu0 %v97
  %225 = vmatmul.mubr.f32.gmra.mrb[0].mxu0 %v30
  %v226 = vpop.f32.mrb[0].mxu0
  %v227 = vadd.f32 %v69, %v226
  %v228 = vpop.f32.mrb[0].mxu0
  %229 = vmatprep.mubr.f32.mxu0 %v100
  %230 = vmatmul.mubr.f32.gmra.mrb[0].mxu0 %v32
  %v231 = vpop.f32.mrb[0].mxu0
  %v232 = vadd.f32 %v69, %v231
  %v233 = vpop.f32.mrb[0].mxu0
  %234 = vmatprep.mubr.f32.mxu0 %v103
  %235 = vmatmul.mubr.f32.gmra.mrb[0].mxu0 %v34
  %v236 = vpop.f32.mrb[0].mxu0
  %v237 = vadd.f32 %v69, %v236
  %v238 = vpop.f32.mrb[0].mxu0
  %239 = vmatprep.mubr.f32.mxu0 %v106
  %240 = vmatmul.mubr.f32.gmra.mrb[0].mxu0 %v36
  %v241 = vpop.f32.mrb[0].mxu0
  %v242 = vadd.f32 %v69, %v241
  %v243 = vpop.f32.mrb[0].mxu0
  %244 = vmatprep.mubr.f32.mxu0 %v109
  %245 = vmatmul.mubr.f32.gmra.mrb[0].mxu0 %v38
  %v246 = vpop.f32.mrb[0].mxu0
  %v247 = vadd.f32 %v69, %v246
  %v248 = vpop.f32.mrb[0].mxu0
  %249 = vmatprep.mubr.f32.mxu0 %v112
  %250 = vmatmul.mubr.f32.gmra.mrb[0].mxu0 %v40
  %v251 = vpop.f32.mrb[0].mxu0
  %v252 = vadd.f32 %v69, %v251
  %v253 = vpop.f32.mrb[0].mxu0
  %254 = vmatprep.mubr.f32.mxu0 %v115
  %255 = vmatmul.mubr.f32.gmra.mrb[0].mxu0 %v42
  %v256 = vpop.f32.mrb[0].mxu0
  %v257 = vadd.f32 %v69, %v256
  %v258 = vpop.f32.mrb[0].mxu0
  %259 = vmatprep.mubr.f32.mxu0 %v118
  %260 = vmatmul.mubr.f32.gmra.mrb[0].mxu0 %v44
  %v261 = vpop.f32.mrb[0].mxu0
  %v262 = vadd.f32 %v69, %v261
  %v263 = vpop.f32.mrb[0].mxu0
  %264 = vdwg.mxu0
  %v265 = vmax.f32 %v187, 0.0
  %v266 = vmax.f32 %v192, 0.0
  %v267 = vmax.f32 %v197, 0.0
  %v268 = vmax.f32 %v202, 0.0
  %v269 = vmax.f32 %v207, 0.0
  %v270 = vmax.f32 %v212, 0.0
  %v271 = vmax.f32 %v217, 0.0
  %v272 = vmax.f32 %v222, 0.0
  %v273 = vmax.f32 %v227, 0.0
  %v274 = vmax.f32 %v232, 0.0
  %v275 = vmax.f32 %v237, 0.0
  %v276 = vmax.f32 %v242, 0.0
  %v277 = vmax.f32 %v247, 0.0
  %v278 = vmax.f32 %v252, 0.0
  %v279 = vmax.f32 %v257, 0.0
  %v280 = vmax.f32 %v262, 0.0
  %vm281 = vcmask 261120
  %282 = vst.msk [vmem:[%s3] sm:$0xff] %vm281, %v265
  %283 = vst.msk [vmem:[%s3 + $0x8] sm:$0xff] %vm281, %v266
  %284 = vst.msk [vmem:[%s3 + $0x10] sm:$0xff] %vm281, %v267
  %285 = vst.msk [vmem:[%s3 + $0x18] sm:$0xff] %vm281, %v268
  %286 = vst.msk [vmem:[%s3 + $0x20] sm:$0xff] %vm281, %v269
  %287 = vst.msk [vmem:[%s3 + $0x28] sm:$0xff] %vm281, %v270
  %288 = vst.msk [vmem:[%s3 + $0x30] sm:$0xff] %vm281, %v271
  %289 = vst.msk [vmem:[%s3 + $0x38] sm:$0xff] %vm281, %v272
  %290 = vst.msk [vmem:[%s3 + $0x40] sm:$0xff] %vm281, %v273
  %291 = vst.msk [vmem:[%s3 + $0x48] sm:$0xff] %vm281, %v274
  %292 = vst.msk [vmem:[%s3 + $0x50] sm:$0xff] %vm281, %v275
  %293 = vst.msk [vmem:[%s3 + $0x58] sm:$0xff] %vm281, %v276
  %294 = vst.msk [vmem:[%s3 + $0x60] sm:$0xff] %vm281, %v277
  %295 = vst.msk [vmem:[%s3 + $0x68] sm:$0xff] %vm281, %v278
  %296 = vst.msk [vmem:[%s3 + $0x70] sm:$0xff] %vm281, %v279
  %297 = vst.msk [vmem:[%s3 + $0x78] sm:$0xff] %vm281, %v280
  // Predicated region
  $region14: #{forward.7} parent=0 // pred_check
    _
  $region15: #{forward.7} parent=0 // pred_check_branch
    %299 = sbr.rel (0) target = $region17
  $region16: #{forward.7} parent=0 // pred_region
    _
  $region17: #{forward.7} parent=0 // pred_fallthru
    _
  // Predicated region
  $region18: #{forward.7} parent=0 // pred_check
    _
  $region19: #{forward.7} parent=0 // pred_check_branch
    %301 = sbr.rel (0) target = $region21
  $region20: #{forward.7} parent=0 // pred_region
    _
  $region21: #{forward.7} parent=0 // pred_fallthru
    _

// kernel: forward.8
$region0: #{forward.8}
  #allocation0 [shape = 'u32[]', space=smem, size = 0x4, offset = 0x4, fixed_abs, tag = 'smem constant byte address 0x4 - core index']
  #allocation1 [shape = 'u32[144,128]{1,0:T(1,128)}', space=vmem, size = 0x12000, scoped, tag = 'internal scratch']
  %s0 = inlined_call_operand.vmem [shape: f32[32,288], index: 0, kind: input, shape index: {}]
  %s1 = inlined_call_operand.vmem [shape: f32[288,64], index: 1, kind: input, shape index: {}]
  %s2 = inlined_call_operand.vmem [shape: f32[1,64], index: 2, kind: input, shape index: {}]
  %s3 = inlined_call_operand.vmem [shape: f32[32,64], index: 3, kind: output, shape index: {}]
  %s4 = sld [smem:[#allocation0]]
  $region22: #{forward.8} parent=0
    _
  %s6 = ssub.s32 1, %s4
  %s7 = scalar_select 0, %s6, %s4
  // Predicated region
  $region2: #{forward.8} parent=0 // pred_check
    _
  $region3: #{forward.8} parent=0 // pred_check_branch
    %9 = sbr.rel (0) target = $region5
  $region4: #{forward.8} parent=0 // pred_region
    _
  $region5: #{forward.8} parent=0 // pred_fallthru
    _
  // Predicated region
  $region6: #{forward.8} parent=0 // pred_check
    _
  $region7: #{forward.8} parent=0 // pred_check_branch
    %11 = sbr.rel (0) target = $region9
  $region8: #{forward.8} parent=0 // pred_region
    _
  $region9: #{forward.8} parent=0 // pred_fallthru
    _
  // Predicated region
  $region10: #{forward.8} parent=0 // pred_check
    _
  $region11: #{forward.8} parent=0 // pred_check_branch
    %13 = sbr.rel (0) target = $region13
  $region12: #{forward.8} parent=0 // pred_region
    _
  $region13: #{forward.8} parent=0 // pred_fallthru
    _
  %v14 = vld [vmem:[%s0] sm:$0xff]
  %v15 = vld [vmem:[%s0 + $0x8] sm:$0xff]
  %v16 = vld [vmem:[%s0 + $0x10] sm:$0xff]
  %v17 = vld [vmem:[%s0 + $0x18] sm:$0xff]
  %v18 = vld [vmem:[%s0 + $0x20] sm:$0xff]
  %v19 = vld [vmem:[%s0 + $0x28] sm:$0xff]
  %v20 = vld [vmem:[%s0 + $0x30] sm:$0xff]
  %v21 = vld [vmem:[%s0 + $0x38] sm:$0xff]
  %v22 = vld [vmem:[%s0 + $0x40] sm:$0xff]
  %v23 = vld [vmem:[%s0 + $0x48] sm:$0xff]
  %v24 = vld [vmem:[%s0 + $0x50] sm:$0xff]
  %v25 = vld [vmem:[%s0 + $0x58] sm:$0xff]
  %v26 = vld [vmem:[%s1] sm:$0xff]
  %v27 = vld [vmem:[%s1 + $0x8] sm:$0xff]
  %v28 = vld [vmem:[%s1 + $0x10] sm:$0xff]
  %v29 = vld [vmem:[%s1 + $0x18] sm:$0xff]
  %v30 = vld [vmem:[%s1 + $0x20] sm:$0xff]
  %v31 = vld [vmem:[%s1 + $0x28] sm:$0xff]
  %v32 = vld [vmem:[%s1 + $0x30] sm:$0xff]
  %v33 = vld [vmem:[%s1 + $0x38] sm:$0xff]
  %v34 = vld [vmem:[%s1 + $0x40] sm:$0xff]
  %v35 = vld [vmem:[%s1 + $0x48] sm:$0xff]
  %v36 = vld [vmem:[%s1 + $0x50] sm:$0xff]
  %v37 = vld [vmem:[%s1 + $0x58] sm:$0xff]
  %v38 = vld [vmem:[%s1 + $0x60] sm:$0xff]
  %v39 = vld [vmem:[%s1 + $0x68] sm:$0xff]
  %v40 = vld [vmem:[%s1 + $0x70] sm:$0xff]
  %v41 = vld [vmem:[%s1 + $0x78] sm:$0xff]
  %v42 = vld [vmem:[%s1 + $0x80] sm:$0xff]
  %v43 = vld [vmem:[%s1 + $0x88] sm:$0xff]
  %v44 = vld [vmem:[%s1 + $0x90] sm:$0xff]
  %v45 = vld [vmem:[%s1 + $0x98] sm:$0xff]
  %v46 = vld [vmem:[%s1 + $0xa0] sm:$0xff]
  %v47 = vld [vmem:[%s1 + $0xa8] sm:$0xff]
  %v48 = vld [vmem:[%s1 + $0xb0] sm:$0xff]
  %v49 = vld [vmem:[%s1 + $0xb8] sm:$0xff]
  %v50 = vld [vmem:[%s1 + $0xc0] sm:$0xff]
  %v51 = vld [vmem:[%s1 + $0xc8] sm:$0xff]
  %v52 = vld [vmem:[%s1 + $0xd0] sm:$0xff]
  %v53 = vld [vmem:[%s1 + $0xd8] sm:$0xff]
  %v54 = vld [vmem:[%s1 + $0xe0] sm:$0xff]
  %v55 = vld [vmem:[%s1 + $0xe8] sm:$0xff]
  %v56 = vld [vmem:[%s1 + $0xf0] sm:$0xff]
  %v57 = vld [vmem:[%s1 + $0xf8] sm:$0xff]
  %v58 = vld [vmem:[%s1 + $0x100] sm:$0xff]
  %v59 = vld [vmem:[%s1 + $0x108] sm:$0xff]
  %v60 = vld [vmem:[%s1 + $0x110] sm:$0xff]
  %v61 = vld [vmem:[%s1 + $0x118] sm:$0xff]
  %v62 = vld [vmem:[%s2] sm:$0x1]
  %v64 = vlaneseq
  %v65 = vshrl.u32 %v64, 7
  %v66 = vsub.s32 0, %v65
  %v67 = vrot.slane %v62, %v66
  %vm69 = vcmask 261120
  %v71 = vsel %vm69, %v16, 0
  %v74 = vsel %vm69, %v19, 0
  %v77 = vsel %vm69, %v22, 0
  %v80 = vsel %vm69, %v25, 0
  %82 = vmatprep.subr.mxu0 0.0
  %83 = vmatpush1.msra.mxu0 %v26
  %84 = vmatprep.subr.mxu0 0.0
  %85 = vmatpush1.msra.mxu0 %v27
  %86 = vmatprep.subr.mxu0 0.0
  %87 = vmatpush1.msra.mxu0 %v28
  %88 = vmatprep.subr.mxu0 0.0
  %89 = vmatpush1.msra.mxu0 %v29
  %90 = vmatprep.subr.mxu0 0.0
  %91 = vmatpush1.msra.mxu0 %v30
  %92 = vmatprep.subr.mxu0 0.0
  %93 = vmatpush1.msra.mxu0 %v31
  %94 = vmatprep.subr.mxu0 0.0
  %95 = vmatpush1.msra.mxu0 %v32
  %96 = vmatprep.subr.mxu0 0.0
  %97 = vmatpush1.msra.mxu0 %v33
  %98 = vmatprep.subr.mxu0 0.0
  %99 = vmatpush1.msra.mxu0 %v34
  %100 = vmatprep.subr.mxu0 0.0
  %101 = vmatpush1.msra.mxu0 %v35
  %102 = vmatprep.subr.mxu0 0.0
  %103 = vmatpush1.msra.mxu0 %v36
  %104 = vmatprep.subr.mxu0 0.0
  %105 = vmatpush1.msra.mxu0 %v37
  %106 = vmatprep.subr.mxu0 0.0
  %107 = vmatpush1.msra.mxu0 %v38
  %108 = vmatprep.subr.mxu0 0.0
  %109 = vmatpush1.msra.mxu0 %v39
  %110 = vmatprep.subr.mxu0 0.0
  %111 = vmatpush1.msra.mxu0 %v40
  %112 = vmatprep.subr.mxu0 0.0
  %113 = vmatpush1.msra.mxu0 %v41
  %114 = vmatprep.subr.mxu0 0.0
  %115 = vmatpush1.msra.mxu0 %v42
  %116 = vmatprep.subr.mxu0 0.0
  %117 = vmatpush1.msra.mxu0 %v43
  %118 = vmatprep.subr.mxu0 0.0
  %119 = vmatpush1.msra.mxu0 %v44
  %120 = vmatprep.subr.mxu0 0.0
  %121 = vmatpush1.msra.mxu0 %v45
  %122 = vmatprep.subr.mxu0 0.0
  %123 = vmatpush1.msra.mxu0 %v46
  %124 = vmatprep.subr.mxu0 0.0
  %125 = vmatpush1.msra.mxu0 %v47
  %126 = vmatprep.subr.mxu0 0.0
  %127 = vmatpush1.msra.mxu0 %v48
  %128 = vmatprep.subr.mxu0 0.0
  %129 = vmatpush1.msra.mxu0 %v49
  %130 = vmatprep.subr.mxu0 0.0
  %131 = vmatpush1.msra.mxu0 %v50
  %132 = vmatprep.subr.mxu0 0.0
  %133 = vmatpush1.msra.mxu0 %v51
  %134 = vmatprep.subr.mxu0 0.0
  %135 = vmatpush1.msra.mxu0 %v52
  %136 = vmatprep.subr.mxu0 0.0
  %137 = vmatpush1.msra.mxu0 %v53
  %138 = vmatprep.subr.mxu0 0.0
  %139 = vmatpush1.msra.mxu0 %v54
  %140 = vmatprep.subr.mxu0 0.0
  %141 = vmatpush1.msra.mxu0 %v55
  %142 = vmatprep.subr.mxu0 0.0
  %143 = vmatpush1.msra.mxu0 %v56
  %144 = vmatprep.subr.mxu0 0.0
  %145 = vmatpush1.msra.mxu0 %v57
  %146 = vmatprep.mubr.f32.mxu0 %v15
  %147 = vmatmul.mubr.f32.gmra.mrb[0].mxu0 %v14
  %v148 = vpop.f32.mrb[0].mxu0
  %v149 = vadd.f32 %v67, %v148
  %v150 = vpop.f32.mrb[0].mxu0
  %151 = vmatprep.mubr.f32.mxu0 %v18
  %152 = vmatmul.mubr.f32.gmra.mrb[0].mxu0 %v17
  %v153 = vpop.f32.mrb[0].mxu0
  %v154 = vadd.f32 %v67, %v153
  %v155 = vpop.f32.mrb[0].mxu0
  %156 = vmatprep.mubr.f32.mxu0 %v21
  %157 = vmatmul.mubr.f32.gmra.mrb[0].mxu0 %v20
  %v158 = vpop.f32.mrb[0].mxu0
  %v159 = vadd.f32 %v67, %v158
  %v160 = vpop.f32.mrb[0].mxu0
  %161 = vmatprep.mubr.f32.mxu0 %v24
  %162 = vmatmul.mubr.f32.gmra.mrb[0].mxu0 %v23
  %v163 = vpop.f32.mrb[0].mxu0
  %v164 = vadd.f32 %v67, %v163
  %v165 = vpop.f32.mrb[0].mxu0
  %166 = vdwg.mxu0
  %167 = vmatprep.subr.mxu0 0.0
  %168 = vmatpush1.msra.mxu0 %v58
  %169 = vmatprep.subr.mxu0 0.0
  %170 = vmatpush1.msra.mxu0 %v59
  %171 = vmatprep.subr.mxu0 0.0
  %172 = vmatpush1.msra.mxu0 %v60
  %173 = vmatprep.subr.mxu0 0.0
  %174 = vmatpush1.msra.mxu0 %v61
  %175 = vmatprep.subr.mxu0 0.0
  %176 = vmatpush1.msra.mxu0 0.0
  %177 = vmatprep.subr.mxu0 0.0
  %178 = vmatpush1.msra.mxu0 0.0
  %179 = vmatprep.subr.mxu0 0.0
  %180 = vmatpush1.msra.mxu0 0.0
  %181 = vmatprep.subr.mxu0 0.0
  %182 = vmatpush1.msra.mxu0 0.0
  %183 = vmatprep.subr.mxu0 0.0
  %184 = vmatpush1.msra.mxu0 0.0
  %185 = vmatprep.subr.mxu0 0.0
  %186 = vmatpush1.msra.mxu0 0.0
  %187 = vmatprep.subr.mxu0 0.0
  %188 = vmatpush1.msra.mxu0 0.0
  %189 = vmatprep.subr.mxu0 0.0
  %190 = vmatpush1.msra.mxu0 0.0
  %191 = vmatprep.subr.mxu0 0.0
  %192 = vmatpush1.msra.mxu0 0.0
  %193 = vmatprep.subr.mxu0 0.0
  %194 = vmatpush1.msra.mxu0 0.0
  %195 = vmatprep.subr.mxu0 0.0
  %196 = vmatpush1.msra.mxu0 0.0
  %197 = vmatprep.subr.mxu0 0.0
  %198 = vmatpush1.msra.mxu0 0.0
  %199 = vmatprep.subr.mxu0 0.0
  %200 = vmatpush1.msra.mxu0 0.0
  %201 = vmatprep.subr.mxu0 0.0
  %202 = vmatpush1.msra.mxu0 0.0
  %203 = vmatprep.subr.mxu0 0.0
  %204 = vmatpush1.msra.mxu0 0.0
  %205 = vmatprep.subr.mxu0 0.0
  %206 = vmatpush1.msra.mxu0 0.0
  %207 = vmatprep.subr.mxu0 0.0
  %208 = vmatpush1.msra.mxu0 0.0
  %209 = vmatprep.subr.mxu0 0.0
  %210 = vmatpush1.msra.mxu0 0.0
  %211 = vmatprep.subr.mxu0 0.0
  %212 = vmatpush1.msra.mxu0 0.0
  %213 = vmatprep.subr.mxu0 0.0
  %214 = vmatpush1.msra.mxu0 0.0
  %215 = vmatprep.subr.mxu0 0.0
  %216 = vmatpush1.msra.mxu0 0.0
  %217 = vmatprep.subr.mxu0 0.0
  %218 = vmatpush1.msra.mxu0 0.0
  %219 = vmatprep.subr.mxu0 0.0
  %220 = vmatpush1.msra.mxu0 0.0
  %221 = vmatprep.subr.mxu0 0.0
  %222 = vmatpush1.msra.mxu0 0.0
  %223 = vmatprep.subr.mxu0 0.0
  %224 = vmatpush1.msra.mxu0 0.0
  %225 = vmatprep.subr.mxu0 0.0
  %226 = vmatpush1.msra.mxu0 0.0
  %227 = vmatprep.subr.mxu0 0.0
  %228 = vmatpush1.msra.mxu0 0.0
  %229 = vmatprep.subr.mxu0 0.0
  %230 = vmatpush1.msra.mxu0 0.0
  %231 = vmatprep.mubr.f32.mxu0 0.0
  %232 = vmatmul.mubr.f32.gmra.mrb[0].mxu0 %v71
  %v233 = vpop.f32.mrb[0].mxu0
  %v234 = vadd.f32 %v149, %v233
  %v235 = vpop.f32.mrb[0].mxu0
  %236 = vmatprep.mubr.f32.mxu0 0.0
  %237 = vmatmul.mubr.f32.gmra.mrb[0].mxu0 %v74
  %v238 = vpop.f32.mrb[0].mxu0
  %v239 = vadd.f32 %v154, %v238
  %v240 = vpop.f32.mrb[0].mxu0
  %241 = vmatprep.mubr.f32.mxu0 0.0
  %242 = vmatmul.mubr.f32.gmra.mrb[0].mxu0 %v77
  %v243 = vpop.f32.mrb[0].mxu0
  %v244 = vadd.f32 %v159, %v243
  %v245 = vpop.f32.mrb[0].mxu0
  %246 = vmatprep.mubr.f32.mxu0 0.0
  %247 = vmatmul.mubr.f32.gmra.mrb[0].mxu0 %v80
  %v248 = vpop.f32.mrb[0].mxu0
  %v249 = vadd.f32 %v164, %v248
  %v250 = vpop.f32.mrb[0].mxu0
  %251 = vdwg.mxu0
  %v252 = vmax.f32 %v234, 0.0
  %v253 = vmax.f32 %v239, 0.0
  %v254 = vmax.f32 %v244, 0.0
  %v255 = vmax.f32 %v249, 0.0
  %vm256 = vcmask 523264
  %257 = vst.msk [vmem:[%s3] sm:$0xff] %vm256, %v252
  %258 = vst.msk [vmem:[%s3 + $0x8] sm:$0xff] %vm256, %v253
  %259 = vst.msk [vmem:[%s3 + $0x10] sm:$0xff] %vm256, %v254
  %260 = vst.msk [vmem:[%s3 + $0x18] sm:$0xff] %vm256, %v255
  // Predicated region
  $region14: #{forward.8} parent=0 // pred_check
    _
  $region15: #{forward.8} parent=0 // pred_check_branch
    %262 = sbr.rel (0) target = $region17
  $region16: #{forward.8} parent=0 // pred_region
    _
  $region17: #{forward.8} parent=0 // pred_fallthru
    _
  // Predicated region
  $region18: #{forward.8} parent=0 // pred_check
    _
  $region19: #{forward.8} parent=0 // pred_check_branch
    %264 = sbr.rel (0) target = $region21
  $region20: #{forward.8} parent=0 // pred_region
    _
  $region21: #{forward.8} parent=0 // pred_fallthru
    _

// kernel: forward.9
$region0: #{forward.9}
  #allocation0 [shape = 'u32[]', space=smem, size = 0x4, offset = 0x4, fixed_abs, tag = 'smem constant byte address 0x4 - core index']
  #allocation1 [shape = 'u32[144,128]{1,0:T(1,128)}', space=vmem, size = 0x12000, scoped, tag = 'internal scratch']
  %s0 = inlined_call_operand.vmem [shape: f32[2,1024], index: 0, kind: input, shape index: {}]
  %s1 = inlined_call_operand.vmem [shape: f32[2,2], index: 1, kind: input, shape index: {}]
  %s2 = inlined_call_operand.vmem [shape: f32[1024,384], index: 2, kind: input, shape index: {}]
  %s3 = inlined_call_operand.vmem [shape: f32[1,384], index: 3, kind: input, shape index: {}]
  %s4 = inlined_call_operand.vmem [shape: f32[2,384], index: 4, kind: input, shape index: {}]
  %s5 = inlined_call_operand.vmem [shape: f32[1,384], index: 5, kind: input, shape index: {}]
  %s6 = inlined_call_operand.vmem [shape: f32[384,384], index: 6, kind: input, shape index: {}]
  %s7 = inlined_call_operand.vmem [shape: f32[1,384], index: 7, kind: input, shape index: {}]
  %s8 = inlined_call_operand.vmem [shape: f32[384,384], index: 8, kind: input, shape index: {}]
  %s9 = inlined_call_operand.vmem [shape: f32[384,384], index: 9, kind: input, shape index: {}]
  %s10 = inlined_call_operand.vmem [shape: f32[1,384], index: 10, kind: input, shape index: {}]
  %s11 = inlined_call_operand.vmem [shape: f32[384,384], index: 11, kind: input, shape index: {}]
  %s12 = inlined_call_operand.vmem [shape: f32[1,384], index: 12, kind: input, shape index: {}]
  %s13 = inlined_call_operand.vmem [shape: f32[384,128], index: 13, kind: input, shape index: {}]
  %s14 = inlined_call_operand.vmem [shape: f32[1,128], index: 14, kind: input, shape index: {}]
  %s15 = inlined_call_operand.vmem [shape: f32[2,128], index: 15, kind: output, shape index: {}]
  %s16 = sld [smem:[#allocation0]]
  $region70: #{forward.9} parent=0
    _
  %s18 = ssub.s32 1, %s16
  %s19 = scalar_select 0, %s18, %s16
  // Predicated region
  $region2: #{forward.9} parent=0 // pred_check
    _
  $region3: #{forward.9} parent=0 // pred_check_branch
    %21 = sbr.rel (0) target = $region5
  $region4: #{forward.9} parent=0 // pred_region
    _
  $region5: #{forward.9} parent=0 // pred_fallthru
    _
  // Predicated region
  $region6: #{forward.9} parent=0 // pred_check
    _
  $region7: #{forward.9} parent=0 // pred_check_branch
    %23 = sbr.rel (0) target = $region9
  $region8: #{forward.9} parent=0 // pred_region
    _
  $region9: #{forward.9} parent=0 // pred_fallthru
    _
  // Predicated region
  $region10: #{forward.9} parent=0 // pred_check
    _
  $region11: #{forward.9} parent=0 // pred_check_branch
    %25 = sbr.rel (0) target = $region13
  $region12: #{forward.9} parent=0 // pred_region
    _
  $region13: #{forward.9} parent=0 // pred_fallthru
    _
  // Predicated region
  $region14: #{forward.9} parent=0 // pred_check
    _
  $region15: #{forward.9} parent=0 // pred_check_branch
    %27 = sbr.rel (0) target = $region17
  $region16: #{forward.9} parent=0 // pred_region
    _
  $region17: #{forward.9} parent=0 // pred_fallthru
    _
  // Predicated region
  $region18: #{forward.9} parent=0 // pred_check
    _
  $region19: #{forward.9} parent=0 // pred_check_branch
    %29 = sbr.rel (0) target = $region21
  $region20: #{forward.9} parent=0 // pred_region
    _
  $region21: #{forward.9} parent=0 // pred_fallthru
    _
  // Predicated region
  $region22: #{forward.9} parent=0 // pred_check
    _
  $region23: #{forward.9} parent=0 // pred_check_branch
    %31 = sbr.rel (0) target = $region25
  $region24: #{forward.9} parent=0 // pred_region
    _
  $region25: #{forward.9} parent=0 // pred_fallthru
    _
  // Predicated region
  $region26: #{forward.9} parent=0 // pred_check
    _
  $region27: #{forward.9} parent=0 // pred_check_branch
    %33 = sbr.rel (0) target = $region29
  $region28: #{forward.9} parent=0 // pred_region
    _
  $region29: #{forward.9} parent=0 // pred_fallthru
    _
  // Predicated region
  $region30: #{forward.9} parent=0 // pred_check
    _
  $region31: #{forward.9} parent=0 // pred_check_branch
    %35 = sbr.rel (0) target = $region33
  $region32: #{forward.9} parent=0 // pred_region
    _
  $region33: #{forward.9} parent=0 // pred_fallthru
    _
  // Predicated region
  $region34: #{forward.9} parent=0 // pred_check
    _
  $region35: #{forward.9} parent=0 // pred_check_branch
    %37 = sbr.rel (0) target = $region37
  $region36: #{forward.9} parent=0 // pred_region
    _
  $region37: #{forward.9} parent=0 // pred_fallthru
    _
  // Predicated region
  $region38: #{forward.9} parent=0 // pred_check
    _
  $region39: #{forward.9} parent=0 // pred_check_branch
    %39 = sbr.rel (0) target = $region41
  $region40: #{forward.9} parent=0 // pred_region
    _
  $region41: #{forward.9} parent=0 // pred_fallthru
    _
  // Predicated region
  $region42: #{forward.9} parent=0 // pred_check
    _
  $region43: #{forward.9} parent=0 // pred_check_branch
    %41 = sbr.rel (0) target = $region45
  $region44: #{forward.9} parent=0 // pred_region
    _
  $region45: #{forward.9} parent=0 // pred_fallthru
    _
  // Predicated region
  $region46: #{forward.9} parent=0 // pred_check
    _
  $region47: #{forward.9} parent=0 // pred_check_branch
    %43 = sbr.rel (0) target = $region49
  $region48: #{forward.9} parent=0 // pred_region
    _
  $region49: #{forward.9} parent=0 // pred_fallthru
    _
  // Predicated region
  $region50: #{forward.9} parent=0 // pred_check
    _
  $region51: #{forward.9} parent=0 // pred_check_branch
    %45 = sbr.rel (0) target = $region53
  $region52: #{forward.9} parent=0 // pred_region
    _
  $region53: #{forward.9} parent=0 // pred_fallthru
    _
  // Predicated region
  $region54: #{forward.9} parent=0 // pred_check
    _
  $region55: #{forward.9} parent=0 // pred_check_branch
    %47 = sbr.rel (0) target = $region57
  $region56: #{forward.9} parent=0 // pred_region
    _
  $region57: #{forward.9} parent=0 // pred_fallthru
    _
  // Predicated region
  $region58: #{forward.9} parent=0 // pred_check
    _
  $region59: #{forward.9} parent=0 // pred_check_branch
    %49 = sbr.rel (0) target = $region61
  $region60: #{forward.9} parent=0 // pred_region
    _
  $region61: #{forward.9} parent=0 // pred_fallthru
    _
  %v50 = vld [vmem:[%s0] sm:$0xff]
  %v51 = vld [vmem:[%s0 + $0x8] sm:$0xff]
  %v52 = vld [vmem:[%s2] sm:$0xff]
  %v53 = vld [vmem:[%s2 + $0x8] sm:$0xff]
  %v54 = vld [vmem:[%s2 + $0x10] sm:$0xff]
  %v55 = vld [vmem:[%s2 + $0x18] sm:$0xff]
  %v56 = vld [vmem:[%s2 + $0x20] sm:$0xff]
  %v57 = vld [vmem:[%s2 + $0x28] sm:$0xff]
  %v58 = vld [vmem:[%s2 + $0x30] sm:$0xff]
  %v59 = vld [vmem:[%s2 + $0x38] sm:$0xff]
  %v60 = vld [vmem:[%s2 + $0x40] sm:$0xff]
  %v61 = vld [vmem:[%s2 + $0x48] sm:$0xff]
  %v62 = vld [vmem:[%s2 + $0x50] sm:$0xff]
  %v63 = vld [vmem:[%s2 + $0x58] sm:$0xff]
  %v64 = vld [vmem:[%s2 + $0x60] sm:$0xff]
  %v65 = vld [vmem:[%s2 + $0x68] sm:$0xff]
  %v66 = vld [vmem:[%s2 + $0x70] sm:$0xff]
  %v67 = vld [vmem:[%s2 + $0x78] sm:$0xff]
  %v68 = vld [vmem:[%s2 + $0x80] sm:$0xff]
  %v69 = vld [vmem:[%s2 + $0x88] sm:$0xff]
  %v70 = vld [vmem:[%s2 + $0x90] sm:$0xff]
  %v71 = vld [vmem:[%s2 + $0x98] sm:$0xff]
  %v72 = vld [vmem:[%s2 + $0xa0] sm:$0xff]
  %v73 = vld [vmem:[%s2 + $0xa8] sm:$0xff]
  %v74 = vld [vmem:[%s2 + $0xb0] sm:$0xff]
  %v75 = vld [vmem:[%s2 + $0xb8] sm:$0xff]
  %v76 = vld [vmem:[%s2 + $0xc0] sm:$0xff]
  %v77 = vld [vmem:[%s2 + $0xc8] sm:$0xff]
  %v78 = vld [vmem:[%s2 + $0xd0] sm:$0xff]
  %v79 = vld [vmem:[%s2 + $0xd8] sm:$0xff]
  %v80 = vld [vmem:[%s2 + $0xe0] sm:$0xff]
  %v81 = vld [vmem:[%s2 + $0xe8] sm:$0xff]
  %v82 = vld [vmem:[%s2 + $0xf0] sm:$0xff]
  %v83 = vld [vmem:[%s2 + $0xf8] sm:$0xff]
  %v84 = vld [vmem:[%s2 + $0x100] sm:$0xff]
  %v85 = vld [vmem:[%s2 + $0x108] sm:$0xff]
  %v86 = vld [vmem:[%s2 + $0x110] sm:$0xff]
  %v87 = vld [vmem:[%s2 + $0x118] sm:$0xff]
  %v88 = vld [vmem:[%s2 + $0x120] sm:$0xff]
  %v89 = vld [vmem:[%s2 + $0x128] sm:$0xff]
  %v90 = vld [vmem:[%s2 + $0x130] sm:$0xff]
  %v91 = vld [vmem:[%s2 + $0x138] sm:$0xff]
  %v92 = vld [vmem:[%s2 + $0x140] sm:$0xff]
  %v93 = vld [vmem:[%s2 + $0x148] sm:$0xff]
  %v94 = vld [vmem:[%s2 + $0x150] sm:$0xff]
  %v95 = vld [vmem:[%s2 + $0x158] sm:$0xff]
  %v96 = vld [vmem:[%s2 + $0x160] sm:$0xff]
  %v97 = vld [vmem:[%s2 + $0x168] sm:$0xff]
  %v98 = vld [vmem:[%s2 + $0x170] sm:$0xff]
  %v99 = vld [vmem:[%s2 + $0x178] sm:$0xff]
  %v100 = vld [vmem:[%s2 + $0x180] sm:$0xff]
  %v101 = vld [vmem:[%s2 + $0x188] sm:$0xff]
  %v102 = vld [vmem:[%s2 + $0x190] sm:$0xff]
  %v103 = vld [vmem:[%s2 + $0x198] sm:$0xff]
  %v104 = vld [vmem:[%s2 + $0x1a0] sm:$0xff]
  %v105 = vld [vmem:[%s2 + $0x1a8] sm:$0xff]
  %v106 = vld [vmem:[%s2 + $0x1b0] sm:$0xff]
  %v107 = vld [vmem:[%s2 + $0x1b8] sm:$0xff]
  %v108 = vld [vmem:[%s2 + $0x1c0] sm:$0xff]
  %v109 = vld [vmem:[%s2 + $0x1c8] sm:$0xff]
  %v110 = vld [vmem:[%s2 + $0x1d0] sm:$0xff]
  %v111 = vld [vmem:[%s2 + $0x1d8] sm:$0xff]
  %v112 = vld [vmem:[%s2 + $0x1e0] sm:$0xff]
  %v113 = vld [vmem:[%s2 + $0x1e8] sm:$0xff]
  %v114 = vld [vmem:[%s2 + $0x1f0] sm:$0xff]
  %v115 = vld [vmem:[%s2 + $0x1f8] sm:$0xff]
  %v116 = vld [vmem:[%s2 + $0x200] sm:$0xff]
  %v117 = vld [vmem:[%s2 + $0x208] sm:$0xff]
  %v118 = vld [vmem:[%s2 + $0x210] sm:$0xff]
  %v119 = vld [vmem:[%s2 + $0x218] sm:$0xff]
  %v120 = vld [vmem:[%s2 + $0x220] sm:$0xff]
  %v121 = vld [vmem:[%s2 + $0x228] sm:$0xff]
  %v122 = vld [vmem:[%s2 + $0x230] sm:$0xff]
  %v123 = vld [vmem:[%s2 + $0x238] sm:$0xff]
  %v124 = vld [vmem:[%s2 + $0x240] sm:$0xff]
  %v125 = vld [vmem:[%s2 + $0x248] sm:$0xff]
  %v126 = vld [vmem:[%s2 + $0x250] sm:$0xff]
  %v127 = vld [vmem:[%s2 + $0x258] sm:$0xff]
  %v128 = vld [vmem:[%s2 + $0x260] sm:$0xff]
  %v129 = vld [vmem:[%s2 + $0x268] sm:$0xff]
  %v130 = vld [vmem:[%s2 + $0x270] sm:$0xff]
  %v131 = vld [vmem:[%s2 + $0x278] sm:$0xff]
  %v132 = vld [vmem:[%s2 + $0x280] sm:$0xff]
  %v133 = vld [vmem:[%s2 + $0x288] sm:$0xff]
  %v134 = vld [vmem:[%s2 + $0x290] sm:$0xff]
  %v135 = vld [vmem:[%s2 + $0x298] sm:$0xff]
  %v136 = vld [vmem:[%s2 + $0x2a0] sm:$0xff]
  %v137 = vld [vmem:[%s2 + $0x2a8] sm:$0xff]
  %v138 = vld [vmem:[%s2 + $0x2b0] sm:$0xff]
  %v139 = vld [vmem:[%s2 + $0x2b8] sm:$0xff]
  %v140 = vld [vmem:[%s2 + $0x2c0] sm:$0xff]
  %v141 = vld [vmem:[%s2 + $0x2c8] sm:$0xff]
  %v142 = vld [vmem:[%s2 + $0x2d0] sm:$0xff]
  %v143 = vld [vmem:[%s2 + $0x2d8] sm:$0xff]
  %v144 = vld [vmem:[%s2 + $0x2e0] sm:$0xff]
  %v145 = vld [vmem:[%s2 + $0x2e8] sm:$0xff]
  %v146 = vld [vmem:[%s2 + $0x2f0] sm:$0xff]
  %v147 = vld [vmem:[%s2 + $0x2f8] sm:$0xff]
  %v148 = vld [vmem:[%s2 + $0x300] sm:$0xff]
  %v149 = vld [vmem:[%s2 + $0x308] sm:$0xff]
  %v150 = vld [vmem:[%s2 + $0x310] sm:$0xff]
  %v151 = vld [vmem:[%s2 + $0x318] sm:$0xff]
  %v152 = vld [vmem:[%s2 + $0x320] sm:$0xff]
  %v153 = vld [vmem:[%s2 + $0x328] sm:$0xff]
  %v154 = vld [vmem:[%s2 + $0x330] sm:$0xff]
  %v155 = vld [vmem:[%s2 + $0x338] sm:$0xff]
  %v156 = vld [vmem:[%s2 + $0x340] sm:$0xff]
  %v157 = vld [vmem:[%s2 + $0x348] sm:$0xff]
  %v158 = vld [vmem:[%s2 + $0x350] sm:$0xff]
  %v159 = vld [vmem:[%s2 + $0x358] sm:$0xff]
  %v160 = vld [vmem:[%s2 + $0x360] sm:$0xff]
  %v161 = vld [vmem:[%s2 + $0x368] sm:$0xff]
  %v162 = vld [vmem:[%s2 + $0x370] sm:$0xff]
  %v163 = vld [vmem:[%s2 + $0x378] sm:$0xff]
  %v164 = vld [vmem:[%s2 + $0x380] sm:$0xff]
  %v165 = vld [vmem:[%s2 + $0x388] sm:$0xff]
  %v166 = vld [vmem:[%s2 + $0x390] sm:$0xff]
  %v167 = vld [vmem:[%s2 + $0x398] sm:$0xff]
  %v168 = vld [vmem:[%s2 + $0x3a0] sm:$0xff]
  %v169 = vld [vmem:[%s2 + $0x3a8] sm:$0xff]
  %v170 = vld [vmem:[%s2 + $0x3b0] sm:$0xff]
  %v171 = vld [vmem:[%s2 + $0x3b8] sm:$0xff]
  %v172 = vld [vmem:[%s2 + $0x3c0] sm:$0xff]
  %v173 = vld [vmem:[%s2 + $0x3c8] sm:$0xff]
  %v174 = vld [vmem:[%s2 + $0x3d0] sm:$0xff]
  %v175 = vld [vmem:[%s2 + $0x3d8] sm:$0xff]
  %v176 = vld [vmem:[%s2 + $0x3e0] sm:$0xff]
  %v177 = vld [vmem:[%s2 + $0x3e8] sm:$0xff]
  %v178 = vld [vmem:[%s2 + $0x3f0] sm:$0xff]
  %v179 = vld [vmem:[%s2 + $0x3f8] sm:$0xff]
  %v180 = vld [vmem:[%s2 + $0x400] sm:$0xff]
  %v181 = vld [vmem:[%s2 + $0x408] sm:$0xff]
  %v182 = vld [vmem:[%s2 + $0x410] sm:$0xff]
  %v183 = vld [vmem:[%s2 + $0x418] sm:$0xff]
  %v184 = vld [vmem:[%s2 + $0x420] sm:$0xff]
  %v185 = vld [vmem:[%s2 + $0x428] sm:$0xff]
  %v186 = vld [vmem:[%s2 + $0x430] sm:$0xff]
  %v187 = vld [vmem:[%s2 + $0x438] sm:$0xff]
  %v188 = vld [vmem:[%s2 + $0x440] sm:$0xff]
  %v189 = vld [vmem:[%s2 + $0x448] sm:$0xff]
  %v190 = vld [vmem:[%s2 + $0x450] sm:$0xff]
  %v191 = vld [vmem:[%s2 + $0x458] sm:$0xff]
  %v192 = vld [vmem:[%s2 + $0x460] sm:$0xff]
  %v193 = vld [vmem:[%s2 + $0x468] sm:$0xff]
  %v194 = vld [vmem:[%s2 + $0x470] sm:$0xff]
  %v195 = vld [vmem:[%s2 + $0x478] sm:$0xff]
  %v196 = vld [vmem:[%s2 + $0x480] sm:$0xff]
  %v197 = vld [vmem:[%s2 + $0x488] sm:$0xff]
  %v198 = vld [vmem:[%s2 + $0x490] sm:$0xff]
  %v199 = vld [vmem:[%s2 + $0x498] sm:$0xff]
  %v200 = vld [vmem:[%s2 + $0x4a0] sm:$0xff]
  %v201 = vld [vmem:[%s2 + $0x4a8] sm:$0xff]
  %v202 = vld [vmem:[%s2 + $0x4b0] sm:$0xff]
  %v203 = vld [vmem:[%s2 + $0x4b8] sm:$0xff]
  %v204 = vld [vmem:[%s2 + $0x4c0] sm:$0xff]
  %v205 = vld [vmem:[%s2 + $0x4c8] sm:$0xff]
  %v206 = vld [vmem:[%s2 + $0x4d0] sm:$0xff]
  %v207 = vld [vmem:[%s2 + $0x4d8] sm:$0xff]
  %v208 = vld [vmem:[%s2 + $0x4e0] sm:$0xff]
  %v209 = vld [vmem:[%s2 + $0x4e8] sm:$0xff]
  %v210 = vld [vmem:[%s2 + $0x4f0] sm:$0xff]
  %v211 = vld [vmem:[%s2 + $0x4f8] sm:$0xff]
  %v212 = vld [vmem:[%s2 + $0x500] sm:$0xff]
  %v213 = vld [vmem:[%s2 + $0x508] sm:$0xff]
  %v214 = vld [vmem:[%s2 + $0x510] sm:$0xff]
  %v215 = vld [vmem:[%s2 + $0x518] sm:$0xff]
  %v216 = vld [vmem:[%s2 + $0x520] sm:$0xff]
  %v217 = vld [vmem:[%s2 + $0x528] sm:$0xff]
  %v218 = vld [vmem:[%s2 + $0x530] sm:$0xff]
  %v219 = vld [vmem:[%s2 + $0x538] sm:$0xff]
  %v220 = vld [vmem:[%s2 + $0x540] sm:$0xff]
  %v221 = vld [vmem:[%s2 + $0x548] sm:$0xff]
  %v222 = vld [vmem:[%s2 + $0x550] sm:$0xff]
  %v223 = vld [vmem:[%s2 + $0x558] sm:$0xff]
  %v224 = vld [vmem:[%s2 + $0x560] sm:$0xff]
  %v225 = vld [vmem:[%s2 + $0x568] sm:$0xff]
  %v226 = vld [vmem:[%s2 + $0x570] sm:$0xff]
  %v227 = vld [vmem:[%s2 + $0x578] sm:$0xff]
  %v228 = vld [vmem:[%s2 + $0x580] sm:$0xff]
  %v229 = vld [vmem:[%s2 + $0x588] sm:$0xff]
  %v230 = vld [vmem:[%s2 + $0x590] sm:$0xff]
  %v231 = vld [vmem:[%s2 + $0x598] sm:$0xff]
  %v232 = vld [vmem:[%s2 + $0x5a0] sm:$0xff]
  %v233 = vld [vmem:[%s2 + $0x5a8] sm:$0xff]
  %v234 = vld [vmem:[%s2 + $0x5b0] sm:$0xff]
  %v235 = vld [vmem:[%s2 + $0x5b8] sm:$0xff]
  %v236 = vld [vmem:[%s2 + $0x5c0] sm:$0xff]
  %v237 = vld [vmem:[%s2 + $0x5c8] sm:$0xff]
  %v238 = vld [vmem:[%s2 + $0x5d0] sm:$0xff]
  %v239 = vld [vmem:[%s2 + $0x5d8] sm:$0xff]
  %v240 = vld [vmem:[%s2 + $0x5e0] sm:$0xff]
  %v241 = vld [vmem:[%s2 + $0x5e8] sm:$0xff]
  %v242 = vld [vmem:[%s2 + $0x5f0] sm:$0xff]
  %v243 = vld [vmem:[%s2 + $0x5f8] sm:$0xff]
  %v244 = vld [vmem:[%s2 + $0x600] sm:$0xff]
  %v245 = vld [vmem:[%s2 + $0x608] sm:$0xff]
  %v246 = vld [vmem:[%s2 + $0x610] sm:$0xff]
  %v247 = vld [vmem:[%s2 + $0x618] sm:$0xff]
  %v248 = vld [vmem:[%s2 + $0x620] sm:$0xff]
  %v249 = vld [vmem:[%s2 + $0x628] sm:$0xff]
  %v250 = vld [vmem:[%s2 + $0x630] sm:$0xff]
  %v251 = vld [vmem:[%s2 + $0x638] sm:$0xff]
  %v252 = vld [vmem:[%s2 + $0x640] sm:$0xff]
  %v253 = vld [vmem:[%s2 + $0x648] sm:$0xff]
  %v254 = vld [vmem:[%s2 + $0x650] sm:$0xff]
  %v255 = vld [vmem:[%s2 + $0x658] sm:$0xff]
  %v256 = vld [vmem:[%s2 + $0x660] sm:$0xff]
  %v257 = vld [vmem:[%s2 + $0x668] sm:$0xff]
  %v258 = vld [vmem:[%s2 + $0x670] sm:$0xff]
  %v259 = vld [vmem:[%s2 + $0x678] sm:$0xff]
  %v260 = vld [vmem:[%s2 + $0x680] sm:$0xff]
  %v261 = vld [vmem:[%s2 + $0x688] sm:$0xff]
  %v262 = vld [vmem:[%s2 + $0x690] sm:$0xff]
  %v263 = vld [vmem:[%s2 + $0x698] sm:$0xff]
  %v264 = vld [vmem:[%s2 + $0x6a0] sm:$0xff]
  %v265 = vld [vmem:[%s2 + $0x6a8] sm:$0xff]
  %v266 = vld [vmem:[%s2 + $0x6b0] sm:$0xff]
  %v267 = vld [vmem:[%s2 + $0x6b8] sm:$0xff]
  %v268 = vld [vmem:[%s2 + $0x6c0] sm:$0xff]
  %v269 = vld [vmem:[%s2 + $0x6c8] sm:$0xff]
  %v270 = vld [vmem:[%s2 + $0x6d0] sm:$0xff]
  %v271 = vld [vmem:[%s2 + $0x6d8] sm:$0xff]
  %v272 = vld [vmem:[%s2 + $0x6e0] sm:$0xff]
  %v273 = vld [vmem:[%s2 + $0x6e8] sm:$0xff]
  %v274 = vld [vmem:[%s2 + $0x6f0] sm:$0xff]
  %v275 = vld [vmem:[%s2 + $0x6f8] sm:$0xff]
  %v276 = vld [vmem:[%s2 + $0x700] sm:$0xff]
  %v277 = vld [vmem:[%s2 + $0x708] sm:$0xff]
  %v278 = vld [vmem:[%s2 + $0x710] sm:$0xff]
  %v279 = vld [vmem:[%s2 + $0x718] sm:$0xff]
  %v280 = vld [vmem:[%s2 + $0x720] sm:$0xff]
  %v281 = vld [vmem:[%s2 + $0x728] sm:$0xff]
  %v282 = vld [vmem:[%s2 + $0x730] sm:$0xff]
  %v283 = vld [vmem:[%s2 + $0x738] sm:$0xff]
  %v284 = vld [vmem:[%s2 + $0x740] sm:$0xff]
  %v285 = vld [vmem:[%s2 + $0x748] sm:$0xff]
  %v286 = vld [vmem:[%s2 + $0x750] sm:$0xff]
  %v287 = vld [vmem:[%s2 + $0x758] sm:$0xff]
  %v288 = vld [vmem:[%s2 + $0x760] sm:$0xff]
  %v289 = vld [vmem:[%s2 + $0x768] sm:$0xff]
  %v290 = vld [vmem:[%s2 + $0x770] sm:$0xff]
  %v291 = vld [vmem:[%s2 + $0x778] sm:$0xff]
  %v292 = vld [vmem:[%s2 + $0x780] sm:$0xff]
  %v293 = vld [vmem:[%s2 + $0x788] sm:$0xff]
  %v294 = vld [vmem:[%s2 + $0x790] sm:$0xff]
  %v295 = vld [vmem:[%s2 + $0x798] sm:$0xff]
  %v296 = vld [vmem:[%s2 + $0x7a0] sm:$0xff]
  %v297 = vld [vmem:[%s2 + $0x7a8] sm:$0xff]
  %v298 = vld [vmem:[%s2 + $0x7b0] sm:$0xff]
  %v299 = vld [vmem:[%s2 + $0x7b8] sm:$0xff]
  %v300 = vld [vmem:[%s2 + $0x7c0] sm:$0xff]
  %v301 = vld [vmem:[%s2 + $0x7c8] sm:$0xff]
  %v302 = vld [vmem:[%s2 + $0x7d0] sm:$0xff]
  %v303 = vld [vmem:[%s2 + $0x7d8] sm:$0xff]
  %v304 = vld [vmem:[%s2 + $0x7e0] sm:$0xff]
  %v305 = vld [vmem:[%s2 + $0x7e8] sm:$0xff]
  %v306 = vld [vmem:[%s2 + $0x7f0] sm:$0xff]
  %v307 = vld [vmem:[%s2 + $0x7f8] sm:$0xff]
  %v308 = vld [vmem:[%s2 + $0x800] sm:$0xff]
  %v309 = vld [vmem:[%s2 + $0x808] sm:$0xff]
  %v310 = vld [vmem:[%s2 + $0x810] sm:$0xff]
  %v311 = vld [vmem:[%s2 + $0x818] sm:$0xff]
  %v312 = vld [vmem:[%s2 + $0x820] sm:$0xff]
  %v313 = vld [vmem:[%s2 + $0x828] sm:$0xff]
  %v314 = vld [vmem:[%s2 + $0x830] sm:$0xff]
  %v315 = vld [vmem:[%s2 + $0x838] sm:$0xff]
  %v316 = vld [vmem:[%s2 + $0x840] sm:$0xff]
  %v317 = vld [vmem:[%s2 + $0x848] sm:$0xff]
  %v318 = vld [vmem:[%s2 + $0x850] sm:$0xff]
  %v319 = vld [vmem:[%s2 + $0x858] sm:$0xff]
  %v320 = vld [vmem:[%s2 + $0x860] sm:$0xff]
  %v321 = vld [vmem:[%s2 + $0x868] sm:$0xff]
  %v322 = vld [vmem:[%s2 + $0x870] sm:$0xff]
  %v323 = vld [vmem:[%s2 + $0x878] sm:$0xff]
  %v324 = vld [vmem:[%s2 + $0x880] sm:$0xff]
  %v325 = vld [vmem:[%s2 + $0x888] sm:$0xff]
  %v326 = vld [vmem:[%s2 + $0x890] sm:$0xff]
  %v327 = vld [vmem:[%s2 + $0x898] sm:$0xff]
  %v328 = vld [vmem:[%s2 + $0x8a0] sm:$0xff]
  %v329 = vld [vmem:[%s2 + $0x8a8] sm:$0xff]
  %v330 = vld [vmem:[%s2 + $0x8b0] sm:$0xff]
  %v331 = vld [vmem:[%s2 + $0x8b8] sm:$0xff]
  %v332 = vld [vmem:[%s2 + $0x8c0] sm:$0xff]
  %v333 = vld [vmem:[%s2 + $0x8c8] sm:$0xff]
  %v334 = vld [vmem:[%s2 + $0x8d0] sm:$0xff]
  %v335 = vld [vmem:[%s2 + $0x8d8] sm:$0xff]
  %v336 = vld [vmem:[%s2 + $0x8e0] sm:$0xff]
  %v337 = vld [vmem:[%s2 + $0x8e8] sm:$0xff]
  %v338 = vld [vmem:[%s2 + $0x8f0] sm:$0xff]
  %v339 = vld [vmem:[%s2 + $0x8f8] sm:$0xff]
  %v340 = vld [vmem:[%s2 + $0x900] sm:$0xff]
  %v341 = vld [vmem:[%s2 + $0x908] sm:$0xff]
  %v342 = vld [vmem:[%s2 + $0x910] sm:$0xff]
  %v343 = vld [vmem:[%s2 + $0x918] sm:$0xff]
  %v344 = vld [vmem:[%s2 + $0x920] sm:$0xff]
  %v345 = vld [vmem:[%s2 + $0x928] sm:$0xff]
  %v346 = vld [vmem:[%s2 + $0x930] sm:$0xff]
  %v347 = vld [vmem:[%s2 + $0x938] sm:$0xff]
  %v348 = vld [vmem:[%s2 + $0x940] sm:$0xff]
  %v349 = vld [vmem:[%s2 + $0x948] sm:$0xff]
  %v350 = vld [vmem:[%s2 + $0x950] sm:$0xff]
  %v351 = vld [vmem:[%s2 + $0x958] sm:$0xff]
  %v352 = vld [vmem:[%s2 + $0x960] sm:$0xff]
  %v353 = vld [vmem:[%s2 + $0x968] sm:$0xff]
  %v354 = vld [vmem:[%s2 + $0x970] sm:$0xff]
  %v355 = vld [vmem:[%s2 + $0x978] sm:$0xff]
  %v356 = vld [vmem:[%s2 + $0x980] sm:$0xff]
  %v357 = vld [vmem:[%s2 + $0x988] sm:$0xff]
  %v358 = vld [vmem:[%s2 + $0x990] sm:$0xff]
  %v359 = vld [vmem:[%s2 + $0x998] sm:$0xff]
  %v360 = vld [vmem:[%s2 + $0x9a0] sm:$0xff]
  %v361 = vld [vmem:[%s2 + $0x9a8] sm:$0xff]
  %v362 = vld [vmem:[%s2 + $0x9b0] sm:$0xff]
  %v363 = vld [vmem:[%s2 + $0x9b8] sm:$0xff]
  %v364 = vld [vmem:[%s2 + $0x9c0] sm:$0xff]
  %v365 = vld [vmem:[%s2 + $0x9c8] sm:$0xff]
  %v366 = vld [vmem:[%s2 + $0x9d0] sm:$0xff]
  %v367 = vld [vmem:[%s2 + $0x9d8] sm:$0xff]
  %v368 = vld [vmem:[%s2 + $0x9e0] sm:$0xff]
  %v369 = vld [vmem:[%s2 + $0x9e8] sm:$0xff]
  %v370 = vld [vmem:[%s2 + $0x9f0] sm:$0xff]
  %v371 = vld [vmem:[%s2 + $0x9f8] sm:$0xff]
  %v372 = vld [vmem:[%s2 + $0xa00] sm:$0xff]
  %v373 = vld [vmem:[%s2 + $0xa08] sm:$0xff]
  %v374 = vld [vmem:[%s2 + $0xa10] sm:$0xff]
  %v375 = vld [vmem:[%s2 + $0xa18] sm:$0xff]
  %v376 = vld [vmem:[%s2 + $0xa20] sm:$0xff]
  %v377 = vld [vmem:[%s2 + $0xa28] sm:$0xff]
  %v378 = vld [vmem:[%s2 + $0xa30] sm:$0xff]
  %v379 = vld [vmem:[%s2 + $0xa38] sm:$0xff]
  %v380 = vld [vmem:[%s2 + $0xa40] sm:$0xff]
  %v381 = vld [vmem:[%s2 + $0xa48] sm:$0xff]
  %v382 = vld [vmem:[%s2 + $0xa50] sm:$0xff]
  %v383 = vld [vmem:[%s2 + $0xa58] sm:$0xff]
  %v384 = vld [vmem:[%s2 + $0xa60] sm:$0xff]
  %v385 = vld [vmem:[%s2 + $0xa68] sm:$0xff]
  %v386 = vld [vmem:[%s2 + $0xa70] sm:$0xff]
  %v387 = vld [vmem:[%s2 + $0xa78] sm:$0xff]
  %v388 = vld [vmem:[%s2 + $0xa80] sm:$0xff]
  %v389 = vld [vmem:[%s2 + $0xa88] sm:$0xff]
  %v390 = vld [vmem:[%s2 + $0xa90] sm:$0xff]
  %v391 = vld [vmem:[%s2 + $0xa98] sm:$0xff]
  %v392 = vld [vmem:[%s2 + $0xaa0] sm:$0xff]
  %v393 = vld [vmem:[%s2 + $0xaa8] sm:$0xff]
  %v394 = vld [vmem:[%s2 + $0xab0] sm:$0xff]
  %v395 = vld [vmem:[%s2 + $0xab8] sm:$0xff]
  %v396 = vld [vmem:[%s2 + $0xac0] sm:$0xff]
  %v397 = vld [vmem:[%s2 + $0xac8] sm:$0xff]
  %v398 = vld [vmem:[%s2 + $0xad0] sm:$0xff]
  %v399 = vld [vmem:[%s2 + $0xad8] sm:$0xff]
  %v400 = vld [vmem:[%s2 + $0xae0] sm:$0xff]
  %v401 = vld [vmem:[%s2 + $0xae8] sm:$0xff]
  %v402 = vld [vmem:[%s2 + $0xaf0] sm:$0xff]
  %v403 = vld [vmem:[%s2 + $0xaf8] sm:$0xff]
  %v404 = vld [vmem:[%s2 + $0xb00] sm:$0xff]
  %v405 = vld [vmem:[%s2 + $0xb08] sm:$0xff]
  %v406 = vld [vmem:[%s2 + $0xb10] sm:$0xff]
  %v407 = vld [vmem:[%s2 + $0xb18] sm:$0xff]
  %v408 = vld [vmem:[%s2 + $0xb20] sm:$0xff]
  %v409 = vld [vmem:[%s2 + $0xb28] sm:$0xff]
  %v410 = vld [vmem:[%s2 + $0xb30] sm:$0xff]
  %v411 = vld [vmem:[%s2 + $0xb38] sm:$0xff]
  %v412 = vld [vmem:[%s2 + $0xb40] sm:$0xff]
  %v413 = vld [vmem:[%s2 + $0xb48] sm:$0xff]
  %v414 = vld [vmem:[%s2 + $0xb50] sm:$0xff]
  %v415 = vld [vmem:[%s2 + $0xb58] sm:$0xff]
  %v416 = vld [vmem:[%s2 + $0xb60] sm:$0xff]
  %v417 = vld [vmem:[%s2 + $0xb68] sm:$0xff]
  %v418 = vld [vmem:[%s2 + $0xb70] sm:$0xff]
  %v419 = vld [vmem:[%s2 + $0xb78] sm:$0xff]
  %v420 = vld [vmem:[%s2 + $0xb80] sm:$0xff]
  %v421 = vld [vmem:[%s2 + $0xb88] sm:$0xff]
  %v422 = vld [vmem:[%s2 + $0xb90] sm:$0xff]
  %v423 = vld [vmem:[%s2 + $0xb98] sm:$0xff]
  %v424 = vld [vmem:[%s2 + $0xba0] sm:$0xff]
  %v425 = vld [vmem:[%s2 + $0xba8] sm:$0xff]
  %v426 = vld [vmem:[%s2 + $0xbb0] sm:$0xff]
  %v427 = vld [vmem:[%s2 + $0xbb8] sm:$0xff]
  %v428 = vld [vmem:[%s2 + $0xbc0] sm:$0xff]
  %v429 = vld [vmem:[%s2 + $0xbc8] sm:$0xff]
  %v430 = vld [vmem:[%s2 + $0xbd0] sm:$0xff]
  %v431 = vld [vmem:[%s2 + $0xbd8] sm:$0xff]
  %v432 = vld [vmem:[%s2 + $0xbe0] sm:$0xff]
  %v433 = vld [vmem:[%s2 + $0xbe8] sm:$0xff]
  %v434 = vld [vmem:[%s2 + $0xbf0] sm:$0xff]
  %v435 = vld [vmem:[%s2 + $0xbf8] sm:$0xff]
  %v436 = vld [vmem:[%s3] sm:$0x7]
  %v438 = vlaneseq
  %v439 = vshrl.u32 %v438, 7
  %v440 = vsub.s32 0, %v439
  %v441 = vrot.slane %v436, %v440
  %v442 = vlaneseq
  %v443 = vshrl.u32 %v442, 7
  %v444 = vsub.s32 1, %v443
  %v445 = vrot.slane %v436, %v444
  %v446 = vlaneseq
  %v447 = vshrl.u32 %v446, 7
  %v448 = vsub.s32 2, %v447
  %v449 = vrot.slane %v436, %v448
  %v455 = vcombine.high %v50, %v50
  %v457 = vunpack.c.l.s4 1983009808
  %v458 = vunpack.c.0.s8 %v457
  %v459 = vlaneseq
  %v460 = vshrl.u32 %v459, 7
  %v461 = vsub.s32 %v458, %v460
  %v462 = vrot.slane %v50, %v461
  %v464 = vunpack.c.l.s4 1983009808
  %v465 = vunpack.c.0.s8 %v464
  %v466 = vlaneseq
  %v467 = vshrl.u32 %v466, 7
  %v468 = vsub.s32 %v465, %v467
  %v469 = vrot.slane %v455, %v468
  %v470 = vcombine.high %v462, %v462
  %v471 = vcombine.high %v469, %v469
  %v472 = vcombine.high %v51, %v51
  %v474 = vunpack.c.l.s4 1983009808
  %v475 = vunpack.c.0.s8 %v474
  %v476 = vlaneseq
  %v477 = vshrl.u32 %v476, 7
  %v478 = vsub.s32 %v475, %v477
  %v479 = vrot.slane %v51, %v478
  %v481 = vunpack.c.l.s4 1983009808
  %v482 = vunpack.c.0.s8 %v481
  %v483 = vlaneseq
  %v484 = vshrl.u32 %v483, 7
  %v485 = vsub.s32 %v482, %v484
  %v486 = vrot.slane %v472, %v485
  %v487 = vcombine.high %v479, %v479
  %v488 = vcombine.high %v486, %v486
  %497 = vmatprep.subr.mxu0 %v53
  %498 = vmatpush1.msra.mxu0 %v52
  %499 = vmatprep.subr.mxu0 %v56
  %500 = vmatpush1.msra.mxu0 %v55
  %501 = vmatprep.subr.mxu0 %v59
  %502 = vmatpush1.msra.mxu0 %v58
  %503 = vmatprep.subr.mxu0 %v62
  %504 = vmatpush1.msra.mxu0 %v61
  %505 = vmatprep.subr.mxu0 %v65
  %506 = vmatpush1.msra.mxu0 %v64
  %507 = vmatprep.subr.mxu0 %v68
  %508 = vmatpush1.msra.mxu0 %v67
  %509 = vmatprep.subr.mxu0 %v71
  %510 = vmatpush1.msra.mxu0 %v70
  %511 = vmatprep.subr.mxu0 %v74
  %512 = vmatpush1.msra.mxu0 %v73
  %513 = vmatprep.subr.mxu0 %v77
  %514 = vmatpush1.msra.mxu0 %v76
  %515 = vmatprep.subr.mxu0 %v80
  %516 = vmatpush1.msra.mxu0 %v79
  %517 = vmatprep.subr.mxu0 %v83
  %518 = vmatpush1.msra.mxu0 %v82
  %519 = vmatprep.subr.mxu0 %v86
  %520 = vmatpush1.msra.mxu0 %v85
  %521 = vmatprep.subr.mxu0 %v89
  %522 = vmatpush1.msra.mxu0 %v88
  %523 = vmatprep.subr.mxu0 %v92
  %524 = vmatpush1.msra.mxu0 %v91
  %525 = vmatprep.subr.mxu0 %v95
  %526 = vmatpush1.msra.mxu0 %v94
  %527 = vmatprep.subr.mxu0 %v98
  %528 = vmatpush1.msra.mxu0 %v97
  %529 = vmatprep.subr.mxu0 %v101
  %530 = vmatpush1.msra.mxu0 %v100
  %531 = vmatprep.subr.mxu0 %v104
  %532 = vmatpush1.msra.mxu0 %v103
  %533 = vmatprep.subr.mxu0 %v107
  %534 = vmatpush1.msra.mxu0 %v106
  %535 = vmatprep.subr.mxu0 %v110
  %536 = vmatpush1.msra.mxu0 %v109
  %537 = vmatprep.subr.mxu0 %v113
  %538 = vmatpush1.msra.mxu0 %v112
  %539 = vmatprep.subr.mxu0 %v116
  %540 = vmatpush1.msra.mxu0 %v115
  %541 = vmatprep.subr.mxu0 %v119
  %542 = vmatpush1.msra.mxu0 %v118
  %543 = vmatprep.subr.mxu0 %v122
  %544 = vmatpush1.msra.mxu0 %v121
  %545 = vmatprep.subr.mxu0 %v125
  %546 = vmatpush1.msra.mxu0 %v124
  %547 = vmatprep.subr.mxu0 %v128
  %548 = vmatpush1.msra.mxu0 %v127
  %549 = vmatprep.subr.mxu0 %v131
  %550 = vmatpush1.msra.mxu0 %v130
  %551 = vmatprep.subr.mxu0 %v134
  %552 = vmatpush1.msra.mxu0 %v133
  %553 = vmatprep.subr.mxu0 %v137
  %554 = vmatpush1.msra.mxu0 %v136
  %555 = vmatprep.subr.mxu0 %v140
  %556 = vmatpush1.msra.mxu0 %v139
  %557 = vmatprep.subr.mxu0 %v143
  %558 = vmatpush1.msra.mxu0 %v142
  %559 = vmatprep.subr.mxu0 %v146
  %560 = vmatpush1.msra.mxu0 %v145
  %561 = vmatprep.mubr.f32.mxu0 %v470
  %562 = vmatmul.mubr.f32.gmra.mrb[0].mxu0 %v462
  %v563 = vpop.f32.mrb[0].mxu0
  %v564 = vadd.f32 %v441, %v563
  %v565 = vpop.f32.mrb[0].mxu0
  %v566 = vadd.f32 %v445, %v565
  %567 = vdwg.mxu0
  %568 = vmatprep.subr.mxu0 %v149
  %569 = vmatpush1.msra.mxu0 %v148
  %570 = vmatprep.subr.mxu0 %v152
  %571 = vmatpush1.msra.mxu0 %v151
  %572 = vmatprep.subr.mxu0 %v155
  %573 = vmatpush1.msra.mxu0 %v154
  %574 = vmatprep.subr.mxu0 %v158
  %575 = vmatpush1.msra.mxu0 %v157
  %576 = vmatprep.subr.mxu0 %v161
  %577 = vmatpush1.msra.mxu0 %v160
  %578 = vmatprep.subr.mxu0 %v164
  %579 = vmatpush1.msra.mxu0 %v163
  %580 = vmatprep.subr.mxu0 %v167
  %581 = vmatpush1.msra.mxu0 %v166
  %582 = vmatprep.subr.mxu0 %v170
  %583 = vmatpush1.msra.mxu0 %v169
  %584 = vmatprep.subr.mxu0 %v173
  %585 = vmatpush1.msra.mxu0 %v172
  %586 = vmatprep.subr.mxu0 %v176
  %587 = vmatpush1.msra.mxu0 %v175
  %588 = vmatprep.subr.mxu0 %v179
  %589 = vmatpush1.msra.mxu0 %v178
  %590 = vmatprep.subr.mxu0 %v182
  %591 = vmatpush1.msra.mxu0 %v181
  %592 = vmatprep.subr.mxu0 %v185
  %593 = vmatpush1.msra.mxu0 %v184
  %594 = vmatprep.subr.mxu0 %v188
  %595 = vmatpush1.msra.mxu0 %v187
  %596 = vmatprep.subr.mxu0 %v191
  %597 = vmatpush1.msra.mxu0 %v190
  %598 = vmatprep.subr.mxu0 %v194
  %599 = vmatpush1.msra.mxu0 %v193
  %600 = vmatprep.subr.mxu0 %v197
  %601 = vmatpush1.msra.mxu0 %v196
  %602 = vmatprep.subr.mxu0 %v200
  %603 = vmatpush1.msra.mxu0 %v199
  %604 = vmatprep.subr.mxu0 %v203
  %605 = vmatpush1.msra.mxu0 %v202
  %606 = vmatprep.subr.mxu0 %v206
  %607 = vmatpush1.msra.mxu0 %v205
  %608 = vmatprep.subr.mxu0 %v209
  %609 = vmatpush1.msra.mxu0 %v208
  %610 = vmatprep.subr.mxu0 %v212
  %611 = vmatpush1.msra.mxu0 %v211
  %612 = vmatprep.subr.mxu0 %v215
  %613 = vmatpush1.msra.mxu0 %v214
  %614 = vmatprep.subr.mxu0 %v218
  %615 = vmatpush1.msra.mxu0 %v217
  %616 = vmatprep.subr.mxu0 %v221
  %617 = vmatpush1.msra.mxu0 %v220
  %618 = vmatprep.subr.mxu0 %v224
  %619 = vmatpush1.msra.mxu0 %v223
  %620 = vmatprep.subr.mxu0 %v227
  %621 = vmatpush1.msra.mxu0 %v226
  %622 = vmatprep.subr.mxu0 %v230
  %623 = vmatpush1.msra.mxu0 %v229
  %624 = vmatprep.subr.mxu0 %v233
  %625 = vmatpush1.msra.mxu0 %v232
  %626 = vmatprep.subr.mxu0 %v236
  %627 = vmatpush1.msra.mxu0 %v235
  %628 = vmatprep.subr.mxu0 %v239
  %629 = vmatpush1.msra.mxu0 %v238
  %630 = vmatprep.subr.mxu0 %v242
  %631 = vmatpush1.msra.mxu0 %v241
  %632 = vmatprep.mubr.f32.mxu0 %v471
  %633 = vmatmul.mubr.f32.gmra.mrb[0].mxu0 %v469
  %v634 = vpop.f32.mrb[0].mxu0
  %v635 = vadd.f32 %v564, %v634
  %v636 = vpop.f32.mrb[0].mxu0
  %v637 = vadd.f32 %v566, %v636
  %638 = vdwg.mxu0
  %639 = vmatprep.subr.mxu0 %v245
  %640 = vmatpush1.msra.mxu0 %v244
  %641 = vmatprep.subr.mxu0 %v248
  %642 = vmatpush1.msra.mxu0 %v247
  %643 = vmatprep.subr.mxu0 %v251
  %644 = vmatpush1.msra.mxu0 %v250
  %645 = vmatprep.subr.mxu0 %v254
  %646 = vmatpush1.msra.mxu0 %v253
  %647 = vmatprep.subr.mxu0 %v257
  %648 = vmatpush1.msra.mxu0 %v256
  %649 = vmatprep.subr.mxu0 %v260
  %650 = vmatpush1.msra.mxu0 %v259
  %651 = vmatprep.subr.mxu0 %v263
  %652 = vmatpush1.msra.mxu0 %v262
  %653 = vmatprep.subr.mxu0 %v266
  %654 = vmatpush1.msra.mxu0 %v265
  %655 = vmatprep.subr.mxu0 %v269
  %656 = vmatpush1.msra.mxu0 %v268
  %657 = vmatprep.subr.mxu0 %v272
  %658 = vmatpush1.msra.mxu0 %v271
  %659 = vmatprep.subr.mxu0 %v275
  %660 = vmatpush1.msra.mxu0 %v274
  %661 = vmatprep.subr.mxu0 %v278
  %662 = vmatpush1.msra.mxu0 %v277
  %663 = vmatprep.subr.mxu0 %v281
  %664 = vmatpush1.msra.mxu0 %v280
  %665 = vmatprep.subr.mxu0 %v284
  %666 = vmatpush1.msra.mxu0 %v283
  %667 = vmatprep.subr.mxu0 %v287
  %668 = vmatpush1.msra.mxu0 %v286
  %669 = vmatprep.subr.mxu0 %v290
  %670 = vmatpush1.msra.mxu0 %v289
  %671 = vmatprep.subr.mxu0 %v293
  %672 = vmatpush1.msra.mxu0 %v292
  %673 = vmatprep.subr.mxu0 %v296
  %674 = vmatpush1.msra.mxu0 %v295
  %675 = vmatprep.subr.mxu0 %v299
  %676 = vmatpush1.msra.mxu0 %v298
  %677 = vmatprep.subr.mxu0 %v302
  %678 = vmatpush1.msra.mxu0 %v301
  %679 = vmatprep.subr.mxu0 %v305
  %680 = vmatpush1.msra.mxu0 %v304
  %681 = vmatprep.subr.mxu0 %v308
  %682 = vmatpush1.msra.mxu0 %v307
  %683 = vmatprep.subr.mxu0 %v311
  %684 = vmatpush1.msra.mxu0 %v310
  %685 = vmatprep.subr.mxu0 %v314
  %686 = vmatpush1.msra.mxu0 %v313
  %687 = vmatprep.subr.mxu0 %v317
  %688 = vmatpush1.msra.mxu0 %v316
  %689 = vmatprep.subr.mxu0 %v320
  %690 = vmatpush1.msra.mxu0 %v319
  %691 = vmatprep.subr.mxu0 %v323
  %692 = vmatpush1.msra.mxu0 %v322
  %693 = vmatprep.subr.mxu0 %v326
  %694 = vmatpush1.msra.mxu0 %v325
  %695 = vmatprep.subr.mxu0 %v329
  %696 = vmatpush1.msra.mxu0 %v328
  %697 = vmatprep.subr.mxu0 %v332
  %698 = vmatpush1.msra.mxu0 %v331
  %699 = vmatprep.subr.mxu0 %v335
  %700 = vmatpush1.msra.mxu0 %v334
  %701 = vmatprep.subr.mxu0 %v338
  %702 = vmatpush1.msra.mxu0 %v337
  %703 = vmatprep.mubr.f32.mxu0 %v487
  %704 = vmatmul.mubr.f32.gmra.mrb[0].mxu0 %v479
  %v705 = vpop.f32.mrb[0].mxu0
  %v706 = vadd.f32 %v635, %v705
  %v707 = vpop.f32.mrb[0].mxu0
  %v708 = vadd.f32 %v637, %v707
  %709 = vdwg.mxu0
  %710 = vmatprep.subr.mxu0 %v341
  %711 = vmatpush1.msra.mxu0 %v340
  %712 = vmatprep.subr.mxu0 %v344
  %713 = vmatpush1.msra.mxu0 %v343
  %714 = vmatprep.subr.mxu0 %v347
  %715 = vmatpush1.msra.mxu0 %v346
  %716 = vmatprep.subr.mxu0 %v350
  %717 = vmatpush1.msra.mxu0 %v349
  %718 = vmatprep.subr.mxu0 %v353
  %719 = vmatpush1.msra.mxu0 %v352
  %720 = vmatprep.subr.mxu0 %v356
  %721 = vmatpush1.msra.mxu0 %v355
  %722 = vmatprep.subr.mxu0 %v359
  %723 = vmatpush1.msra.mxu0 %v358
  %724 = vmatprep.subr.mxu0 %v362
  %725 = vmatpush1.msra.mxu0 %v361
  %726 = vmatprep.subr.mxu0 %v365
  %727 = vmatpush1.msra.mxu0 %v364
  %728 = vmatprep.subr.mxu0 %v368
  %729 = vmatpush1.msra.mxu0 %v367
  %730 = vmatprep.subr.mxu0 %v371
  %731 = vmatpush1.msra.mxu0 %v370
  %732 = vmatprep.subr.mxu0 %v374
  %733 = vmatpush1.msra.mxu0 %v373
  %734 = vmatprep.subr.mxu0 %v377
  %735 = vmatpush1.msra.mxu0 %v376
  %736 = vmatprep.subr.mxu0 %v380
  %737 = vmatpush1.msra.mxu0 %v379
  %738 = vmatprep.subr.mxu0 %v383
  %739 = vmatpush1.msra.mxu0 %v382
  %740 = vmatprep.subr.mxu0 %v386
  %741 = vmatpush1.msra.mxu0 %v385
  %742 = vmatprep.subr.mxu0 %v389
  %743 = vmatpush1.msra.mxu0 %v388
  %744 = vmatprep.subr.mxu0 %v392
  %745 = vmatpush1.msra.mxu0 %v391
  %746 = vmatprep.subr.mxu0 %v395
  %747 = vmatpush1.msra.mxu0 %v394
  %748 = vmatprep.subr.mxu0 %v398
  %749 = vmatpush1.msra.mxu0 %v397
  %750 = vmatprep.subr.mxu0 %v401
  %751 = vmatpush1.msra.mxu0 %v400
  %752 = vmatprep.subr.mxu0 %v404
  %753 = vmatpush1.msra.mxu0 %v403
  %754 = vmatprep.subr.mxu0 %v407
  %755 = vmatpush1.msra.mxu0 %v406
  %756 = vmatprep.subr.mxu0 %v410
  %757 = vmatpush1.msra.mxu0 %v409
  %758 = vmatprep.subr.mxu0 %v413
  %759 = vmatpush1.msra.mxu0 %v412
  %760 = vmatprep.subr.mxu0 %v416
  %761 = vmatpush1.msra.mxu0 %v415
  %762 = vmatprep.subr.mxu0 %v419
  %763 = vmatpush1.msra.mxu0 %v418
  %764 = vmatprep.subr.mxu0 %v422
  %765 = vmatpush1.msra.mxu0 %v421
  %766 = vmatprep.subr.mxu0 %v425
  %767 = vmatpush1.msra.mxu0 %v424
  %768 = vmatprep.subr.mxu0 %v428
  %769 = vmatpush1.msra.mxu0 %v427
  %770 = vmatprep.subr.mxu0 %v431
  %771 = vmatpush1.msra.mxu0 %v430
  %772 = vmatprep.subr.mxu0 %v434
  %773 = vmatpush1.msra.mxu0 %v433
  %774 = vmatprep.mubr.f32.mxu0 %v488
  %775 = vmatmul.mubr.f32.gmra.mrb[0].mxu0 %v486
  %v776 = vpop.f32.mrb[0].mxu0
  %v777 = vadd.f32 %v706, %v776
  %v778 = vpop.f32.mrb[0].mxu0
  %v779 = vadd.f32 %v708, %v778
  %780 = vdwg.mxu0
  %781 = vmatprep.subr.mxu0 0.0
  %782 = vmatpush1.msra.mxu0 %v54
  %783 = vmatprep.subr.mxu0 0.0
  %784 = vmatpush1.msra.mxu0 %v57
  %785 = vmatprep.subr.mxu0 0.0
  %786 = vmatpush1.msra.mxu0 %v60
  %787 = vmatprep.subr.mxu0 0.0
  %788 = vmatpush1.msra.mxu0 %v63
  %789 = vmatprep.subr.mxu0 0.0
  %790 = vmatpush1.msra.mxu0 %v66
  %791 = vmatprep.subr.mxu0 0.0
  %792 = vmatpush1.msra.mxu0 %v69
  %793 = vmatprep.subr.mxu0 0.0
  %794 = vmatpush1.msra.mxu0 %v72
  %795 = vmatprep.subr.mxu0 0.0
  %796 = vmatpush1.msra.mxu0 %v75
  %797 = vmatprep.subr.mxu0 0.0
  %798 = vmatpush1.msra.mxu0 %v78
  %799 = vmatprep.subr.mxu0 0.0
  %800 = vmatpush1.msra.mxu0 %v81
  %801 = vmatprep.subr.mxu0 0.0
  %802 = vmatpush1.msra.mxu0 %v84
  %803 = vmatprep.subr.mxu0 0.0
  %804 = vmatpush1.msra.mxu0 %v87
  %805 = vmatprep.subr.mxu0 0.0
  %806 = vmatpush1.msra.mxu0 %v90
  %807 = vmatprep.subr.mxu0 0.0
  %808 = vmatpush1.msra.mxu0 %v93
  %809 = vmatprep.subr.mxu0 0.0
  %810 = vmatpush1.msra.mxu0 %v96
  %811 = vmatprep.subr.mxu0 0.0
  %812 = vmatpush1.msra.mxu0 %v99
  %813 = vmatprep.subr.mxu0 0.0
  %814 = vmatpush1.msra.mxu0 %v102
  %815 = vmatprep.subr.mxu0 0.0
  %816 = vmatpush1.msra.mxu0 %v105
  %817 = vmatprep.subr.mxu0 0.0
  %818 = vmatpush1.msra.mxu0 %v108
  %819 = vmatprep.subr.mxu0 0.0
  %820 = vmatpush1.msra.mxu0 %v111
  %821 = vmatprep.subr.mxu0 0.0
  %822 = vmatpush1.msra.mxu0 %v114
  %823 = vmatprep.subr.mxu0 0.0
  %824 = vmatpush1.msra.mxu0 %v117
  %825 = vmatprep.subr.mxu0 0.0
  %826 = vmatpush1.msra.mxu0 %v120
  %827 = vmatprep.subr.mxu0 0.0
  %828 = vmatpush1.msra.mxu0 %v123
  %829 = vmatprep.subr.mxu0 0.0
  %830 = vmatpush1.msra.mxu0 %v126
  %831 = vmatprep.subr.mxu0 0.0
  %832 = vmatpush1.msra.mxu0 %v129
  %833 = vmatprep.subr.mxu0 0.0
  %834 = vmatpush1.msra.mxu0 %v132
  %835 = vmatprep.subr.mxu0 0.0
  %836 = vmatpush1.msra.mxu0 %v135
  %837 = vmatprep.subr.mxu0 0.0
  %838 = vmatpush1.msra.mxu0 %v138
  %839 = vmatprep.subr.mxu0 0.0
  %840 = vmatpush1.msra.mxu0 %v141
  %841 = vmatprep.subr.mxu0 0.0
  %842 = vmatpush1.msra.mxu0 %v144
  %843 = vmatprep.subr.mxu0 0.0
  %844 = vmatpush1.msra.mxu0 %v147
  %845 = vmatprep.mubr.f32.mxu0 %v470
  %846 = vmatmul.mubr.f32.gmra.mrb[0].mxu0 %v462
  %v847 = vpop.f32.mrb[0].mxu0
  %v848 = vadd.f32 %v449, %v847
  %v849 = vpop.f32.mrb[0].mxu0
  %850 = vdwg.mxu0
  %851 = vmatprep.subr.mxu0 0.0
  %852 = vmatpush1.msra.mxu0 %v150
  %853 = vmatprep.subr.mxu0 0.0
  %854 = vmatpush1.msra.mxu0 %v153
  %855 = vmatprep.subr.mxu0 0.0
  %856 = vmatpush1.msra.mxu0 %v156
  %857 = vmatprep.subr.mxu0 0.0
  %858 = vmatpush1.msra.mxu0 %v159
  %859 = vmatprep.subr.mxu0 0.0
  %860 = vmatpush1.msra.mxu0 %v162
  %861 = vmatprep.subr.mxu0 0.0
  %862 = vmatpush1.msra.mxu0 %v165
  %863 = vmatprep.subr.mxu0 0.0
  %864 = vmatpush1.msra.mxu0 %v168
  %865 = vmatprep.subr.mxu0 0.0
  %866 = vmatpush1.msra.mxu0 %v171
  %867 = vmatprep.subr.mxu0 0.0
  %868 = vmatpush1.msra.mxu0 %v174
  %869 = vmatprep.subr.mxu0 0.0
  %870 = vmatpush1.msra.mxu0 %v177
  %871 = vmatprep.subr.mxu0 0.0
  %872 = vmatpush1.msra.mxu0 %v180
  %873 = vmatprep.subr.mxu0 0.0
  %874 = vmatpush1.msra.mxu0 %v183
  %875 = vmatprep.subr.mxu0 0.0
  %876 = vmatpush1.msra.mxu0 %v186
  %877 = vmatprep.subr.mxu0 0.0
  %878 = vmatpush1.msra.mxu0 %v189
  %879 = vmatprep.subr.mxu0 0.0
  %880 = vmatpush1.msra.mxu0 %v192
  %881 = vmatprep.subr.mxu0 0.0
  %882 = vmatpush1.msra.mxu0 %v195
  %883 = vmatprep.subr.mxu0 0.0
  %884 = vmatpush1.msra.mxu0 %v198
  %885 = vmatprep.subr.mxu0 0.0
  %886 = vmatpush1.msra.mxu0 %v201
  %887 = vmatprep.subr.mxu0 0.0
  %888 = vmatpush1.msra.mxu0 %v204
  %889 = vmatprep.subr.mxu0 0.0
  %890 = vmatpush1.msra.mxu0 %v207
  %891 = vmatprep.subr.mxu0 0.0
  %892 = vmatpush1.msra.mxu0 %v210
  %893 = vmatprep.subr.mxu0 0.0
  %894 = vmatpush1.msra.mxu0 %v213
  %895 = vmatprep.subr.mxu0 0.0
  %896 = vmatpush1.msra.mxu0 %v216
  %897 = vmatprep.subr.mxu0 0.0
  %898 = vmatpush1.msra.mxu0 %v219
  %899 = vmatprep.subr.mxu0 0.0
  %900 = vmatpush1.msra.mxu0 %v222
  %901 = vmatprep.subr.mxu0 0.0
  %902 = vmatpush1.msra.mxu0 %v225
  %903 = vmatprep.subr.mxu0 0.0
  %904 = vmatpush1.msra.mxu0 %v228
  %905 = vmatprep.subr.mxu0 0.0
  %906 = vmatpush1.msra.mxu0 %v231
  %907 = vmatprep.subr.mxu0 0.0
  %908 = vmatpush1.msra.mxu0 %v234
  %909 = vmatprep.subr.mxu0 0.0
  %910 = vmatpush1.msra.mxu0 %v237
  %911 = vmatprep.subr.mxu0 0.0
  %912 = vmatpush1.msra.mxu0 %v240
  %913 = vmatprep.subr.mxu0 0.0
  %914 = vmatpush1.msra.mxu0 %v243
  %915 = vmatprep.mubr.f32.mxu0 %v471
  %916 = vmatmul.mubr.f32.gmra.mrb[0].mxu0 %v469
  %v917 = vpop.f32.mrb[0].mxu0
  %v918 = vadd.f32 %v848, %v917
  %v919 = vpop.f32.mrb[0].mxu0
  %920 = vdwg.mxu0
  %921 = vmatprep.subr.mxu0 0.0
  %922 = vmatpush1.msra.mxu0 %v246
  %923 = vmatprep.subr.mxu0 0.0
  %924 = vmatpush1.msra.mxu0 %v249
  %925 = vmatprep.subr.mxu0 0.0
  %926 = vmatpush1.msra.mxu0 %v252
  %927 = vmatprep.subr.mxu0 0.0
  %928 = vmatpush1.msra.mxu0 %v255
  %929 = vmatprep.subr.mxu0 0.0
  %930 = vmatpush1.msra.mxu0 %v258
  %931 = vmatprep.subr.mxu0 0.0
  %932 = vmatpush1.msra.mxu0 %v261
  %933 = vmatprep.subr.mxu0 0.0
  %934 = vmatpush1.msra.mxu0 %v264
  %935 = vmatprep.subr.mxu0 0.0
  %936 = vmatpush1.msra.mxu0 %v267
  %937 = vmatprep.subr.mxu0 0.0
  %938 = vmatpush1.msra.mxu0 %v270
  %939 = vmatprep.subr.mxu0 0.0
  %940 = vmatpush1.msra.mxu0 %v273
  %941 = vmatprep.subr.mxu0 0.0
  %942 = vmatpush1.msra.mxu0 %v276
  %943 = vmatprep.subr.mxu0 0.0
  %944 = vmatpush1.msra.mxu0 %v279
  %945 = vmatprep.subr.mxu0 0.0
  %946 = vmatpush1.msra.mxu0 %v282
  %947 = vmatprep.subr.mxu0 0.0
  %948 = vmatpush1.msra.mxu0 %v285
  %949 = vmatprep.subr.mxu0 0.0
  %950 = vmatpush1.msra.mxu0 %v288
  %951 = vmatprep.subr.mxu0 0.0
  %952 = vmatpush1.msra.mxu0 %v291
  %953 = vmatprep.subr.mxu0 0.0
  %954 = vmatpush1.msra.mxu0 %v294
  %955 = vmatprep.subr.mxu0 0.0
  %956 = vmatpush1.msra.mxu0 %v297
  %957 = vmatprep.subr.mxu0 0.0
  %958 = vmatpush1.msra.mxu0 %v300
  %959 = vmatprep.subr.mxu0 0.0
  %960 = vmatpush1.msra.mxu0 %v303
  %961 = vmatprep.subr.mxu0 0.0
  %962 = vmatpush1.msra.mxu0 %v306
  %963 = vmatprep.subr.mxu0 0.0
  %964 = vmatpush1.msra.mxu0 %v309
  %965 = vmatprep.subr.mxu0 0.0
  %966 = vmatpush1.msra.mxu0 %v312
  %967 = vmatprep.subr.mxu0 0.0
  %968 = vmatpush1.msra.mxu0 %v315
  %969 = vmatprep.subr.mxu0 0.0
  %970 = vmatpush1.msra.mxu0 %v318
  %971 = vmatprep.subr.mxu0 0.0
  %972 = vmatpush1.msra.mxu0 %v321
  %973 = vmatprep.subr.mxu0 0.0
  %974 = vmatpush1.msra.mxu0 %v324
  %975 = vmatprep.subr.mxu0 0.0
  %976 = vmatpush1.msra.mxu0 %v327
  %977 = vmatprep.subr.mxu0 0.0
  %978 = vmatpush1.msra.mxu0 %v330
  %979 = vmatprep.subr.mxu0 0.0
  %980 = vmatpush1.msra.mxu0 %v333
  %981 = vmatprep.subr.mxu0 0.0
  %982 = vmatpush1.msra.mxu0 %v336
  %983 = vmatprep.subr.mxu0 0.0
  %984 = vmatpush1.msra.mxu0 %v339
  %985 = vmatprep.mubr.f32.mxu0 %v487
  %986 = vmatmul.mubr.f32.gmra.mrb[0].mxu0 %v479
  %v987 = vpop.f32.mrb[0].mxu0
  %v988 = vadd.f32 %v918, %v987
  %v989 = vpop.f32.mrb[0].mxu0
  %990 = vdwg.mxu0
  %991 = vmatprep.subr.mxu0 0.0
  %992 = vmatpush1.msra.mxu0 %v342
  %993 = vmatprep.subr.mxu0 0.0
  %994 = vmatpush1.msra.mxu0 %v345
  %995 = vmatprep.subr.mxu0 0.0
  %996 = vmatpush1.msra.mxu0 %v348
  %997 = vmatprep.subr.mxu0 0.0
  %998 = vmatpush1.msra.mxu0 %v351
  %999 = vmatprep.subr.mxu0 0.0
  %1000 = vmatpush1.msra.mxu0 %v354
  %1001 = vmatprep.subr.mxu0 0.0
  %1002 = vmatpush1.msra.mxu0 %v357
  %1003 = vmatprep.subr.mxu0 0.0
  %1004 = vmatpush1.msra.mxu0 %v360
  %1005 = vmatprep.subr.mxu0 0.0
  %1006 = vmatpush1.msra.mxu0 %v363
  %1007 = vmatprep.subr.mxu0 0.0
  %1008 = vmatpush1.msra.mxu0 %v366
  %1009 = vmatprep.subr.mxu0 0.0
  %1010 = vmatpush1.msra.mxu0 %v369
  %1011 = vmatprep.subr.mxu0 0.0
  %1012 = vmatpush1.msra.mxu0 %v372
  %1013 = vmatprep.subr.mxu0 0.0
  %1014 = vmatpush1.msra.mxu0 %v375
  %1015 = vmatprep.subr.mxu0 0.0
  %1016 = vmatpush1.msra.mxu0 %v378
  %1017 = vmatprep.subr.mxu0 0.0
  %1018 = vmatpush1.msra.mxu0 %v381
  %1019 = vmatprep.subr.mxu0 0.0
  %1020 = vmatpush1.msra.mxu0 %v384
  %1021 = vmatprep.subr.mxu0 0.0
  %1022 = vmatpush1.msra.mxu0 %v387
  %1023 = vmatprep.subr.mxu0 0.0
  %1024 = vmatpush1.msra.mxu0 %v390
  %1025 = vmatprep.subr.mxu0 0.0
  %1026 = vmatpush1.msra.mxu0 %v393
  %1027 = vmatprep.subr.mxu0 0.0
  %1028 = vmatpush1.msra.mxu0 %v396
  %1029 = vmatprep.subr.mxu0 0.0
  %1030 = vmatpush1.msra.mxu0 %v399
  %1031 = vmatprep.subr.mxu0 0.0
  %1032 = vmatpush1.msra.mxu0 %v402
  %1033 = vmatprep.subr.mxu0 0.0
  %1034 = vmatpush1.msra.mxu0 %v405
  %1035 = vmatprep.subr.mxu0 0.0
  %1036 = vmatpush1.msra.mxu0 %v408
  %1037 = vmatprep.subr.mxu0 0.0
  %1038 = vmatpush1.msra.mxu0 %v411
  %1039 = vmatprep.subr.mxu0 0.0
  %1040 = vmatpush1.msra.mxu0 %v414
  %1041 = vmatprep.subr.mxu0 0.0
  %1042 = vmatpush1.msra.mxu0 %v417
  %1043 = vmatprep.subr.mxu0 0.0
  %1044 = vmatpush1.msra.mxu0 %v420
  %1045 = vmatprep.subr.mxu0 0.0
  %1046 = vmatpush1.msra.mxu0 %v423
  %1047 = vmatprep.subr.mxu0 0.0
  %1048 = vmatpush1.msra.mxu0 %v426
  %1049 = vmatprep.subr.mxu0 0.0
  %1050 = vmatpush1.msra.mxu0 %v429
  %1051 = vmatprep.subr.mxu0 0.0
  %1052 = vmatpush1.msra.mxu0 %v432
  %1053 = vmatprep.subr.mxu0 0.0
  %1054 = vmatpush1.msra.mxu0 %v435
  %1055 = vmatprep.mubr.f32.mxu0 %v488
  %1056 = vmatmul.mubr.f32.gmra.mrb[0].mxu0 %v486
  %v1057 = vpop.f32.mrb[0].mxu0
  %v1058 = vadd.f32 %v988, %v1057
  %v1059 = vpop.f32.mrb[0].mxu0
  %1060 = vdwg.mxu0
  %v1061 = vmax.f32 %v777, 0.0
  %v1062 = vmax.f32 %v779, 0.0
  %v1063 = vmax.f32 %v1058, 0.0
  %v1064 = vld [vmem:[%s1] sm:$0x3]
  %v1065 = vld [vmem:[%s4] sm:$0x3f]
  %1067 = vset.pattern.permute.xlu0 0
  %1068 = vperm.xlu0 %1067, %v1064
  %v1069 = vpop.permute.xlu0 %1068
  %v1072 = vlaneseq
  %v1073 = vshrl.u32 %v1072, 7
  %v1074 = vsub.s32 0, %v1073
  %v1075 = vrot.slane %v1065, %v1074
  %v1076 = vlaneseq
  %v1077 = vshrl.u32 %v1076, 7
  %v1078 = vsub.s32 2, %v1077
  %v1079 = vrot.slane %v1065, %v1078
  %v1080 = vlaneseq
  %v1081 = vshrl.u32 %v1080, 7
  %v1082 = vsub.s32 4, %v1081
  %v1083 = vrot.slane %v1065, %v1082
  %v1087 = vlaneseq
  %v1088 = vshrl.u32 %v1087, 7
  %v1089 = vsub.s32 0, %v1088
  %v1090 = vrot.slane %v1075, %v1089
  %v1091 = vlaneseq
  %v1092 = vshrl.u32 %v1091, 7
  %v1093 = vsub.s32 0, %v1092
  %v1094 = vrot.slane %v1079, %v1093
  %v1095 = vlaneseq
  %v1096 = vshrl.u32 %v1095, 7
  %v1097 = vsub.s32 0, %v1096
  %v1098 = vrot.slane %v1083, %v1097
  %v1099 = vmul.f32 %v1069, %v1090
  %v1100 = vmul.f32 %v1069, %v1094
  %v1101 = vmul.f32 %v1069, %v1098
  %1102 = vset.pattern.permute.xlu0 1
  %1103 = vperm.xlu0 %1102, %v1064
  %v1104 = vpop.permute.xlu0 %1103
  %v1106 = vlaneseq
  %v1107 = vshrl.u32 %v1106, 7
  %v1108 = vsub.s32 1, %v1107
  %v1109 = vrot.slane %v1065, %v1108
  %v1110 = vlaneseq
  %v1111 = vshrl.u32 %v1110, 7
  %v1112 = vsub.s32 3, %v1111
  %v1113 = vrot.slane %v1065, %v1112
  %v1114 = vlaneseq
  %v1115 = vshrl.u32 %v1114, 7
  %v1116 = vsub.s32 5, %v1115
  %v1117 = vrot.slane %v1065, %v1116
  %v1121 = vlaneseq
  %v1122 = vshrl.u32 %v1121, 7
  %v1123 = vsub.s32 1, %v1122
  %v1124 = vrot.slane %v1109, %v1123
  %v1125 = vlaneseq
  %v1126 = vshrl.u32 %v1125, 7
  %v1127 = vsub.s32 1, %v1126
  %v1128 = vrot.slane %v1113, %v1127
  %v1129 = vlaneseq
  %v1130 = vshrl.u32 %v1129, 7
  %v1131 = vsub.s32 1, %v1130
  %v1132 = vrot.slane %v1117, %v1131
  %v1133 = vmul.f32 %v1104, %v1124
  %v1134 = vmul.f32 %v1104, %v1128
  %v1135 = vmul.f32 %v1104, %v1132
  %v1136 = vadd.f32 %v1099, %v1133
  %v1137 = vadd.f32 %v1100, %v1134
  %v1138 = vadd.f32 %v1101, %v1135
  %v1139 = vld [vmem:[%s5] sm:$0x7]
  %v1141 = vlaneseq
  %v1142 = vshrl.u32 %v1141, 7
  %v1143 = vsub.s32 0, %v1142
  %v1144 = vrot.slane %v1139, %v1143
  %v1145 = vlaneseq
  %v1146 = vshrl.u32 %v1145, 7
  %v1147 = vsub.s32 1, %v1146
  %v1148 = vrot.slane %v1139, %v1147
  %v1149 = vlaneseq
  %v1150 = vshrl.u32 %v1149, 7
  %v1151 = vsub.s32 2, %v1150
  %v1152 = vrot.slane %v1139, %v1151
  %v1156 = vadd.f32 %v1136, %v1144
  %v1157 = vadd.f32 %v1137, %v1148
  %v1158 = vadd.f32 %v1138, %v1152
  %v1159 = vmax.f32 %v1156, 0.0
  %v1160 = vmax.f32 %v1157, 0.0
  %v1161 = vmax.f32 %v1158, 0.0
  %v1162 = vld [vmem:[%s6] sm:$0xff]
  %v1163 = vld [vmem:[%s6 + $0x8] sm:$0xff]
  %v1164 = vld [vmem:[%s6 + $0x10] sm:$0xff]
  %v1165 = vld [vmem:[%s6 + $0x18] sm:$0xff]
  %v1166 = vld [vmem:[%s6 + $0x20] sm:$0xff]
  %v1167 = vld [vmem:[%s6 + $0x28] sm:$0xff]
  %v1168 = vld [vmem:[%s6 + $0x30] sm:$0xff]
  %v1169 = vld [vmem:[%s6 + $0x38] sm:$0xff]
  %v1170 = vld [vmem:[%s6 + $0x40] sm:$0xff]
  %v1171 = vld [vmem:[%s6 + $0x48] sm:$0xff]
  %v1172 = vld [vmem:[%s6 + $0x50] sm:$0xff]
  %v1173 = vld [vmem:[%s6 + $0x58] sm:$0xff]
  %v1174 = vld [vmem:[%s6 + $0x60] sm:$0xff]
  %v1175 = vld [vmem:[%s6 + $0x68] sm:$0xff]
  %v1176 = vld [vmem:[%s6 + $0x70] sm:$0xff]
  %v1177 = vld [vmem:[%s6 + $0x78] sm:$0xff]
  %v1178 = vld [vmem:[%s6 + $0x80] sm:$0xff]
  %v1179 = vld [vmem:[%s6 + $0x88] sm:$0xff]
  %v1180 = vld [vmem:[%s6 + $0x90] sm:$0xff]
  %v1181 = vld [vmem:[%s6 + $0x98] sm:$0xff]
  %v1182 = vld [vmem:[%s6 + $0xa0] sm:$0xff]
  %v1183 = vld [vmem:[%s6 + $0xa8] sm:$0xff]
  %v1184 = vld [vmem:[%s6 + $0xb0] sm:$0xff]
  %v1185 = vld [vmem:[%s6 + $0xb8] sm:$0xff]
  %v1186 = vld [vmem:[%s6 + $0xc0] sm:$0xff]
  %v1187 = vld [vmem:[%s6 + $0xc8] sm:$0xff]
  %v1188 = vld [vmem:[%s6 + $0xd0] sm:$0xff]
  %v1189 = vld [vmem:[%s6 + $0xd8] sm:$0xff]
  %v1190 = vld [vmem:[%s6 + $0xe0] sm:$0xff]
  %v1191 = vld [vmem:[%s6 + $0xe8] sm:$0xff]
  %v1192 = vld [vmem:[%s6 + $0xf0] sm:$0xff]
  %v1193 = vld [vmem:[%s6 + $0xf8] sm:$0xff]
  %v1194 = vld [vmem:[%s6 + $0x100] sm:$0xff]
  %v1195 = vld [vmem:[%s6 + $0x108] sm:$0xff]
  %v1196 = vld [vmem:[%s6 + $0x110] sm:$0xff]
  %v1197 = vld [vmem:[%s6 + $0x118] sm:$0xff]
  %v1198 = vld [vmem:[%s6 + $0x120] sm:$0xff]
  %v1199 = vld [vmem:[%s6 + $0x128] sm:$0xff]
  %v1200 = vld [vmem:[%s6 + $0x130] sm:$0xff]
  %v1201 = vld [vmem:[%s6 + $0x138] sm:$0xff]
  %v1202 = vld [vmem:[%s6 + $0x140] sm:$0xff]
  %v1203 = vld [vmem:[%s6 + $0x148] sm:$0xff]
  %v1204 = vld [vmem:[%s6 + $0x150] sm:$0xff]
  %v1205 = vld [vmem:[%s6 + $0x158] sm:$0xff]
  %v1206 = vld [vmem:[%s6 + $0x160] sm:$0xff]
  %v1207 = vld [vmem:[%s6 + $0x168] sm:$0xff]
  %v1208 = vld [vmem:[%s6 + $0x170] sm:$0xff]
  %v1209 = vld [vmem:[%s6 + $0x178] sm:$0xff]
  %v1210 = vld [vmem:[%s6 + $0x180] sm:$0xff]
  %v1211 = vld [vmem:[%s6 + $0x188] sm:$0xff]
  %v1212 = vld [vmem:[%s6 + $0x190] sm:$0xff]
  %v1213 = vld [vmem:[%s6 + $0x198] sm:$0xff]
  %v1214 = vld [vmem:[%s6 + $0x1a0] sm:$0xff]
  %v1215 = vld [vmem:[%s6 + $0x1a8] sm:$0xff]
  %v1216 = vld [vmem:[%s6 + $0x1b0] sm:$0xff]
  %v1217 = vld [vmem:[%s6 + $0x1b8] sm:$0xff]
  %v1218 = vld [vmem:[%s6 + $0x1c0] sm:$0xff]
  %v1219 = vld [vmem:[%s6 + $0x1c8] sm:$0xff]
  %v1220 = vld [vmem:[%s6 + $0x1d0] sm:$0xff]
  %v1221 = vld [vmem:[%s6 + $0x1d8] sm:$0xff]
  %v1222 = vld [vmem:[%s6 + $0x1e0] sm:$0xff]
  %v1223 = vld [vmem:[%s6 + $0x1e8] sm:$0xff]
  %v1224 = vld [vmem:[%s6 + $0x1f0] sm:$0xff]
  %v1225 = vld [vmem:[%s6 + $0x1f8] sm:$0xff]
  %v1226 = vld [vmem:[%s6 + $0x200] sm:$0xff]
  %v1227 = vld [vmem:[%s6 + $0x208] sm:$0xff]
  %v1228 = vld [vmem:[%s6 + $0x210] sm:$0xff]
  %v1229 = vld [vmem:[%s6 + $0x218] sm:$0xff]
  %v1230 = vld [vmem:[%s6 + $0x220] sm:$0xff]
  %v1231 = vld [vmem:[%s6 + $0x228] sm:$0xff]
  %v1232 = vld [vmem:[%s6 + $0x230] sm:$0xff]
  %v1233 = vld [vmem:[%s6 + $0x238] sm:$0xff]
  %v1234 = vld [vmem:[%s6 + $0x240] sm:$0xff]
  %v1235 = vld [vmem:[%s6 + $0x248] sm:$0xff]
  %v1236 = vld [vmem:[%s6 + $0x250] sm:$0xff]
  %v1237 = vld [vmem:[%s6 + $0x258] sm:$0xff]
  %v1238 = vld [vmem:[%s6 + $0x260] sm:$0xff]
  %v1239 = vld [vmem:[%s6 + $0x268] sm:$0xff]
  %v1240 = vld [vmem:[%s6 + $0x270] sm:$0xff]
  %v1241 = vld [vmem:[%s6 + $0x278] sm:$0xff]
  %v1242 = vld [vmem:[%s6 + $0x280] sm:$0xff]
  %v1243 = vld [vmem:[%s6 + $0x288] sm:$0xff]
  %v1244 = vld [vmem:[%s6 + $0x290] sm:$0xff]
  %v1245 = vld [vmem:[%s6 + $0x298] sm:$0xff]
  %v1246 = vld [vmem:[%s6 + $0x2a0] sm:$0xff]
  %v1247 = vld [vmem:[%s6 + $0x2a8] sm:$0xff]
  %v1248 = vld [vmem:[%s6 + $0x2b0] sm:$0xff]
  %v1249 = vld [vmem:[%s6 + $0x2b8] sm:$0xff]
  %v1250 = vld [vmem:[%s6 + $0x2c0] sm:$0xff]
  %v1251 = vld [vmem:[%s6 + $0x2c8] sm:$0xff]
  %v1252 = vld [vmem:[%s6 + $0x2d0] sm:$0xff]
  %v1253 = vld [vmem:[%s6 + $0x2d8] sm:$0xff]
  %v1254 = vld [vmem:[%s6 + $0x2e0] sm:$0xff]
  %v1255 = vld [vmem:[%s6 + $0x2e8] sm:$0xff]
  %v1256 = vld [vmem:[%s6 + $0x2f0] sm:$0xff]
  %v1257 = vld [vmem:[%s6 + $0x2f8] sm:$0xff]
  %v1258 = vld [vmem:[%s6 + $0x300] sm:$0xff]
  %v1259 = vld [vmem:[%s6 + $0x308] sm:$0xff]
  %v1260 = vld [vmem:[%s6 + $0x310] sm:$0xff]
  %v1261 = vld [vmem:[%s6 + $0x318] sm:$0xff]
  %v1262 = vld [vmem:[%s6 + $0x320] sm:$0xff]
  %v1263 = vld [vmem:[%s6 + $0x328] sm:$0xff]
  %v1264 = vld [vmem:[%s6 + $0x330] sm:$0xff]
  %v1265 = vld [vmem:[%s6 + $0x338] sm:$0xff]
  %v1266 = vld [vmem:[%s6 + $0x340] sm:$0xff]
  %v1267 = vld [vmem:[%s6 + $0x348] sm:$0xff]
  %v1268 = vld [vmem:[%s6 + $0x350] sm:$0xff]
  %v1269 = vld [vmem:[%s6 + $0x358] sm:$0xff]
  %v1270 = vld [vmem:[%s6 + $0x360] sm:$0xff]
  %v1271 = vld [vmem:[%s6 + $0x368] sm:$0xff]
  %v1272 = vld [vmem:[%s6 + $0x370] sm:$0xff]
  %v1273 = vld [vmem:[%s6 + $0x378] sm:$0xff]
  %v1274 = vld [vmem:[%s6 + $0x380] sm:$0xff]
  %v1275 = vld [vmem:[%s6 + $0x388] sm:$0xff]
  %v1276 = vld [vmem:[%s6 + $0x390] sm:$0xff]
  %v1277 = vld [vmem:[%s6 + $0x398] sm:$0xff]
  %v1278 = vld [vmem:[%s6 + $0x3a0] sm:$0xff]
  %v1279 = vld [vmem:[%s6 + $0x3a8] sm:$0xff]
  %v1280 = vld [vmem:[%s6 + $0x3b0] sm:$0xff]
  %v1281 = vld [vmem:[%s6 + $0x3b8] sm:$0xff]
  %v1282 = vld [vmem:[%s6 + $0x3c0] sm:$0xff]
  %v1283 = vld [vmem:[%s6 + $0x3c8] sm:$0xff]
  %v1284 = vld [vmem:[%s6 + $0x3d0] sm:$0xff]
  %v1285 = vld [vmem:[%s6 + $0x3d8] sm:$0xff]
  %v1286 = vld [vmem:[%s6 + $0x3e0] sm:$0xff]
  %v1287 = vld [vmem:[%s6 + $0x3e8] sm:$0xff]
  %v1288 = vld [vmem:[%s6 + $0x3f0] sm:$0xff]
  %v1289 = vld [vmem:[%s6 + $0x3f8] sm:$0xff]
  %v1290 = vld [vmem:[%s6 + $0x400] sm:$0xff]
  %v1291 = vld [vmem:[%s6 + $0x408] sm:$0xff]
  %v1292 = vld [vmem:[%s6 + $0x410] sm:$0xff]
  %v1293 = vld [vmem:[%s6 + $0x418] sm:$0xff]
  %v1294 = vld [vmem:[%s6 + $0x420] sm:$0xff]
  %v1295 = vld [vmem:[%s6 + $0x428] sm:$0xff]
  %v1296 = vld [vmem:[%s6 + $0x430] sm:$0xff]
  %v1297 = vld [vmem:[%s6 + $0x438] sm:$0xff]
  %v1298 = vld [vmem:[%s6 + $0x440] sm:$0xff]
  %v1299 = vld [vmem:[%s6 + $0x448] sm:$0xff]
  %v1300 = vld [vmem:[%s6 + $0x450] sm:$0xff]
  %v1301 = vld [vmem:[%s6 + $0x458] sm:$0xff]
  %v1302 = vld [vmem:[%s6 + $0x460] sm:$0xff]
  %v1303 = vld [vmem:[%s6 + $0x468] sm:$0xff]
  %v1304 = vld [vmem:[%s6 + $0x470] sm:$0xff]
  %v1305 = vld [vmem:[%s6 + $0x478] sm:$0xff]
  %v1306 = vld [vmem:[%s7] sm:$0x7]
  %v1308 = vlaneseq
  %v1309 = vshrl.u32 %v1308, 7
  %v1310 = vsub.s32 0, %v1309
  %v1311 = vrot.slane %v1306, %v1310
  %v1312 = vlaneseq
  %v1313 = vshrl.u32 %v1312, 7
  %v1314 = vsub.s32 1, %v1313
  %v1315 = vrot.slane %v1306, %v1314
  %v1316 = vlaneseq
  %v1317 = vshrl.u32 %v1316, 7
  %v1318 = vsub.s32 2, %v1317
  %v1319 = vrot.slane %v1306, %v1318
  %1323 = vmatprep.subr.mxu0 %v1163
  %1324 = vmatpush1.msra.mxu0 %v1162
  %1325 = vmatprep.subr.mxu0 %v1166
  %1326 = vmatpush1.msra.mxu0 %v1165
  %1327 = vmatprep.subr.mxu0 %v1169
  %1328 = vmatpush1.msra.mxu0 %v1168
  %1329 = vmatprep.subr.mxu0 %v1172
  %1330 = vmatpush1.msra.mxu0 %v1171
  %1331 = vmatprep.subr.mxu0 %v1175
  %1332 = vmatpush1.msra.mxu0 %v1174
  %1333 = vmatprep.subr.mxu0 %v1178
  %1334 = vmatpush1.msra.mxu0 %v1177
  %1335 = vmatprep.subr.mxu0 %v1181
  %1336 = vmatpush1.msra.mxu0 %v1180
  %1337 = vmatprep.subr.mxu0 %v1184
  %1338 = vmatpush1.msra.mxu0 %v1183
  %1339 = vmatprep.subr.mxu0 %v1187
  %1340 = vmatpush1.msra.mxu0 %v1186
  %1341 = vmatprep.subr.mxu0 %v1190
  %1342 = vmatpush1.msra.mxu0 %v1189
  %1343 = vmatprep.subr.mxu0 %v1193
  %1344 = vmatpush1.msra.mxu0 %v1192
  %1345 = vmatprep.subr.mxu0 %v1196
  %1346 = vmatpush1.msra.mxu0 %v1195
  %1347 = vmatprep.subr.mxu0 %v1199
  %1348 = vmatpush1.msra.mxu0 %v1198
  %1349 = vmatprep.subr.mxu0 %v1202
  %1350 = vmatpush1.msra.mxu0 %v1201
  %1351 = vmatprep.subr.mxu0 %v1205
  %1352 = vmatpush1.msra.mxu0 %v1204
  %1353 = vmatprep.subr.mxu0 %v1208
  %1354 = vmatpush1.msra.mxu0 %v1207
  %1355 = vmatprep.subr.mxu0 %v1211
  %1356 = vmatpush1.msra.mxu0 %v1210
  %1357 = vmatprep.subr.mxu0 %v1214
  %1358 = vmatpush1.msra.mxu0 %v1213
  %1359 = vmatprep.subr.mxu0 %v1217
  %1360 = vmatpush1.msra.mxu0 %v1216
  %1361 = vmatprep.subr.mxu0 %v1220
  %1362 = vmatpush1.msra.mxu0 %v1219
  %1363 = vmatprep.subr.mxu0 %v1223
  %1364 = vmatpush1.msra.mxu0 %v1222
  %1365 = vmatprep.subr.mxu0 %v1226
  %1366 = vmatpush1.msra.mxu0 %v1225
  %1367 = vmatprep.subr.mxu0 %v1229
  %1368 = vmatpush1.msra.mxu0 %v1228
  %1369 = vmatprep.subr.mxu0 %v1232
  %1370 = vmatpush1.msra.mxu0 %v1231
  %1371 = vmatprep.subr.mxu0 %v1235
  %1372 = vmatpush1.msra.mxu0 %v1234
  %1373 = vmatprep.subr.mxu0 %v1238
  %1374 = vmatpush1.msra.mxu0 %v1237
  %1375 = vmatprep.subr.mxu0 %v1241
  %1376 = vmatpush1.msra.mxu0 %v1240
  %1377 = vmatprep.subr.mxu0 %v1244
  %1378 = vmatpush1.msra.mxu0 %v1243
  %1379 = vmatprep.subr.mxu0 %v1247
  %1380 = vmatpush1.msra.mxu0 %v1246
  %1381 = vmatprep.subr.mxu0 %v1250
  %1382 = vmatpush1.msra.mxu0 %v1249
  %1383 = vmatprep.subr.mxu0 %v1253
  %1384 = vmatpush1.msra.mxu0 %v1252
  %1385 = vmatprep.subr.mxu0 %v1256
  %1386 = vmatpush1.msra.mxu0 %v1255
  %1387 = vmatprep.mubr.f32.mxu0 %v1160
  %1388 = vmatmul.mubr.f32.gmra.mrb[0].mxu0 %v1159
  %v1389 = vpop.f32.mrb[0].mxu0
  %v1390 = vadd.f32 %v1311, %v1389
  %v1391 = vpop.f32.mrb[0].mxu0
  %v1392 = vadd.f32 %v1315, %v1391
  %1393 = vdwg.mxu0
  %1394 = vmatprep.subr.mxu0 %v1259
  %1395 = vmatpush1.msra.mxu0 %v1258
  %1396 = vmatprep.subr.mxu0 %v1262
  %1397 = vmatpush1.msra.mxu0 %v1261
  %1398 = vmatprep.subr.mxu0 %v1265
  %1399 = vmatpush1.msra.mxu0 %v1264
  %1400 = vmatprep.subr.mxu0 %v1268
  %1401 = vmatpush1.msra.mxu0 %v1267
  %1402 = vmatprep.subr.mxu0 %v1271
  %1403 = vmatpush1.msra.mxu0 %v1270
  %1404 = vmatprep.subr.mxu0 %v1274
  %1405 = vmatpush1.msra.mxu0 %v1273
  %1406 = vmatprep.subr.mxu0 %v1277
  %1407 = vmatpush1.msra.mxu0 %v1276
  %1408 = vmatprep.subr.mxu0 %v1280
  %1409 = vmatpush1.msra.mxu0 %v1279
  %1410 = vmatprep.subr.mxu0 %v1283
  %1411 = vmatpush1.msra.mxu0 %v1282
  %1412 = vmatprep.subr.mxu0 %v1286
  %1413 = vmatpush1.msra.mxu0 %v1285
  %1414 = vmatprep.subr.mxu0 %v1289
  %1415 = vmatpush1.msra.mxu0 %v1288
  %1416 = vmatprep.subr.mxu0 %v1292
  %1417 = vmatpush1.msra.mxu0 %v1291
  %1418 = vmatprep.subr.mxu0 %v1295
  %1419 = vmatpush1.msra.mxu0 %v1294
  %1420 = vmatprep.subr.mxu0 %v1298
  %1421 = vmatpush1.msra.mxu0 %v1297
  %1422 = vmatprep.subr.mxu0 %v1301
  %1423 = vmatpush1.msra.mxu0 %v1300
  %1424 = vmatprep.subr.mxu0 %v1304
  %1425 = vmatpush1.msra.mxu0 %v1303
  %1426 = vmatprep.subr.mxu0 0.0
  %1427 = vmatpush1.msra.mxu0 0.0
  %1428 = vmatprep.subr.mxu0 0.0
  %1429 = vmatpush1.msra.mxu0 0.0
  %1430 = vmatprep.subr.mxu0 0.0
  %1431 = vmatpush1.msra.mxu0 0.0
  %1432 = vmatprep.subr.mxu0 0.0
  %1433 = vmatpush1.msra.mxu0 0.0
  %1434 = vmatprep.subr.mxu0 0.0
  %1435 = vmatpush1.msra.mxu0 0.0
  %1436 = vmatprep.subr.mxu0 0.0
  %1437 = vmatpush1.msra.mxu0 0.0
  %1438 = vmatprep.subr.mxu0 0.0
  %1439 = vmatpush1.msra.mxu0 0.0
  %1440 = vmatprep.subr.mxu0 0.0
  %1441 = vmatpush1.msra.mxu0 0.0
  %1442 = vmatprep.subr.mxu0 0.0
  %1443 = vmatpush1.msra.mxu0 0.0
  %1444 = vmatprep.subr.mxu0 0.0
  %1445 = vmatpush1.msra.mxu0 0.0
  %1446 = vmatprep.subr.mxu0 0.0
  %1447 = vmatpush1.msra.mxu0 0.0
  %1448 = vmatprep.subr.mxu0 0.0
  %1449 = vmatpush1.msra.mxu0 0.0
  %1450 = vmatprep.subr.mxu0 0.0
  %1451 = vmatpush1.msra.mxu0 0.0
  %1452 = vmatprep.subr.mxu0 0.0
  %1453 = vmatpush1.msra.mxu0 0.0
  %1454 = vmatprep.subr.mxu0 0.0
  %1455 = vmatpush1.msra.mxu0 0.0
  %1456 = vmatprep.subr.mxu0 0.0
  %1457 = vmatpush1.msra.mxu0 0.0
  %1458 = vmatprep.mubr.f32.mxu0 0.0
  %1459 = vmatmul.mubr.f32.gmra.mrb[0].mxu0 %v1161
  %v1460 = vpop.f32.mrb[0].mxu0
  %v1461 = vadd.f32 %v1390, %v1460
  %v1462 = vpop.f32.mrb[0].mxu0
  %v1463 = vadd.f32 %v1392, %v1462
  %1464 = vdwg.mxu0
  %1465 = vmatprep.subr.mxu0 0.0
  %1466 = vmatpush1.msra.mxu0 %v1164
  %1467 = vmatprep.subr.mxu0 0.0
  %1468 = vmatpush1.msra.mxu0 %v1167
  %1469 = vmatprep.subr.mxu0 0.0
  %1470 = vmatpush1.msra.mxu0 %v1170
  %1471 = vmatprep.subr.mxu0 0.0
  %1472 = vmatpush1.msra.mxu0 %v1173
  %1473 = vmatprep.subr.mxu0 0.0
  %1474 = vmatpush1.msra.mxu0 %v1176
  %1475 = vmatprep.subr.mxu0 0.0
  %1476 = vmatpush1.msra.mxu0 %v1179
  %1477 = vmatprep.subr.mxu0 0.0
  %1478 = vmatpush1.msra.mxu0 %v1182
  %1479 = vmatprep.subr.mxu0 0.0
  %1480 = vmatpush1.msra.mxu0 %v1185
  %1481 = vmatprep.subr.mxu0 0.0
  %1482 = vmatpush1.msra.mxu0 %v1188
  %1483 = vmatprep.subr.mxu0 0.0
  %1484 = vmatpush1.msra.mxu0 %v1191
  %1485 = vmatprep.subr.mxu0 0.0
  %1486 = vmatpush1.msra.mxu0 %v1194
  %1487 = vmatprep.subr.mxu0 0.0
  %1488 = vmatpush1.msra.mxu0 %v1197
  %1489 = vmatprep.subr.mxu0 0.0
  %1490 = vmatpush1.msra.mxu0 %v1200
  %1491 = vmatprep.subr.mxu0 0.0
  %1492 = vmatpush1.msra.mxu0 %v1203
  %1493 = vmatprep.subr.mxu0 0.0
  %1494 = vmatpush1.msra.mxu0 %v1206
  %1495 = vmatprep.subr.mxu0 0.0
  %1496 = vmatpush1.msra.mxu0 %v1209
  %1497 = vmatprep.subr.mxu0 0.0
  %1498 = vmatpush1.msra.mxu0 %v1212
  %1499 = vmatprep.subr.mxu0 0.0
  %1500 = vmatpush1.msra.mxu0 %v1215
  %1501 = vmatprep.subr.mxu0 0.0
  %1502 = vmatpush1.msra.mxu0 %v1218
  %1503 = vmatprep.subr.mxu0 0.0
  %1504 = vmatpush1.msra.mxu0 %v1221
  %1505 = vmatprep.subr.mxu0 0.0
  %1506 = vmatpush1.msra.mxu0 %v1224
  %1507 = vmatprep.subr.mxu0 0.0
  %1508 = vmatpush1.msra.mxu0 %v1227
  %1509 = vmatprep.subr.mxu0 0.0
  %1510 = vmatpush1.msra.mxu0 %v1230
  %1511 = vmatprep.subr.mxu0 0.0
  %1512 = vmatpush1.msra.mxu0 %v1233
  %1513 = vmatprep.subr.mxu0 0.0
  %1514 = vmatpush1.msra.mxu0 %v1236
  %1515 = vmatprep.subr.mxu0 0.0
  %1516 = vmatpush1.msra.mxu0 %v1239
  %1517 = vmatprep.subr.mxu0 0.0
  %1518 = vmatpush1.msra.mxu0 %v1242
  %1519 = vmatprep.subr.mxu0 0.0
  %1520 = vmatpush1.msra.mxu0 %v1245
  %1521 = vmatprep.subr.mxu0 0.0
  %1522 = vmatpush1.msra.mxu0 %v1248
  %1523 = vmatprep.subr.mxu0 0.0
  %1524 = vmatpush1.msra.mxu0 %v1251
  %1525 = vmatprep.subr.mxu0 0.0
  %1526 = vmatpush1.msra.mxu0 %v1254
  %1527 = vmatprep.subr.mxu0 0.0
  %1528 = vmatpush1.msra.mxu0 %v1257
  %1529 = vmatprep.mubr.f32.mxu0 %v1160
  %1530 = vmatmul.mubr.f32.gmra.mrb[0].mxu0 %v1159
  %v1531 = vpop.f32.mrb[0].mxu0
  %v1532 = vadd.f32 %v1319, %v1531
  %v1533 = vpop.f32.mrb[0].mxu0
  %1534 = vdwg.mxu0
  %1535 = vmatprep.subr.mxu0 0.0
  %1536 = vmatpush1.msra.mxu0 %v1260
  %1537 = vmatprep.subr.mxu0 0.0
  %1538 = vmatpush1.msra.mxu0 %v1263
  %1539 = vmatprep.subr.mxu0 0.0
  %1540 = vmatpush1.msra.mxu0 %v1266
  %1541 = vmatprep.subr.mxu0 0.0
  %1542 = vmatpush1.msra.mxu0 %v1269
  %1543 = vmatprep.subr.mxu0 0.0
  %1544 = vmatpush1.msra.mxu0 %v1272
  %1545 = vmatprep.subr.mxu0 0.0
  %1546 = vmatpush1.msra.mxu0 %v1275
  %1547 = vmatprep.subr.mxu0 0.0
  %1548 = vmatpush1.msra.mxu0 %v1278
  %1549 = vmatprep.subr.mxu0 0.0
  %1550 = vmatpush1.msra.mxu0 %v1281
  %1551 = vmatprep.subr.mxu0 0.0
  %1552 = vmatpush1.msra.mxu0 %v1284
  %1553 = vmatprep.subr.mxu0 0.0
  %1554 = vmatpush1.msra.mxu0 %v1287
  %1555 = vmatprep.subr.mxu0 0.0
  %1556 = vmatpush1.msra.mxu0 %v1290
  %1557 = vmatprep.subr.mxu0 0.0
  %1558 = vmatpush1.msra.mxu0 %v1293
  %1559 = vmatprep.subr.mxu0 0.0
  %1560 = vmatpush1.msra.mxu0 %v1296
  %1561 = vmatprep.subr.mxu0 0.0
  %1562 = vmatpush1.msra.mxu0 %v1299
  %1563 = vmatprep.subr.mxu0 0.0
  %1564 = vmatpush1.msra.mxu0 %v1302
  %1565 = vmatprep.subr.mxu0 0.0
  %1566 = vmatpush1.msra.mxu0 %v1305
  %1567 = vmatprep.subr.mxu0 0.0
  %1568 = vmatpush1.msra.mxu0 0.0
  %1569 = vmatprep.subr.mxu0 0.0
  %1570 = vmatpush1.msra.mxu0 0.0
  %1571 = vmatprep.subr.mxu0 0.0
  %1572 = vmatpush1.msra.mxu0 0.0
  %1573 = vmatprep.subr.mxu0 0.0
  %1574 = vmatpush1.msra.mxu0 0.0
  %1575 = vmatprep.subr.mxu0 0.0
  %1576 = vmatpush1.msra.mxu0 0.0
  %1577 = vmatprep.subr.mxu0 0.0
  %1578 = vmatpush1.msra.mxu0 0.0
  %1579 = vmatprep.subr.mxu0 0.0
  %1580 = vmatpush1.msra.mxu0 0.0
  %1581 = vmatprep.subr.mxu0 0.0
  %1582 = vmatpush1.msra.mxu0 0.0
  %1583 = vmatprep.subr.mxu0 0.0
  %1584 = vmatpush1.msra.mxu0 0.0
  %1585 = vmatprep.subr.mxu0 0.0
  %1586 = vmatpush1.msra.mxu0 0.0
  %1587 = vmatprep.subr.mxu0 0.0
  %1588 = vmatpush1.msra.mxu0 0.0
  %1589 = vmatprep.subr.mxu0 0.0
  %1590 = vmatpush1.msra.mxu0 0.0
  %1591 = vmatprep.subr.mxu0 0.0
  %1592 = vmatpush1.msra.mxu0 0.0
  %1593 = vmatprep.subr.mxu0 0.0
  %1594 = vmatpush1.msra.mxu0 0.0
  %1595 = vmatprep.subr.mxu0 0.0
  %1596 = vmatpush1.msra.mxu0 0.0
  %1597 = vmatprep.subr.mxu0 0.0
  %1598 = vmatpush1.msra.mxu0 0.0
  %1599 = vmatprep.mubr.f32.mxu0 0.0
  %1600 = vmatmul.mubr.f32.gmra.mrb[0].mxu0 %v1161
  %v1601 = vpop.f32.mrb[0].mxu0
  %v1602 = vadd.f32 %v1532, %v1601
  %v1603 = vpop.f32.mrb[0].mxu0
  %1604 = vdwg.mxu0
  %v1605 = vmax.f32 %v1461, 0.0
  %v1606 = vmax.f32 %v1463, 0.0
  %v1607 = vmax.f32 %v1602, 0.0
  %v1608 = vld [vmem:[%s8] sm:$0xff]
  %v1609 = vld [vmem:[%s8 + $0x8] sm:$0xff]
  %v1610 = vld [vmem:[%s8 + $0x10] sm:$0xff]
  %v1611 = vld [vmem:[%s8 + $0x18] sm:$0xff]
  %v1612 = vld [vmem:[%s8 + $0x20] sm:$0xff]
  %v1613 = vld [vmem:[%s8 + $0x28] sm:$0xff]
  %v1614 = vld [vmem:[%s8 + $0x30] sm:$0xff]
  %v1615 = vld [vmem:[%s8 + $0x38] sm:$0xff]
  %v1616 = vld [vmem:[%s8 + $0x40] sm:$0xff]
  %v1617 = vld [vmem:[%s8 + $0x48] sm:$0xff]
  %v1618 = vld [vmem:[%s8 + $0x50] sm:$0xff]
  %v1619 = vld [vmem:[%s8 + $0x58] sm:$0xff]
  %v1620 = vld [vmem:[%s8 + $0x60] sm:$0xff]
  %v1621 = vld [vmem:[%s8 + $0x68] sm:$0xff]
  %v1622 = vld [vmem:[%s8 + $0x70] sm:$0xff]
  %v1623 = vld [vmem:[%s8 + $0x78] sm:$0xff]
  %v1624 = vld [vmem:[%s8 + $0x80] sm:$0xff]
  %v1625 = vld [vmem:[%s8 + $0x88] sm:$0xff]
  %v1626 = vld [vmem:[%s8 + $0x90] sm:$0xff]
  %v1627 = vld [vmem:[%s8 + $0x98] sm:$0xff]
  %v1628 = vld [vmem:[%s8 + $0xa0] sm:$0xff]
  %v1629 = vld [vmem:[%s8 + $0xa8] sm:$0xff]
  %v1630 = vld [vmem:[%s8 + $0xb0] sm:$0xff]
  %v1631 = vld [vmem:[%s8 + $0xb8] sm:$0xff]
  %v1632 = vld [vmem:[%s8 + $0xc0] sm:$0xff]
  %v1633 = vld [vmem:[%s8 + $0xc8] sm:$0xff]
  %v1634 = vld [vmem:[%s8 + $0xd0] sm:$0xff]
  %v1635 = vld [vmem:[%s8 + $0xd8] sm:$0xff]
  %v1636 = vld [vmem:[%s8 + $0xe0] sm:$0xff]
  %v1637 = vld [vmem:[%s8 + $0xe8] sm:$0xff]
  %v1638 = vld [vmem:[%s8 + $0xf0] sm:$0xff]
  %v1639 = vld [vmem:[%s8 + $0xf8] sm:$0xff]
  %v1640 = vld [vmem:[%s8 + $0x100] sm:$0xff]
  %v1641 = vld [vmem:[%s8 + $0x108] sm:$0xff]
  %v1642 = vld [vmem:[%s8 + $0x110] sm:$0xff]
  %v1643 = vld [vmem:[%s8 + $0x118] sm:$0xff]
  %v1644 = vld [vmem:[%s8 + $0x120] sm:$0xff]
  %v1645 = vld [vmem:[%s8 + $0x128] sm:$0xff]
  %v1646 = vld [vmem:[%s8 + $0x130] sm:$0xff]
  %v1647 = vld [vmem:[%s8 + $0x138] sm:$0xff]
  %v1648 = vld [vmem:[%s8 + $0x140] sm:$0xff]
  %v1649 = vld [vmem:[%s8 + $0x148] sm:$0xff]
  %v1650 = vld [vmem:[%s8 + $0x150] sm:$0xff]
  %v1651 = vld [vmem:[%s8 + $0x158] sm:$0xff]
  %v1652 = vld [vmem:[%s8 + $0x160] sm:$0xff]
  %v1653 = vld [vmem:[%s8 + $0x168] sm:$0xff]
  %v1654 = vld [vmem:[%s8 + $0x170] sm:$0xff]
  %v1655 = vld [vmem:[%s8 + $0x178] sm:$0xff]
  %v1656 = vld [vmem:[%s8 + $0x180] sm:$0xff]
  %v1657 = vld [vmem:[%s8 + $0x188] sm:$0xff]
  %v1658 = vld [vmem:[%s8 + $0x190] sm:$0xff]
  %v1659 = vld [vmem:[%s8 + $0x198] sm:$0xff]
  %v1660 = vld [vmem:[%s8 + $0x1a0] sm:$0xff]
  %v1661 = vld [vmem:[%s8 + $0x1a8] sm:$0xff]
  %v1662 = vld [vmem:[%s8 + $0x1b0] sm:$0xff]
  %v1663 = vld [vmem:[%s8 + $0x1b8] sm:$0xff]
  %v1664 = vld [vmem:[%s8 + $0x1c0] sm:$0xff]
  %v1665 = vld [vmem:[%s8 + $0x1c8] sm:$0xff]
  %v1666 = vld [vmem:[%s8 + $0x1d0] sm:$0xff]
  %v1667 = vld [vmem:[%s8 + $0x1d8] sm:$0xff]
  %v1668 = vld [vmem:[%s8 + $0x1e0] sm:$0xff]
  %v1669 = vld [vmem:[%s8 + $0x1e8] sm:$0xff]
  %v1670 = vld [vmem:[%s8 + $0x1f0] sm:$0xff]
  %v1671 = vld [vmem:[%s8 + $0x1f8] sm:$0xff]
  %v1672 = vld [vmem:[%s8 + $0x200] sm:$0xff]
  %v1673 = vld [vmem:[%s8 + $0x208] sm:$0xff]
  %v1674 = vld [vmem:[%s8 + $0x210] sm:$0xff]
  %v1675 = vld [vmem:[%s8 + $0x218] sm:$0xff]
  %v1676 = vld [vmem:[%s8 + $0x220] sm:$0xff]
  %v1677 = vld [vmem:[%s8 + $0x228] sm:$0xff]
  %v1678 = vld [vmem:[%s8 + $0x230] sm:$0xff]
  %v1679 = vld [vmem:[%s8 + $0x238] sm:$0xff]
  %v1680 = vld [vmem:[%s8 + $0x240] sm:$0xff]
  %v1681 = vld [vmem:[%s8 + $0x248] sm:$0xff]
  %v1682 = vld [vmem:[%s8 + $0x250] sm:$0xff]
  %v1683 = vld [vmem:[%s8 + $0x258] sm:$0xff]
  %v1684 = vld [vmem:[%s8 + $0x260] sm:$0xff]
  %v1685 = vld [vmem:[%s8 + $0x268] sm:$0xff]
  %v1686 = vld [vmem:[%s8 + $0x270] sm:$0xff]
  %v1687 = vld [vmem:[%s8 + $0x278] sm:$0xff]
  %v1688 = vld [vmem:[%s8 + $0x280] sm:$0xff]
  %v1689 = vld [vmem:[%s8 + $0x288] sm:$0xff]
  %v1690 = vld [vmem:[%s8 + $0x290] sm:$0xff]
  %v1691 = vld [vmem:[%s8 + $0x298] sm:$0xff]
  %v1692 = vld [vmem:[%s8 + $0x2a0] sm:$0xff]
  %v1693 = vld [vmem:[%s8 + $0x2a8] sm:$0xff]
  %v1694 = vld [vmem:[%s8 + $0x2b0] sm:$0xff]
  %v1695 = vld [vmem:[%s8 + $0x2b8] sm:$0xff]
  %v1696 = vld [vmem:[%s8 + $0x2c0] sm:$0xff]
  %v1697 = vld [vmem:[%s8 + $0x2c8] sm:$0xff]
  %v1698 = vld [vmem:[%s8 + $0x2d0] sm:$0xff]
  %v1699 = vld [vmem:[%s8 + $0x2d8] sm:$0xff]
  %v1700 = vld [vmem:[%s8 + $0x2e0] sm:$0xff]
  %v1701 = vld [vmem:[%s8 + $0x2e8] sm:$0xff]
  %v1702 = vld [vmem:[%s8 + $0x2f0] sm:$0xff]
  %v1703 = vld [vmem:[%s8 + $0x2f8] sm:$0xff]
  %v1704 = vld [vmem:[%s8 + $0x300] sm:$0xff]
  %v1705 = vld [vmem:[%s8 + $0x308] sm:$0xff]
  %v1706 = vld [vmem:[%s8 + $0x310] sm:$0xff]
  %v1707 = vld [vmem:[%s8 + $0x318] sm:$0xff]
  %v1708 = vld [vmem:[%s8 + $0x320] sm:$0xff]
  %v1709 = vld [vmem:[%s8 + $0x328] sm:$0xff]
  %v1710 = vld [vmem:[%s8 + $0x330] sm:$0xff]
  %v1711 = vld [vmem:[%s8 + $0x338] sm:$0xff]
  %v1712 = vld [vmem:[%s8 + $0x340] sm:$0xff]
  %v1713 = vld [vmem:[%s8 + $0x348] sm:$0xff]
  %v1714 = vld [vmem:[%s8 + $0x350] sm:$0xff]
  %v1715 = vld [vmem:[%s8 + $0x358] sm:$0xff]
  %v1716 = vld [vmem:[%s8 + $0x360] sm:$0xff]
  %v1717 = vld [vmem:[%s8 + $0x368] sm:$0xff]
  %v1718 = vld [vmem:[%s8 + $0x370] sm:$0xff]
  %v1719 = vld [vmem:[%s8 + $0x378] sm:$0xff]
  %v1720 = vld [vmem:[%s8 + $0x380] sm:$0xff]
  %v1721 = vld [vmem:[%s8 + $0x388] sm:$0xff]
  %v1722 = vld [vmem:[%s8 + $0x390] sm:$0xff]
  %v1723 = vld [vmem:[%s8 + $0x398] sm:$0xff]
  %v1724 = vld [vmem:[%s8 + $0x3a0] sm:$0xff]
  %v1725 = vld [vmem:[%s8 + $0x3a8] sm:$0xff]
  %v1726 = vld [vmem:[%s8 + $0x3b0] sm:$0xff]
  %v1727 = vld [vmem:[%s8 + $0x3b8] sm:$0xff]
  %v1728 = vld [vmem:[%s8 + $0x3c0] sm:$0xff]
  %v1729 = vld [vmem:[%s8 + $0x3c8] sm:$0xff]
  %v1730 = vld [vmem:[%s8 + $0x3d0] sm:$0xff]
  %v1731 = vld [vmem:[%s8 + $0x3d8] sm:$0xff]
  %v1732 = vld [vmem:[%s8 + $0x3e0] sm:$0xff]
  %v1733 = vld [vmem:[%s8 + $0x3e8] sm:$0xff]
  %v1734 = vld [vmem:[%s8 + $0x3f0] sm:$0xff]
  %v1735 = vld [vmem:[%s8 + $0x3f8] sm:$0xff]
  %v1736 = vld [vmem:[%s8 + $0x400] sm:$0xff]
  %v1737 = vld [vmem:[%s8 + $0x408] sm:$0xff]
  %v1738 = vld [vmem:[%s8 + $0x410] sm:$0xff]
  %v1739 = vld [vmem:[%s8 + $0x418] sm:$0xff]
  %v1740 = vld [vmem:[%s8 + $0x420] sm:$0xff]
  %v1741 = vld [vmem:[%s8 + $0x428] sm:$0xff]
  %v1742 = vld [vmem:[%s8 + $0x430] sm:$0xff]
  %v1743 = vld [vmem:[%s8 + $0x438] sm:$0xff]
  %v1744 = vld [vmem:[%s8 + $0x440] sm:$0xff]
  %v1745 = vld [vmem:[%s8 + $0x448] sm:$0xff]
  %v1746 = vld [vmem:[%s8 + $0x450] sm:$0xff]
  %v1747 = vld [vmem:[%s8 + $0x458] sm:$0xff]
  %v1748 = vld [vmem:[%s8 + $0x460] sm:$0xff]
  %v1749 = vld [vmem:[%s8 + $0x468] sm:$0xff]
  %v1750 = vld [vmem:[%s8 + $0x470] sm:$0xff]
  %v1751 = vld [vmem:[%s8 + $0x478] sm:$0xff]
  %v1752 = vld [vmem:[%s9] sm:$0xff]
  %v1753 = vld [vmem:[%s9 + $0x8] sm:$0xff]
  %v1754 = vld [vmem:[%s9 + $0x10] sm:$0xff]
  %v1755 = vld [vmem:[%s9 + $0x18] sm:$0xff]
  %v1756 = vld [vmem:[%s9 + $0x20] sm:$0xff]
  %v1757 = vld [vmem:[%s9 + $0x28] sm:$0xff]
  %v1758 = vld [vmem:[%s9 + $0x30] sm:$0xff]
  %v1759 = vld [vmem:[%s9 + $0x38] sm:$0xff]
  %v1760 = vld [vmem:[%s9 + $0x40] sm:$0xff]
  %v1761 = vld [vmem:[%s9 + $0x48] sm:$0xff]
  %v1762 = vld [vmem:[%s9 + $0x50] sm:$0xff]
  %v1763 = vld [vmem:[%s9 + $0x58] sm:$0xff]
  %v1764 = vld [vmem:[%s9 + $0x60] sm:$0xff]
  %v1765 = vld [vmem:[%s9 + $0x68] sm:$0xff]
  %v1766 = vld [vmem:[%s9 + $0x70] sm:$0xff]
  %v1767 = vld [vmem:[%s9 + $0x78] sm:$0xff]
  %v1768 = vld [vmem:[%s9 + $0x80] sm:$0xff]
  %v1769 = vld [vmem:[%s9 + $0x88] sm:$0xff]
  %v1770 = vld [vmem:[%s9 + $0x90] sm:$0xff]
  %v1771 = vld [vmem:[%s9 + $0x98] sm:$0xff]
  %v1772 = vld [vmem:[%s9 + $0xa0] sm:$0xff]
  %v1773 = vld [vmem:[%s9 + $0xa8] sm:$0xff]
  %v1774 = vld [vmem:[%s9 + $0xb0] sm:$0xff]
  %v1775 = vld [vmem:[%s9 + $0xb8] sm:$0xff]
  %v1776 = vld [vmem:[%s9 + $0xc0] sm:$0xff]
  %v1777 = vld [vmem:[%s9 + $0xc8] sm:$0xff]
  %v1778 = vld [vmem:[%s9 + $0xd0] sm:$0xff]
  %v1779 = vld [vmem:[%s9 + $0xd8] sm:$0xff]
  %v1780 = vld [vmem:[%s9 + $0xe0] sm:$0xff]
  %v1781 = vld [vmem:[%s9 + $0xe8] sm:$0xff]
  %v1782 = vld [vmem:[%s9 + $0xf0] sm:$0xff]
  %v1783 = vld [vmem:[%s9 + $0xf8] sm:$0xff]
  %v1784 = vld [vmem:[%s9 + $0x100] sm:$0xff]
  %v1785 = vld [vmem:[%s9 + $0x108] sm:$0xff]
  %v1786 = vld [vmem:[%s9 + $0x110] sm:$0xff]
  %v1787 = vld [vmem:[%s9 + $0x118] sm:$0xff]
  %v1788 = vld [vmem:[%s9 + $0x120] sm:$0xff]
  %v1789 = vld [vmem:[%s9 + $0x128] sm:$0xff]
  %v1790 = vld [vmem:[%s9 + $0x130] sm:$0xff]
  %v1791 = vld [vmem:[%s9 + $0x138] sm:$0xff]
  %v1792 = vld [vmem:[%s9 + $0x140] sm:$0xff]
  %v1793 = vld [vmem:[%s9 + $0x148] sm:$0xff]
  %v1794 = vld [vmem:[%s9 + $0x150] sm:$0xff]
  %v1795 = vld [vmem:[%s9 + $0x158] sm:$0xff]
  %v1796 = vld [vmem:[%s9 + $0x160] sm:$0xff]
  %v1797 = vld [vmem:[%s9 + $0x168] sm:$0xff]
  %v1798 = vld [vmem:[%s9 + $0x170] sm:$0xff]
  %v1799 = vld [vmem:[%s9 + $0x178] sm:$0xff]
  %v1800 = vld [vmem:[%s9 + $0x180] sm:$0xff]
  %v1801 = vld [vmem:[%s9 + $0x188] sm:$0xff]
  %v1802 = vld [vmem:[%s9 + $0x190] sm:$0xff]
  %v1803 = vld [vmem:[%s9 + $0x198] sm:$0xff]
  %v1804 = vld [vmem:[%s9 + $0x1a0] sm:$0xff]
  %v1805 = vld [vmem:[%s9 + $0x1a8] sm:$0xff]
  %v1806 = vld [vmem:[%s9 + $0x1b0] sm:$0xff]
  %v1807 = vld [vmem:[%s9 + $0x1b8] sm:$0xff]
  %v1808 = vld [vmem:[%s9 + $0x1c0] sm:$0xff]
  %v1809 = vld [vmem:[%s9 + $0x1c8] sm:$0xff]
  %v1810 = vld [vmem:[%s9 + $0x1d0] sm:$0xff]
  %v1811 = vld [vmem:[%s9 + $0x1d8] sm:$0xff]
  %v1812 = vld [vmem:[%s9 + $0x1e0] sm:$0xff]
  %v1813 = vld [vmem:[%s9 + $0x1e8] sm:$0xff]
  %v1814 = vld [vmem:[%s9 + $0x1f0] sm:$0xff]
  %v1815 = vld [vmem:[%s9 + $0x1f8] sm:$0xff]
  %v1816 = vld [vmem:[%s9 + $0x200] sm:$0xff]
  %v1817 = vld [vmem:[%s9 + $0x208] sm:$0xff]
  %v1818 = vld [vmem:[%s9 + $0x210] sm:$0xff]
  %v1819 = vld [vmem:[%s9 + $0x218] sm:$0xff]
  %v1820 = vld [vmem:[%s9 + $0x220] sm:$0xff]
  %v1821 = vld [vmem:[%s9 + $0x228] sm:$0xff]
  %v1822 = vld [vmem:[%s9 + $0x230] sm:$0xff]
  %v1823 = vld [vmem:[%s9 + $0x238] sm:$0xff]
  %v1824 = vld [vmem:[%s9 + $0x240] sm:$0xff]
  %v1825 = vld [vmem:[%s9 + $0x248] sm:$0xff]
  %v1826 = vld [vmem:[%s9 + $0x250] sm:$0xff]
  %v1827 = vld [vmem:[%s9 + $0x258] sm:$0xff]
  %v1828 = vld [vmem:[%s9 + $0x260] sm:$0xff]
  %v1829 = vld [vmem:[%s9 + $0x268] sm:$0xff]
  %v1830 = vld [vmem:[%s9 + $0x270] sm:$0xff]
  %v1831 = vld [vmem:[%s9 + $0x278] sm:$0xff]
  %v1832 = vld [vmem:[%s9 + $0x280] sm:$0xff]
  %v1833 = vld [vmem:[%s9 + $0x288] sm:$0xff]
  %v1834 = vld [vmem:[%s9 + $0x290] sm:$0xff]
  %v1835 = vld [vmem:[%s9 + $0x298] sm:$0xff]
  %v1836 = vld [vmem:[%s9 + $0x2a0] sm:$0xff]
  %v1837 = vld [vmem:[%s9 + $0x2a8] sm:$0xff]
  %v1838 = vld [vmem:[%s9 + $0x2b0] sm:$0xff]
  %v1839 = vld [vmem:[%s9 + $0x2b8] sm:$0xff]
  %v1840 = vld [vmem:[%s9 + $0x2c0] sm:$0xff]
  %v1841 = vld [vmem:[%s9 + $0x2c8] sm:$0xff]
  %v1842 = vld [vmem:[%s9 + $0x2d0] sm:$0xff]
  %v1843 = vld [vmem:[%s9 + $0x2d8] sm:$0xff]
  %v1844 = vld [vmem:[%s9 + $0x2e0] sm:$0xff]
  %v1845 = vld [vmem:[%s9 + $0x2e8] sm:$0xff]
  %v1846 = vld [vmem:[%s9 + $0x2f0] sm:$0xff]
  %v1847 = vld [vmem:[%s9 + $0x2f8] sm:$0xff]
  %v1848 = vld [vmem:[%s9 + $0x300] sm:$0xff]
  %v1849 = vld [vmem:[%s9 + $0x308] sm:$0xff]
  %v1850 = vld [vmem:[%s9 + $0x310] sm:$0xff]
  %v1851 = vld [vmem:[%s9 + $0x318] sm:$0xff]
  %v1852 = vld [vmem:[%s9 + $0x320] sm:$0xff]
  %v1853 = vld [vmem:[%s9 + $0x328] sm:$0xff]
  %v1854 = vld [vmem:[%s9 + $0x330] sm:$0xff]
  %v1855 = vld [vmem:[%s9 + $0x338] sm:$0xff]
  %v1856 = vld [vmem:[%s9 + $0x340] sm:$0xff]
  %v1857 = vld [vmem:[%s9 + $0x348] sm:$0xff]
  %v1858 = vld [vmem:[%s9 + $0x350] sm:$0xff]
  %v1859 = vld [vmem:[%s9 + $0x358] sm:$0xff]
  %v1860 = vld [vmem:[%s9 + $0x360] sm:$0xff]
  %v1861 = vld [vmem:[%s9 + $0x368] sm:$0xff]
  %v1862 = vld [vmem:[%s9 + $0x370] sm:$0xff]
  %v1863 = vld [vmem:[%s9 + $0x378] sm:$0xff]
  %v1864 = vld [vmem:[%s9 + $0x380] sm:$0xff]
  %v1865 = vld [vmem:[%s9 + $0x388] sm:$0xff]
  %v1866 = vld [vmem:[%s9 + $0x390] sm:$0xff]
  %v1867 = vld [vmem:[%s9 + $0x398] sm:$0xff]
  %v1868 = vld [vmem:[%s9 + $0x3a0] sm:$0xff]
  %v1869 = vld [vmem:[%s9 + $0x3a8] sm:$0xff]
  %v1870 = vld [vmem:[%s9 + $0x3b0] sm:$0xff]
  %v1871 = vld [vmem:[%s9 + $0x3b8] sm:$0xff]
  %v1872 = vld [vmem:[%s9 + $0x3c0] sm:$0xff]
  %v1873 = vld [vmem:[%s9 + $0x3c8] sm:$0xff]
  %v1874 = vld [vmem:[%s9 + $0x3d0] sm:$0xff]
  %v1875 = vld [vmem:[%s9 + $0x3d8] sm:$0xff]
  %v1876 = vld [vmem:[%s9 + $0x3e0] sm:$0xff]
  %v1877 = vld [vmem:[%s9 + $0x3e8] sm:$0xff]
  %v1878 = vld [vmem:[%s9 + $0x3f0] sm:$0xff]
  %v1879 = vld [vmem:[%s9 + $0x3f8] sm:$0xff]
  %v1880 = vld [vmem:[%s9 + $0x400] sm:$0xff]
  %v1881 = vld [vmem:[%s9 + $0x408] sm:$0xff]
  %v1882 = vld [vmem:[%s9 + $0x410] sm:$0xff]
  %v1883 = vld [vmem:[%s9 + $0x418] sm:$0xff]
  %v1884 = vld [vmem:[%s9 + $0x420] sm:$0xff]
  %v1885 = vld [vmem:[%s9 + $0x428] sm:$0xff]
  %v1886 = vld [vmem:[%s9 + $0x430] sm:$0xff]
  %v1887 = vld [vmem:[%s9 + $0x438] sm:$0xff]
  %v1888 = vld [vmem:[%s9 + $0x440] sm:$0xff]
  %v1889 = vld [vmem:[%s9 + $0x448] sm:$0xff]
  %v1890 = vld [vmem:[%s9 + $0x450] sm:$0xff]
  %v1891 = vld [vmem:[%s9 + $0x458] sm:$0xff]
  %v1892 = vld [vmem:[%s9 + $0x460] sm:$0xff]
  %v1893 = vld [vmem:[%s9 + $0x468] sm:$0xff]
  %v1894 = vld [vmem:[%s9 + $0x470] sm:$0xff]
  %v1895 = vld [vmem:[%s9 + $0x478] sm:$0xff]
  %1896 = vmatprep.subr.mxu0 %v1753
  %1897 = vmatpush1.msra.mxu0 %v1752
  %1898 = vmatprep.subr.mxu0 %v1756
  %1899 = vmatpush1.msra.mxu0 %v1755
  %1900 = vmatprep.subr.mxu0 %v1759
  %1901 = vmatpush1.msra.mxu0 %v1758
  %1902 = vmatprep.subr.mxu0 %v1762
  %1903 = vmatpush1.msra.mxu0 %v1761
  %1904 = vmatprep.subr.mxu0 %v1765
  %1905 = vmatpush1.msra.mxu0 %v1764
  %1906 = vmatprep.subr.mxu0 %v1768
  %1907 = vmatpush1.msra.mxu0 %v1767
  %1908 = vmatprep.subr.mxu0 %v1771
  %1909 = vmatpush1.msra.mxu0 %v1770
  %1910 = vmatprep.subr.mxu0 %v1774
  %1911 = vmatpush1.msra.mxu0 %v1773
  %1912 = vmatprep.subr.mxu0 %v1777
  %1913 = vmatpush1.msra.mxu0 %v1776
  %1914 = vmatprep.subr.mxu0 %v1780
  %1915 = vmatpush1.msra.mxu0 %v1779
  %1916 = vmatprep.subr.mxu0 %v1783
  %1917 = vmatpush1.msra.mxu0 %v1782
  %1918 = vmatprep.subr.mxu0 %v1786
  %1919 = vmatpush1.msra.mxu0 %v1785
  %1920 = vmatprep.subr.mxu0 %v1789
  %1921 = vmatpush1.msra.mxu0 %v1788
  %1922 = vmatprep.subr.mxu0 %v1792
  %1923 = vmatpush1.msra.mxu0 %v1791
  %1924 = vmatprep.subr.mxu0 %v1795
  %1925 = vmatpush1.msra.mxu0 %v1794
  %1926 = vmatprep.subr.mxu0 %v1798
  %1927 = vmatpush1.msra.mxu0 %v1797
  %1928 = vmatprep.subr.mxu0 %v1801
  %1929 = vmatpush1.msra.mxu0 %v1800
  %1930 = vmatprep.subr.mxu0 %v1804
  %1931 = vmatpush1.msra.mxu0 %v1803
  %1932 = vmatprep.subr.mxu0 %v1807
  %1933 = vmatpush1.msra.mxu0 %v1806
  %1934 = vmatprep.subr.mxu0 %v1810
  %1935 = vmatpush1.msra.mxu0 %v1809
  %1936 = vmatprep.subr.mxu0 %v1813
  %1937 = vmatpush1.msra.mxu0 %v1812
  %1938 = vmatprep.subr.mxu0 %v1816
  %1939 = vmatpush1.msra.mxu0 %v1815
  %1940 = vmatprep.subr.mxu0 %v1819
  %1941 = vmatpush1.msra.mxu0 %v1818
  %1942 = vmatprep.subr.mxu0 %v1822
  %1943 = vmatpush1.msra.mxu0 %v1821
  %1944 = vmatprep.subr.mxu0 %v1825
  %1945 = vmatpush1.msra.mxu0 %v1824
  %1946 = vmatprep.subr.mxu0 %v1828
  %1947 = vmatpush1.msra.mxu0 %v1827
  %1948 = vmatprep.subr.mxu0 %v1831
  %1949 = vmatpush1.msra.mxu0 %v1830
  %1950 = vmatprep.subr.mxu0 %v1834
  %1951 = vmatpush1.msra.mxu0 %v1833
  %1952 = vmatprep.subr.mxu0 %v1837
  %1953 = vmatpush1.msra.mxu0 %v1836
  %1954 = vmatprep.subr.mxu0 %v1840
  %1955 = vmatpush1.msra.mxu0 %v1839
  %1956 = vmatprep.subr.mxu0 %v1843
  %1957 = vmatpush1.msra.mxu0 %v1842
  %1958 = vmatprep.subr.mxu0 %v1846
  %1959 = vmatpush1.msra.mxu0 %v1845
  %1960 = vmatprep.mubr.f32.mxu0 %v1606
  %1961 = vmatmul.mubr.f32.gmra.mrb[0].mxu0 %v1605
  %v1962 = vpop.f32.mrb[0].mxu0
  %v1963 = vadd.f32 0.0, %v1962
  %v1964 = vpop.f32.mrb[0].mxu0
  %v1965 = vadd.f32 0.0, %v1964
  %1966 = vdwg.mxu0
  %1967 = vmatprep.subr.mxu0 %v1849
  %1968 = vmatpush1.msra.mxu0 %v1848
  %1969 = vmatprep.subr.mxu0 %v1852
  %1970 = vmatpush1.msra.mxu0 %v1851
  %1971 = vmatprep.subr.mxu0 %v1855
  %1972 = vmatpush1.msra.mxu0 %v1854
  %1973 = vmatprep.subr.mxu0 %v1858
  %1974 = vmatpush1.msra.mxu0 %v1857
  %1975 = vmatprep.subr.mxu0 %v1861
  %1976 = vmatpush1.msra.mxu0 %v1860
  %1977 = vmatprep.subr.mxu0 %v1864
  %1978 = vmatpush1.msra.mxu0 %v1863
  %1979 = vmatprep.subr.mxu0 %v1867
  %1980 = vmatpush1.msra.mxu0 %v1866
  %1981 = vmatprep.subr.mxu0 %v1870
  %1982 = vmatpush1.msra.mxu0 %v1869
  %1983 = vmatprep.subr.mxu0 %v1873
  %1984 = vmatpush1.msra.mxu0 %v1872
  %1985 = vmatprep.subr.mxu0 %v1876
  %1986 = vmatpush1.msra.mxu0 %v1875
  %1987 = vmatprep.subr.mxu0 %v1879
  %1988 = vmatpush1.msra.mxu0 %v1878
  %1989 = vmatprep.subr.mxu0 %v1882
  %1990 = vmatpush1.msra.mxu0 %v1881
  %1991 = vmatprep.subr.mxu0 %v1885
  %1992 = vmatpush1.msra.mxu0 %v1884
  %1993 = vmatprep.subr.mxu0 %v1888
  %1994 = vmatpush1.msra.mxu0 %v1887
  %1995 = vmatprep.subr.mxu0 %v1891
  %1996 = vmatpush1.msra.mxu0 %v1890
  %1997 = vmatprep.subr.mxu0 %v1894
  %1998 = vmatpush1.msra.mxu0 %v1893
  %1999 = vmatprep.subr.mxu0 0.0
  %2000 = vmatpush1.msra.mxu0 0.0
  %2001 = vmatprep.subr.mxu0 0.0
  %2002 = vmatpush1.msra.mxu0 0.0
  %2003 = vmatprep.subr.mxu0 0.0
  %2004 = vmatpush1.msra.mxu0 0.0
  %2005 = vmatprep.subr.mxu0 0.0
  %2006 = vmatpush1.msra.mxu0 0.0
  %2007 = vmatprep.subr.mxu0 0.0
  %2008 = vmatpush1.msra.mxu0 0.0
  %2009 = vmatprep.subr.mxu0 0.0
  %2010 = vmatpush1.msra.mxu0 0.0
  %2011 = vmatprep.subr.mxu0 0.0
  %2012 = vmatpush1.msra.mxu0 0.0
  %2013 = vmatprep.subr.mxu0 0.0
  %2014 = vmatpush1.msra.mxu0 0.0
  %2015 = vmatprep.subr.mxu0 0.0
  %2016 = vmatpush1.msra.mxu0 0.0
  %2017 = vmatprep.subr.mxu0 0.0
  %2018 = vmatpush1.msra.mxu0 0.0
  %2019 = vmatprep.subr.mxu0 0.0
  %2020 = vmatpush1.msra.mxu0 0.0
  %2021 = vmatprep.subr.mxu0 0.0
  %2022 = vmatpush1.msra.mxu0 0.0
  %2023 = vmatprep.subr.mxu0 0.0
  %2024 = vmatpush1.msra.mxu0 0.0
  %2025 = vmatprep.subr.mxu0 0.0
  %2026 = vmatpush1.msra.mxu0 0.0
  %2027 = vmatprep.subr.mxu0 0.0
  %2028 = vmatpush1.msra.mxu0 0.0
  %2029 = vmatprep.subr.mxu0 0.0
  %2030 = vmatpush1.msra.mxu0 0.0
  %2031 = vmatprep.mubr.f32.mxu0 0.0
  %2032 = vmatmul.mubr.f32.gmra.mrb[0].mxu0 %v1607
  %v2033 = vpop.f32.mrb[0].mxu0
  %v2034 = vadd.f32 %v1963, %v2033
  %v2035 = vpop.f32.mrb[0].mxu0
  %v2036 = vadd.f32 %v1965, %v2035
  %2037 = vdwg.mxu0
  %2038 = vmatprep.subr.mxu0 0.0
  %2039 = vmatpush1.msra.mxu0 %v1754
  %2040 = vmatprep.subr.mxu0 0.0
  %2041 = vmatpush1.msra.mxu0 %v1757
  %2042 = vmatprep.subr.mxu0 0.0
  %2043 = vmatpush1.msra.mxu0 %v1760
  %2044 = vmatprep.subr.mxu0 0.0
  %2045 = vmatpush1.msra.mxu0 %v1763
  %2046 = vmatprep.subr.mxu0 0.0
  %2047 = vmatpush1.msra.mxu0 %v1766
  %2048 = vmatprep.subr.mxu0 0.0
  %2049 = vmatpush1.msra.mxu0 %v1769
  %2050 = vmatprep.subr.mxu0 0.0
  %2051 = vmatpush1.msra.mxu0 %v1772
  %2052 = vmatprep.subr.mxu0 0.0
  %2053 = vmatpush1.msra.mxu0 %v1775
  %2054 = vmatprep.subr.mxu0 0.0
  %2055 = vmatpush1.msra.mxu0 %v1778
  %2056 = vmatprep.subr.mxu0 0.0
  %2057 = vmatpush1.msra.mxu0 %v1781
  %2058 = vmatprep.subr.mxu0 0.0
  %2059 = vmatpush1.msra.mxu0 %v1784
  %2060 = vmatprep.subr.mxu0 0.0
  %2061 = vmatpush1.msra.mxu0 %v1787
  %2062 = vmatprep.subr.mxu0 0.0
  %2063 = vmatpush1.msra.mxu0 %v1790
  %2064 = vmatprep.subr.mxu0 0.0
  %2065 = vmatpush1.msra.mxu0 %v1793
  %2066 = vmatprep.subr.mxu0 0.0
  %2067 = vmatpush1.msra.mxu0 %v1796
  %2068 = vmatprep.subr.mxu0 0.0
  %2069 = vmatpush1.msra.mxu0 %v1799
  %2070 = vmatprep.subr.mxu0 0.0
  %2071 = vmatpush1.msra.mxu0 %v1802
  %2072 = vmatprep.subr.mxu0 0.0
  %2073 = vmatpush1.msra.mxu0 %v1805
  %2074 = vmatprep.subr.mxu0 0.0
  %2075 = vmatpush1.msra.mxu0 %v1808
  %2076 = vmatprep.subr.mxu0 0.0
  %2077 = vmatpush1.msra.mxu0 %v1811
  %2078 = vmatprep.subr.mxu0 0.0
  %2079 = vmatpush1.msra.mxu0 %v1814
  %2080 = vmatprep.subr.mxu0 0.0
  %2081 = vmatpush1.msra.mxu0 %v1817
  %2082 = vmatprep.subr.mxu0 0.0
  %2083 = vmatpush1.msra.mxu0 %v1820
  %2084 = vmatprep.subr.mxu0 0.0
  %2085 = vmatpush1.msra.mxu0 %v1823
  %2086 = vmatprep.subr.mxu0 0.0
  %2087 = vmatpush1.msra.mxu0 %v1826
  %2088 = vmatprep.subr.mxu0 0.0
  %2089 = vmatpush1.msra.mxu0 %v1829
  %2090 = vmatprep.subr.mxu0 0.0
  %2091 = vmatpush1.msra.mxu0 %v1832
  %2092 = vmatprep.subr.mxu0 0.0
  %2093 = vmatpush1.msra.mxu0 %v1835
  %2094 = vmatprep.subr.mxu0 0.0
  %2095 = vmatpush1.msra.mxu0 %v1838
  %2096 = vmatprep.subr.mxu0 0.0
  %2097 = vmatpush1.msra.mxu0 %v1841
  %2098 = vmatprep.subr.mxu0 0.0
  %2099 = vmatpush1.msra.mxu0 %v1844
  %2100 = vmatprep.subr.mxu0 0.0
  %2101 = vmatpush1.msra.mxu0 %v1847
  %2102 = vmatprep.mubr.f32.mxu0 %v1606
  %2103 = vmatmul.mubr.f32.gmra.mrb[0].mxu0 %v1605
  %v2104 = vpop.f32.mrb[0].mxu0
  %v2105 = vadd.f32 0.0, %v2104
  %v2106 = vpop.f32.mrb[0].mxu0
  %2107 = vdwg.mxu0
  %2108 = vmatprep.subr.mxu0 0.0
  %2109 = vmatpush1.msra.mxu0 %v1850
  %2110 = vmatprep.subr.mxu0 0.0
  %2111 = vmatpush1.msra.mxu0 %v1853
  %2112 = vmatprep.subr.mxu0 0.0
  %2113 = vmatpush1.msra.mxu0 %v1856
  %2114 = vmatprep.subr.mxu0 0.0
  %2115 = vmatpush1.msra.mxu0 %v1859
  %2116 = vmatprep.subr.mxu0 0.0
  %2117 = vmatpush1.msra.mxu0 %v1862
  %2118 = vmatprep.subr.mxu0 0.0
  %2119 = vmatpush1.msra.mxu0 %v1865
  %2120 = vmatprep.subr.mxu0 0.0
  %2121 = vmatpush1.msra.mxu0 %v1868
  %2122 = vmatprep.subr.mxu0 0.0
  %2123 = vmatpush1.msra.mxu0 %v1871
  %2124 = vmatprep.subr.mxu0 0.0
  %2125 = vmatpush1.msra.mxu0 %v1874
  %2126 = vmatprep.subr.mxu0 0.0
  %2127 = vmatpush1.msra.mxu0 %v1877
  %2128 = vmatprep.subr.mxu0 0.0
  %2129 = vmatpush1.msra.mxu0 %v1880
  %2130 = vmatprep.subr.mxu0 0.0
  %2131 = vmatpush1.msra.mxu0 %v1883
  %2132 = vmatprep.subr.mxu0 0.0
  %2133 = vmatpush1.msra.mxu0 %v1886
  %2134 = vmatprep.subr.mxu0 0.0
  %2135 = vmatpush1.msra.mxu0 %v1889
  %2136 = vmatprep.subr.mxu0 0.0
  %2137 = vmatpush1.msra.mxu0 %v1892
  %2138 = vmatprep.subr.mxu0 0.0
  %2139 = vmatpush1.msra.mxu0 %v1895
  %2140 = vmatprep.subr.mxu0 0.0
  %2141 = vmatpush1.msra.mxu0 0.0
  %2142 = vmatprep.subr.mxu0 0.0
  %2143 = vmatpush1.msra.mxu0 0.0
  %2144 = vmatprep.subr.mxu0 0.0
  %2145 = vmatpush1.msra.mxu0 0.0
  %2146 = vmatprep.subr.mxu0 0.0
  %2147 = vmatpush1.msra.mxu0 0.0
  %2148 = vmatprep.subr.mxu0 0.0
  %2149 = vmatpush1.msra.mxu0 0.0
  %2150 = vmatprep.subr.mxu0 0.0
  %2151 = vmatpush1.msra.mxu0 0.0
  %2152 = vmatprep.subr.mxu0 0.0
  %2153 = vmatpush1.msra.mxu0 0.0
  %2154 = vmatprep.subr.mxu0 0.0
  %2155 = vmatpush1.msra.mxu0 0.0
  %2156 = vmatprep.subr.mxu0 0.0
  %2157 = vmatpush1.msra.mxu0 0.0
  %2158 = vmatprep.subr.mxu0 0.0
  %2159 = vmatpush1.msra.mxu0 0.0
  %2160 = vmatprep.subr.mxu0 0.0
  %2161 = vmatpush1.msra.mxu0 0.0
  %2162 = vmatprep.subr.mxu0 0.0
  %2163 = vmatpush1.msra.mxu0 0.0
  %2164 = vmatprep.subr.mxu0 0.0
  %2165 = vmatpush1.msra.mxu0 0.0
  %2166 = vmatprep.subr.mxu0 0.0
  %2167 = vmatpush1.msra.mxu0 0.0
  %2168 = vmatprep.subr.mxu0 0.0
  %2169 = vmatpush1.msra.mxu0 0.0
  %2170 = vmatprep.subr.mxu0 0.0
  %2171 = vmatpush1.msra.mxu0 0.0
  %2172 = vmatprep.mubr.f32.mxu0 0.0
  %2173 = vmatmul.mubr.f32.gmra.mrb[0].mxu0 %v1607
  %v2174 = vpop.f32.mrb[0].mxu0
  %v2175 = vadd.f32 %v2105, %v2174
  %v2176 = vpop.f32.mrb[0].mxu0
  %2177 = vdwg.mxu0
  %2178 = vmatprep.subr.mxu0 %v1609
  %2179 = vmatpush1.msra.mxu0 %v1608
  %2180 = vmatprep.subr.mxu0 %v1612
  %2181 = vmatpush1.msra.mxu0 %v1611
  %2182 = vmatprep.subr.mxu0 %v1615
  %2183 = vmatpush1.msra.mxu0 %v1614
  %2184 = vmatprep.subr.mxu0 %v1618
  %2185 = vmatpush1.msra.mxu0 %v1617
  %2186 = vmatprep.subr.mxu0 %v1621
  %2187 = vmatpush1.msra.mxu0 %v1620
  %2188 = vmatprep.subr.mxu0 %v1624
  %2189 = vmatpush1.msra.mxu0 %v1623
  %2190 = vmatprep.subr.mxu0 %v1627
  %2191 = vmatpush1.msra.mxu0 %v1626
  %2192 = vmatprep.subr.mxu0 %v1630
  %2193 = vmatpush1.msra.mxu0 %v1629
  %2194 = vmatprep.subr.mxu0 %v1633
  %2195 = vmatpush1.msra.mxu0 %v1632
  %2196 = vmatprep.subr.mxu0 %v1636
  %2197 = vmatpush1.msra.mxu0 %v1635
  %2198 = vmatprep.subr.mxu0 %v1639
  %2199 = vmatpush1.msra.mxu0 %v1638
  %2200 = vmatprep.subr.mxu0 %v1642
  %2201 = vmatpush1.msra.mxu0 %v1641
  %2202 = vmatprep.subr.mxu0 %v1645
  %2203 = vmatpush1.msra.mxu0 %v1644
  %2204 = vmatprep.subr.mxu0 %v1648
  %2205 = vmatpush1.msra.mxu0 %v1647
  %2206 = vmatprep.subr.mxu0 %v1651
  %2207 = vmatpush1.msra.mxu0 %v1650
  %2208 = vmatprep.subr.mxu0 %v1654
  %2209 = vmatpush1.msra.mxu0 %v1653
  %2210 = vmatprep.subr.mxu0 %v1657
  %2211 = vmatpush1.msra.mxu0 %v1656
  %2212 = vmatprep.subr.mxu0 %v1660
  %2213 = vmatpush1.msra.mxu0 %v1659
  %2214 = vmatprep.subr.mxu0 %v1663
  %2215 = vmatpush1.msra.mxu0 %v1662
  %2216 = vmatprep.subr.mxu0 %v1666
  %2217 = vmatpush1.msra.mxu0 %v1665
  %2218 = vmatprep.subr.mxu0 %v1669
  %2219 = vmatpush1.msra.mxu0 %v1668
  %2220 = vmatprep.subr.mxu0 %v1672
  %2221 = vmatpush1.msra.mxu0 %v1671
  %2222 = vmatprep.subr.mxu0 %v1675
  %2223 = vmatpush1.msra.mxu0 %v1674
  %2224 = vmatprep.subr.mxu0 %v1678
  %2225 = vmatpush1.msra.mxu0 %v1677
  %2226 = vmatprep.subr.mxu0 %v1681
  %2227 = vmatpush1.msra.mxu0 %v1680
  %2228 = vmatprep.subr.mxu0 %v1684
  %2229 = vmatpush1.msra.mxu0 %v1683
  %2230 = vmatprep.subr.mxu0 %v1687
  %2231 = vmatpush1.msra.mxu0 %v1686
  %2232 = vmatprep.subr.mxu0 %v1690
  %2233 = vmatpush1.msra.mxu0 %v1689
  %2234 = vmatprep.subr.mxu0 %v1693
  %2235 = vmatpush1.msra.mxu0 %v1692
  %2236 = vmatprep.subr.mxu0 %v1696
  %2237 = vmatpush1.msra.mxu0 %v1695
  %2238 = vmatprep.subr.mxu0 %v1699
  %2239 = vmatpush1.msra.mxu0 %v1698
  %2240 = vmatprep.subr.mxu0 %v1702
  %2241 = vmatpush1.msra.mxu0 %v1701
  %2242 = vmatprep.mubr.f32.mxu0 %v1062
  %2243 = vmatmul.mubr.f32.gmra.mrb[0].mxu0 %v1061
  %v2244 = vpop.f32.mrb[0].mxu0
  %v2245 = vadd.f32 %v2034, %v2244
  %v2246 = vpop.f32.mrb[0].mxu0
  %v2247 = vadd.f32 %v2036, %v2246
  %2248 = vdwg.mxu0
  %2249 = vmatprep.subr.mxu0 %v1705
  %2250 = vmatpush1.msra.mxu0 %v1704
  %2251 = vmatprep.subr.mxu0 %v1708
  %2252 = vmatpush1.msra.mxu0 %v1707
  %2253 = vmatprep.subr.mxu0 %v1711
  %2254 = vmatpush1.msra.mxu0 %v1710
  %2255 = vmatprep.subr.mxu0 %v1714
  %2256 = vmatpush1.msra.mxu0 %v1713
  %2257 = vmatprep.subr.mxu0 %v1717
  %2258 = vmatpush1.msra.mxu0 %v1716
  %2259 = vmatprep.subr.mxu0 %v1720
  %2260 = vmatpush1.msra.mxu0 %v1719
  %2261 = vmatprep.subr.mxu0 %v1723
  %2262 = vmatpush1.msra.mxu0 %v1722
  %2263 = vmatprep.subr.mxu0 %v1726
  %2264 = vmatpush1.msra.mxu0 %v1725
  %2265 = vmatprep.subr.mxu0 %v1729
  %2266 = vmatpush1.msra.mxu0 %v1728
  %2267 = vmatprep.subr.mxu0 %v1732
  %2268 = vmatpush1.msra.mxu0 %v1731
  %2269 = vmatprep.subr.mxu0 %v1735
  %2270 = vmatpush1.msra.mxu0 %v1734
  %2271 = vmatprep.subr.mxu0 %v1738
  %2272 = vmatpush1.msra.mxu0 %v1737
  %2273 = vmatprep.subr.mxu0 %v1741
  %2274 = vmatpush1.msra.mxu0 %v1740
  %2275 = vmatprep.subr.mxu0 %v1744
  %2276 = vmatpush1.msra.mxu0 %v1743
  %2277 = vmatprep.subr.mxu0 %v1747
  %2278 = vmatpush1.msra.mxu0 %v1746
  %2279 = vmatprep.subr.mxu0 %v1750
  %2280 = vmatpush1.msra.mxu0 %v1749
  %2281 = vmatprep.subr.mxu0 0.0
  %2282 = vmatpush1.msra.mxu0 0.0
  %2283 = vmatprep.subr.mxu0 0.0
  %2284 = vmatpush1.msra.mxu0 0.0
  %2285 = vmatprep.subr.mxu0 0.0
  %2286 = vmatpush1.msra.mxu0 0.0
  %2287 = vmatprep.subr.mxu0 0.0
  %2288 = vmatpush1.msra.mxu0 0.0
  %2289 = vmatprep.subr.mxu0 0.0
  %2290 = vmatpush1.msra.mxu0 0.0
  %2291 = vmatprep.subr.mxu0 0.0
  %2292 = vmatpush1.msra.mxu0 0.0
  %2293 = vmatprep.subr.mxu0 0.0
  %2294 = vmatpush1.msra.mxu0 0.0
  %2295 = vmatprep.subr.mxu0 0.0
  %2296 = vmatpush1.msra.mxu0 0.0
  %2297 = vmatprep.subr.mxu0 0.0
  %2298 = vmatpush1.msra.mxu0 0.0
  %2299 = vmatprep.subr.mxu0 0.0
  %2300 = vmatpush1.msra.mxu0 0.0
  %2301 = vmatprep.subr.mxu0 0.0
  %2302 = vmatpush1.msra.mxu0 0.0
  %2303 = vmatprep.subr.mxu0 0.0
  %2304 = vmatpush1.msra.mxu0 0.0
  %2305 = vmatprep.subr.mxu0 0.0
  %2306 = vmatpush1.msra.mxu0 0.0
  %2307 = vmatprep.subr.mxu0 0.0
  %2308 = vmatpush1.msra.mxu0 0.0
  %2309 = vmatprep.subr.mxu0 0.0
  %2310 = vmatpush1.msra.mxu0 0.0
  %2311 = vmatprep.subr.mxu0 0.0
  %2312 = vmatpush1.msra.mxu0 0.0
  %2313 = vmatprep.mubr.f32.mxu0 0.0
  %2314 = vmatmul.mubr.f32.gmra.mrb[0].mxu0 %v1063
  %v2315 = vpop.f32.mrb[0].mxu0
  %v2316 = vadd.f32 %v2245, %v2315
  %v2317 = vpop.f32.mrb[0].mxu0
  %v2318 = vadd.f32 %v2247, %v2317
  %2319 = vdwg.mxu0
  %2320 = vmatprep.subr.mxu0 0.0
  %2321 = vmatpush1.msra.mxu0 %v1610
  %2322 = vmatprep.subr.mxu0 0.0
  %2323 = vmatpush1.msra.mxu0 %v1613
  %2324 = vmatprep.subr.mxu0 0.0
  %2325 = vmatpush1.msra.mxu0 %v1616
  %2326 = vmatprep.subr.mxu0 0.0
  %2327 = vmatpush1.msra.mxu0 %v1619
  %2328 = vmatprep.subr.mxu0 0.0
  %2329 = vmatpush1.msra.mxu0 %v1622
  %2330 = vmatprep.subr.mxu0 0.0
  %2331 = vmatpush1.msra.mxu0 %v1625
  %2332 = vmatprep.subr.mxu0 0.0
  %2333 = vmatpush1.msra.mxu0 %v1628
  %2334 = vmatprep.subr.mxu0 0.0
  %2335 = vmatpush1.msra.mxu0 %v1631
  %2336 = vmatprep.subr.mxu0 0.0
  %2337 = vmatpush1.msra.mxu0 %v1634
  %2338 = vmatprep.subr.mxu0 0.0
  %2339 = vmatpush1.msra.mxu0 %v1637
  %2340 = vmatprep.subr.mxu0 0.0
  %2341 = vmatpush1.msra.mxu0 %v1640
  %2342 = vmatprep.subr.mxu0 0.0
  %2343 = vmatpush1.msra.mxu0 %v1643
  %2344 = vmatprep.subr.mxu0 0.0
  %2345 = vmatpush1.msra.mxu0 %v1646
  %2346 = vmatprep.subr.mxu0 0.0
  %2347 = vmatpush1.msra.mxu0 %v1649
  %2348 = vmatprep.subr.mxu0 0.0
  %2349 = vmatpush1.msra.mxu0 %v1652
  %2350 = vmatprep.subr.mxu0 0.0
  %2351 = vmatpush1.msra.mxu0 %v1655
  %2352 = vmatprep.subr.mxu0 0.0
  %2353 = vmatpush1.msra.mxu0 %v1658
  %2354 = vmatprep.subr.mxu0 0.0
  %2355 = vmatpush1.msra.mxu0 %v1661
  %2356 = vmatprep.subr.mxu0 0.0
  %2357 = vmatpush1.msra.mxu0 %v1664
  %2358 = vmatprep.subr.mxu0 0.0
  %2359 = vmatpush1.msra.mxu0 %v1667
  %2360 = vmatprep.subr.mxu0 0.0
  %2361 = vmatpush1.msra.mxu0 %v1670
  %2362 = vmatprep.subr.mxu0 0.0
  %2363 = vmatpush1.msra.mxu0 %v1673
  %2364 = vmatprep.subr.mxu0 0.0
  %2365 = vmatpush1.msra.mxu0 %v1676
  %2366 = vmatprep.subr.mxu0 0.0
  %2367 = vmatpush1.msra.mxu0 %v1679
  %2368 = vmatprep.subr.mxu0 0.0
  %2369 = vmatpush1.msra.mxu0 %v1682
  %2370 = vmatprep.subr.mxu0 0.0
  %2371 = vmatpush1.msra.mxu0 %v1685
  %2372 = vmatprep.subr.mxu0 0.0
  %2373 = vmatpush1.msra.mxu0 %v1688
  %2374 = vmatprep.subr.mxu0 0.0
  %2375 = vmatpush1.msra.mxu0 %v1691
  %2376 = vmatprep.subr.mxu0 0.0
  %2377 = vmatpush1.msra.mxu0 %v1694
  %2378 = vmatprep.subr.mxu0 0.0
  %2379 = vmatpush1.msra.mxu0 %v1697
  %2380 = vmatprep.subr.mxu0 0.0
  %2381 = vmatpush1.msra.mxu0 %v1700
  %2382 = vmatprep.subr.mxu0 0.0
  %2383 = vmatpush1.msra.mxu0 %v1703
  %2384 = vmatprep.mubr.f32.mxu0 %v1062
  %2385 = vmatmul.mubr.f32.gmra.mrb[0].mxu0 %v1061
  %v2386 = vpop.f32.mrb[0].mxu0
  %v2387 = vadd.f32 %v2175, %v2386
  %v2388 = vpop.f32.mrb[0].mxu0
  %2389 = vdwg.mxu0
  %2390 = vmatprep.subr.mxu0 0.0
  %2391 = vmatpush1.msra.mxu0 %v1706
  %2392 = vmatprep.subr.mxu0 0.0
  %2393 = vmatpush1.msra.mxu0 %v1709
  %2394 = vmatprep.subr.mxu0 0.0
  %2395 = vmatpush1.msra.mxu0 %v1712
  %2396 = vmatprep.subr.mxu0 0.0
  %2397 = vmatpush1.msra.mxu0 %v1715
  %2398 = vmatprep.subr.mxu0 0.0
  %2399 = vmatpush1.msra.mxu0 %v1718
  %2400 = vmatprep.subr.mxu0 0.0
  %2401 = vmatpush1.msra.mxu0 %v1721
  %2402 = vmatprep.subr.mxu0 0.0
  %2403 = vmatpush1.msra.mxu0 %v1724
  %2404 = vmatprep.subr.mxu0 0.0
  %2405 = vmatpush1.msra.mxu0 %v1727
  %2406 = vmatprep.subr.mxu0 0.0
  %2407 = vmatpush1.msra.mxu0 %v1730
  %2408 = vmatprep.subr.mxu0 0.0
  %2409 = vmatpush1.msra.mxu0 %v1733
  %2410 = vmatprep.subr.mxu0 0.0
  %2411 = vmatpush1.msra.mxu0 %v1736
  %2412 = vmatprep.subr.mxu0 0.0
  %2413 = vmatpush1.msra.mxu0 %v1739
  %2414 = vmatprep.subr.mxu0 0.0
  %2415 = vmatpush1.msra.mxu0 %v1742
  %2416 = vmatprep.subr.mxu0 0.0
  %2417 = vmatpush1.msra.mxu0 %v1745
  %2418 = vmatprep.subr.mxu0 0.0
  %2419 = vmatpush1.msra.mxu0 %v1748
  %2420 = vmatprep.subr.mxu0 0.0
  %2421 = vmatpush1.msra.mxu0 %v1751
  %2422 = vmatprep.subr.mxu0 0.0
  %2423 = vmatpush1.msra.mxu0 0.0
  %2424 = vmatprep.subr.mxu0 0.0
  %2425 = vmatpush1.msra.mxu0 0.0
  %2426 = vmatprep.subr.mxu0 0.0
  %2427 = vmatpush1.msra.mxu0 0.0
  %2428 = vmatprep.subr.mxu0 0.0
  %2429 = vmatpush1.msra.mxu0 0.0
  %2430 = vmatprep.subr.mxu0 0.0
  %2431 = vmatpush1.msra.mxu0 0.0
  %2432 = vmatprep.subr.mxu0 0.0
  %2433 = vmatpush1.msra.mxu0 0.0
  %2434 = vmatprep.subr.mxu0 0.0
  %2435 = vmatpush1.msra.mxu0 0.0
  %2436 = vmatprep.subr.mxu0 0.0
  %2437 = vmatpush1.msra.mxu0 0.0
  %2438 = vmatprep.subr.mxu0 0.0
  %2439 = vmatpush1.msra.mxu0 0.0
  %2440 = vmatprep.subr.mxu0 0.0
  %2441 = vmatpush1.msra.mxu0 0.0
  %2442 = vmatprep.subr.mxu0 0.0
  %2443 = vmatpush1.msra.mxu0 0.0
  %2444 = vmatprep.subr.mxu0 0.0
  %2445 = vmatpush1.msra.mxu0 0.0
  %2446 = vmatprep.subr.mxu0 0.0
  %2447 = vmatpush1.msra.mxu0 0.0
  %2448 = vmatprep.subr.mxu0 0.0
  %2449 = vmatpush1.msra.mxu0 0.0
  %2450 = vmatprep.subr.mxu0 0.0
  %2451 = vmatpush1.msra.mxu0 0.0
  %2452 = vmatprep.subr.mxu0 0.0
  %2453 = vmatpush1.msra.mxu0 0.0
  %2454 = vmatprep.mubr.f32.mxu0 0.0
  %2455 = vmatmul.mubr.f32.gmra.mrb[0].mxu0 %v1063
  %v2456 = vpop.f32.mrb[0].mxu0
  %v2457 = vadd.f32 %v2387, %v2456
  %v2458 = vpop.f32.mrb[0].mxu0
  %2459 = vdwg.mxu0
  %v2460 = vld [vmem:[%s10] sm:$0x7]
  %v2462 = vlaneseq
  %v2463 = vshrl.u32 %v2462, 7
  %v2464 = vsub.s32 0, %v2463
  %v2465 = vrot.slane %v2460, %v2464
  %v2466 = vlaneseq
  %v2467 = vshrl.u32 %v2466, 7
  %v2468 = vsub.s32 1, %v2467
  %v2469 = vrot.slane %v2460, %v2468
  %v2470 = vlaneseq
  %v2471 = vshrl.u32 %v2470, 7
  %v2472 = vsub.s32 2, %v2471
  %v2473 = vrot.slane %v2460, %v2472
  %v2477 = vadd.f32 %v2316, %v2465
  %v2478 = vadd.f32 %v2318, %v2469
  %v2479 = vadd.f32 %v2457, %v2473
  %v2480 = vmax.f32 %v2477, 0.0
  %v2481 = vmax.f32 %v2478, 0.0
  %v2482 = vmax.f32 %v2479, 0.0
  %v2483 = vld [vmem:[%s11] sm:$0xff]
  %v2484 = vld [vmem:[%s11 + $0x8] sm:$0xff]
  %v2485 = vld [vmem:[%s11 + $0x10] sm:$0xff]
  %v2486 = vld [vmem:[%s11 + $0x18] sm:$0xff]
  %v2487 = vld [vmem:[%s11 + $0x20] sm:$0xff]
  %v2488 = vld [vmem:[%s11 + $0x28] sm:$0xff]
  %v2489 = vld [vmem:[%s11 + $0x30] sm:$0xff]
  %v2490 = vld [vmem:[%s11 + $0x38] sm:$0xff]
  %v2491 = vld [vmem:[%s11 + $0x40] sm:$0xff]
  %v2492 = vld [vmem:[%s11 + $0x48] sm:$0xff]
  %v2493 = vld [vmem:[%s11 + $0x50] sm:$0xff]
  %v2494 = vld [vmem:[%s11 + $0x58] sm:$0xff]
  %v2495 = vld [vmem:[%s11 + $0x60] sm:$0xff]
  %v2496 = vld [vmem:[%s11 + $0x68] sm:$0xff]
  %v2497 = vld [vmem:[%s11 + $0x70] sm:$0xff]
  %v2498 = vld [vmem:[%s11 + $0x78] sm:$0xff]
  %v2499 = vld [vmem:[%s11 + $0x80] sm:$0xff]
  %v2500 = vld [vmem:[%s11 + $0x88] sm:$0xff]
  %v2501 = vld [vmem:[%s11 + $0x90] sm:$0xff]
  %v2502 = vld [vmem:[%s11 + $0x98] sm:$0xff]
  %v2503 = vld [vmem:[%s11 + $0xa0] sm:$0xff]
  %v2504 = vld [vmem:[%s11 + $0xa8] sm:$0xff]
  %v2505 = vld [vmem:[%s11 + $0xb0] sm:$0xff]
  %v2506 = vld [vmem:[%s11 + $0xb8] sm:$0xff]
  %v2507 = vld [vmem:[%s11 + $0xc0] sm:$0xff]
  %v2508 = vld [vmem:[%s11 + $0xc8] sm:$0xff]
  %v2509 = vld [vmem:[%s11 + $0xd0] sm:$0xff]
  %v2510 = vld [vmem:[%s11 + $0xd8] sm:$0xff]
  %v2511 = vld [vmem:[%s11 + $0xe0] sm:$0xff]
  %v2512 = vld [vmem:[%s11 + $0xe8] sm:$0xff]
  %v2513 = vld [vmem:[%s11 + $0xf0] sm:$0xff]
  %v2514 = vld [vmem:[%s11 + $0xf8] sm:$0xff]
  %v2515 = vld [vmem:[%s11 + $0x100] sm:$0xff]
  %v2516 = vld [vmem:[%s11 + $0x108] sm:$0xff]
  %v2517 = vld [vmem:[%s11 + $0x110] sm:$0xff]
  %v2518 = vld [vmem:[%s11 + $0x118] sm:$0xff]
  %v2519 = vld [vmem:[%s11 + $0x120] sm:$0xff]
  %v2520 = vld [vmem:[%s11 + $0x128] sm:$0xff]
  %v2521 = vld [vmem:[%s11 + $0x130] sm:$0xff]
  %v2522 = vld [vmem:[%s11 + $0x138] sm:$0xff]
  %v2523 = vld [vmem:[%s11 + $0x140] sm:$0xff]
  %v2524 = vld [vmem:[%s11 + $0x148] sm:$0xff]
  %v2525 = vld [vmem:[%s11 + $0x150] sm:$0xff]
  %v2526 = vld [vmem:[%s11 + $0x158] sm:$0xff]
  %v2527 = vld [vmem:[%s11 + $0x160] sm:$0xff]
  %v2528 = vld [vmem:[%s11 + $0x168] sm:$0xff]
  %v2529 = vld [vmem:[%s11 + $0x170] sm:$0xff]
  %v2530 = vld [vmem:[%s11 + $0x178] sm:$0xff]
  %v2531 = vld [vmem:[%s11 + $0x180] sm:$0xff]
  %v2532 = vld [vmem:[%s11 + $0x188] sm:$0xff]
  %v2533 = vld [vmem:[%s11 + $0x190] sm:$0xff]
  %v2534 = vld [vmem:[%s11 + $0x198] sm:$0xff]
  %v2535 = vld [vmem:[%s11 + $0x1a0] sm:$0xff]
  %v2536 = vld [vmem:[%s11 + $0x1a8] sm:$0xff]
  %v2537 = vld [vmem:[%s11 + $0x1b0] sm:$0xff]
  %v2538 = vld [vmem:[%s11 + $0x1b8] sm:$0xff]
  %v2539 = vld [vmem:[%s11 + $0x1c0] sm:$0xff]
  %v2540 = vld [vmem:[%s11 + $0x1c8] sm:$0xff]
  %v2541 = vld [vmem:[%s11 + $0x1d0] sm:$0xff]
  %v2542 = vld [vmem:[%s11 + $0x1d8] sm:$0xff]
  %v2543 = vld [vmem:[%s11 + $0x1e0] sm:$0xff]
  %v2544 = vld [vmem:[%s11 + $0x1e8] sm:$0xff]
  %v2545 = vld [vmem:[%s11 + $0x1f0] sm:$0xff]
  %v2546 = vld [vmem:[%s11 + $0x1f8] sm:$0xff]
  %v2547 = vld [vmem:[%s11 + $0x200] sm:$0xff]
  %v2548 = vld [vmem:[%s11 + $0x208] sm:$0xff]
  %v2549 = vld [vmem:[%s11 + $0x210] sm:$0xff]
  %v2550 = vld [vmem:[%s11 + $0x218] sm:$0xff]
  %v2551 = vld [vmem:[%s11 + $0x220] sm:$0xff]
  %v2552 = vld [vmem:[%s11 + $0x228] sm:$0xff]
  %v2553 = vld [vmem:[%s11 + $0x230] sm:$0xff]
  %v2554 = vld [vmem:[%s11 + $0x238] sm:$0xff]
  %v2555 = vld [vmem:[%s11 + $0x240] sm:$0xff]
  %v2556 = vld [vmem:[%s11 + $0x248] sm:$0xff]
  %v2557 = vld [vmem:[%s11 + $0x250] sm:$0xff]
  %v2558 = vld [vmem:[%s11 + $0x258] sm:$0xff]
  %v2559 = vld [vmem:[%s11 + $0x260] sm:$0xff]
  %v2560 = vld [vmem:[%s11 + $0x268] sm:$0xff]
  %v2561 = vld [vmem:[%s11 + $0x270] sm:$0xff]
  %v2562 = vld [vmem:[%s11 + $0x278] sm:$0xff]
  %v2563 = vld [vmem:[%s11 + $0x280] sm:$0xff]
  %v2564 = vld [vmem:[%s11 + $0x288] sm:$0xff]
  %v2565 = vld [vmem:[%s11 + $0x290] sm:$0xff]
  %v2566 = vld [vmem:[%s11 + $0x298] sm:$0xff]
  %v2567 = vld [vmem:[%s11 + $0x2a0] sm:$0xff]
  %v2568 = vld [vmem:[%s11 + $0x2a8] sm:$0xff]
  %v2569 = vld [vmem:[%s11 + $0x2b0] sm:$0xff]
  %v2570 = vld [vmem:[%s11 + $0x2b8] sm:$0xff]
  %v2571 = vld [vmem:[%s11 + $0x2c0] sm:$0xff]
  %v2572 = vld [vmem:[%s11 + $0x2c8] sm:$0xff]
  %v2573 = vld [vmem:[%s11 + $0x2d0] sm:$0xff]
  %v2574 = vld [vmem:[%s11 + $0x2d8] sm:$0xff]
  %v2575 = vld [vmem:[%s11 + $0x2e0] sm:$0xff]
  %v2576 = vld [vmem:[%s11 + $0x2e8] sm:$0xff]
  %v2577 = vld [vmem:[%s11 + $0x2f0] sm:$0xff]
  %v2578 = vld [vmem:[%s11 + $0x2f8] sm:$0xff]
  %v2579 = vld [vmem:[%s11 + $0x300] sm:$0xff]
  %v2580 = vld [vmem:[%s11 + $0x308] sm:$0xff]
  %v2581 = vld [vmem:[%s11 + $0x310] sm:$0xff]
  %v2582 = vld [vmem:[%s11 + $0x318] sm:$0xff]
  %v2583 = vld [vmem:[%s11 + $0x320] sm:$0xff]
  %v2584 = vld [vmem:[%s11 + $0x328] sm:$0xff]
  %v2585 = vld [vmem:[%s11 + $0x330] sm:$0xff]
  %v2586 = vld [vmem:[%s11 + $0x338] sm:$0xff]
  %v2587 = vld [vmem:[%s11 + $0x340] sm:$0xff]
  %v2588 = vld [vmem:[%s11 + $0x348] sm:$0xff]
  %v2589 = vld [vmem:[%s11 + $0x350] sm:$0xff]
  %v2590 = vld [vmem:[%s11 + $0x358] sm:$0xff]
  %v2591 = vld [vmem:[%s11 + $0x360] sm:$0xff]
  %v2592 = vld [vmem:[%s11 + $0x368] sm:$0xff]
  %v2593 = vld [vmem:[%s11 + $0x370] sm:$0xff]
  %v2594 = vld [vmem:[%s11 + $0x378] sm:$0xff]
  %v2595 = vld [vmem:[%s11 + $0x380] sm:$0xff]
  %v2596 = vld [vmem:[%s11 + $0x388] sm:$0xff]
  %v2597 = vld [vmem:[%s11 + $0x390] sm:$0xff]
  %v2598 = vld [vmem:[%s11 + $0x398] sm:$0xff]
  %v2599 = vld [vmem:[%s11 + $0x3a0] sm:$0xff]
  %v2600 = vld [vmem:[%s11 + $0x3a8] sm:$0xff]
  %v2601 = vld [vmem:[%s11 + $0x3b0] sm:$0xff]
  %v2602 = vld [vmem:[%s11 + $0x3b8] sm:$0xff]
  %v2603 = vld [vmem:[%s11 + $0x3c0] sm:$0xff]
  %v2604 = vld [vmem:[%s11 + $0x3c8] sm:$0xff]
  %v2605 = vld [vmem:[%s11 + $0x3d0] sm:$0xff]
  %v2606 = vld [vmem:[%s11 + $0x3d8] sm:$0xff]
  %v2607 = vld [vmem:[%s11 + $0x3e0] sm:$0xff]
  %v2608 = vld [vmem:[%s11 + $0x3e8] sm:$0xff]
  %v2609 = vld [vmem:[%s11 + $0x3f0] sm:$0xff]
  %v2610 = vld [vmem:[%s11 + $0x3f8] sm:$0xff]
  %v2611 = vld [vmem:[%s11 + $0x400] sm:$0xff]
  %v2612 = vld [vmem:[%s11 + $0x408] sm:$0xff]
  %v2613 = vld [vmem:[%s11 + $0x410] sm:$0xff]
  %v2614 = vld [vmem:[%s11 + $0x418] sm:$0xff]
  %v2615 = vld [vmem:[%s11 + $0x420] sm:$0xff]
  %v2616 = vld [vmem:[%s11 + $0x428] sm:$0xff]
  %v2617 = vld [vmem:[%s11 + $0x430] sm:$0xff]
  %v2618 = vld [vmem:[%s11 + $0x438] sm:$0xff]
  %v2619 = vld [vmem:[%s11 + $0x440] sm:$0xff]
  %v2620 = vld [vmem:[%s11 + $0x448] sm:$0xff]
  %v2621 = vld [vmem:[%s11 + $0x450] sm:$0xff]
  %v2622 = vld [vmem:[%s11 + $0x458] sm:$0xff]
  %v2623 = vld [vmem:[%s11 + $0x460] sm:$0xff]
  %v2624 = vld [vmem:[%s11 + $0x468] sm:$0xff]
  %v2625 = vld [vmem:[%s11 + $0x470] sm:$0xff]
  %v2626 = vld [vmem:[%s11 + $0x478] sm:$0xff]
  %v2627 = vld [vmem:[%s12] sm:$0x7]
  %v2629 = vlaneseq
  %v2630 = vshrl.u32 %v2629, 7
  %v2631 = vsub.s32 0, %v2630
  %v2632 = vrot.slane %v2627, %v2631
  %v2633 = vlaneseq
  %v2634 = vshrl.u32 %v2633, 7
  %v2635 = vsub.s32 1, %v2634
  %v2636 = vrot.slane %v2627, %v2635
  %v2637 = vlaneseq
  %v2638 = vshrl.u32 %v2637, 7
  %v2639 = vsub.s32 2, %v2638
  %v2640 = vrot.slane %v2627, %v2639
  %2644 = vmatprep.subr.mxu0 %v2484
  %2645 = vmatpush1.msra.mxu0 %v2483
  %2646 = vmatprep.subr.mxu0 %v2487
  %2647 = vmatpush1.msra.mxu0 %v2486
  %2648 = vmatprep.subr.mxu0 %v2490
  %2649 = vmatpush1.msra.mxu0 %v2489
  %2650 = vmatprep.subr.mxu0 %v2493
  %2651 = vmatpush1.msra.mxu0 %v2492
  %2652 = vmatprep.subr.mxu0 %v2496
  %2653 = vmatpush1.msra.mxu0 %v2495
  %2654 = vmatprep.subr.mxu0 %v2499
  %2655 = vmatpush1.msra.mxu0 %v2498
  %2656 = vmatprep.subr.mxu0 %v2502
  %2657 = vmatpush1.msra.mxu0 %v2501
  %2658 = vmatprep.subr.mxu0 %v2505
  %2659 = vmatpush1.msra.mxu0 %v2504
  %2660 = vmatprep.subr.mxu0 %v2508
  %2661 = vmatpush1.msra.mxu0 %v2507
  %2662 = vmatprep.subr.mxu0 %v2511
  %2663 = vmatpush1.msra.mxu0 %v2510
  %2664 = vmatprep.subr.mxu0 %v2514
  %2665 = vmatpush1.msra.mxu0 %v2513
  %2666 = vmatprep.subr.mxu0 %v2517
  %2667 = vmatpush1.msra.mxu0 %v2516
  %2668 = vmatprep.subr.mxu0 %v2520
  %2669 = vmatpush1.msra.mxu0 %v2519
  %2670 = vmatprep.subr.mxu0 %v2523
  %2671 = vmatpush1.msra.mxu0 %v2522
  %2672 = vmatprep.subr.mxu0 %v2526
  %2673 = vmatpush1.msra.mxu0 %v2525
  %2674 = vmatprep.subr.mxu0 %v2529
  %2675 = vmatpush1.msra.mxu0 %v2528
  %2676 = vmatprep.subr.mxu0 %v2532
  %2677 = vmatpush1.msra.mxu0 %v2531
  %2678 = vmatprep.subr.mxu0 %v2535
  %2679 = vmatpush1.msra.mxu0 %v2534
  %2680 = vmatprep.subr.mxu0 %v2538
  %2681 = vmatpush1.msra.mxu0 %v2537
  %2682 = vmatprep.subr.mxu0 %v2541
  %2683 = vmatpush1.msra.mxu0 %v2540
  %2684 = vmatprep.subr.mxu0 %v2544
  %2685 = vmatpush1.msra.mxu0 %v2543
  %2686 = vmatprep.subr.mxu0 %v2547
  %2687 = vmatpush1.msra.mxu0 %v2546
  %2688 = vmatprep.subr.mxu0 %v2550
  %2689 = vmatpush1.msra.mxu0 %v2549
  %2690 = vmatprep.subr.mxu0 %v2553
  %2691 = vmatpush1.msra.mxu0 %v2552
  %2692 = vmatprep.subr.mxu0 %v2556
  %2693 = vmatpush1.msra.mxu0 %v2555
  %2694 = vmatprep.subr.mxu0 %v2559
  %2695 = vmatpush1.msra.mxu0 %v2558
  %2696 = vmatprep.subr.mxu0 %v2562
  %2697 = vmatpush1.msra.mxu0 %v2561
  %2698 = vmatprep.subr.mxu0 %v2565
  %2699 = vmatpush1.msra.mxu0 %v2564
  %2700 = vmatprep.subr.mxu0 %v2568
  %2701 = vmatpush1.msra.mxu0 %v2567
  %2702 = vmatprep.subr.mxu0 %v2571
  %2703 = vmatpush1.msra.mxu0 %v2570
  %2704 = vmatprep.subr.mxu0 %v2574
  %2705 = vmatpush1.msra.mxu0 %v2573
  %2706 = vmatprep.subr.mxu0 %v2577
  %2707 = vmatpush1.msra.mxu0 %v2576
  %2708 = vmatprep.mubr.f32.mxu0 %v2481
  %2709 = vmatmul.mubr.f32.gmra.mrb[0].mxu0 %v2480
  %v2710 = vpop.f32.mrb[0].mxu0
  %v2711 = vadd.f32 %v2632, %v2710
  %v2712 = vpop.f32.mrb[0].mxu0
  %v2713 = vadd.f32 %v2636, %v2712
  %2714 = vdwg.mxu0
  %2715 = vmatprep.subr.mxu0 %v2580
  %2716 = vmatpush1.msra.mxu0 %v2579
  %2717 = vmatprep.subr.mxu0 %v2583
  %2718 = vmatpush1.msra.mxu0 %v2582
  %2719 = vmatprep.subr.mxu0 %v2586
  %2720 = vmatpush1.msra.mxu0 %v2585
  %2721 = vmatprep.subr.mxu0 %v2589
  %2722 = vmatpush1.msra.mxu0 %v2588
  %2723 = vmatprep.subr.mxu0 %v2592
  %2724 = vmatpush1.msra.mxu0 %v2591
  %2725 = vmatprep.subr.mxu0 %v2595
  %2726 = vmatpush1.msra.mxu0 %v2594
  %2727 = vmatprep.subr.mxu0 %v2598
  %2728 = vmatpush1.msra.mxu0 %v2597
  %2729 = vmatprep.subr.mxu0 %v2601
  %2730 = vmatpush1.msra.mxu0 %v2600
  %2731 = vmatprep.subr.mxu0 %v2604
  %2732 = vmatpush1.msra.mxu0 %v2603
  %2733 = vmatprep.subr.mxu0 %v2607
  %2734 = vmatpush1.msra.mxu0 %v2606
  %2735 = vmatprep.subr.mxu0 %v2610
  %2736 = vmatpush1.msra.mxu0 %v2609
  %2737 = vmatprep.subr.mxu0 %v2613
  %2738 = vmatpush1.msra.mxu0 %v2612
  %2739 = vmatprep.subr.mxu0 %v2616
  %2740 = vmatpush1.msra.mxu0 %v2615
  %2741 = vmatprep.subr.mxu0 %v2619
  %2742 = vmatpush1.msra.mxu0 %v2618
  %2743 = vmatprep.subr.mxu0 %v2622
  %2744 = vmatpush1.msra.mxu0 %v2621
  %2745 = vmatprep.subr.mxu0 %v2625
  %2746 = vmatpush1.msra.mxu0 %v2624
  %2747 = vmatprep.subr.mxu0 0.0
  %2748 = vmatpush1.msra.mxu0 0.0
  %2749 = vmatprep.subr.mxu0 0.0
  %2750 = vmatpush1.msra.mxu0 0.0
  %2751 = vmatprep.subr.mxu0 0.0
  %2752 = vmatpush1.msra.mxu0 0.0
  %2753 = vmatprep.subr.mxu0 0.0
  %2754 = vmatpush1.msra.mxu0 0.0
  %2755 = vmatprep.subr.mxu0 0.0
  %2756 = vmatpush1.msra.mxu0 0.0
  %2757 = vmatprep.subr.mxu0 0.0
  %2758 = vmatpush1.msra.mxu0 0.0
  %2759 = vmatprep.subr.mxu0 0.0
  %2760 = vmatpush1.msra.mxu0 0.0
  %2761 = vmatprep.subr.mxu0 0.0
  %2762 = vmatpush1.msra.mxu0 0.0
  %2763 = vmatprep.subr.mxu0 0.0
  %2764 = vmatpush1.msra.mxu0 0.0
  %2765 = vmatprep.subr.mxu0 0.0
  %2766 = vmatpush1.msra.mxu0 0.0
  %2767 = vmatprep.subr.mxu0 0.0
  %2768 = vmatpush1.msra.mxu0 0.0
  %2769 = vmatprep.subr.mxu0 0.0
  %2770 = vmatpush1.msra.mxu0 0.0
  %2771 = vmatprep.subr.mxu0 0.0
  %2772 = vmatpush1.msra.mxu0 0.0
  %2773 = vmatprep.subr.mxu0 0.0
  %2774 = vmatpush1.msra.mxu0 0.0
  %2775 = vmatprep.subr.mxu0 0.0
  %2776 = vmatpush1.msra.mxu0 0.0
  %2777 = vmatprep.subr.mxu0 0.0
  %2778 = vmatpush1.msra.mxu0 0.0
  %2779 = vmatprep.mubr.f32.mxu0 0.0
  %2780 = vmatmul.mubr.f32.gmra.mrb[0].mxu0 %v2482
  %v2781 = vpop.f32.mrb[0].mxu0
  %v2782 = vadd.f32 %v2711, %v2781
  %v2783 = vpop.f32.mrb[0].mxu0
  %v2784 = vadd.f32 %v2713, %v2783
  %2785 = vdwg.mxu0
  %2786 = vmatprep.subr.mxu0 0.0
  %2787 = vmatpush1.msra.mxu0 %v2485
  %2788 = vmatprep.subr.mxu0 0.0
  %2789 = vmatpush1.msra.mxu0 %v2488
  %2790 = vmatprep.subr.mxu0 0.0
  %2791 = vmatpush1.msra.mxu0 %v2491
  %2792 = vmatprep.subr.mxu0 0.0
  %2793 = vmatpush1.msra.mxu0 %v2494
  %2794 = vmatprep.subr.mxu0 0.0
  %2795 = vmatpush1.msra.mxu0 %v2497
  %2796 = vmatprep.subr.mxu0 0.0
  %2797 = vmatpush1.msra.mxu0 %v2500
  %2798 = vmatprep.subr.mxu0 0.0
  %2799 = vmatpush1.msra.mxu0 %v2503
  %2800 = vmatprep.subr.mxu0 0.0
  %2801 = vmatpush1.msra.mxu0 %v2506
  %2802 = vmatprep.subr.mxu0 0.0
  %2803 = vmatpush1.msra.mxu0 %v2509
  %2804 = vmatprep.subr.mxu0 0.0
  %2805 = vmatpush1.msra.mxu0 %v2512
  %2806 = vmatprep.subr.mxu0 0.0
  %2807 = vmatpush1.msra.mxu0 %v2515
  %2808 = vmatprep.subr.mxu0 0.0
  %2809 = vmatpush1.msra.mxu0 %v2518
  %2810 = vmatprep.subr.mxu0 0.0
  %2811 = vmatpush1.msra.mxu0 %v2521
  %2812 = vmatprep.subr.mxu0 0.0
  %2813 = vmatpush1.msra.mxu0 %v2524
  %2814 = vmatprep.subr.mxu0 0.0
  %2815 = vmatpush1.msra.mxu0 %v2527
  %2816 = vmatprep.subr.mxu0 0.0
  %2817 = vmatpush1.msra.mxu0 %v2530
  %2818 = vmatprep.subr.mxu0 0.0
  %2819 = vmatpush1.msra.mxu0 %v2533
  %2820 = vmatprep.subr.mxu0 0.0
  %2821 = vmatpush1.msra.mxu0 %v2536
  %2822 = vmatprep.subr.mxu0 0.0
  %2823 = vmatpush1.msra.mxu0 %v2539
  %2824 = vmatprep.subr.mxu0 0.0
  %2825 = vmatpush1.msra.mxu0 %v2542
  %2826 = vmatprep.subr.mxu0 0.0
  %2827 = vmatpush1.msra.mxu0 %v2545
  %2828 = vmatprep.subr.mxu0 0.0
  %2829 = vmatpush1.msra.mxu0 %v2548
  %2830 = vmatprep.subr.mxu0 0.0
  %2831 = vmatpush1.msra.mxu0 %v2551
  %2832 = vmatprep.subr.mxu0 0.0
  %2833 = vmatpush1.msra.mxu0 %v2554
  %2834 = vmatprep.subr.mxu0 0.0
  %2835 = vmatpush1.msra.mxu0 %v2557
  %2836 = vmatprep.subr.mxu0 0.0
  %2837 = vmatpush1.msra.mxu0 %v2560
  %2838 = vmatprep.subr.mxu0 0.0
  %2839 = vmatpush1.msra.mxu0 %v2563
  %2840 = vmatprep.subr.mxu0 0.0
  %2841 = vmatpush1.msra.mxu0 %v2566
  %2842 = vmatprep.subr.mxu0 0.0
  %2843 = vmatpush1.msra.mxu0 %v2569
  %2844 = vmatprep.subr.mxu0 0.0
  %2845 = vmatpush1.msra.mxu0 %v2572
  %2846 = vmatprep.subr.mxu0 0.0
  %2847 = vmatpush1.msra.mxu0 %v2575
  %2848 = vmatprep.subr.mxu0 0.0
  %2849 = vmatpush1.msra.mxu0 %v2578
  %2850 = vmatprep.mubr.f32.mxu0 %v2481
  %2851 = vmatmul.mubr.f32.gmra.mrb[0].mxu0 %v2480
  %v2852 = vpop.f32.mrb[0].mxu0
  %v2853 = vadd.f32 %v2640, %v2852
  %v2854 = vpop.f32.mrb[0].mxu0
  %2855 = vdwg.mxu0
  %2856 = vmatprep.subr.mxu0 0.0
  %2857 = vmatpush1.msra.mxu0 %v2581
  %2858 = vmatprep.subr.mxu0 0.0
  %2859 = vmatpush1.msra.mxu0 %v2584
  %2860 = vmatprep.subr.mxu0 0.0
  %2861 = vmatpush1.msra.mxu0 %v2587
  %2862 = vmatprep.subr.mxu0 0.0
  %2863 = vmatpush1.msra.mxu0 %v2590
  %2864 = vmatprep.subr.mxu0 0.0
  %2865 = vmatpush1.msra.mxu0 %v2593
  %2866 = vmatprep.subr.mxu0 0.0
  %2867 = vmatpush1.msra.mxu0 %v2596
  %2868 = vmatprep.subr.mxu0 0.0
  %2869 = vmatpush1.msra.mxu0 %v2599
  %2870 = vmatprep.subr.mxu0 0.0
  %2871 = vmatpush1.msra.mxu0 %v2602
  %2872 = vmatprep.subr.mxu0 0.0
  %2873 = vmatpush1.msra.mxu0 %v2605
  %2874 = vmatprep.subr.mxu0 0.0
  %2875 = vmatpush1.msra.mxu0 %v2608
  %2876 = vmatprep.subr.mxu0 0.0
  %2877 = vmatpush1.msra.mxu0 %v2611
  %2878 = vmatprep.subr.mxu0 0.0
  %2879 = vmatpush1.msra.mxu0 %v2614
  %2880 = vmatprep.subr.mxu0 0.0
  %2881 = vmatpush1.msra.mxu0 %v2617
  %2882 = vmatprep.subr.mxu0 0.0
  %2883 = vmatpush1.msra.mxu0 %v2620
  %2884 = vmatprep.subr.mxu0 0.0
  %2885 = vmatpush1.msra.mxu0 %v2623
  %2886 = vmatprep.subr.mxu0 0.0
  %2887 = vmatpush1.msra.mxu0 %v2626
  %2888 = vmatprep.subr.mxu0 0.0
  %2889 = vmatpush1.msra.mxu0 0.0
  %2890 = vmatprep.subr.mxu0 0.0
  %2891 = vmatpush1.msra.mxu0 0.0
  %2892 = vmatprep.subr.mxu0 0.0
  %2893 = vmatpush1.msra.mxu0 0.0
  %2894 = vmatprep.subr.mxu0 0.0
  %2895 = vmatpush1.msra.mxu0 0.0
  %2896 = vmatprep.subr.mxu0 0.0
  %2897 = vmatpush1.msra.mxu0 0.0
  %2898 = vmatprep.subr.mxu0 0.0
  %2899 = vmatpush1.msra.mxu0 0.0
  %2900 = vmatprep.subr.mxu0 0.0
  %2901 = vmatpush1.msra.mxu0 0.0
  %2902 = vmatprep.subr.mxu0 0.0
  %2903 = vmatpush1.msra.mxu0 0.0
  %2904 = vmatprep.subr.mxu0 0.0
  %2905 = vmatpush1.msra.mxu0 0.0
  %2906 = vmatprep.subr.mxu0 0.0
  %2907 = vmatpush1.msra.mxu0 0.0
  %2908 = vmatprep.subr.mxu0 0.0
  %2909 = vmatpush1.msra.mxu0 0.0
  %2910 = vmatprep.subr.mxu0 0.0
  %2911 = vmatpush1.msra.mxu0 0.0
  %2912 = vmatprep.subr.mxu0 0.0
  %2913 = vmatpush1.msra.mxu0 0.0
  %2914 = vmatprep.subr.mxu0 0.0
  %2915 = vmatpush1.msra.mxu0 0.0
  %2916 = vmatprep.subr.mxu0 0.0
  %2917 = vmatpush1.msra.mxu0 0.0
  %2918 = vmatprep.subr.mxu0 0.0
  %2919 = vmatpush1.msra.mxu0 0.0
  %2920 = vmatprep.mubr.f32.mxu0 0.0
  %2921 = vmatmul.mubr.f32.gmra.mrb[0].mxu0 %v2482
  %v2922 = vpop.f32.mrb[0].mxu0
  %v2923 = vadd.f32 %v2853, %v2922
  %v2924 = vpop.f32.mrb[0].mxu0
  %2925 = vdwg.mxu0
  %v2926 = vmax.f32 %v2782, 0.0
  %v2927 = vmax.f32 %v2784, 0.0
  %v2928 = vmax.f32 %v2923, 0.0
  %v2929 = vld [vmem:[%s13] sm:$0xff]
  %v2930 = vld [vmem:[%s13 + $0x8] sm:$0xff]
  %v2931 = vld [vmem:[%s13 + $0x10] sm:$0xff]
  %v2932 = vld [vmem:[%s13 + $0x18] sm:$0xff]
  %v2933 = vld [vmem:[%s13 + $0x20] sm:$0xff]
  %v2934 = vld [vmem:[%s13 + $0x28] sm:$0xff]
  %v2935 = vld [vmem:[%s13 + $0x30] sm:$0xff]
  %v2936 = vld [vmem:[%s13 + $0x38] sm:$0xff]
  %v2937 = vld [vmem:[%s13 + $0x40] sm:$0xff]
  %v2938 = vld [vmem:[%s13 + $0x48] sm:$0xff]
  %v2939 = vld [vmem:[%s13 + $0x50] sm:$0xff]
  %v2940 = vld [vmem:[%s13 + $0x58] sm:$0xff]
  %v2941 = vld [vmem:[%s13 + $0x60] sm:$0xff]
  %v2942 = vld [vmem:[%s13 + $0x68] sm:$0xff]
  %v2943 = vld [vmem:[%s13 + $0x70] sm:$0xff]
  %v2944 = vld [vmem:[%s13 + $0x78] sm:$0xff]
  %v2945 = vld [vmem:[%s13 + $0x80] sm:$0xff]
  %v2946 = vld [vmem:[%s13 + $0x88] sm:$0xff]
  %v2947 = vld [vmem:[%s13 + $0x90] sm:$0xff]
  %v2948 = vld [vmem:[%s13 + $0x98] sm:$0xff]
  %v2949 = vld [vmem:[%s13 + $0xa0] sm:$0xff]
  %v2950 = vld [vmem:[%s13 + $0xa8] sm:$0xff]
  %v2951 = vld [vmem:[%s13 + $0xb0] sm:$0xff]
  %v2952 = vld [vmem:[%s13 + $0xb8] sm:$0xff]
  %v2953 = vld [vmem:[%s13 + $0xc0] sm:$0xff]
  %v2954 = vld [vmem:[%s13 + $0xc8] sm:$0xff]
  %v2955 = vld [vmem:[%s13 + $0xd0] sm:$0xff]
  %v2956 = vld [vmem:[%s13 + $0xd8] sm:$0xff]
  %v2957 = vld [vmem:[%s13 + $0xe0] sm:$0xff]
  %v2958 = vld [vmem:[%s13 + $0xe8] sm:$0xff]
  %v2959 = vld [vmem:[%s13 + $0xf0] sm:$0xff]
  %v2960 = vld [vmem:[%s13 + $0xf8] sm:$0xff]
  %v2961 = vld [vmem:[%s13 + $0x100] sm:$0xff]
  %v2962 = vld [vmem:[%s13 + $0x108] sm:$0xff]
  %v2963 = vld [vmem:[%s13 + $0x110] sm:$0xff]
  %v2964 = vld [vmem:[%s13 + $0x118] sm:$0xff]
  %v2965 = vld [vmem:[%s13 + $0x120] sm:$0xff]
  %v2966 = vld [vmem:[%s13 + $0x128] sm:$0xff]
  %v2967 = vld [vmem:[%s13 + $0x130] sm:$0xff]
  %v2968 = vld [vmem:[%s13 + $0x138] sm:$0xff]
  %v2969 = vld [vmem:[%s13 + $0x140] sm:$0xff]
  %v2970 = vld [vmem:[%s13 + $0x148] sm:$0xff]
  %v2971 = vld [vmem:[%s13 + $0x150] sm:$0xff]
  %v2972 = vld [vmem:[%s13 + $0x158] sm:$0xff]
  %v2973 = vld [vmem:[%s13 + $0x160] sm:$0xff]
  %v2974 = vld [vmem:[%s13 + $0x168] sm:$0xff]
  %v2975 = vld [vmem:[%s13 + $0x170] sm:$0xff]
  %v2976 = vld [vmem:[%s13 + $0x178] sm:$0xff]
  %v2977 = vld [vmem:[%s14] sm:$0x1]
  %v2979 = vlaneseq
  %v2980 = vshrl.u32 %v2979, 7
  %v2981 = vsub.s32 0, %v2980
  %v2982 = vrot.slane %v2977, %v2981
  %2984 = vmatprep.subr.mxu0 0.0
  %2985 = vmatpush1.msra.mxu0 %v2929
  %2986 = vmatprep.subr.mxu0 0.0
  %2987 = vmatpush1.msra.mxu0 %v2930
  %2988 = vmatprep.subr.mxu0 0.0
  %2989 = vmatpush1.msra.mxu0 %v2931
  %2990 = vmatprep.subr.mxu0 0.0
  %2991 = vmatpush1.msra.mxu0 %v2932
  %2992 = vmatprep.subr.mxu0 0.0
  %2993 = vmatpush1.msra.mxu0 %v2933
  %2994 = vmatprep.subr.mxu0 0.0
  %2995 = vmatpush1.msra.mxu0 %v2934
  %2996 = vmatprep.subr.mxu0 0.0
  %2997 = vmatpush1.msra.mxu0 %v2935
  %2998 = vmatprep.subr.mxu0 0.0
  %2999 = vmatpush1.msra.mxu0 %v2936
  %3000 = vmatprep.subr.mxu0 0.0
  %3001 = vmatpush1.msra.mxu0 %v2937
  %3002 = vmatprep.subr.mxu0 0.0
  %3003 = vmatpush1.msra.mxu0 %v2938
  %3004 = vmatprep.subr.mxu0 0.0
  %3005 = vmatpush1.msra.mxu0 %v2939
  %3006 = vmatprep.subr.mxu0 0.0
  %3007 = vmatpush1.msra.mxu0 %v2940
  %3008 = vmatprep.subr.mxu0 0.0
  %3009 = vmatpush1.msra.mxu0 %v2941
  %3010 = vmatprep.subr.mxu0 0.0
  %3011 = vmatpush1.msra.mxu0 %v2942
  %3012 = vmatprep.subr.mxu0 0.0
  %3013 = vmatpush1.msra.mxu0 %v2943
  %3014 = vmatprep.subr.mxu0 0.0
  %3015 = vmatpush1.msra.mxu0 %v2944
  %3016 = vmatprep.subr.mxu0 0.0
  %3017 = vmatpush1.msra.mxu0 %v2945
  %3018 = vmatprep.subr.mxu0 0.0
  %3019 = vmatpush1.msra.mxu0 %v2946
  %3020 = vmatprep.subr.mxu0 0.0
  %3021 = vmatpush1.msra.mxu0 %v2947
  %3022 = vmatprep.subr.mxu0 0.0
  %3023 = vmatpush1.msra.mxu0 %v2948
  %3024 = vmatprep.subr.mxu0 0.0
  %3025 = vmatpush1.msra.mxu0 %v2949
  %3026 = vmatprep.subr.mxu0 0.0
  %3027 = vmatpush1.msra.mxu0 %v2950
  %3028 = vmatprep.subr.mxu0 0.0
  %3029 = vmatpush1.msra.mxu0 %v2951
  %3030 = vmatprep.subr.mxu0 0.0
  %3031 = vmatpush1.msra.mxu0 %v2952
  %3032 = vmatprep.subr.mxu0 0.0
  %3033 = vmatpush1.msra.mxu0 %v2953
  %3034 = vmatprep.subr.mxu0 0.0
  %3035 = vmatpush1.msra.mxu0 %v2954
  %3036 = vmatprep.subr.mxu0 0.0
  %3037 = vmatpush1.msra.mxu0 %v2955
  %3038 = vmatprep.subr.mxu0 0.0
  %3039 = vmatpush1.msra.mxu0 %v2956
  %3040 = vmatprep.subr.mxu0 0.0
  %3041 = vmatpush1.msra.mxu0 %v2957
  %3042 = vmatprep.subr.mxu0 0.0
  %3043 = vmatpush1.msra.mxu0 %v2958
  %3044 = vmatprep.subr.mxu0 0.0
  %3045 = vmatpush1.msra.mxu0 %v2959
  %3046 = vmatprep.subr.mxu0 0.0
  %3047 = vmatpush1.msra.mxu0 %v2960
  %3048 = vmatprep.mubr.f32.mxu0 %v2927
  %3049 = vmatmul.mubr.f32.gmra.mrb[0].mxu0 %v2926
  %v3050 = vpop.f32.mrb[0].mxu0
  %v3051 = vadd.f32 %v2982, %v3050
  %v3052 = vpop.f32.mrb[0].mxu0
  %3053 = vdwg.mxu0
  %3054 = vmatprep.subr.mxu0 0.0
  %3055 = vmatpush1.msra.mxu0 %v2961
  %3056 = vmatprep.subr.mxu0 0.0
  %3057 = vmatpush1.msra.mxu0 %v2962
  %3058 = vmatprep.subr.mxu0 0.0
  %3059 = vmatpush1.msra.mxu0 %v2963
  %3060 = vmatprep.subr.mxu0 0.0
  %3061 = vmatpush1.msra.mxu0 %v2964
  %3062 = vmatprep.subr.mxu0 0.0
  %3063 = vmatpush1.msra.mxu0 %v2965
  %3064 = vmatprep.subr.mxu0 0.0
  %3065 = vmatpush1.msra.mxu0 %v2966
  %3066 = vmatprep.subr.mxu0 0.0
  %3067 = vmatpush1.msra.mxu0 %v2967
  %3068 = vmatprep.subr.mxu0 0.0
  %3069 = vmatpush1.msra.mxu0 %v2968
  %3070 = vmatprep.subr.mxu0 0.0
  %3071 = vmatpush1.msra.mxu0 %v2969
  %3072 = vmatprep.subr.mxu0 0.0
  %3073 = vmatpush1.msra.mxu0 %v2970
  %3074 = vmatprep.subr.mxu0 0.0
  %3075 = vmatpush1.msra.mxu0 %v2971
  %3076 = vmatprep.subr.mxu0 0.0
  %3077 = vmatpush1.msra.mxu0 %v2972
  %3078 = vmatprep.subr.mxu0 0.0
  %3079 = vmatpush1.msra.mxu0 %v2973
  %3080 = vmatprep.subr.mxu0 0.0
  %3081 = vmatpush1.msra.mxu0 %v2974
  %3082 = vmatprep.subr.mxu0 0.0
  %3083 = vmatpush1.msra.mxu0 %v2975
  %3084 = vmatprep.subr.mxu0 0.0
  %3085 = vmatpush1.msra.mxu0 %v2976
  %3086 = vmatprep.subr.mxu0 0.0
  %3087 = vmatpush1.msra.mxu0 0.0
  %3088 = vmatprep.subr.mxu0 0.0
  %3089 = vmatpush1.msra.mxu0 0.0
  %3090 = vmatprep.subr.mxu0 0.0
  %3091 = vmatpush1.msra.mxu0 0.0
  %3092 = vmatprep.subr.mxu0 0.0
  %3093 = vmatpush1.msra.mxu0 0.0
  %3094 = vmatprep.subr.mxu0 0.0
  %3095 = vmatpush1.msra.mxu0 0.0
  %3096 = vmatprep.subr.mxu0 0.0
  %3097 = vmatpush1.msra.mxu0 0.0
  %3098 = vmatprep.subr.mxu0 0.0
  %3099 = vmatpush1.msra.mxu0 0.0
  %3100 = vmatprep.subr.mxu0 0.0
  %3101 = vmatpush1.msra.mxu0 0.0
  %3102 = vmatprep.subr.mxu0 0.0
  %3103 = vmatpush1.msra.mxu0 0.0
  %3104 = vmatprep.subr.mxu0 0.0
  %3105 = vmatpush1.msra.mxu0 0.0
  %3106 = vmatprep.subr.mxu0 0.0
  %3107 = vmatpush1.msra.mxu0 0.0
  %3108 = vmatprep.subr.mxu0 0.0
  %3109 = vmatpush1.msra.mxu0 0.0
  %3110 = vmatprep.subr.mxu0 0.0
  %3111 = vmatpush1.msra.mxu0 0.0
  %3112 = vmatprep.subr.mxu0 0.0
  %3113 = vmatpush1.msra.mxu0 0.0
  %3114 = vmatprep.subr.mxu0 0.0
  %3115 = vmatpush1.msra.mxu0 0.0
  %3116 = vmatprep.subr.mxu0 0.0
  %3117 = vmatpush1.msra.mxu0 0.0
  %3118 = vmatprep.mubr.f32.mxu0 0.0
  %3119 = vmatmul.mubr.f32.gmra.mrb[0].mxu0 %v2928
  %v3120 = vpop.f32.mrb[0].mxu0
  %v3121 = vadd.f32 %v3051, %v3120
  %v3122 = vpop.f32.mrb[0].mxu0
  %3123 = vdwg.mxu0
  %3124 = vst [vmem:[%s15] sm:$0x3] %v3121
  // Predicated region
  $region62: #{forward.9} parent=0 // pred_check
    _
  $region63: #{forward.9} parent=0 // pred_check_branch
    %3126 = sbr.rel (0) target = $region65
  $region64: #{forward.9} parent=0 // pred_region
    _
  $region65: #{forward.9} parent=0 // pred_fallthru
    _
  // Predicated region
  $region66: #{forward.9} parent=0 // pred_check
    _
  $region67: #{forward.9} parent=0 // pred_check_branch
    %3128 = sbr.rel (0) target = $region69
  $region68: #{forward.9} parent=0 // pred_region
    _
  $region69: #{forward.9} parent=0 // pred_fallthru
    _

</llo_original>
